<compile_context>
chip_gen: v5e
topology: v5e:2x2
jax: 0.10.0
libtpu: 0.0.40
codegen_flags: <defaults>
</compile_context>

<pallas_src>
import functools
import math

import jax
import jax.numpy as jnp
from jax.experimental import pallas as pl
from jax.experimental.pallas import tpu as pltpu


def _bcast2(shape):
    """BlockSpec for a weight replicated across the grid (constant block index)."""
    return pl.BlockSpec(shape, lambda *_: (0,) * len(shape))


# ----------------------------------------------------------------------------
# Kernel 1: first projection + positional embedding add (fused)
# ----------------------------------------------------------------------------

def _first_proj_kernel(x_ref, w_ref, b_ref, pos_ref, o_ref):
    x = x_ref[0].astype(jnp.bfloat16)                       # (S, Dm)
    y = jnp.dot(x, w_ref[...], preferred_element_type=jnp.float32)
    o_ref[0] = (y + b_ref[...] + pos_ref[...]).astype(o_ref.dtype)


def first_proj(x, w, b, pos):
    B, S, Dm = x.shape
    E = w.shape[1]
    return pl.pallas_call(
        _first_proj_kernel,
        out_shape=jax.ShapeDtypeStruct((B, S, E), jnp.float32),
        grid=(B,),
        in_specs=[
            pl.BlockSpec((1, S, Dm), lambda i: (i, 0, 0)),
            _bcast2((Dm, E)),
            _bcast2((1, E)),
            _bcast2((S, E)),
        ],
        out_specs=pl.BlockSpec((1, S, E), lambda i: (i, 0, 0)),
        compiler_params=pltpu.CompilerParams(dimension_semantics=("parallel",)),
    )(x, w, b.reshape(1, E), pos)


# ----------------------------------------------------------------------------
# Kernel 2: fully fused transformer encoder layer (one call per layer)
# ----------------------------------------------------------------------------

def _encoder_layer_kernel(x_ref, in_w_ref, in_b_ref, out_w_ref, out_b_ref,
                          ln_g_ref, ln_b_ref, ff1_w_ref, ff1_b_ref,
                          ff2_w_ref, ff2_b_ref, o_ref, *, num_heads):
    x = x_ref[0]                                            # (S, E) f32
    S, E = x.shape
    Dh = E // num_heads
    scale = 1.0 / math.sqrt(Dh)

    # --- multi-head self-attention ---
    xb = x.astype(jnp.bfloat16)
    qkv = jnp.dot(xb, in_w_ref[...], preferred_element_type=jnp.float32)
    qkv = qkv + in_b_ref[...]
    q, k, v = qkv[:, :E], qkv[:, E:2 * E], qkv[:, 2 * E:]

    # Per-head attention; the out-projection is fused into the head loop
    # (attn @ out_w == sum_h head_h @ out_w[h*Dh:(h+1)*Dh, :]) so the kernel
    # never materializes a lane-sparse head-major tensor and no transpose/reshape
    # glue ever touches HBM.
    ow = out_w_ref[...]                                     # (E, E) bf16
    attn = jnp.broadcast_to(out_b_ref[...], (S, E)).astype(jnp.float32)
    for hd in range(num_heads):
        sl = slice(hd * Dh, (hd + 1) * Dh)
        qh = q[:, sl].astype(jnp.bfloat16)
        kh = k[:, sl].astype(jnp.bfloat16)
        vh = v[:, sl].astype(jnp.bfloat16)
        s = jax.lax.dot_general(qh, kh, (((1,), (1,)), ((), ())),
                                preferred_element_type=jnp.float32) * scale
        s = s - jnp.max(s, axis=-1, keepdims=True)          # softmax in f32
        p = jnp.exp(s)
        p = p / jnp.sum(p, axis=-1, keepdims=True)
        head = jnp.dot(p.astype(jnp.bfloat16), vh,
                       preferred_element_type=jnp.float32)  # (S, Dh)
        attn = attn + jnp.dot(head.astype(jnp.bfloat16), ow[sl, :],
                              preferred_element_type=jnp.float32)

    def ln(z):                                              # LayerNorm, eps=1e-5, f32
        mu = jnp.mean(z, axis=-1, keepdims=True)
        zc = z - mu
        var = jnp.mean(zc * zc, axis=-1, keepdims=True)
        return zc * jax.lax.rsqrt(var + 1e-5) * ln_g_ref[...] + ln_b_ref[...]

    h = ln(x + attn)                                        # residual add fused

    # --- feed-forward ---
    ff = jnp.dot(h.astype(jnp.bfloat16), ff1_w_ref[...],
                 preferred_element_type=jnp.float32) + ff1_b_ref[...]
    ff = jnp.maximum(ff, 0.0)
    ff = jnp.dot(ff.astype(jnp.bfloat16), ff2_w_ref[...],
                 preferred_element_type=jnp.float32) + ff2_b_ref[...]
    h = ln(h + ff)                                          # same LN applied again

    # 0.7/0.3 residual mix fused into the epilogue (lane-dense (S, E) store).
    o_ref[0] = (0.7 * h + 0.3 * x).astype(o_ref.dtype)


def encoder_layer(x, p, num_heads):
    B, S, E = x.shape
    kern = functools.partial(_encoder_layer_kernel, num_heads=num_heads)
    return pl.pallas_call(
        kern,
        out_shape=jax.ShapeDtypeStruct((B, S, E), jnp.float32),
        grid=(B,),
        in_specs=[
            pl.BlockSpec((1, S, E), lambda i: (i, 0, 0)),
            _bcast2((E, 3 * E)), _bcast2((1, 3 * E)),
            _bcast2((E, E)), _bcast2((1, E)),
            _bcast2((1, E)), _bcast2((1, E)),
            _bcast2((E, E)), _bcast2((1, E)),
            _bcast2((E, E)), _bcast2((1, E)),
        ],
        out_specs=pl.BlockSpec((1, S, E), lambda i: (i, 0, 0)),
        compiler_params=pltpu.CompilerParams(dimension_semantics=("parallel",)),
    )(x, p["in_w"], p["in_b"].reshape(1, -1),
      p["out_w"], p["out_b"].reshape(1, -1),
      p["ln_g"].reshape(1, -1), p["ln_b"].reshape(1, -1),
      p["ff1_w"], p["ff1_b"].reshape(1, -1),
      p["ff2_w"], p["ff2_b"].reshape(1, -1))


# ----------------------------------------------------------------------------
# Kernel 3: fused bidirectional LSTM layer (time-major, both directions at once)
# ----------------------------------------------------------------------------

def _bilstm_kernel(x_ref, wif_ref, whf_ref, bf_ref, wib_ref, whb_ref, bb_ref,
                   o_ref, hf, cf, hb, cb, hf_hist, hb_hist):
    S = x_ref.shape[0]
    H = hf.shape[1]
    wif, whf, bfv = wif_ref[...], whf_ref[...], bf_ref[...]
    wib, whb, bbv = wib_ref[...], whb_ref[...], bb_ref[...]

    hf[...] = jnp.zeros_like(hf)
    cf[...] = jnp.zeros_like(cf)
    hb[...] = jnp.zeros_like(hb)
    cb[...] = jnp.zeros_like(cb)

    def cell(x_t, h_prev, c_prev, wih, whh, bias):
        g = (jnp.dot(x_t, wih, preferred_element_type=jnp.float32)
             + jnp.dot(h_prev.astype(jnp.bfloat16), whh,
                       preferred_element_type=jnp.float32)
             + bias)
        # TODO(synk): re-pack gates so each i/f/g/o span is 128-lane aligned
        # (fwd/bwd interleaved); H=64 slices below still cost a few lane selects.
        i_g = jax.nn.sigmoid(g[:, 0:H])
        f_g = jax.nn.sigmoid(g[:, H:2 * H])
        g_g = jnp.tanh(g[:, 2 * H:3 * H])
        o_g = jax.nn.sigmoid(g[:, 3 * H:4 * H])
        c_new = f_g * c_prev + i_g * g_g
        h_new = o_g * jnp.tanh(c_new)
        return h_new, c_new

    def step(t, carry):
        # Forward direction consumes x[t]; backward direction consumes x[S-1-t]
        # in the same iteration, so the two recurrences hide each other's latency.
        hfn, cfn = cell(x_ref[t].astype(jnp.bfloat16), hf[...], cf[...],
                        wif, whf, bfv)
        hbn, cbn = cell(x_ref[S - 1 - t].astype(jnp.bfloat16), hb[...], cb[...],
                        wib, whb, bbv)
        hf[...] = hfn
        cf[...] = cfn
        hb[...] = hbn
        cb[...] = cbn
        hf_hist[t] = hfn
        hb_hist[S - 1 - t] = hbn
        return carry

    jax.lax.fori_loop(0, S, step, 0)
    # Single lane-dense store of the concatenated (S, B, 2H) output.
    o_ref[...] = jnp.concatenate([hf_hist[...], hb_hist[...]],
                                 axis=-1).astype(o_ref.dtype)


def bilstm_layer(x_tm, p):
    """x_tm: (S, B, E) time-major -> (S, B, E) time-major (E = 2H)."""
    S, B, E = x_tm.shape
    H = E // 2
    # TODO(synk): for long sequences, chunk the (S, B, E) input over time with a
    # double-buffered DMA instead of a single whole-sequence VMEM block.
    return pl.pallas_call(
        _bilstm_kernel,
        out_shape=jax.ShapeDtypeStruct((S, B, 2 * H), jnp.float32),
        grid=(1,),
        in_specs=[
            pl.BlockSpec((S, B, E), lambda i: (0, 0, 0)),
            _bcast2((E, 4 * H)), _bcast2((H, 4 * H)), _bcast2((1, 4 * H)),
            _bcast2((E, 4 * H)), _bcast2((H, 4 * H)), _bcast2((1, 4 * H)),
        ],
        out_specs=pl.BlockSpec((S, B, 2 * H), lambda i: (0, 0, 0)),
        scratch_shapes=[
            pltpu.VMEM((B, H), jnp.float32),    # h fwd
            pltpu.VMEM((B, H), jnp.float32),    # c fwd
            pltpu.VMEM((B, H), jnp.float32),    # h bwd
            pltpu.VMEM((B, H), jnp.float32),    # c bwd
            pltpu.VMEM((S, B, H), jnp.float32), # fwd hidden history
            pltpu.VMEM((S, B, H), jnp.float32), # bwd hidden history
        ],
        compiler_params=pltpu.CompilerParams(dimension_semantics=("arbitrary",)),
    )(x_tm, p["w_ih_f"], p["w_hh_f"], p["b_f"].reshape(1, -1),
      p["w_ih_b"], p["w_hh_b"], p["b_b"].reshape(1, -1))


# ----------------------------------------------------------------------------
# Kernel 4: fused classifier head (fc1 + ReLU + fc2), 128-lane padded output
# ----------------------------------------------------------------------------

def _fc_head_kernel(x_ref, w1_ref, b1_ref, w2_ref, b2_ref, o_ref):
    x = x_ref[...].astype(jnp.bfloat16)
    h = jnp.dot(x, w1_ref[...], preferred_element_type=jnp.float32) + b1_ref[...]
    h = jnp.maximum(h, 0.0)
    y = jnp.dot(h.astype(jnp.bfloat16), w2_ref[...],
                preferred_element_type=jnp.float32) + b2_ref[...]
    o_ref[...] = y.astype(o_ref.dtype)


def fc_head(x, w1, b1, w2p, b2p):
    M, E = x.shape
    F = w1.shape[1]
    Np = w2p.shape[1]                       # padded (lane-dense) output width
    tm = 256 if (M % 256 == 0 and M >= 256) else 128
    Mp = ((M + tm - 1) // tm) * tm          # pad rows instead of whole-M fallback
    if Mp != M:
        x = jnp.pad(x, ((0, Mp - M), (0, 0)))
    out = pl.pallas_call(
        _fc_head_kernel,
        out_shape=jax.ShapeDtypeStruct((Mp, Np), jnp.float32),
        grid=(Mp // tm,),
        in_specs=[
            pl.BlockSpec((tm, E), lambda i: (i, 0)),
            _bcast2((E, F)), _bcast2((1, F)),
            _bcast2((F, Np)), _bcast2((1, Np)),
        ],
        out_specs=pl.BlockSpec((tm, Np), lambda i: (i, 0)),
        compiler_params=pltpu.CompilerParams(dimension_semantics=("parallel",)),
    )(x, w1, b1.reshape(1, -1), w2p, b2p.reshape(1, -1))
    return out[:M]


# ----------------------------------------------------------------------------
# Forward pass (plain JAX glue around the fused kernels)
# ----------------------------------------------------------------------------

@functools.partial(jax.jit, static_argnames=("num_heads", "out_dim"))
def sleep_transformer_forward(x, params, *, num_heads, out_dim):
    """x: (B, S, model_dim) -> (B, S, out_dim). Eval mode (dropout = identity)."""
    B, S, _ = x.shape
    E = params["first_w"].shape[1]

    # first linear + positional embedding add (fused, one kernel)
    h = first_proj(x, params["first_w"], params["first_b"], params["pos"][0])

    # fused encoder layers (attention + FFN + LN + 0.7/0.3 residual mix per call)
    for p in params["enc"]:
        h = encoder_layer(h, p, num_heads)

    # BiLSTM stack, time-major end-to-end (one transpose in, one transpose out)
    h = jnp.transpose(h, (1, 0, 2))
    for p in params["lstm"]:
        h = bilstm_layer(h, p)
    h = jnp.transpose(h, (1, 0, 2))

    # fused classifier head with lane-dense padded output, sliced back in JAX
    y = fc_head(h.reshape(B * S, E), params["fc1_w"], params["fc1_b"],
                params["fc2_w_pad"], params["fc2_b_pad"])
    return y[:, :out_dim].reshape(B, S, out_dim)


# ----------------------------------------------------------------------------
# Deterministic parameter init (synthetic weights; matmul weights stored bf16)
# ----------------------------------------------------------------------------

def init_params(key, *, model_dim, embed_dim, num_encoder_layers,
                num_lstm_layers, seq_len, fc_hidden, out_dim):
    keys = iter(jax.random.split(key, 256))

    def nrm(shape, std=0.02, dtype=jnp.float32):
        v = std * jax.random.normal(next(keys), shape, dtype=jnp.float32)
        return v.astype(dtype)

    E = embed_dim
    H = E // 2
    bf16 = jnp.bfloat16
    out_pad = max(128, ((out_dim + 127) // 128) * 128)
    fc2_w = nrm((fc_hidden, out_dim))
    fc2_b = nrm((out_dim,))
    params = {
        "first_w": nrm((model_dim, E), dtype=bf16),
        "first_b": nrm((E,)),
        "pos": nrm((1, seq_len, E)),                        # torch.normal(0, 0.02)
        "enc": [],
        "lstm": [],
        "fc1_w": nrm((E, fc_hidden), dtype=bf16),
        "fc1_b": nrm((fc_hidden,)),
        # fc2 padded to 128 lanes (zero columns) for a dense output store.
        "fc2_w_pad": jnp.pad(fc2_w, ((0, 0), (0, out_pad - out_dim))).astype(bf16),
        "fc2_b_pad": jnp.pad(fc2_b, (0, out_pad - out_dim)),
    }
    for _ in range(num_encoder_layers):
        params["enc"].append({
            "in_w": nrm((E, 3 * E), dtype=bf16),            # in_proj_weight.T
            "in_b": nrm((3 * E,)),
            "out_w": nrm((E, E), dtype=bf16),               # out_proj.weight.T
            "out_b": nrm((E,)),
            "ln_g": jnp.ones((E,), jnp.float32),
            "ln_b": jnp.zeros((E,), jnp.float32),
            "ff1_w": nrm((E, E), dtype=bf16),               # seq_model_dim == embed_dim
            "ff1_b": nrm((E,)),
            "ff2_w": nrm((E, E), dtype=bf16),
            "ff2_b": nrm((E,)),
        })
    for _ in range(num_lstm_layers):
        params["lstm"].append({
            "w_ih_f": nrm((E, 4 * H), dtype=bf16),          # weight_ih_l0.T
            "w_hh_f": nrm((H, 4 * H), dtype=bf16),          # weight_hh_l0.T
            "b_f": nrm((4 * H,)),                           # b_ih + b_hh (combined)
            "w_ih_b": nrm((E, 4 * H), dtype=bf16),          # reverse direction
            "w_hh_b": nrm((H, 4 * H), dtype=bf16),
            "b_b": nrm((4 * H,)),
        })
    return params


# ----------------------------------------------------------------------------
# Demo
# ----------------------------------------------------------------------------

if __name__ == "__main__":
    B, S = 2, 32
    model_dim = 64
    embed_dim = 128
    num_heads = 4
    num_encoder_layers = 2
    num_lstm_layers = 2
    fc_hidden = 128
    out_dim = 2

    root = jax.random.PRNGKey(0)
    k_x, k_p = jax.random.split(root)
    x = jax.random.normal(k_x, (B, S, model_dim), dtype=jnp.float32)
    params = init_params(
        k_p,
        model_dim=model_dim,
        embed_dim=embed_dim,
        num_encoder_layers=num_encoder_layers,
        num_lstm_layers=num_lstm_layers,
        seq_len=S,
        fc_hidden=fc_hidden,
        out_dim=out_dim,
    )

    out = sleep_transformer_forward(x, params, num_heads=num_heads, out_dim=out_dim)
    out = jax.block_until_ready(out)
    assert out.shape == (B, S, out_dim), out.shape
    assert bool(jnp.all(jnp.isfinite(out)))
    print("KERNEL_OK")
</pallas_src>

<mosaic_0001>
module attributes {stable_mosaic.version = 11 : i64} {
  func.func @_first_proj_kernel(%arg0: i32, %arg1: memref<1x32x64xf32, #tpu.memory_space<vmem>>, %arg2: memref<64x128xbf16, #tpu.memory_space<vmem>>, %arg3: memref<1x128xf32, #tpu.memory_space<vmem>>, %arg4: memref<32x128xf32, #tpu.memory_space<vmem>>, %arg5: memref<1x32x128xf32, #tpu.memory_space<vmem>>) attributes {dimension_semantics = [#tpu.dimension_semantics<parallel>], iteration_bounds = array<i64: 2>, scalar_prefetch = 0 : i64, scratch_operands = 0 : i64, tpu.core_type = #tpu.core_type<tc>, window_params = [{transform_indices = @transform_0, window_bounds = array<i64: 1, 32, 64>}, {pipeline_mode = #tpu.pipeline_mode<synchronous>, transform_indices = @transform_1, window_bounds = array<i64: 64, 128>}, {pipeline_mode = #tpu.pipeline_mode<synchronous>, transform_indices = @transform_2, window_bounds = array<i64: 1, 128>}, {pipeline_mode = #tpu.pipeline_mode<synchronous>, transform_indices = @transform_3, window_bounds = array<i64: 32, 128>}, {transform_indices = @transform_4, window_bounds = array<i64: 1, 32, 128>}]} {
    %c0 = arith.constant 0 : index
    %c0_0 = arith.constant 0 : index
    %c0_1 = arith.constant 0 : index
    %0 = vector.load %arg1[%c0, %c0_0, %c0_1] : memref<1x32x64xf32, #tpu.memory_space<vmem>>, vector<1x32x64xf32>
    %1 = vector.shape_cast %0 : vector<1x32x64xf32> to vector<32x64xf32>
    %2 = arith.truncf %1 : vector<32x64xf32> to vector<32x64xbf16>
    %c0_2 = arith.constant 0 : index
    %c0_3 = arith.constant 0 : index
    %3 = vector.load %arg2[%c0_2, %c0_3] : memref<64x128xbf16, #tpu.memory_space<vmem>>, vector<64x128xbf16>
    %cst = arith.constant dense<0.000000e+00> : vector<32x128xf32>
    %4 = tpu.matmul %2, %3, %cst {dimension_numbers = #tpu.dot_dimension_numbers<[1], [0], [0], [1], [0, 0, 1, 1], [], []>} : vector<32x64xbf16>, vector<64x128xbf16>, vector<32x128xf32> -> vector<32x128xf32>
    %c0_4 = arith.constant 0 : index
    %c0_5 = arith.constant 0 : index
    %5 = vector.load %arg3[%c0_4, %c0_5] : memref<1x128xf32, #tpu.memory_space<vmem>>, vector<1x128xf32>
    %6 = vector.broadcast %5 : vector<1x128xf32> to vector<32x128xf32>
    %7 = arith.addf %4, %6 : vector<32x128xf32>
    %c0_6 = arith.constant 0 : index
    %c0_7 = arith.constant 0 : index
    %8 = vector.load %arg4[%c0_6, %c0_7] : memref<32x128xf32, #tpu.memory_space<vmem>>, vector<32x128xf32>
    %9 = arith.addf %7, %8 : vector<32x128xf32>
    %c0_8 = arith.constant 0 : index
    %c0_9 = arith.constant 0 : index
    %c0_10 = arith.constant 0 : index
    %10 = vector.load %arg5[%c0_8, %c0_9, %c0_10] : memref<1x32x128xf32, #tpu.memory_space<vmem>>, vector<1x32x128xf32>
    %11 = vector.shape_cast %10 : vector<1x32x128xf32> to vector<32x128xf32>
    %12 = vector.shape_cast %9 : vector<32x128xf32> to vector<1x32x128xf32>
    tpu.vector_store %arg5[%c0_8, %c0_9, %c0_10], %12 {strides = array<i32>} : memref<1x32x128xf32, #tpu.memory_space<vmem>>, vector<1x32x128xf32>,
    return
  }
  func.func @transform_0(%arg0: i32) -> (i32, i32, i32) {
    %c0_i32 = arith.constant 0 : i32
    %c0_i32_0 = arith.constant 0 : i32
    %c0_i32_1 = arith.constant 0 : i32
    return %arg0, %c0_i32, %c0_i32_0 : i32, i32, i32
  }
  func.func @transform_1(%arg0: i32) -> (i32, i32) {
    %c0_i32 = arith.constant 0 : i32
    %c0_i32_0 = arith.constant 0 : i32
    %c0_i32_1 = arith.constant 0 : i32
    return %c0_i32, %c0_i32_0 : i32, i32
  }
  func.func @transform_2(%arg0: i32) -> (i32, i32) {
    %c0_i32 = arith.constant 0 : i32
    %c0_i32_0 = arith.constant 0 : i32
    %c0_i32_1 = arith.constant 0 : i32
    return %c0_i32, %c0_i32_0 : i32, i32
  }
  func.func @transform_3(%arg0: i32) -> (i32, i32) {
    %c0_i32 = arith.constant 0 : i32
    %c0_i32_0 = arith.constant 0 : i32
    %c0_i32_1 = arith.constant 0 : i32
    return %c0_i32, %c0_i32_0 : i32, i32
  }
  func.func @transform_4(%arg0: i32) -> (i32, i32, i32) {
    %c0_i32 = arith.constant 0 : i32
    %c0_i32_0 = arith.constant 0 : i32
    %c0_i32_1 = arith.constant 0 : i32
    return %arg0, %c0_i32, %c0_i32_0 : i32, i32, i32
  }
}

module attributes {stable_mosaic.version = 11 : i64} {
  func.func @_encoder_layer_kernel(%arg0: i32, %arg1: memref<1x32x128xf32, #tpu.memory_space<vmem>>, %arg2: memref<128x384xbf16, #tpu.memory_space<vmem>>, %arg3: memref<1x384xf32, #tpu.memory_space<vmem>>, %arg4: memref<128x128xbf16, #tpu.memory_space<vmem>>, %arg5: memref<1x128xf32, #tpu.memory_space<vmem>>, %arg6: memref<1x128xf32, #tpu.memory_space<vmem>>, %arg7: memref<1x128xf32, #tpu.memory_space<vmem>>, %arg8: memref<128x128xbf16, #tpu.memory_space<vmem>>, %arg9: memref<1x128xf32, #tpu.memory_space<vmem>>, %arg10: memref<128x128xbf16, #tpu.memory_space<vmem>>, %arg11: memref<1x128xf32, #tpu.memory_space<vmem>>, %arg12: memref<1x32x128xf32, #tpu.memory_space<vmem>>) attributes {dimension_semantics = [#tpu.dimension_semantics<parallel>], iteration_bounds = array<i64: 2>, scalar_prefetch = 0 : i64, scratch_operands = 0 : i64, tpu.core_type = #tpu.core_type<tc>, window_params = [{transform_indices = @transform_0, window_bounds = array<i64: 1, 32, 128>}, {pipeline_mode = #tpu.pipeline_mode<synchronous>, transform_indices = @transform_1, window_bounds = array<i64: 128, 384>}, {pipeline_mode = #tpu.pipeline_mode<synchronous>, transform_indices = @transform_2, window_bounds = array<i64: 1, 384>}, {pipeline_mode = #tpu.pipeline_mode<synchronous>, transform_indices = @transform_3, window_bounds = array<i64: 128, 128>}, {pipeline_mode = #tpu.pipeline_mode<synchronous>, transform_indices = @transform_4, window_bounds = array<i64: 1, 128>}, {pipeline_mode = #tpu.pipeline_mode<synchronous>, transform_indices = @transform_5, window_bounds = array<i64: 1, 128>}, {pipeline_mode = #tpu.pipeline_mode<synchronous>, transform_indices = @transform_6, window_bounds = array<i64: 1, 128>}, {pipeline_mode = #tpu.pipeline_mode<synchronous>, transform_indices = @transform_7, window_bounds = array<i64: 128, 128>}, {pipeline_mode = #tpu.pipeline_mode<synchronous>, transform_indices = @transform_8, window_bounds = array<i64: 1, 128>}, {pipeline_mode = #tpu.pipeline_mode<synchronous>, transform_indices = @transform_9, window_bounds = array<i64: 128, 128>}, {pipeline_mode = #tpu.pipeline_mode<synchronous>, transform_indices = @transform_10, window_bounds = array<i64: 1, 128>}, {transform_indices = @transform_11, window_bounds = array<i64: 1, 32, 128>}]} {
    %c0 = arith.constant 0 : index
    %c0_0 = arith.constant 0 : index
    %c0_1 = arith.constant 0 : index
    %0 = vector.load %arg1[%c0, %c0_0, %c0_1] : memref<1x32x128xf32, #tpu.memory_space<vmem>>, vector<1x32x128xf32>
    %1 = vector.shape_cast %0 : vector<1x32x128xf32> to vector<32x128xf32>
    %2 = arith.truncf %1 : vector<32x128xf32> to vector<32x128xbf16>
    %c0_2 = arith.constant 0 : index
    %c0_3 = arith.constant 0 : index
    %3 = vector.load %arg2[%c0_2, %c0_3] : memref<128x384xbf16, #tpu.memory_space<vmem>>, vector<128x384xbf16>
    %cst = arith.constant dense<0.000000e+00> : vector<32x384xf32>
    %4 = tpu.matmul %2, %3, %cst {dimension_numbers = #tpu.dot_dimension_numbers<[1], [0], [0], [1], [0, 0, 1, 1], [], []>} : vector<32x128xbf16>, vector<128x384xbf16>, vector<32x384xf32> -> vector<32x384xf32>
    %c0_4 = arith.constant 0 : index
    %c0_5 = arith.constant 0 : index
    %5 = vector.load %arg3[%c0_4, %c0_5] : memref<1x384xf32, #tpu.memory_space<vmem>>, vector<1x384xf32>
    %6 = vector.broadcast %5 : vector<1x384xf32> to vector<32x384xf32>
    %7 = arith.addf %4, %6 : vector<32x384xf32>
    %8 = vector.extract_strided_slice %7 {offsets = [0, 0], sizes = [32, 128], strides = [1, 1]} : vector<32x384xf32> to vector<32x128xf32>
    %9 = vector.extract_strided_slice %7 {offsets = [0, 128], sizes = [32, 128], strides = [1, 1]} : vector<32x384xf32> to vector<32x128xf32>
    %10 = vector.extract_strided_slice %7 {offsets = [0, 256], sizes = [32, 128], strides = [1, 1]} : vector<32x384xf32> to vector<32x128xf32>
    %c0_6 = arith.constant 0 : index
    %c0_7 = arith.constant 0 : index
    %11 = vector.load %arg4[%c0_6, %c0_7] : memref<128x128xbf16, #tpu.memory_space<vmem>>, vector<128x128xbf16>
    %c0_8 = arith.constant 0 : index
    %c0_9 = arith.constant 0 : index
    %12 = vector.load %arg5[%c0_8, %c0_9] : memref<1x128xf32, #tpu.memory_space<vmem>>, vector<1x128xf32>
    %13 = vector.shape_cast %12 : vector<1x128xf32> to vector<1x128xf32>
    %14 = vector.broadcast %13 : vector<1x128xf32> to vector<32x128xf32>
    %15 = vector.extract_strided_slice %8 {offsets = [0, 0], sizes = [32, 32], strides = [1, 1]} : vector<32x128xf32> to vector<32x32xf32>
    %16 = arith.truncf %15 : vector<32x32xf32> to vector<32x32xbf16>
    %17 = vector.extract_strided_slice %9 {offsets = [0, 0], sizes = [32, 32], strides = [1, 1]} : vector<32x128xf32> to vector<32x32xf32>
    %18 = arith.truncf %17 : vector<32x32xf32> to vector<32x32xbf16>
    %19 = vector.extract_strided_slice %10 {offsets = [0, 0], sizes = [32, 32], strides = [1, 1]} : vector<32x128xf32> to vector<32x32xf32>
    %20 = arith.truncf %19 : vector<32x32xf32> to vector<32x32xbf16>
    %cst_10 = arith.constant dense<0.000000e+00> : vector<32x32xf32>
    %21 = tpu.matmul %16, %18, %cst_10 {dimension_numbers = #tpu.dot_dimension_numbers<[1], [1], [0], [0], [0, 0, 1, 0], [], []>} : vector<32x32xbf16>, vector<32x32xbf16>, vector<32x32xf32> -> vector<32x32xf32>
    %cst_11 = arith.constant 0.176776692 : f32
    %22 = vector.broadcast %cst_11 : f32 to vector<32x32xf32>
    %23 = arith.mulf %21, %22 : vector<32x32xf32>
    %cst_12 = arith.constant dense<0xFF800000> : vector<32xf32>
    %24 = vector.multi_reduction <maximumf>, %23, %cst_12 [1] : vector<32x32xf32> to vector<32xf32>
    %25 = vector.shape_cast %24 : vector<32xf32> to vector<32x1xf32>
    %26 = vector.broadcast %25 : vector<32x1xf32> to vector<32x32xf32>
    %27 = arith.subf %23, %26 : vector<32x32xf32>
    %28 = math.exp %27 : vector<32x32xf32>
    %cst_13 = arith.constant dense<0.000000e+00> : vector<32xf32>
    %29 = vector.multi_reduction <add>, %28, %cst_13 [1] : vector<32x32xf32> to vector<32xf32>
    %30 = vector.shape_cast %29 : vector<32xf32> to vector<32x1xf32>
    %31 = vector.broadcast %30 : vector<32x1xf32> to vector<32x32xf32>
    %32 = arith.divf %28, %31 : vector<32x32xf32>
    %33 = arith.truncf %32 : vector<32x32xf32> to vector<32x32xbf16>
    %cst_14 = arith.constant dense<0.000000e+00> : vector<32x32xf32>
    %34 = tpu.matmul %33, %20, %cst_14 {dimension_numbers = #tpu.dot_dimension_numbers<[1], [0], [0], [1], [0, 0, 1, 1], [], []>} : vector<32x32xbf16>, vector<32x32xbf16>, vector<32x32xf32> -> vector<32x32xf32>
    %35 = arith.truncf %34 : vector<32x32xf32> to vector<32x32xbf16>
    %36 = vector.extract_strided_slice %11 {offsets = [0, 0], sizes = [32, 128], strides = [1, 1]} : vector<128x128xbf16> to vector<32x128xbf16>
    %cst_15 = arith.constant dense<0.000000e+00> : vector<32x128xf32>
    %37 = tpu.matmul %35, %36, %cst_15 {dimension_numbers = #tpu.dot_dimension_numbers<[1], [0], [0], [1], [0, 0, 1, 1], [], []>} : vector<32x32xbf16>, vector<32x128xbf16>, vector<32x128xf32> -> vector<32x128xf32>
    %38 = arith.addf %14, %37 : vector<32x128xf32>
    %39 = vector.extract_strided_slice %8 {offsets = [0, 32], sizes = [32, 32], strides = [1, 1]} : vector<32x128xf32> to vector<32x32xf32>
    %40 = arith.truncf %39 : vector<32x32xf32> to vector<32x32xbf16>
    %41 = vector.extract_strided_slice %9 {offsets = [0, 32], sizes = [32, 32], strides = [1, 1]} : vector<32x128xf32> to vector<32x32xf32>
    %42 = arith.truncf %41 : vector<32x32xf32> to vector<32x32xbf16>
    %43 = vector.extract_strided_slice %10 {offsets = [0, 32], sizes = [32, 32], strides = [1, 1]} : vector<32x128xf32> to vector<32x32xf32>
    %44 = arith.truncf %43 : vector<32x32xf32> to vector<32x32xbf16>
    %cst_16 = arith.constant dense<0.000000e+00> : vector<32x32xf32>
    %45 = tpu.matmul %40, %42, %cst_16 {dimension_numbers = #tpu.dot_dimension_numbers<[1], [1], [0], [0], [0, 0, 1, 0], [], []>} : vector<32x32xbf16>, vector<32x32xbf16>, vector<32x32xf32> -> vector<32x32xf32>
    %cst_17 = arith.constant 0.176776692 : f32
    %46 = vector.broadcast %cst_17 : f32 to vector<32x32xf32>
    %47 = arith.mulf %45, %46 : vector<32x32xf32>
    %cst_18 = arith.constant dense<0xFF800000> : vector<32xf32>
    %48 = vector.multi_reduction <maximumf>, %47, %cst_18 [1] : vector<32x32xf32> to vector<32xf32>
    %49 = vector.shape_cast %48 : vector<32xf32> to vector<32x1xf32>
    %50 = vector.broadcast %49 : vector<32x1xf32> to vector<32x32xf32>
    %51 = arith.subf %47, %50 : vector<32x32xf32>
    %52 = math.exp %51 : vector<32x32xf32>
    %cst_19 = arith.constant dense<0.000000e+00> : vector<32xf32>
    %53 = vector.multi_reduction <add>, %52, %cst_19 [1] : vector<32x32xf32> to vector<32xf32>
    %54 = vector.shape_cast %53 : vector<32xf32> to vector<32x1xf32>
    %55 = vector.broadcast %54 : vector<32x1xf32> to vector<32x32xf32>
    %56 = arith.divf %52, %55 : vector<32x32xf32>
    %57 = arith.truncf %56 : vector<32x32xf32> to vector<32x32xbf16>
    %cst_20 = arith.constant dense<0.000000e+00> : vector<32x32xf32>
    %58 = tpu.matmul %57, %44, %cst_20 {dimension_numbers = #tpu.dot_dimension_numbers<[1], [0], [0], [1], [0, 0, 1, 1], [], []>} : vector<32x32xbf16>, vector<32x32xbf16>, vector<32x32xf32> -> vector<32x32xf32>
    %59 = arith.truncf %58 : vector<32x32xf32> to vector<32x32xbf16>
    %60 = vector.extract_strided_slice %11 {offsets = [32, 0], sizes = [32, 128], strides = [1, 1]} : vector<128x128xbf16> to vector<32x128xbf16>
    %cst_21 = arith.constant dense<0.000000e+00> : vector<32x128xf32>
    %61 = tpu.matmul %59, %60, %cst_21 {dimension_numbers = #tpu.dot_dimension_numbers<[1], [0], [0], [1], [0, 0, 1, 1], [], []>} : vector<32x32xbf16>, vector<32x128xbf16>, vector<32x128xf32> -> vector<32x128xf32>
    %62 = arith.addf %38, %61 : vector<32x128xf32>
    %63 = vector.extract_strided_slice %8 {offsets = [0, 64], sizes = [32, 32], strides = [1, 1]} : vector<32x128xf32> to vector<32x32xf32>
    %64 = arith.truncf %63 : vector<32x32xf32> to vector<32x32xbf16>
    %65 = vector.extract_strided_slice %9 {offsets = [0, 64], sizes = [32, 32], strides = [1, 1]} : vector<32x128xf32> to vector<32x32xf32>
    %66 = arith.truncf %65 : vector<32x32xf32> to vector<32x32xbf16>
    %67 = vector.extract_strided_slice %10 {offsets = [0, 64], sizes = [32, 32], strides = [1, 1]} : vector<32x128xf32> to vector<32x32xf32>
    %68 = arith.truncf %67 : vector<32x32xf32> to vector<32x32xbf16>
    %cst_22 = arith.constant dense<0.000000e+00> : vector<32x32xf32>
    %69 = tpu.matmul %64, %66, %cst_22 {dimension_numbers = #tpu.dot_dimension_numbers<[1], [1], [0], [0], [0, 0, 1, 0], [], []>} : vector<32x32xbf16>, vector<32x32xbf16>, vector<32x32xf32> -> vector<32x32xf32>
    %cst_23 = arith.constant 0.176776692 : f32
    %70 = vector.broadcast %cst_23 : f32 to vector<32x32xf32>
    %71 = arith.mulf %69, %70 : vector<32x32xf32>
    %cst_24 = arith.constant dense<0xFF800000> : vector<32xf32>
    %72 = vector.multi_reduction <maximumf>, %71, %cst_24 [1] : vector<32x32xf32> to vector<32xf32>
    %73 = vector.shape_cast %72 : vector<32xf32> to vector<32x1xf32>
    %74 = vector.broadcast %73 : vector<32x1xf32> to vector<32x32xf32>
    %75 = arith.subf %71, %74 : vector<32x32xf32>
    %76 = math.exp %75 : vector<32x32xf32>
    %cst_25 = arith.constant dense<0.000000e+00> : vector<32xf32>
    %77 = vector.multi_reduction <add>, %76, %cst_25 [1] : vector<32x32xf32> to vector<32xf32>
    %78 = vector.shape_cast %77 : vector<32xf32> to vector<32x1xf32>
    %79 = vector.broadcast %78 : vector<32x1xf32> to vector<32x32xf32>
    %80 = arith.divf %76, %79 : vector<32x32xf32>
    %81 = arith.truncf %80 : vector<32x32xf32> to vector<32x32xbf16>
    %cst_26 = arith.constant dense<0.000000e+00> : vector<32x32xf32>
    %82 = tpu.matmul %81, %68, %cst_26 {dimension_numbers = #tpu.dot_dimension_numbers<[1], [0], [0], [1], [0, 0, 1, 1], [], []>} : vector<32x32xbf16>, vector<32x32xbf16>, vector<32x32xf32> -> vector<32x32xf32>
    %83 = arith.truncf %82 : vector<32x32xf32> to vector<32x32xbf16>
    %84 = vector.extract_strided_slice %11 {offsets = [64, 0], sizes = [32, 128], strides = [1, 1]} : vector<128x128xbf16> to vector<32x128xbf16>
    %cst_27 = arith.constant dense<0.000000e+00> : vector<32x128xf32>
    %85 = tpu.matmul %83, %84, %cst_27 {dimension_numbers = #tpu.dot_dimension_numbers<[1], [0], [0], [1], [0, 0, 1, 1], [], []>} : vector<32x32xbf16>, vector<32x128xbf16>, vector<32x128xf32> -> vector<32x128xf32>
    %86 = arith.addf %62, %85 : vector<32x128xf32>
    %87 = vector.extract_strided_slice %8 {offsets = [0, 96], sizes = [32, 32], strides = [1, 1]} : vector<32x128xf32> to vector<32x32xf32>
    %88 = arith.truncf %87 : vector<32x32xf32> to vector<32x32xbf16>
    %89 = vector.extract_strided_slice %9 {offsets = [0, 96], sizes = [32, 32], strides = [1, 1]} : vector<32x128xf32> to vector<32x32xf32>
    %90 = arith.truncf %89 : vector<32x32xf32> to vector<32x32xbf16>
    %91 = vector.extract_strided_slice %10 {offsets = [0, 96], sizes = [32, 32], strides = [1, 1]} : vector<32x128xf32> to vector<32x32xf32>
    %92 = arith.truncf %91 : vector<32x32xf32> to vector<32x32xbf16>
    %cst_28 = arith.constant dense<0.000000e+00> : vector<32x32xf32>
    %93 = tpu.matmul %88, %90, %cst_28 {dimension_numbers = #tpu.dot_dimension_numbers<[1], [1], [0], [0], [0, 0, 1, 0], [], []>} : vector<32x32xbf16>, vector<32x32xbf16>, vector<32x32xf32> -> vector<32x32xf32>
    %cst_29 = arith.constant 0.176776692 : f32
    %94 = vector.broadcast %cst_29 : f32 to vector<32x32xf32>
    %95 = arith.mulf %93, %94 : vector<32x32xf32>
    %cst_30 = arith.constant dense<0xFF800000> : vector<32xf32>
    %96 = vector.multi_reduction <maximumf>, %95, %cst_30 [1] : vector<32x32xf32> to vector<32xf32>
    %97 = vector.shape_cast %96 : vector<32xf32> to vector<32x1xf32>
    %98 = vector.broadcast %97 : vector<32x1xf32> to vector<32x32xf32>
    %99 = arith.subf %95, %98 : vector<32x32xf32>
    %100 = math.exp %99 : vector<32x32xf32>
    %cst_31 = arith.constant dense<0.000000e+00> : vector<32xf32>
    %101 = vector.multi_reduction <add>, %100, %cst_31 [1] : vector<32x32xf32> to vector<32xf32>
    %102 = vector.shape_cast %101 : vector<32xf32> to vector<32x1xf32>
    %103 = vector.broadcast %102 : vector<32x1xf32> to vector<32x32xf32>
    %104 = arith.divf %100, %103 : vector<32x32xf32>
    %105 = arith.truncf %104 : vector<32x32xf32> to vector<32x32xbf16>
    %cst_32 = arith.constant dense<0.000000e+00> : vector<32x32xf32>
    %106 = tpu.matmul %105, %92, %cst_32 {dimension_numbers = #tpu.dot_dimension_numbers<[1], [0], [0], [1], [0, 0, 1, 1], [], []>} : vector<32x32xbf16>, vector<32x32xbf16>, vector<32x32xf32> -> vector<32x32xf32>
    %107 = arith.truncf %106 : vector<32x32xf32> to vector<32x32xbf16>
    %108 = vector.extract_strided_slice %11 {offsets = [96, 0], sizes = [32, 128], strides = [1, 1]} : vector<128x128xbf16> to vector<32x128xbf16>
    %cst_33 = arith.constant dense<0.000000e+00> : vector<32x128xf32>
    %109 = tpu.matmul %107, %108, %cst_33 {dimension_numbers = #tpu.dot_dimension_numbers<[1], [0], [0], [1], [0, 0, 1, 1], [], []>} : vector<32x32xbf16>, vector<32x128xbf16>, vector<32x128xf32> -> vector<32x128xf32>
    %110 = arith.addf %86, %109 : vector<32x128xf32>
    %111 = arith.addf %1, %110 : vector<32x128xf32>
    %cst_34 = arith.constant dense<0.000000e+00> : vector<32xf32>
    %112 = vector.multi_reduction <add>, %111, %cst_34 [1] : vector<32x128xf32> to vector<32xf32>
    %113 = vector.shape_cast %112 : vector<32xf32> to vector<32x1xf32>
    %cst_35 = arith.constant 1.280000e+02 : f32
    %114 = vector.broadcast %cst_35 : f32 to vector<32x1xf32>
    %115 = arith.divf %113, %114 : vector<32x1xf32>
    %116 = vector.broadcast %115 : vector<32x1xf32> to vector<32x128xf32>
    %117 = arith.subf %111, %116 : vector<32x128xf32>
    %118 = arith.mulf %117, %117 : vector<32x128xf32>
    %cst_36 = arith.constant dense<0.000000e+00> : vector<32xf32>
    %119 = vector.multi_reduction <add>, %118, %cst_36 [1] : vector<32x128xf32> to vector<32xf32>
    %120 = vector.shape_cast %119 : vector<32xf32> to vector<32x1xf32>
    %cst_37 = arith.constant 1.280000e+02 : f32
    %121 = vector.broadcast %cst_37 : f32 to vector<32x1xf32>
    %122 = arith.divf %120, %121 : vector<32x1xf32>
    %cst_38 = arith.constant 9.99999974E-6 : f32
    %123 = vector.broadcast %cst_38 : f32 to vector<32x1xf32>
    %124 = arith.addf %122, %123 : vector<32x1xf32>
    %125 = math.rsqrt %124 : vector<32x1xf32>
    %126 = vector.broadcast %125 : vector<32x1xf32> to vector<32x128xf32>
    %127 = arith.mulf %117, %126 : vector<32x128xf32>
    %c0_39 = arith.constant 0 : index
    %c0_40 = arith.constant 0 : index
    %128 = vector.load %arg6[%c0_39, %c0_40] : memref<1x128xf32, #tpu.memory_space<vmem>>, vector<1x128xf32>
    %129 = vector.broadcast %128 : vector<1x128xf32> to vector<32x128xf32>
    %130 = arith.mulf %127, %129 : vector<32x128xf32>
    %c0_41 = arith.constant 0 : index
    %c0_42 = arith.constant 0 : index
    %131 = vector.load %arg7[%c0_41, %c0_42] : memref<1x128xf32, #tpu.memory_space<vmem>>, vector<1x128xf32>
    %132 = vector.broadcast %131 : vector<1x128xf32> to vector<32x128xf32>
    %133 = arith.addf %130, %132 : vector<32x128xf32>
    %134 = arith.truncf %133 : vector<32x128xf32> to vector<32x128xbf16>
    %c0_43 = arith.constant 0 : index
    %c0_44 = arith.constant 0 : index
    %135 = vector.load %arg8[%c0_43, %c0_44] : memref<128x128xbf16, #tpu.memory_space<vmem>>, vector<128x128xbf16>
    %cst_45 = arith.constant dense<0.000000e+00> : vector<32x128xf32>
    %136 = tpu.matmul %134, %135, %cst_45 {dimension_numbers = #tpu.dot_dimension_numbers<[1], [0], [0], [1], [0, 0, 1, 1], [], []>} : vector<32x128xbf16>, vector<128x128xbf16>, vector<32x128xf32> -> vector<32x128xf32>
    %c0_46 = arith.constant 0 : index
    %c0_47 = arith.constant 0 : index
    %137 = vector.load %arg9[%c0_46, %c0_47] : memref<1x128xf32, #tpu.memory_space<vmem>>, vector<1x128xf32>
    %138 = vector.broadcast %137 : vector<1x128xf32> to vector<32x128xf32>
    %139 = arith.addf %136, %138 : vector<32x128xf32>
    %cst_48 = arith.constant 0.000000e+00 : f32
    %140 = vector.broadcast %cst_48 : f32 to vector<32x128xf32>
    %141 = arith.maximumf %139, %140 : vector<32x128xf32>
    %142 = arith.truncf %141 : vector<32x128xf32> to vector<32x128xbf16>
    %c0_49 = arith.constant 0 : index
    %c0_50 = arith.constant 0 : index
    %143 = vector.load %arg10[%c0_49, %c0_50] : memref<128x128xbf16, #tpu.memory_space<vmem>>, vector<128x128xbf16>
    %cst_51 = arith.constant dense<0.000000e+00> : vector<32x128xf32>
    %144 = tpu.matmul %142, %143, %cst_51 {dimension_numbers = #tpu.dot_dimension_numbers<[1], [0], [0], [1], [0, 0, 1, 1], [], []>} : vector<32x128xbf16>, vector<128x128xbf16>, vector<32x128xf32> -> vector<32x128xf32>
    %c0_52 = arith.constant 0 : index
    %c0_53 = arith.constant 0 : index
    %145 = vector.load %arg11[%c0_52, %c0_53] : memref<1x128xf32, #tpu.memory_space<vmem>>, vector<1x128xf32>
    %146 = vector.broadcast %145 : vector<1x128xf32> to vector<32x128xf32>
    %147 = arith.addf %144, %146 : vector<32x128xf32>
    %148 = arith.addf %133, %147 : vector<32x128xf32>
    %cst_54 = arith.constant dense<0.000000e+00> : vector<32xf32>
    %149 = vector.multi_reduction <add>, %148, %cst_54 [1] : vector<32x128xf32> to vector<32xf32>
    %150 = vector.shape_cast %149 : vector<32xf32> to vector<32x1xf32>
    %cst_55 = arith.constant 1.280000e+02 : f32
    %151 = vector.broadcast %cst_55 : f32 to vector<32x1xf32>
    %152 = arith.divf %150, %151 : vector<32x1xf32>
    %153 = vector.broadcast %152 : vector<32x1xf32> to vector<32x128xf32>
    %154 = arith.subf %148, %153 : vector<32x128xf32>
    %155 = arith.mulf %154, %154 : vector<32x128xf32>
    %cst_56 = arith.constant dense<0.000000e+00> : vector<32xf32>
    %156 = vector.multi_reduction <add>, %155, %cst_56 [1] : vector<32x128xf32> to vector<32xf32>
    %157 = vector.shape_cast %156 : vector<32xf32> to vector<32x1xf32>
    %cst_57 = arith.constant 1.280000e+02 : f32
    %158 = vector.broadcast %cst_57 : f32 to vector<32x1xf32>
    %159 = arith.divf %157, %158 : vector<32x1xf32>
    %cst_58 = arith.constant 9.99999974E-6 : f32
    %160 = vector.broadcast %cst_58 : f32 to vector<32x1xf32>
    %161 = arith.addf %159, %160 : vector<32x1xf32>
    %162 = math.rsqrt %161 : vector<32x1xf32>
    %163 = vector.broadcast %162 : vector<32x1xf32> to vector<32x128xf32>
    %164 = arith.mulf %154, %163 : vector<32x128xf32>
    %c0_59 = arith.constant 0 : index
    %c0_60 = arith.constant 0 : index
    %165 = vector.load %arg6[%c0_59, %c0_60] : memref<1x128xf32, #tpu.memory_space<vmem>>, vector<1x128xf32>
    %166 = vector.broadcast %165 : vector<1x128xf32> to vector<32x128xf32>
    %167 = arith.mulf %164, %166 : vector<32x128xf32>
    %c0_61 = arith.constant 0 : index
    %c0_62 = arith.constant 0 : index
    %168 = vector.load %arg7[%c0_61, %c0_62] : memref<1x128xf32, #tpu.memory_space<vmem>>, vector<1x128xf32>
    %169 = vector.broadcast %168 : vector<1x128xf32> to vector<32x128xf32>
    %170 = arith.addf %167, %169 : vector<32x128xf32>
    %cst_63 = arith.constant 0.699999988 : f32
    %171 = vector.broadcast %cst_63 : f32 to vector<32x128xf32>
    %172 = arith.mulf %171, %170 : vector<32x128xf32>
    %cst_64 = arith.constant 3.000000e-01 : f32
    %173 = vector.broadcast %cst_64 : f32 to vector<32x128xf32>
    %174 = arith.mulf %173, %1 : vector<32x128xf32>
    %175 = arith.addf %172, %174 : vector<32x128xf32>
    %c0_65 = arith.constant 0 : index
    %c0_66 = arith.constant 0 : index
    %c0_67 = arith.constant 0 : index
    %176 = vector.load %arg12[%c0_65, %c0_66, %c0_67] : memref<1x32x128xf32, #tpu.memory_space<vmem>>, vector<1x32x128xf32>
    %177 = vector.shape_cast %176 : vector<1x32x128xf32> to vector<32x128xf32>
    %178 = vector.shape_cast %175 : vector<32x128xf32> to vector<1x32x128xf32>
    tpu.vector_store %arg12[%c0_65, %c0_66, %c0_67], %178 {strides = array<i32>} : memref<1x32x128xf32, #tpu.memory_space<vmem>>, vector<1x32x128xf32>,
    return
  }
  func.func @transform_0(%arg0: i32) -> (i32, i32, i32) {
    %c0_i32 = arith.constant 0 : i32
    %c0_i32_0 = arith.constant 0 : i32
    %c0_i32_1 = arith.constant 0 : i32
    return %arg0, %c0_i32, %c0_i32_0 : i32, i32, i32
  }
  func.func @transform_1(%arg0: i32) -> (i32, i32) {
    %c0_i32 = arith.constant 0 : i32
    %c0_i32_0 = arith.constant 0 : i32
    %c0_i32_1 = arith.constant 0 : i32
    return %c0_i32, %c0_i32_0 : i32, i32
  }
  func.func @transform_2(%arg0: i32) -> (i32, i32) {
    %c0_i32 = arith.constant 0 : i32
    %c0_i32_0 = arith.constant 0 : i32
    %c0_i32_1 = arith.constant 0 : i32
    return %c0_i32, %c0_i32_0 : i32, i32
  }
  func.func @transform_3(%arg0: i32) -> (i32, i32) {
    %c0_i32 = arith.constant 0 : i32
    %c0_i32_0 = arith.constant 0 : i32
    %c0_i32_1 = arith.constant 0 : i32
    return %c0_i32, %c0_i32_0 : i32, i32
  }
  func.func @transform_4(%arg0: i32) -> (i32, i32) {
    %c0_i32 = arith.constant 0 : i32
    %c0_i32_0 = arith.constant 0 : i32
    %c0_i32_1 = arith.constant 0 : i32
    return %c0_i32, %c0_i32_0 : i32, i32
  }
  func.func @transform_5(%arg0: i32) -> (i32, i32) {
    %c0_i32 = arith.constant 0 : i32
    %c0_i32_0 = arith.constant 0 : i32
    %c0_i32_1 = arith.constant 0 : i32
    return %c0_i32, %c0_i32_0 : i32, i32
  }
  func.func @transform_6(%arg0: i32) -> (i32, i32) {
    %c0_i32 = arith.constant 0 : i32
    %c0_i32_0 = arith.constant 0 : i32
    %c0_i32_1 = arith.constant 0 : i32
    return %c0_i32, %c0_i32_0 : i32, i32
  }
  func.func @transform_7(%arg0: i32) -> (i32, i32) {
    %c0_i32 = arith.constant 0 : i32
    %c0_i32_0 = arith.constant 0 : i32
    %c0_i32_1 = arith.constant 0 : i32
    return %c0_i32, %c0_i32_0 : i32, i32
  }
  func.func @transform_8(%arg0: i32) -> (i32, i32) {
    %c0_i32 = arith.constant 0 : i32
    %c0_i32_0 = arith.constant 0 : i32
    %c0_i32_1 = arith.constant 0 : i32
    return %c0_i32, %c0_i32_0 : i32, i32
  }
  func.func @transform_9(%arg0: i32) -> (i32, i32) {
    %c0_i32 = arith.constant 0 : i32
    %c0_i32_0 = arith.constant 0 : i32
    %c0_i32_1 = arith.constant 0 : i32
    return %c0_i32, %c0_i32_0 : i32, i32
  }
  func.func @transform_10(%arg0: i32) -> (i32, i32) {
    %c0_i32 = arith.constant 0 : i32
    %c0_i32_0 = arith.constant 0 : i32
    %c0_i32_1 = arith.constant 0 : i32
    return %c0_i32, %c0_i32_0 : i32, i32
  }
  func.func @transform_11(%arg0: i32) -> (i32, i32, i32) {
    %c0_i32 = arith.constant 0 : i32
    %c0_i32_0 = arith.constant 0 : i32
    %c0_i32_1 = arith.constant 0 : i32
    return %arg0, %c0_i32, %c0_i32_0 : i32, i32, i32
  }
}

module attributes {stable_mosaic.version = 11 : i64} {
  func.func @_encoder_layer_kernel(%arg0: i32, %arg1: memref<1x32x128xf32, #tpu.memory_space<vmem>>, %arg2: memref<128x384xbf16, #tpu.memory_space<vmem>>, %arg3: memref<1x384xf32, #tpu.memory_space<vmem>>, %arg4: memref<128x128xbf16, #tpu.memory_space<vmem>>, %arg5: memref<1x128xf32, #tpu.memory_space<vmem>>, %arg6: memref<1x128xf32, #tpu.memory_space<vmem>>, %arg7: memref<1x128xf32, #tpu.memory_space<vmem>>, %arg8: memref<128x128xbf16, #tpu.memory_space<vmem>>, %arg9: memref<1x128xf32, #tpu.memory_space<vmem>>, %arg10: memref<128x128xbf16, #tpu.memory_space<vmem>>, %arg11: memref<1x128xf32, #tpu.memory_space<vmem>>, %arg12: memref<1x32x128xf32, #tpu.memory_space<vmem>>) attributes {dimension_semantics = [#tpu.dimension_semantics<parallel>], iteration_bounds = array<i64: 2>, scalar_prefetch = 0 : i64, scratch_operands = 0 : i64, tpu.core_type = #tpu.core_type<tc>, window_params = [{transform_indices = @transform_0, window_bounds = array<i64: 1, 32, 128>}, {pipeline_mode = #tpu.pipeline_mode<synchronous>, transform_indices = @transform_1, window_bounds = array<i64: 128, 384>}, {pipeline_mode = #tpu.pipeline_mode<synchronous>, transform_indices = @transform_2, window_bounds = array<i64: 1, 384>}, {pipeline_mode = #tpu.pipeline_mode<synchronous>, transform_indices = @transform_3, window_bounds = array<i64: 128, 128>}, {pipeline_mode = #tpu.pipeline_mode<synchronous>, transform_indices = @transform_4, window_bounds = array<i64: 1, 128>}, {pipeline_mode = #tpu.pipeline_mode<synchronous>, transform_indices = @transform_5, window_bounds = array<i64: 1, 128>}, {pipeline_mode = #tpu.pipeline_mode<synchronous>, transform_indices = @transform_6, window_bounds = array<i64: 1, 128>}, {pipeline_mode = #tpu.pipeline_mode<synchronous>, transform_indices = @transform_7, window_bounds = array<i64: 128, 128>}, {pipeline_mode = #tpu.pipeline_mode<synchronous>, transform_indices = @transform_8, window_bounds = array<i64: 1, 128>}, {pipeline_mode = #tpu.pipeline_mode<synchronous>, transform_indices = @transform_9, window_bounds = array<i64: 128, 128>}, {pipeline_mode = #tpu.pipeline_mode<synchronous>, transform_indices = @transform_10, window_bounds = array<i64: 1, 128>}, {transform_indices = @transform_11, window_bounds = array<i64: 1, 32, 128>}]} {
    %c0 = arith.constant 0 : index
    %c0_0 = arith.constant 0 : index
    %c0_1 = arith.constant 0 : index
    %0 = vector.load %arg1[%c0, %c0_0, %c0_1] : memref<1x32x128xf32, #tpu.memory_space<vmem>>, vector<1x32x128xf32>
    %1 = vector.shape_cast %0 : vector<1x32x128xf32> to vector<32x128xf32>
    %2 = arith.truncf %1 : vector<32x128xf32> to vector<32x128xbf16>
    %c0_2 = arith.constant 0 : index
    %c0_3 = arith.constant 0 : index
    %3 = vector.load %arg2[%c0_2, %c0_3] : memref<128x384xbf16, #tpu.memory_space<vmem>>, vector<128x384xbf16>
    %cst = arith.constant dense<0.000000e+00> : vector<32x384xf32>
    %4 = tpu.matmul %2, %3, %cst {dimension_numbers = #tpu.dot_dimension_numbers<[1], [0], [0], [1], [0, 0, 1, 1], [], []>} : vector<32x128xbf16>, vector<128x384xbf16>, vector<32x384xf32> -> vector<32x384xf32>
    %c0_4 = arith.constant 0 : index
    %c0_5 = arith.constant 0 : index
    %5 = vector.load %arg3[%c0_4, %c0_5] : memref<1x384xf32, #tpu.memory_space<vmem>>, vector<1x384xf32>
    %6 = vector.broadcast %5 : vector<1x384xf32> to vector<32x384xf32>
    %7 = arith.addf %4, %6 : vector<32x384xf32>
    %8 = vector.extract_strided_slice %7 {offsets = [0, 0], sizes = [32, 128], strides = [1, 1]} : vector<32x384xf32> to vector<32x128xf32>
    %9 = vector.extract_strided_slice %7 {offsets = [0, 128], sizes = [32, 128], strides = [1, 1]} : vector<32x384xf32> to vector<32x128xf32>
    %10 = vector.extract_strided_slice %7 {offsets = [0, 256], sizes = [32, 128], strides = [1, 1]} : vector<32x384xf32> to vector<32x128xf32>
    %c0_6 = arith.constant 0 : index
    %c0_7 = arith.constant 0 : index
    %11 = vector.load %arg4[%c0_6, %c0_7] : memref<128x128xbf16, #tpu.memory_space<vmem>>, vector<128x128xbf16>
    %c0_8 = arith.constant 0 : index
    %c0_9 = arith.constant 0 : index
    %12 = vector.load %arg5[%c0_8, %c0_9] : memref<1x128xf32, #tpu.memory_space<vmem>>, vector<1x128xf32>
    %13 = vector.shape_cast %12 : vector<1x128xf32> to vector<1x128xf32>
    %14 = vector.broadcast %13 : vector<1x128xf32> to vector<32x128xf32>
    %15 = vector.extract_strided_slice %8 {offsets = [0, 0], sizes = [32, 32], strides = [1, 1]} : vector<32x128xf32> to vector<32x32xf32>
    %16 = arith.truncf %15 : vector<32x32xf32> to vector<32x32xbf16>
    %17 = vector.extract_strided_slice %9 {offsets = [0, 0], sizes = [32, 32], strides = [1, 1]} : vector<32x128xf32> to vector<32x32xf32>
    %18 = arith.truncf %17 : vector<32x32xf32> to vector<32x32xbf16>
    %19 = vector.extract_strided_slice %10 {offsets = [0, 0], sizes = [32, 32], strides = [1, 1]} : vector<32x128xf32> to vector<32x32xf32>
    %20 = arith.truncf %19 : vector<32x32xf32> to vector<32x32xbf16>
    %cst_10 = arith.constant dense<0.000000e+00> : vector<32x32xf32>
    %21 = tpu.matmul %16, %18, %cst_10 {dimension_numbers = #tpu.dot_dimension_numbers<[1], [1], [0], [0], [0, 0, 1, 0], [], []>} : vector<32x32xbf16>, vector<32x32xbf16>, vector<32x32xf32> -> vector<32x32xf32>
    %cst_11 = arith.constant 0.176776692 : f32
    %22 = vector.broadcast %cst_11 : f32 to vector<32x32xf32>
    %23 = arith.mulf %21, %22 : vector<32x32xf32>
    %cst_12 = arith.constant dense<0xFF800000> : vector<32xf32>
    %24 = vector.multi_reduction <maximumf>, %23, %cst_12 [1] : vector<32x32xf32> to vector<32xf32>
    %25 = vector.shape_cast %24 : vector<32xf32> to vector<32x1xf32>
    %26 = vector.broadcast %25 : vector<32x1xf32> to vector<32x32xf32>
    %27 = arith.subf %23, %26 : vector<32x32xf32>
    %28 = math.exp %27 : vector<32x32xf32>
    %cst_13 = arith.constant dense<0.000000e+00> : vector<32xf32>
    %29 = vector.multi_reduction <add>, %28, %cst_13 [1] : vector<32x32xf32> to vector<32xf32>
    %30 = vector.shape_cast %29 : vector<32xf32> to vector<32x1xf32>
    %31 = vector.broadcast %30 : vector<32x1xf32> to vector<32x32xf32>
    %32 = arith.divf %28, %31 : vector<32x32xf32>
    %33 = arith.truncf %32 : vector<32x32xf32> to vector<32x32xbf16>
    %cst_14 = arith.constant dense<0.000000e+00> : vector<32x32xf32>
    %34 = tpu.matmul %33, %20, %cst_14 {dimension_numbers = #tpu.dot_dimension_numbers<[1], [0], [0], [1], [0, 0, 1, 1], [], []>} : vector<32x32xbf16>, vector<32x32xbf16>, vector<32x32xf32> -> vector<32x32xf32>
    %35 = arith.truncf %34 : vector<32x32xf32> to vector<32x32xbf16>
    %36 = vector.extract_strided_slice %11 {offsets = [0, 0], sizes = [32, 128], strides = [1, 1]} : vector<128x128xbf16> to vector<32x128xbf16>
    %cst_15 = arith.constant dense<0.000000e+00> : vector<32x128xf32>
    %37 = tpu.matmul %35, %36, %cst_15 {dimension_numbers = #tpu.dot_dimension_numbers<[1], [0], [0], [1], [0, 0, 1, 1], [], []>} : vector<32x32xbf16>, vector<32x128xbf16>, vector<32x128xf32> -> vector<32x128xf32>
    %38 = arith.addf %14, %37 : vector<32x128xf32>
    %39 = vector.extract_strided_slice %8 {offsets = [0, 32], sizes = [32, 32], strides = [1, 1]} : vector<32x128xf32> to vector<32x32xf32>
    %40 = arith.truncf %39 : vector<32x32xf32> to vector<32x32xbf16>
    %41 = vector.extract_strided_slice %9 {offsets = [0, 32], sizes = [32, 32], strides = [1, 1]} : vector<32x128xf32> to vector<32x32xf32>
    %42 = arith.truncf %41 : vector<32x32xf32> to vector<32x32xbf16>
    %43 = vector.extract_strided_slice %10 {offsets = [0, 32], sizes = [32, 32], strides = [1, 1]} : vector<32x128xf32> to vector<32x32xf32>
    %44 = arith.truncf %43 : vector<32x32xf32> to vector<32x32xbf16>
    %cst_16 = arith.constant dense<0.000000e+00> : vector<32x32xf32>
    %45 = tpu.matmul %40, %42, %cst_16 {dimension_numbers = #tpu.dot_dimension_numbers<[1], [1], [0], [0], [0, 0, 1, 0], [], []>} : vector<32x32xbf16>, vector<32x32xbf16>, vector<32x32xf32> -> vector<32x32xf32>
    %cst_17 = arith.constant 0.176776692 : f32
    %46 = vector.broadcast %cst_17 : f32 to vector<32x32xf32>
    %47 = arith.mulf %45, %46 : vector<32x32xf32>
    %cst_18 = arith.constant dense<0xFF800000> : vector<32xf32>
    %48 = vector.multi_reduction <maximumf>, %47, %cst_18 [1] : vector<32x32xf32> to vector<32xf32>
    %49 = vector.shape_cast %48 : vector<32xf32> to vector<32x1xf32>
    %50 = vector.broadcast %49 : vector<32x1xf32> to vector<32x32xf32>
    %51 = arith.subf %47, %50 : vector<32x32xf32>
    %52 = math.exp %51 : vector<32x32xf32>
    %cst_19 = arith.constant dense<0.000000e+00> : vector<32xf32>
    %53 = vector.multi_reduction <add>, %52, %cst_19 [1] : vector<32x32xf32> to vector<32xf32>
    %54 = vector.shape_cast %53 : vector<32xf32> to vector<32x1xf32>
    %55 = vector.broadcast %54 : vector<32x1xf32> to vector<32x32xf32>
    %56 = arith.divf %52, %55 : vector<32x32xf32>
    %57 = arith.truncf %56 : vector<32x32xf32> to vector<32x32xbf16>
    %cst_20 = arith.constant dense<0.000000e+00> : vector<32x32xf32>
    %58 = tpu.matmul %57, %44, %cst_20 {dimension_numbers = #tpu.dot_dimension_numbers<[1], [0], [0], [1], [0, 0, 1, 1], [], []>} : vector<32x32xbf16>, vector<32x32xbf16>, vector<32x32xf32> -> vector<32x32xf32>
    %59 = arith.truncf %58 : vector<32x32xf32> to vector<32x32xbf16>
    %60 = vector.extract_strided_slice %11 {offsets = [32, 0], sizes = [32, 128], strides = [1, 1]} : vector<128x128xbf16> to vector<32x128xbf16>
    %cst_21 = arith.constant dense<0.000000e+00> : vector<32x128xf32>
    %61 = tpu.matmul %59, %60, %cst_21 {dimension_numbers = #tpu.dot_dimension_numbers<[1], [0], [0], [1], [0, 0, 1, 1], [], []>} : vector<32x32xbf16>, vector<32x128xbf16>, vector<32x128xf32> -> vector<32x128xf32>
    %62 = arith.addf %38, %61 : vector<32x128xf32>
    %63 = vector.extract_strided_slice %8 {offsets = [0, 64], sizes = [32, 32], strides = [1, 1]} : vector<32x128xf32> to vector<32x32xf32>
    %64 = arith.truncf %63 : vector<32x32xf32> to vector<32x32xbf16>
    %65 = vector.extract_strided_slice %9 {offsets = [0, 64], sizes = [32, 32], strides = [1, 1]} : vector<32x128xf32> to vector<32x32xf32>
    %66 = arith.truncf %65 : vector<32x32xf32> to vector<32x32xbf16>
    %67 = vector.extract_strided_slice %10 {offsets = [0, 64], sizes = [32, 32], strides = [1, 1]} : vector<32x128xf32> to vector<32x32xf32>
    %68 = arith.truncf %67 : vector<32x32xf32> to vector<32x32xbf16>
    %cst_22 = arith.constant dense<0.000000e+00> : vector<32x32xf32>
    %69 = tpu.matmul %64, %66, %cst_22 {dimension_numbers = #tpu.dot_dimension_numbers<[1], [1], [0], [0], [0, 0, 1, 0], [], []>} : vector<32x32xbf16>, vector<32x32xbf16>, vector<32x32xf32> -> vector<32x32xf32>
    %cst_23 = arith.constant 0.176776692 : f32
    %70 = vector.broadcast %cst_23 : f32 to vector<32x32xf32>
    %71 = arith.mulf %69, %70 : vector<32x32xf32>
    %cst_24 = arith.constant dense<0xFF800000> : vector<32xf32>
    %72 = vector.multi_reduction <maximumf>, %71, %cst_24 [1] : vector<32x32xf32> to vector<32xf32>
    %73 = vector.shape_cast %72 : vector<32xf32> to vector<32x1xf32>
    %74 = vector.broadcast %73 : vector<32x1xf32> to vector<32x32xf32>
    %75 = arith.subf %71, %74 : vector<32x32xf32>
    %76 = math.exp %75 : vector<32x32xf32>
    %cst_25 = arith.constant dense<0.000000e+00> : vector<32xf32>
    %77 = vector.multi_reduction <add>, %76, %cst_25 [1] : vector<32x32xf32> to vector<32xf32>
    %78 = vector.shape_cast %77 : vector<32xf32> to vector<32x1xf32>
    %79 = vector.broadcast %78 : vector<32x1xf32> to vector<32x32xf32>
    %80 = arith.divf %76, %79 : vector<32x32xf32>
    %81 = arith.truncf %80 : vector<32x32xf32> to vector<32x32xbf16>
    %cst_26 = arith.constant dense<0.000000e+00> : vector<32x32xf32>
    %82 = tpu.matmul %81, %68, %cst_26 {dimension_numbers = #tpu.dot_dimension_numbers<[1], [0], [0], [1], [0, 0, 1, 1], [], []>} : vector<32x32xbf16>, vector<32x32xbf16>, vector<32x32xf32> -> vector<32x32xf32>
    %83 = arith.truncf %82 : vector<32x32xf32> to vector<32x32xbf16>
    %84 = vector.extract_strided_slice %11 {offsets = [64, 0], sizes = [32, 128], strides = [1, 1]} : vector<128x128xbf16> to vector<32x128xbf16>
    %cst_27 = arith.constant dense<0.000000e+00> : vector<32x128xf32>
    %85 = tpu.matmul %83, %84, %cst_27 {dimension_numbers = #tpu.dot_dimension_numbers<[1], [0], [0], [1], [0, 0, 1, 1], [], []>} : vector<32x32xbf16>, vector<32x128xbf16>, vector<32x128xf32> -> vector<32x128xf32>
    %86 = arith.addf %62, %85 : vector<32x128xf32>
    %87 = vector.extract_strided_slice %8 {offsets = [0, 96], sizes = [32, 32], strides = [1, 1]} : vector<32x128xf32> to vector<32x32xf32>
    %88 = arith.truncf %87 : vector<32x32xf32> to vector<32x32xbf16>
    %89 = vector.extract_strided_slice %9 {offsets = [0, 96], sizes = [32, 32], strides = [1, 1]} : vector<32x128xf32> to vector<32x32xf32>
    %90 = arith.truncf %89 : vector<32x32xf32> to vector<32x32xbf16>
    %91 = vector.extract_strided_slice %10 {offsets = [0, 96], sizes = [32, 32], strides = [1, 1]} : vector<32x128xf32> to vector<32x32xf32>
    %92 = arith.truncf %91 : vector<32x32xf32> to vector<32x32xbf16>
    %cst_28 = arith.constant dense<0.000000e+00> : vector<32x32xf32>
    %93 = tpu.matmul %88, %90, %cst_28 {dimension_numbers = #tpu.dot_dimension_numbers<[1], [1], [0], [0], [0, 0, 1, 0], [], []>} : vector<32x32xbf16>, vector<32x32xbf16>, vector<32x32xf32> -> vector<32x32xf32>
    %cst_29 = arith.constant 0.176776692 : f32
    %94 = vector.broadcast %cst_29 : f32 to vector<32x32xf32>
    %95 = arith.mulf %93, %94 : vector<32x32xf32>
    %cst_30 = arith.constant dense<0xFF800000> : vector<32xf32>
    %96 = vector.multi_reduction <maximumf>, %95, %cst_30 [1] : vector<32x32xf32> to vector<32xf32>
    %97 = vector.shape_cast %96 : vector<32xf32> to vector<32x1xf32>
    %98 = vector.broadcast %97 : vector<32x1xf32> to vector<32x32xf32>
    %99 = arith.subf %95, %98 : vector<32x32xf32>
    %100 = math.exp %99 : vector<32x32xf32>
    %cst_31 = arith.constant dense<0.000000e+00> : vector<32xf32>
    %101 = vector.multi_reduction <add>, %100, %cst_31 [1] : vector<32x32xf32> to vector<32xf32>
    %102 = vector.shape_cast %101 : vector<32xf32> to vector<32x1xf32>
    %103 = vector.broadcast %102 : vector<32x1xf32> to vector<32x32xf32>
    %104 = arith.divf %100, %103 : vector<32x32xf32>
    %105 = arith.truncf %104 : vector<32x32xf32> to vector<32x32xbf16>
    %cst_32 = arith.constant dense<0.000000e+00> : vector<32x32xf32>
    %106 = tpu.matmul %105, %92, %cst_32 {dimension_numbers = #tpu.dot_dimension_numbers<[1], [0], [0], [1], [0, 0, 1, 1], [], []>} : vector<32x32xbf16>, vector<32x32xbf16>, vector<32x32xf32> -> vector<32x32xf32>
    %107 = arith.truncf %106 : vector<32x32xf32> to vector<32x32xbf16>
    %108 = vector.extract_strided_slice %11 {offsets = [96, 0], sizes = [32, 128], strides = [1, 1]} : vector<128x128xbf16> to vector<32x128xbf16>
    %cst_33 = arith.constant dense<0.000000e+00> : vector<32x128xf32>
    %109 = tpu.matmul %107, %108, %cst_33 {dimension_numbers = #tpu.dot_dimension_numbers<[1], [0], [0], [1], [0, 0, 1, 1], [], []>} : vector<32x32xbf16>, vector<32x128xbf16>, vector<32x128xf32> -> vector<32x128xf32>
    %110 = arith.addf %86, %109 : vector<32x128xf32>
    %111 = arith.addf %1, %110 : vector<32x128xf32>
    %cst_34 = arith.constant dense<0.000000e+00> : vector<32xf32>
    %112 = vector.multi_reduction <add>, %111, %cst_34 [1] : vector<32x128xf32> to vector<32xf32>
    %113 = vector.shape_cast %112 : vector<32xf32> to vector<32x1xf32>
    %cst_35 = arith.constant 1.280000e+02 : f32
    %114 = vector.broadcast %cst_35 : f32 to vector<32x1xf32>
    %115 = arith.divf %113, %114 : vector<32x1xf32>
    %116 = vector.broadcast %115 : vector<32x1xf32> to vector<32x128xf32>
    %117 = arith.subf %111, %116 : vector<32x128xf32>
    %118 = arith.mulf %117, %117 : vector<32x128xf32>
    %cst_36 = arith.constant dense<0.000000e+00> : vector<32xf32>
    %119 = vector.multi_reduction <add>, %118, %cst_36 [1] : vector<32x128xf32> to vector<32xf32>
    %120 = vector.shape_cast %119 : vector<32xf32> to vector<32x1xf32>
    %cst_37 = arith.constant 1.280000e+02 : f32
    %121 = vector.broadcast %cst_37 : f32 to vector<32x1xf32>
    %122 = arith.divf %120, %121 : vector<32x1xf32>
    %cst_38 = arith.constant 9.99999974E-6 : f32
    %123 = vector.broadcast %cst_38 : f32 to vector<32x1xf32>
    %124 = arith.addf %122, %123 : vector<32x1xf32>
    %125 = math.rsqrt %124 : vector<32x1xf32>
    %126 = vector.broadcast %125 : vector<32x1xf32> to vector<32x128xf32>
    %127 = arith.mulf %117, %126 : vector<32x128xf32>
    %c0_39 = arith.constant 0 : index
    %c0_40 = arith.constant 0 : index
    %128 = vector.load %arg6[%c0_39, %c0_40] : memref<1x128xf32, #tpu.memory_space<vmem>>, vector<1x128xf32>
    %129 = vector.broadcast %128 : vector<1x128xf32> to vector<32x128xf32>
    %130 = arith.mulf %127, %129 : vector<32x128xf32>
    %c0_41 = arith.constant 0 : index
    %c0_42 = arith.constant 0 : index
    %131 = vector.load %arg7[%c0_41, %c0_42] : memref<1x128xf32, #tpu.memory_space<vmem>>, vector<1x128xf32>
    %132 = vector.broadcast %131 : vector<1x128xf32> to vector<32x128xf32>
    %133 = arith.addf %130, %132 : vector<32x128xf32>
    %134 = arith.truncf %133 : vector<32x128xf32> to vector<32x128xbf16>
    %c0_43 = arith.constant 0 : index
    %c0_44 = arith.constant 0 : index
    %135 = vector.load %arg8[%c0_43, %c0_44] : memref<128x128xbf16, #tpu.memory_space<vmem>>, vector<128x128xbf16>
    %cst_45 = arith.constant dense<0.000000e+00> : vector<32x128xf32>
    %136 = tpu.matmul %134, %135, %cst_45 {dimension_numbers = #tpu.dot_dimension_numbers<[1], [0], [0], [1], [0, 0, 1, 1], [], []>} : vector<32x128xbf16>, vector<128x128xbf16>, vector<32x128xf32> -> vector<32x128xf32>
    %c0_46 = arith.constant 0 : index
    %c0_47 = arith.constant 0 : index
    %137 = vector.load %arg9[%c0_46, %c0_47] : memref<1x128xf32, #tpu.memory_space<vmem>>, vector<1x128xf32>
    %138 = vector.broadcast %137 : vector<1x128xf32> to vector<32x128xf32>
    %139 = arith.addf %136, %138 : vector<32x128xf32>
    %cst_48 = arith.constant 0.000000e+00 : f32
    %140 = vector.broadcast %cst_48 : f32 to vector<32x128xf32>
    %141 = arith.maximumf %139, %140 : vector<32x128xf32>
    %142 = arith.truncf %141 : vector<32x128xf32> to vector<32x128xbf16>
    %c0_49 = arith.constant 0 : index
    %c0_50 = arith.constant 0 : index
    %143 = vector.load %arg10[%c0_49, %c0_50] : memref<128x128xbf16, #tpu.memory_space<vmem>>, vector<128x128xbf16>
    %cst_51 = arith.constant dense<0.000000e+00> : vector<32x128xf32>
    %144 = tpu.matmul %142, %143, %cst_51 {dimension_numbers = #tpu.dot_dimension_numbers<[1], [0], [0], [1], [0, 0, 1, 1], [], []>} : vector<32x128xbf16>, vector<128x128xbf16>, vector<32x128xf32> -> vector<32x128xf32>
    %c0_52 = arith.constant 0 : index
    %c0_53 = arith.constant 0 : index
    %145 = vector.load %arg11[%c0_52, %c0_53] : memref<1x128xf32, #tpu.memory_space<vmem>>, vector<1x128xf32>
    %146 = vector.broadcast %145 : vector<1x128xf32> to vector<32x128xf32>
    %147 = arith.addf %144, %146 : vector<32x128xf32>
    %148 = arith.addf %133, %147 : vector<32x128xf32>
    %cst_54 = arith.constant dense<0.000000e+00> : vector<32xf32>
    %149 = vector.multi_reduction <add>, %148, %cst_54 [1] : vector<32x128xf32> to vector<32xf32>
    %150 = vector.shape_cast %149 : vector<32xf32> to vector<32x1xf32>
    %cst_55 = arith.constant 1.280000e+02 : f32
    %151 = vector.broadcast %cst_55 : f32 to vector<32x1xf32>
    %152 = arith.divf %150, %151 : vector<32x1xf32>
    %153 = vector.broadcast %152 : vector<32x1xf32> to vector<32x128xf32>
    %154 = arith.subf %148, %153 : vector<32x128xf32>
    %155 = arith.mulf %154, %154 : vector<32x128xf32>
    %cst_56 = arith.constant dense<0.000000e+00> : vector<32xf32>
    %156 = vector.multi_reduction <add>, %155, %cst_56 [1] : vector<32x128xf32> to vector<32xf32>
    %157 = vector.shape_cast %156 : vector<32xf32> to vector<32x1xf32>
    %cst_57 = arith.constant 1.280000e+02 : f32
    %158 = vector.broadcast %cst_57 : f32 to vector<32x1xf32>
    %159 = arith.divf %157, %158 : vector<32x1xf32>
    %cst_58 = arith.constant 9.99999974E-6 : f32
    %160 = vector.broadcast %cst_58 : f32 to vector<32x1xf32>
    %161 = arith.addf %159, %160 : vector<32x1xf32>
    %162 = math.rsqrt %161 : vector<32x1xf32>
    %163 = vector.broadcast %162 : vector<32x1xf32> to vector<32x128xf32>
    %164 = arith.mulf %154, %163 : vector<32x128xf32>
    %c0_59 = arith.constant 0 : index
    %c0_60 = arith.constant 0 : index
    %165 = vector.load %arg6[%c0_59, %c0_60] : memref<1x128xf32, #tpu.memory_space<vmem>>, vector<1x128xf32>
    %166 = vector.broadcast %165 : vector<1x128xf32> to vector<32x128xf32>
    %167 = arith.mulf %164, %166 : vector<32x128xf32>
    %c0_61 = arith.constant 0 : index
    %c0_62 = arith.constant 0 : index
    %168 = vector.load %arg7[%c0_61, %c0_62] : memref<1x128xf32, #tpu.memory_space<vmem>>, vector<1x128xf32>
    %169 = vector.broadcast %168 : vector<1x128xf32> to vector<32x128xf32>
    %170 = arith.addf %167, %169 : vector<32x128xf32>
    %cst_63 = arith.constant 0.699999988 : f32
    %171 = vector.broadcast %cst_63 : f32 to vector<32x128xf32>
    %172 = arith.mulf %171, %170 : vector<32x128xf32>
    %cst_64 = arith.constant 3.000000e-01 : f32
    %173 = vector.broadcast %cst_64 : f32 to vector<32x128xf32>
    %174 = arith.mulf %173, %1 : vector<32x128xf32>
    %175 = arith.addf %172, %174 : vector<32x128xf32>
    %c0_65 = arith.constant 0 : index
    %c0_66 = arith.constant 0 : index
    %c0_67 = arith.constant 0 : index
    %176 = vector.load %arg12[%c0_65, %c0_66, %c0_67] : memref<1x32x128xf32, #tpu.memory_space<vmem>>, vector<1x32x128xf32>
    %177 = vector.shape_cast %176 : vector<1x32x128xf32> to vector<32x128xf32>
    %178 = vector.shape_cast %175 : vector<32x128xf32> to vector<1x32x128xf32>
    tpu.vector_store %arg12[%c0_65, %c0_66, %c0_67], %178 {strides = array<i32>} : memref<1x32x128xf32, #tpu.memory_space<vmem>>, vector<1x32x128xf32>,
    return
  }
  func.func @transform_0(%arg0: i32) -> (i32, i32, i32) {
    %c0_i32 = arith.constant 0 : i32
    %c0_i32_0 = arith.constant 0 : i32
    %c0_i32_1 = arith.constant 0 : i32
    return %arg0, %c0_i32, %c0_i32_0 : i32, i32, i32
  }
  func.func @transform_1(%arg0: i32) -> (i32, i32) {
    %c0_i32 = arith.constant 0 : i32
    %c0_i32_0 = arith.constant 0 : i32
    %c0_i32_1 = arith.constant 0 : i32
    return %c0_i32, %c0_i32_0 : i32, i32
  }
  func.func @transform_2(%arg0: i32) -> (i32, i32) {
    %c0_i32 = arith.constant 0 : i32
    %c0_i32_0 = arith.constant 0 : i32
    %c0_i32_1 = arith.constant 0 : i32
    return %c0_i32, %c0_i32_0 : i32, i32
  }
  func.func @transform_3(%arg0: i32) -> (i32, i32) {
    %c0_i32 = arith.constant 0 : i32
    %c0_i32_0 = arith.constant 0 : i32
    %c0_i32_1 = arith.constant 0 : i32
    return %c0_i32, %c0_i32_0 : i32, i32
  }
  func.func @transform_4(%arg0: i32) -> (i32, i32) {
    %c0_i32 = arith.constant 0 : i32
    %c0_i32_0 = arith.constant 0 : i32
    %c0_i32_1 = arith.constant 0 : i32
    return %c0_i32, %c0_i32_0 : i32, i32
  }
  func.func @transform_5(%arg0: i32) -> (i32, i32) {
    %c0_i32 = arith.constant 0 : i32
    %c0_i32_0 = arith.constant 0 : i32
    %c0_i32_1 = arith.constant 0 : i32
    return %c0_i32, %c0_i32_0 : i32, i32
  }
  func.func @transform_6(%arg0: i32) -> (i32, i32) {
    %c0_i32 = arith.constant 0 : i32
    %c0_i32_0 = arith.constant 0 : i32
    %c0_i32_1 = arith.constant 0 : i32
    return %c0_i32, %c0_i32_0 : i32, i32
  }
  func.func @transform_7(%arg0: i32) -> (i32, i32) {
    %c0_i32 = arith.constant 0 : i32
    %c0_i32_0 = arith.constant 0 : i32
    %c0_i32_1 = arith.constant 0 : i32
    return %c0_i32, %c0_i32_0 : i32, i32
  }
  func.func @transform_8(%arg0: i32) -> (i32, i32) {
    %c0_i32 = arith.constant 0 : i32
    %c0_i32_0 = arith.constant 0 : i32
    %c0_i32_1 = arith.constant 0 : i32
    return %c0_i32, %c0_i32_0 : i32, i32
  }
  func.func @transform_9(%arg0: i32) -> (i32, i32) {
    %c0_i32 = arith.constant 0 : i32
    %c0_i32_0 = arith.constant 0 : i32
    %c0_i32_1 = arith.constant 0 : i32
    return %c0_i32, %c0_i32_0 : i32, i32
  }
  func.func @transform_10(%arg0: i32) -> (i32, i32) {
    %c0_i32 = arith.constant 0 : i32
    %c0_i32_0 = arith.constant 0 : i32
    %c0_i32_1 = arith.constant 0 : i32
    return %c0_i32, %c0_i32_0 : i32, i32
  }
  func.func @transform_11(%arg0: i32) -> (i32, i32, i32) {
    %c0_i32 = arith.constant 0 : i32
    %c0_i32_0 = arith.constant 0 : i32
    %c0_i32_1 = arith.constant 0 : i32
    return %arg0, %c0_i32, %c0_i32_0 : i32, i32, i32
  }
}

module attributes {stable_mosaic.version = 11 : i64} {
  func.func @_bilstm_kernel(%arg0: i32, %arg1: memref<32x2x128xf32, #tpu.memory_space<vmem>>, %arg2: memref<128x256xbf16, #tpu.memory_space<vmem>>, %arg3: memref<64x256xbf16, #tpu.memory_space<vmem>>, %arg4: memref<1x256xf32, #tpu.memory_space<vmem>>, %arg5: memref<128x256xbf16, #tpu.memory_space<vmem>>, %arg6: memref<64x256xbf16, #tpu.memory_space<vmem>>, %arg7: memref<1x256xf32, #tpu.memory_space<vmem>>, %arg8: memref<32x2x128xf32, #tpu.memory_space<vmem>>, %arg9: memref<2x64xf32, #tpu.memory_space<vmem>>, %arg10: memref<2x64xf32, #tpu.memory_space<vmem>>, %arg11: memref<2x64xf32, #tpu.memory_space<vmem>>, %arg12: memref<2x64xf32, #tpu.memory_space<vmem>>, %arg13: memref<32x2x64xf32, #tpu.memory_space<vmem>>, %arg14: memref<32x2x64xf32, #tpu.memory_space<vmem>>) attributes {dimension_semantics = [#tpu.dimension_semantics<arbitrary>], iteration_bounds = array<i64: 1>, scalar_prefetch = 0 : i64, scratch_operands = 6 : i64, tpu.core_type = #tpu.core_type<tc>, window_params = [{pipeline_mode = #tpu.pipeline_mode<synchronous>, transform_indices = @transform_0, window_bounds = array<i64: 32, 2, 128>}, {pipeline_mode = #tpu.pipeline_mode<synchronous>, transform_indices = @transform_1, window_bounds = array<i64: 128, 256>}, {pipeline_mode = #tpu.pipeline_mode<synchronous>, transform_indices = @transform_2, window_bounds = array<i64: 64, 256>}, {pipeline_mode = #tpu.pipeline_mode<synchronous>, transform_indices = @transform_3, window_bounds = array<i64: 1, 256>}, {pipeline_mode = #tpu.pipeline_mode<synchronous>, transform_indices = @transform_4, window_bounds = array<i64: 128, 256>}, {pipeline_mode = #tpu.pipeline_mode<synchronous>, transform_indices = @transform_5, window_bounds = array<i64: 64, 256>}, {pipeline_mode = #tpu.pipeline_mode<synchronous>, transform_indices = @transform_6, window_bounds = array<i64: 1, 256>}, {pipeline_mode = #tpu.pipeline_mode<synchronous>, transform_indices = @transform_7, window_bounds = array<i64: 32, 2, 128>}]} {
    %c0 = arith.constant 0 : index
    %c0_0 = arith.constant 0 : index
    %0 = vector.load %arg2[%c0, %c0_0] : memref<128x256xbf16, #tpu.memory_space<vmem>>, vector<128x256xbf16>
    %c0_1 = arith.constant 0 : index
    %c0_2 = arith.constant 0 : index
    %1 = vector.load %arg3[%c0_1, %c0_2] : memref<64x256xbf16, #tpu.memory_space<vmem>>, vector<64x256xbf16>
    %c0_3 = arith.constant 0 : index
    %c0_4 = arith.constant 0 : index
    %2 = vector.load %arg4[%c0_3, %c0_4] : memref<1x256xf32, #tpu.memory_space<vmem>>, vector<1x256xf32>
    %c0_5 = arith.constant 0 : index
    %c0_6 = arith.constant 0 : index
    %3 = vector.load %arg5[%c0_5, %c0_6] : memref<128x256xbf16, #tpu.memory_space<vmem>>, vector<128x256xbf16>
    %c0_7 = arith.constant 0 : index
    %c0_8 = arith.constant 0 : index
    %4 = vector.load %arg6[%c0_7, %c0_8] : memref<64x256xbf16, #tpu.memory_space<vmem>>, vector<64x256xbf16>
    %c0_9 = arith.constant 0 : index
    %c0_10 = arith.constant 0 : index
    %5 = vector.load %arg7[%c0_9, %c0_10] : memref<1x256xf32, #tpu.memory_space<vmem>>, vector<1x256xf32>
    %cst = arith.constant 0.000000e+00 : f32
    %6 = vector.broadcast %cst : f32 to vector<2x64xf32>
    %c0_11 = arith.constant 0 : index
    %c0_12 = arith.constant 0 : index
    %7 = vector.load %arg9[%c0_11, %c0_12] : memref<2x64xf32, #tpu.memory_space<vmem>>, vector<2x64xf32>
    tpu.vector_store %arg9[%c0_11, %c0_12], %6 {strides = array<i32>} : memref<2x64xf32, #tpu.memory_space<vmem>>, vector<2x64xf32>,
    %cst_13 = arith.constant 0.000000e+00 : f32
    %8 = vector.broadcast %cst_13 : f32 to vector<2x64xf32>
    %c0_14 = arith.constant 0 : index
    %c0_15 = arith.constant 0 : index
    %9 = vector.load %arg10[%c0_14, %c0_15] : memref<2x64xf32, #tpu.memory_space<vmem>>, vector<2x64xf32>
    tpu.vector_store %arg10[%c0_14, %c0_15], %8 {strides = array<i32>} : memref<2x64xf32, #tpu.memory_space<vmem>>, vector<2x64xf32>,
    %cst_16 = arith.constant 0.000000e+00 : f32
    %10 = vector.broadcast %cst_16 : f32 to vector<2x64xf32>
    %c0_17 = arith.constant 0 : index
    %c0_18 = arith.constant 0 : index
    %11 = vector.load %arg11[%c0_17, %c0_18] : memref<2x64xf32, #tpu.memory_space<vmem>>, vector<2x64xf32>
    tpu.vector_store %arg11[%c0_17, %c0_18], %10 {strides = array<i32>} : memref<2x64xf32, #tpu.memory_space<vmem>>, vector<2x64xf32>,
    %cst_19 = arith.constant 0.000000e+00 : f32
    %12 = vector.broadcast %cst_19 : f32 to vector<2x64xf32>
    %c0_20 = arith.constant 0 : index
    %c0_21 = arith.constant 0 : index
    %13 = vector.load %arg12[%c0_20, %c0_21] : memref<2x64xf32, #tpu.memory_space<vmem>>, vector<2x64xf32>
    tpu.vector_store %arg12[%c0_20, %c0_21], %12 {strides = array<i32>} : memref<2x64xf32, #tpu.memory_space<vmem>>, vector<2x64xf32>,
    %c0_i32 = arith.constant 0 : i32
    %c32_i32 = arith.constant 32 : i32
    %14 = arith.addi %c0_i32, %c32_i32 : i32
    %c1_i32 = arith.constant 1 : i32
    scf.for %arg15 = %c0_i32 to %14 step %c1_i32  : i32 {
      %19 = arith.index_cast %arg15 : i32 to index
      %c0_32 = arith.constant 0 : index
      %c0_33 = arith.constant 0 : index
      %20 = vector.load %arg1[%19, %c0_32, %c0_33] : memref<32x2x128xf32, #tpu.memory_space<vmem>>, vector<1x2x128xf32>
      %21 = vector.shape_cast %20 : vector<1x2x128xf32> to vector<2x128xf32>
      %22 = arith.truncf %21 : vector<2x128xf32> to vector<2x128xbf16>
      %c0_34 = arith.constant 0 : index
      %c0_35 = arith.constant 0 : index
      %23 = vector.load %arg9[%c0_34, %c0_35] : memref<2x64xf32, #tpu.memory_space<vmem>>, vector<2x64xf32>
      %c0_36 = arith.constant 0 : index
      %c0_37 = arith.constant 0 : index
      %24 = vector.load %arg10[%c0_36, %c0_37] : memref<2x64xf32, #tpu.memory_space<vmem>>, vector<2x64xf32>
      %cst_38 = arith.constant dense<0.000000e+00> : vector<2x256xf32>
      %25 = tpu.matmul %22, %0, %cst_38 {dimension_numbers = #tpu.dot_dimension_numbers<[1], [0], [0], [1], [0, 0, 1, 1], [], []>} : vector<2x128xbf16>, vector<128x256xbf16>, vector<2x256xf32> -> vector<2x256xf32>
      %26 = arith.truncf %23 : vector<2x64xf32> to vector<2x64xbf16>
      %cst_39 = arith.constant dense<0.000000e+00> : vector<2x256xf32>
      %27 = tpu.matmul %26, %1, %cst_39 {dimension_numbers = #tpu.dot_dimension_numbers<[1], [0], [0], [1], [0, 0, 1, 1], [], []>} : vector<2x64xbf16>, vector<64x256xbf16>, vector<2x256xf32> -> vector<2x256xf32>
      %28 = arith.addf %25, %27 : vector<2x256xf32>
      %29 = vector.broadcast %2 : vector<1x256xf32> to vector<2x256xf32>
      %30 = arith.addf %28, %29 : vector<2x256xf32>
      %31 = vector.extract_strided_slice %30 {offsets = [0, 0], sizes = [2, 64], strides = [1, 1]} : vector<2x256xf32> to vector<2x64xf32>
      %32 = arith.negf %31 : vector<2x64xf32>
      %33 = math.exp %32 : vector<2x64xf32>
      %cst_40 = arith.constant 1.000000e+00 : f32
      %34 = vector.broadcast %cst_40 : f32 to vector<2x64xf32>
      %35 = arith.addf %34, %33 : vector<2x64xf32>
      %36 = arith.divf %34, %35 : vector<2x64xf32>
      %37 = vector.extract_strided_slice %30 {offsets = [0, 64], sizes = [2, 64], strides = [1, 1]} : vector<2x256xf32> to vector<2x64xf32>
      %38 = arith.negf %37 : vector<2x64xf32>
      %39 = math.exp %38 : vector<2x64xf32>
      %cst_41 = arith.constant 1.000000e+00 : f32
      %40 = vector.broadcast %cst_41 : f32 to vector<2x64xf32>
      %41 = arith.addf %40, %39 : vector<2x64xf32>
      %42 = arith.divf %40, %41 : vector<2x64xf32>
      %43 = vector.extract_strided_slice %30 {offsets = [0, 128], sizes = [2, 64], strides = [1, 1]} : vector<2x256xf32> to vector<2x64xf32>
      %44 = math.tanh %43 : vector<2x64xf32>
      %45 = vector.extract_strided_slice %30 {offsets = [0, 192], sizes = [2, 64], strides = [1, 1]} : vector<2x256xf32> to vector<2x64xf32>
      %46 = arith.negf %45 : vector<2x64xf32>
      %47 = math.exp %46 : vector<2x64xf32>
      %cst_42 = arith.constant 1.000000e+00 : f32
      %48 = vector.broadcast %cst_42 : f32 to vector<2x64xf32>
      %49 = arith.addf %48, %47 : vector<2x64xf32>
      %50 = arith.divf %48, %49 : vector<2x64xf32>
      %51 = arith.mulf %42, %24 : vector<2x64xf32>
      %52 = arith.mulf %36, %44 : vector<2x64xf32>
      %53 = arith.addf %51, %52 : vector<2x64xf32>
      %54 = math.tanh %53 : vector<2x64xf32>
      %55 = arith.mulf %50, %54 : vector<2x64xf32>
      %c31_i32 = arith.constant 31 : i32
      %56 = arith.subi %c31_i32, %arg15 : i32
      %57 = arith.index_cast %56 : i32 to index
      %c0_43 = arith.constant 0 : index
      %c0_44 = arith.constant 0 : index
      %58 = vector.load %arg1[%57, %c0_43, %c0_44] : memref<32x2x128xf32, #tpu.memory_space<vmem>>, vector<1x2x128xf32>
      %59 = vector.shape_cast %58 : vector<1x2x128xf32> to vector<2x128xf32>
      %60 = arith.truncf %59 : vector<2x128xf32> to vector<2x128xbf16>
      %c0_45 = arith.constant 0 : index
      %c0_46 = arith.constant 0 : index
      %61 = vector.load %arg11[%c0_45, %c0_46] : memref<2x64xf32, #tpu.memory_space<vmem>>, vector<2x64xf32>
      %c0_47 = arith.constant 0 : index
      %c0_48 = arith.constant 0 : index
      %62 = vector.load %arg12[%c0_47, %c0_48] : memref<2x64xf32, #tpu.memory_space<vmem>>, vector<2x64xf32>
      %cst_49 = arith.constant dense<0.000000e+00> : vector<2x256xf32>
      %63 = tpu.matmul %60, %3, %cst_49 {dimension_numbers = #tpu.dot_dimension_numbers<[1], [0], [0], [1], [0, 0, 1, 1], [], []>} : vector<2x128xbf16>, vector<128x256xbf16>, vector<2x256xf32> -> vector<2x256xf32>
      %64 = arith.truncf %61 : vector<2x64xf32> to vector<2x64xbf16>
      %cst_50 = arith.constant dense<0.000000e+00> : vector<2x256xf32>
      %65 = tpu.matmul %64, %4, %cst_50 {dimension_numbers = #tpu.dot_dimension_numbers<[1], [0], [0], [1], [0, 0, 1, 1], [], []>} : vector<2x64xbf16>, vector<64x256xbf16>, vector<2x256xf32> -> vector<2x256xf32>
      %66 = arith.addf %63, %65 : vector<2x256xf32>
      %67 = vector.broadcast %5 : vector<1x256xf32> to vector<2x256xf32>
      %68 = arith.addf %66, %67 : vector<2x256xf32>
      %69 = vector.extract_strided_slice %68 {offsets = [0, 0], sizes = [2, 64], strides = [1, 1]} : vector<2x256xf32> to vector<2x64xf32>
      %70 = arith.negf %69 : vector<2x64xf32>
      %71 = math.exp %70 : vector<2x64xf32>
      %cst_51 = arith.constant 1.000000e+00 : f32
      %72 = vector.broadcast %cst_51 : f32 to vector<2x64xf32>
      %73 = arith.addf %72, %71 : vector<2x64xf32>
      %74 = arith.divf %72, %73 : vector<2x64xf32>
      %75 = vector.extract_strided_slice %68 {offsets = [0, 64], sizes = [2, 64], strides = [1, 1]} : vector<2x256xf32> to vector<2x64xf32>
      %76 = arith.negf %75 : vector<2x64xf32>
      %77 = math.exp %76 : vector<2x64xf32>
      %cst_52 = arith.constant 1.000000e+00 : f32
      %78 = vector.broadcast %cst_52 : f32 to vector<2x64xf32>
      %79 = arith.addf %78, %77 : vector<2x64xf32>
      %80 = arith.divf %78, %79 : vector<2x64xf32>
      %81 = vector.extract_strided_slice %68 {offsets = [0, 128], sizes = [2, 64], strides = [1, 1]} : vector<2x256xf32> to vector<2x64xf32>
      %82 = math.tanh %81 : vector<2x64xf32>
      %83 = vector.extract_strided_slice %68 {offsets = [0, 192], sizes = [2, 64], strides = [1, 1]} : vector<2x256xf32> to vector<2x64xf32>
      %84 = arith.negf %83 : vector<2x64xf32>
      %85 = math.exp %84 : vector<2x64xf32>
      %cst_53 = arith.constant 1.000000e+00 : f32
      %86 = vector.broadcast %cst_53 : f32 to vector<2x64xf32>
      %87 = arith.addf %86, %85 : vector<2x64xf32>
      %88 = arith.divf %86, %87 : vector<2x64xf32>
      %89 = arith.mulf %80, %62 : vector<2x64xf32>
      %90 = arith.mulf %74, %82 : vector<2x64xf32>
      %91 = arith.addf %89, %90 : vector<2x64xf32>
      %92 = math.tanh %91 : vector<2x64xf32>
      %93 = arith.mulf %88, %92 : vector<2x64xf32>
      %c0_54 = arith.constant 0 : index
      %c0_55 = arith.constant 0 : index
      %94 = vector.load %arg9[%c0_54, %c0_55] : memref<2x64xf32, #tpu.memory_space<vmem>>, vector<2x64xf32>
      tpu.vector_store %arg9[%c0_54, %c0_55], %55 {strides = array<i32>} : memref<2x64xf32, #tpu.memory_space<vmem>>, vector<2x64xf32>,
      %c0_56 = arith.constant 0 : index
      %c0_57 = arith.constant 0 : index
      %95 = vector.load %arg10[%c0_56, %c0_57] : memref<2x64xf32, #tpu.memory_space<vmem>>, vector<2x64xf32>
      tpu.vector_store %arg10[%c0_56, %c0_57], %53 {strides = array<i32>} : memref<2x64xf32, #tpu.memory_space<vmem>>, vector<2x64xf32>,
      %c0_58 = arith.constant 0 : index
      %c0_59 = arith.constant 0 : index
      %96 = vector.load %arg11[%c0_58, %c0_59] : memref<2x64xf32, #tpu.memory_space<vmem>>, vector<2x64xf32>
      tpu.vector_store %arg11[%c0_58, %c0_59], %93 {strides = array<i32>} : memref<2x64xf32, #tpu.memory_space<vmem>>, vector<2x64xf32>,
      %c0_60 = arith.constant 0 : index
      %c0_61 = arith.constant 0 : index
      %97 = vector.load %arg12[%c0_60, %c0_61] : memref<2x64xf32, #tpu.memory_space<vmem>>, vector<2x64xf32>
      tpu.vector_store %arg12[%c0_60, %c0_61], %91 {strides = array<i32>} : memref<2x64xf32, #tpu.memory_space<vmem>>, vector<2x64xf32>,
      %98 = arith.index_cast %arg15 : i32 to index
      %c0_62 = arith.constant 0 : index
      %c0_63 = arith.constant 0 : index
      %99 = vector.load %arg13[%98, %c0_62, %c0_63] : memref<32x2x64xf32, #tpu.memory_space<vmem>>, vector<1x2x64xf32>
      %100 = vector.shape_cast %99 : vector<1x2x64xf32> to vector<2x64xf32>
      %101 = vector.shape_cast %55 : vector<2x64xf32> to vector<1x2x64xf32>
      tpu.vector_store %arg13[%98, %c0_62, %c0_63], %101 {strides = array<i32>} : memref<32x2x64xf32, #tpu.memory_space<vmem>>, vector<1x2x64xf32>,
      %c31_i32_64 = arith.constant 31 : i32
      %102 = arith.subi %c31_i32_64, %arg15 : i32
      %103 = arith.index_cast %102 : i32 to index
      %c0_65 = arith.constant 0 : index
      %c0_66 = arith.constant 0 : index
      %104 = vector.load %arg14[%103, %c0_65, %c0_66] : memref<32x2x64xf32, #tpu.memory_space<vmem>>, vector<1x2x64xf32>
      %105 = vector.shape_cast %104 : vector<1x2x64xf32> to vector<2x64xf32>
      %106 = vector.shape_cast %93 : vector<2x64xf32> to vector<1x2x64xf32>
      tpu.vector_store %arg14[%103, %c0_65, %c0_66], %106 {strides = array<i32>} : memref<32x2x64xf32, #tpu.memory_space<vmem>>, vector<1x2x64xf32>,
    }
    %c32_i32_22 = arith.constant 32 : i32
    %c0_23 = arith.constant 0 : index
    %c0_24 = arith.constant 0 : index
    %c0_25 = arith.constant 0 : index
    %15 = vector.load %arg13[%c0_23, %c0_24, %c0_25] : memref<32x2x64xf32, #tpu.memory_space<vmem>>, vector<32x2x64xf32>
    %c0_26 = arith.constant 0 : index
    %c0_27 = arith.constant 0 : index
    %c0_28 = arith.constant 0 : index
    %16 = vector.load %arg14[%c0_26, %c0_27, %c0_28] : memref<32x2x64xf32, #tpu.memory_space<vmem>>, vector<32x2x64xf32>
    %17 = tpu.concatenate %15, %16 in 2 : vector<32x2x64xf32>, vector<32x2x64xf32> -> vector<32x2x128xf32>
    %c0_29 = arith.constant 0 : index
    %c0_30 = arith.constant 0 : index
    %c0_31 = arith.constant 0 : index
    %18 = vector.load %arg8[%c0_29, %c0_30, %c0_31] : memref<32x2x128xf32, #tpu.memory_space<vmem>>, vector<32x2x128xf32>
    tpu.vector_store %arg8[%c0_29, %c0_30, %c0_31], %17 {strides = array<i32>} : memref<32x2x128xf32, #tpu.memory_space<vmem>>, vector<32x2x128xf32>,
    return
  }
  func.func @transform_0(%arg0: i32) -> (i32, i32, i32) {
    %c0_i32 = arith.constant 0 : i32
    %c0_i32_0 = arith.constant 0 : i32
    %c0_i32_1 = arith.constant 0 : i32
    %c0_i32_2 = arith.constant 0 : i32
    return %c0_i32, %c0_i32_0, %c0_i32_1 : i32, i32, i32
  }
  func.func @transform_1(%arg0: i32) -> (i32, i32) {
    %c0_i32 = arith.constant 0 : i32
    %c0_i32_0 = arith.constant 0 : i32
    %c0_i32_1 = arith.constant 0 : i32
    return %c0_i32, %c0_i32_0 : i32, i32
  }
  func.func @transform_2(%arg0: i32) -> (i32, i32) {
    %c0_i32 = arith.constant 0 : i32
    %c0_i32_0 = arith.constant 0 : i32
    %c0_i32_1 = arith.constant 0 : i32
    return %c0_i32, %c0_i32_0 : i32, i32
  }
  func.func @transform_3(%arg0: i32) -> (i32, i32) {
    %c0_i32 = arith.constant 0 : i32
    %c0_i32_0 = arith.constant 0 : i32
    %c0_i32_1 = arith.constant 0 : i32
    return %c0_i32, %c0_i32_0 : i32, i32
  }
  func.func @transform_4(%arg0: i32) -> (i32, i32) {
    %c0_i32 = arith.constant 0 : i32
    %c0_i32_0 = arith.constant 0 : i32
    %c0_i32_1 = arith.constant 0 : i32
    return %c0_i32, %c0_i32_0 : i32, i32
  }
  func.func @transform_5(%arg0: i32) -> (i32, i32) {
    %c0_i32 = arith.constant 0 : i32
    %c0_i32_0 = arith.constant 0 : i32
    %c0_i32_1 = arith.constant 0 : i32
    return %c0_i32, %c0_i32_0 : i32, i32
  }
  func.func @transform_6(%arg0: i32) -> (i32, i32) {
    %c0_i32 = arith.constant 0 : i32
    %c0_i32_0 = arith.constant 0 : i32
    %c0_i32_1 = arith.constant 0 : i32
    return %c0_i32, %c0_i32_0 : i32, i32
  }
  func.func @transform_7(%arg0: i32) -> (i32, i32, i32) {
    %c0_i32 = arith.constant 0 : i32
    %c0_i32_0 = arith.constant 0 : i32
    %c0_i32_1 = arith.constant 0 : i32
    %c0_i32_2 = arith.constant 0 : i32
    return %c0_i32, %c0_i32_0, %c0_i32_1 : i32, i32, i32
  }
}

module attributes {stable_mosaic.version = 11 : i64} {
  func.func @_bilstm_kernel(%arg0: i32, %arg1: memref<32x2x128xf32, #tpu.memory_space<vmem>>, %arg2: memref<128x256xbf16, #tpu.memory_space<vmem>>, %arg3: memref<64x256xbf16, #tpu.memory_space<vmem>>, %arg4: memref<1x256xf32, #tpu.memory_space<vmem>>, %arg5: memref<128x256xbf16, #tpu.memory_space<vmem>>, %arg6: memref<64x256xbf16, #tpu.memory_space<vmem>>, %arg7: memref<1x256xf32, #tpu.memory_space<vmem>>, %arg8: memref<32x2x128xf32, #tpu.memory_space<vmem>>, %arg9: memref<2x64xf32, #tpu.memory_space<vmem>>, %arg10: memref<2x64xf32, #tpu.memory_space<vmem>>, %arg11: memref<2x64xf32, #tpu.memory_space<vmem>>, %arg12: memref<2x64xf32, #tpu.memory_space<vmem>>, %arg13: memref<32x2x64xf32, #tpu.memory_space<vmem>>, %arg14: memref<32x2x64xf32, #tpu.memory_space<vmem>>) attributes {dimension_semantics = [#tpu.dimension_semantics<arbitrary>], iteration_bounds = array<i64: 1>, scalar_prefetch = 0 : i64, scratch_operands = 6 : i64, tpu.core_type = #tpu.core_type<tc>, window_params = [{pipeline_mode = #tpu.pipeline_mode<synchronous>, transform_indices = @transform_0, window_bounds = array<i64: 32, 2, 128>}, {pipeline_mode = #tpu.pipeline_mode<synchronous>, transform_indices = @transform_1, window_bounds = array<i64: 128, 256>}, {pipeline_mode = #tpu.pipeline_mode<synchronous>, transform_indices = @transform_2, window_bounds = array<i64: 64, 256>}, {pipeline_mode = #tpu.pipeline_mode<synchronous>, transform_indices = @transform_3, window_bounds = array<i64: 1, 256>}, {pipeline_mode = #tpu.pipeline_mode<synchronous>, transform_indices = @transform_4, window_bounds = array<i64: 128, 256>}, {pipeline_mode = #tpu.pipeline_mode<synchronous>, transform_indices = @transform_5, window_bounds = array<i64: 64, 256>}, {pipeline_mode = #tpu.pipeline_mode<synchronous>, transform_indices = @transform_6, window_bounds = array<i64: 1, 256>}, {pipeline_mode = #tpu.pipeline_mode<synchronous>, transform_indices = @transform_7, window_bounds = array<i64: 32, 2, 128>}]} {
    %c0 = arith.constant 0 : index
    %c0_0 = arith.constant 0 : index
    %0 = vector.load %arg2[%c0, %c0_0] : memref<128x256xbf16, #tpu.memory_space<vmem>>, vector<128x256xbf16>
    %c0_1 = arith.constant 0 : index
    %c0_2 = arith.constant 0 : index
    %1 = vector.load %arg3[%c0_1, %c0_2] : memref<64x256xbf16, #tpu.memory_space<vmem>>, vector<64x256xbf16>
    %c0_3 = arith.constant 0 : index
    %c0_4 = arith.constant 0 : index
    %2 = vector.load %arg4[%c0_3, %c0_4] : memref<1x256xf32, #tpu.memory_space<vmem>>, vector<1x256xf32>
    %c0_5 = arith.constant 0 : index
    %c0_6 = arith.constant 0 : index
    %3 = vector.load %arg5[%c0_5, %c0_6] : memref<128x256xbf16, #tpu.memory_space<vmem>>, vector<128x256xbf16>
    %c0_7 = arith.constant 0 : index
    %c0_8 = arith.constant 0 : index
    %4 = vector.load %arg6[%c0_7, %c0_8] : memref<64x256xbf16, #tpu.memory_space<vmem>>, vector<64x256xbf16>
    %c0_9 = arith.constant 0 : index
    %c0_10 = arith.constant 0 : index
    %5 = vector.load %arg7[%c0_9, %c0_10] : memref<1x256xf32, #tpu.memory_space<vmem>>, vector<1x256xf32>
    %cst = arith.constant 0.000000e+00 : f32
    %6 = vector.broadcast %cst : f32 to vector<2x64xf32>
    %c0_11 = arith.constant 0 : index
    %c0_12 = arith.constant 0 : index
    %7 = vector.load %arg9[%c0_11, %c0_12] : memref<2x64xf32, #tpu.memory_space<vmem>>, vector<2x64xf32>
    tpu.vector_store %arg9[%c0_11, %c0_12], %6 {strides = array<i32>} : memref<2x64xf32, #tpu.memory_space<vmem>>, vector<2x64xf32>,
    %cst_13 = arith.constant 0.000000e+00 : f32
    %8 = vector.broadcast %cst_13 : f32 to vector<2x64xf32>
    %c0_14 = arith.constant 0 : index
    %c0_15 = arith.constant 0 : index
    %9 = vector.load %arg10[%c0_14, %c0_15] : memref<2x64xf32, #tpu.memory_space<vmem>>, vector<2x64xf32>
    tpu.vector_store %arg10[%c0_14, %c0_15], %8 {strides = array<i32>} : memref<2x64xf32, #tpu.memory_space<vmem>>, vector<2x64xf32>,
    %cst_16 = arith.constant 0.000000e+00 : f32
    %10 = vector.broadcast %cst_16 : f32 to vector<2x64xf32>
    %c0_17 = arith.constant 0 : index
    %c0_18 = arith.constant 0 : index
    %11 = vector.load %arg11[%c0_17, %c0_18] : memref<2x64xf32, #tpu.memory_space<vmem>>, vector<2x64xf32>
    tpu.vector_store %arg11[%c0_17, %c0_18], %10 {strides = array<i32>} : memref<2x64xf32, #tpu.memory_space<vmem>>, vector<2x64xf32>,
    %cst_19 = arith.constant 0.000000e+00 : f32
    %12 = vector.broadcast %cst_19 : f32 to vector<2x64xf32>
    %c0_20 = arith.constant 0 : index
    %c0_21 = arith.constant 0 : index
    %13 = vector.load %arg12[%c0_20, %c0_21] : memref<2x64xf32, #tpu.memory_space<vmem>>, vector<2x64xf32>
    tpu.vector_store %arg12[%c0_20, %c0_21], %12 {strides = array<i32>} : memref<2x64xf32, #tpu.memory_space<vmem>>, vector<2x64xf32>,
    %c0_i32 = arith.constant 0 : i32
    %c32_i32 = arith.constant 32 : i32
    %14 = arith.addi %c0_i32, %c32_i32 : i32
    %c1_i32 = arith.constant 1 : i32
    scf.for %arg15 = %c0_i32 to %14 step %c1_i32  : i32 {
      %19 = arith.index_cast %arg15 : i32 to index
      %c0_32 = arith.constant 0 : index
      %c0_33 = arith.constant 0 : index
      %20 = vector.load %arg1[%19, %c0_32, %c0_33] : memref<32x2x128xf32, #tpu.memory_space<vmem>>, vector<1x2x128xf32>
      %21 = vector.shape_cast %20 : vector<1x2x128xf32> to vector<2x128xf32>
      %22 = arith.truncf %21 : vector<2x128xf32> to vector<2x128xbf16>
      %c0_34 = arith.constant 0 : index
      %c0_35 = arith.constant 0 : index
      %23 = vector.load %arg9[%c0_34, %c0_35] : memref<2x64xf32, #tpu.memory_space<vmem>>, vector<2x64xf32>
      %c0_36 = arith.constant 0 : index
      %c0_37 = arith.constant 0 : index
      %24 = vector.load %arg10[%c0_36, %c0_37] : memref<2x64xf32, #tpu.memory_space<vmem>>, vector<2x64xf32>
      %cst_38 = arith.constant dense<0.000000e+00> : vector<2x256xf32>
      %25 = tpu.matmul %22, %0, %cst_38 {dimension_numbers = #tpu.dot_dimension_numbers<[1], [0], [0], [1], [0, 0, 1, 1], [], []>} : vector<2x128xbf16>, vector<128x256xbf16>, vector<2x256xf32> -> vector<2x256xf32>
      %26 = arith.truncf %23 : vector<2x64xf32> to vector<2x64xbf16>
      %cst_39 = arith.constant dense<0.000000e+00> : vector<2x256xf32>
      %27 = tpu.matmul %26, %1, %cst_39 {dimension_numbers = #tpu.dot_dimension_numbers<[1], [0], [0], [1], [0, 0, 1, 1], [], []>} : vector<2x64xbf16>, vector<64x256xbf16>, vector<2x256xf32> -> vector<2x256xf32>
      %28 = arith.addf %25, %27 : vector<2x256xf32>
      %29 = vector.broadcast %2 : vector<1x256xf32> to vector<2x256xf32>
      %30 = arith.addf %28, %29 : vector<2x256xf32>
      %31 = vector.extract_strided_slice %30 {offsets = [0, 0], sizes = [2, 64], strides = [1, 1]} : vector<2x256xf32> to vector<2x64xf32>
      %32 = arith.negf %31 : vector<2x64xf32>
      %33 = math.exp %32 : vector<2x64xf32>
      %cst_40 = arith.constant 1.000000e+00 : f32
      %34 = vector.broadcast %cst_40 : f32 to vector<2x64xf32>
      %35 = arith.addf %34, %33 : vector<2x64xf32>
      %36 = arith.divf %34, %35 : vector<2x64xf32>
      %37 = vector.extract_strided_slice %30 {offsets = [0, 64], sizes = [2, 64], strides = [1, 1]} : vector<2x256xf32> to vector<2x64xf32>
      %38 = arith.negf %37 : vector<2x64xf32>
      %39 = math.exp %38 : vector<2x64xf32>
      %cst_41 = arith.constant 1.000000e+00 : f32
      %40 = vector.broadcast %cst_41 : f32 to vector<2x64xf32>
      %41 = arith.addf %40, %39 : vector<2x64xf32>
      %42 = arith.divf %40, %41 : vector<2x64xf32>
      %43 = vector.extract_strided_slice %30 {offsets = [0, 128], sizes = [2, 64], strides = [1, 1]} : vector<2x256xf32> to vector<2x64xf32>
      %44 = math.tanh %43 : vector<2x64xf32>
      %45 = vector.extract_strided_slice %30 {offsets = [0, 192], sizes = [2, 64], strides = [1, 1]} : vector<2x256xf32> to vector<2x64xf32>
      %46 = arith.negf %45 : vector<2x64xf32>
      %47 = math.exp %46 : vector<2x64xf32>
      %cst_42 = arith.constant 1.000000e+00 : f32
      %48 = vector.broadcast %cst_42 : f32 to vector<2x64xf32>
      %49 = arith.addf %48, %47 : vector<2x64xf32>
      %50 = arith.divf %48, %49 : vector<2x64xf32>
      %51 = arith.mulf %42, %24 : vector<2x64xf32>
      %52 = arith.mulf %36, %44 : vector<2x64xf32>
      %53 = arith.addf %51, %52 : vector<2x64xf32>
      %54 = math.tanh %53 : vector<2x64xf32>
      %55 = arith.mulf %50, %54 : vector<2x64xf32>
      %c31_i32 = arith.constant 31 : i32
      %56 = arith.subi %c31_i32, %arg15 : i32
      %57 = arith.index_cast %56 : i32 to index
      %c0_43 = arith.constant 0 : index
      %c0_44 = arith.constant 0 : index
      %58 = vector.load %arg1[%57, %c0_43, %c0_44] : memref<32x2x128xf32, #tpu.memory_space<vmem>>, vector<1x2x128xf32>
      %59 = vector.shape_cast %58 : vector<1x2x128xf32> to vector<2x128xf32>
      %60 = arith.truncf %59 : vector<2x128xf32> to vector<2x128xbf16>
      %c0_45 = arith.constant 0 : index
      %c0_46 = arith.constant 0 : index
      %61 = vector.load %arg11[%c0_45, %c0_46] : memref<2x64xf32, #tpu.memory_space<vmem>>, vector<2x64xf32>
      %c0_47 = arith.constant 0 : index
      %c0_48 = arith.constant 0 : index
      %62 = vector.load %arg12[%c0_47, %c0_48] : memref<2x64xf32, #tpu.memory_space<vmem>>, vector<2x64xf32>
      %cst_49 = arith.constant dense<0.000000e+00> : vector<2x256xf32>
      %63 = tpu.matmul %60, %3, %cst_49 {dimension_numbers = #tpu.dot_dimension_numbers<[1], [0], [0], [1], [0, 0, 1, 1], [], []>} : vector<2x128xbf16>, vector<128x256xbf16>, vector<2x256xf32> -> vector<2x256xf32>
      %64 = arith.truncf %61 : vector<2x64xf32> to vector<2x64xbf16>
      %cst_50 = arith.constant dense<0.000000e+00> : vector<2x256xf32>
      %65 = tpu.matmul %64, %4, %cst_50 {dimension_numbers = #tpu.dot_dimension_numbers<[1], [0], [0], [1], [0, 0, 1, 1], [], []>} : vector<2x64xbf16>, vector<64x256xbf16>, vector<2x256xf32> -> vector<2x256xf32>
      %66 = arith.addf %63, %65 : vector<2x256xf32>
      %67 = vector.broadcast %5 : vector<1x256xf32> to vector<2x256xf32>
      %68 = arith.addf %66, %67 : vector<2x256xf32>
      %69 = vector.extract_strided_slice %68 {offsets = [0, 0], sizes = [2, 64], strides = [1, 1]} : vector<2x256xf32> to vector<2x64xf32>
      %70 = arith.negf %69 : vector<2x64xf32>
      %71 = math.exp %70 : vector<2x64xf32>
      %cst_51 = arith.constant 1.000000e+00 : f32
      %72 = vector.broadcast %cst_51 : f32 to vector<2x64xf32>
      %73 = arith.addf %72, %71 : vector<2x64xf32>
      %74 = arith.divf %72, %73 : vector<2x64xf32>
      %75 = vector.extract_strided_slice %68 {offsets = [0, 64], sizes = [2, 64], strides = [1, 1]} : vector<2x256xf32> to vector<2x64xf32>
      %76 = arith.negf %75 : vector<2x64xf32>
      %77 = math.exp %76 : vector<2x64xf32>
      %cst_52 = arith.constant 1.000000e+00 : f32
      %78 = vector.broadcast %cst_52 : f32 to vector<2x64xf32>
      %79 = arith.addf %78, %77 : vector<2x64xf32>
      %80 = arith.divf %78, %79 : vector<2x64xf32>
      %81 = vector.extract_strided_slice %68 {offsets = [0, 128], sizes = [2, 64], strides = [1, 1]} : vector<2x256xf32> to vector<2x64xf32>
      %82 = math.tanh %81 : vector<2x64xf32>
      %83 = vector.extract_strided_slice %68 {offsets = [0, 192], sizes = [2, 64], strides = [1, 1]} : vector<2x256xf32> to vector<2x64xf32>
      %84 = arith.negf %83 : vector<2x64xf32>
      %85 = math.exp %84 : vector<2x64xf32>
      %cst_53 = arith.constant 1.000000e+00 : f32
      %86 = vector.broadcast %cst_53 : f32 to vector<2x64xf32>
      %87 = arith.addf %86, %85 : vector<2x64xf32>
      %88 = arith.divf %86, %87 : vector<2x64xf32>
      %89 = arith.mulf %80, %62 : vector<2x64xf32>
      %90 = arith.mulf %74, %82 : vector<2x64xf32>
      %91 = arith.addf %89, %90 : vector<2x64xf32>
      %92 = math.tanh %91 : vector<2x64xf32>
      %93 = arith.mulf %88, %92 : vector<2x64xf32>
      %c0_54 = arith.constant 0 : index
      %c0_55 = arith.constant 0 : index
      %94 = vector.load %arg9[%c0_54, %c0_55] : memref<2x64xf32, #tpu.memory_space<vmem>>, vector<2x64xf32>
      tpu.vector_store %arg9[%c0_54, %c0_55], %55 {strides = array<i32>} : memref<2x64xf32, #tpu.memory_space<vmem>>, vector<2x64xf32>,
      %c0_56 = arith.constant 0 : index
      %c0_57 = arith.constant 0 : index
      %95 = vector.load %arg10[%c0_56, %c0_57] : memref<2x64xf32, #tpu.memory_space<vmem>>, vector<2x64xf32>
      tpu.vector_store %arg10[%c0_56, %c0_57], %53 {strides = array<i32>} : memref<2x64xf32, #tpu.memory_space<vmem>>, vector<2x64xf32>,
      %c0_58 = arith.constant 0 : index
      %c0_59 = arith.constant 0 : index
      %96 = vector.load %arg11[%c0_58, %c0_59] : memref<2x64xf32, #tpu.memory_space<vmem>>, vector<2x64xf32>
      tpu.vector_store %arg11[%c0_58, %c0_59], %93 {strides = array<i32>} : memref<2x64xf32, #tpu.memory_space<vmem>>, vector<2x64xf32>,
      %c0_60 = arith.constant 0 : index
      %c0_61 = arith.constant 0 : index
      %97 = vector.load %arg12[%c0_60, %c0_61] : memref<2x64xf32, #tpu.memory_space<vmem>>, vector<2x64xf32>
      tpu.vector_store %arg12[%c0_60, %c0_61], %91 {strides = array<i32>} : memref<2x64xf32, #tpu.memory_space<vmem>>, vector<2x64xf32>,
      %98 = arith.index_cast %arg15 : i32 to index
      %c0_62 = arith.constant 0 : index
      %c0_63 = arith.constant 0 : index
      %99 = vector.load %arg13[%98, %c0_62, %c0_63] : memref<32x2x64xf32, #tpu.memory_space<vmem>>, vector<1x2x64xf32>
      %100 = vector.shape_cast %99 : vector<1x2x64xf32> to vector<2x64xf32>
      %101 = vector.shape_cast %55 : vector<2x64xf32> to vector<1x2x64xf32>
      tpu.vector_store %arg13[%98, %c0_62, %c0_63], %101 {strides = array<i32>} : memref<32x2x64xf32, #tpu.memory_space<vmem>>, vector<1x2x64xf32>,
      %c31_i32_64 = arith.constant 31 : i32
      %102 = arith.subi %c31_i32_64, %arg15 : i32
      %103 = arith.index_cast %102 : i32 to index
      %c0_65 = arith.constant 0 : index
      %c0_66 = arith.constant 0 : index
      %104 = vector.load %arg14[%103, %c0_65, %c0_66] : memref<32x2x64xf32, #tpu.memory_space<vmem>>, vector<1x2x64xf32>
      %105 = vector.shape_cast %104 : vector<1x2x64xf32> to vector<2x64xf32>
      %106 = vector.shape_cast %93 : vector<2x64xf32> to vector<1x2x64xf32>
      tpu.vector_store %arg14[%103, %c0_65, %c0_66], %106 {strides = array<i32>} : memref<32x2x64xf32, #tpu.memory_space<vmem>>, vector<1x2x64xf32>,
    }
    %c32_i32_22 = arith.constant 32 : i32
    %c0_23 = arith.constant 0 : index
    %c0_24 = arith.constant 0 : index
    %c0_25 = arith.constant 0 : index
    %15 = vector.load %arg13[%c0_23, %c0_24, %c0_25] : memref<32x2x64xf32, #tpu.memory_space<vmem>>, vector<32x2x64xf32>
    %c0_26 = arith.constant 0 : index
    %c0_27 = arith.constant 0 : index
    %c0_28 = arith.constant 0 : index
    %16 = vector.load %arg14[%c0_26, %c0_27, %c0_28] : memref<32x2x64xf32, #tpu.memory_space<vmem>>, vector<32x2x64xf32>
    %17 = tpu.concatenate %15, %16 in 2 : vector<32x2x64xf32>, vector<32x2x64xf32> -> vector<32x2x128xf32>
    %c0_29 = arith.constant 0 : index
    %c0_30 = arith.constant 0 : index
    %c0_31 = arith.constant 0 : index
    %18 = vector.load %arg8[%c0_29, %c0_30, %c0_31] : memref<32x2x128xf32, #tpu.memory_space<vmem>>, vector<32x2x128xf32>
    tpu.vector_store %arg8[%c0_29, %c0_30, %c0_31], %17 {strides = array<i32>} : memref<32x2x128xf32, #tpu.memory_space<vmem>>, vector<32x2x128xf32>,
    return
  }
  func.func @transform_0(%arg0: i32) -> (i32, i32, i32) {
    %c0_i32 = arith.constant 0 : i32
    %c0_i32_0 = arith.constant 0 : i32
    %c0_i32_1 = arith.constant 0 : i32
    %c0_i32_2 = arith.constant 0 : i32
    return %c0_i32, %c0_i32_0, %c0_i32_1 : i32, i32, i32
  }
  func.func @transform_1(%arg0: i32) -> (i32, i32) {
    %c0_i32 = arith.constant 0 : i32
    %c0_i32_0 = arith.constant 0 : i32
    %c0_i32_1 = arith.constant 0 : i32
    return %c0_i32, %c0_i32_0 : i32, i32
  }
  func.func @transform_2(%arg0: i32) -> (i32, i32) {
    %c0_i32 = arith.constant 0 : i32
    %c0_i32_0 = arith.constant 0 : i32
    %c0_i32_1 = arith.constant 0 : i32
    return %c0_i32, %c0_i32_0 : i32, i32
  }
  func.func @transform_3(%arg0: i32) -> (i32, i32) {
    %c0_i32 = arith.constant 0 : i32
    %c0_i32_0 = arith.constant 0 : i32
    %c0_i32_1 = arith.constant 0 : i32
    return %c0_i32, %c0_i32_0 : i32, i32
  }
  func.func @transform_4(%arg0: i32) -> (i32, i32) {
    %c0_i32 = arith.constant 0 : i32
    %c0_i32_0 = arith.constant 0 : i32
    %c0_i32_1 = arith.constant 0 : i32
    return %c0_i32, %c0_i32_0 : i32, i32
  }
  func.func @transform_5(%arg0: i32) -> (i32, i32) {
    %c0_i32 = arith.constant 0 : i32
    %c0_i32_0 = arith.constant 0 : i32
    %c0_i32_1 = arith.constant 0 : i32
    return %c0_i32, %c0_i32_0 : i32, i32
  }
  func.func @transform_6(%arg0: i32) -> (i32, i32) {
    %c0_i32 = arith.constant 0 : i32
    %c0_i32_0 = arith.constant 0 : i32
    %c0_i32_1 = arith.constant 0 : i32
    return %c0_i32, %c0_i32_0 : i32, i32
  }
  func.func @transform_7(%arg0: i32) -> (i32, i32, i32) {
    %c0_i32 = arith.constant 0 : i32
    %c0_i32_0 = arith.constant 0 : i32
    %c0_i32_1 = arith.constant 0 : i32
    %c0_i32_2 = arith.constant 0 : i32
    return %c0_i32, %c0_i32_0, %c0_i32_1 : i32, i32, i32
  }
}

module attributes {stable_mosaic.version = 11 : i64} {
  func.func @_fc_head_kernel(%arg0: i32, %arg1: memref<128x128xf32, #tpu.memory_space<vmem>>, %arg2: memref<128x128xbf16, #tpu.memory_space<vmem>>, %arg3: memref<1x128xf32, #tpu.memory_space<vmem>>, %arg4: memref<128x128xbf16, #tpu.memory_space<vmem>>, %arg5: memref<1x128xf32, #tpu.memory_space<vmem>>, %arg6: memref<128x128xf32, #tpu.memory_space<vmem>>) attributes {dimension_semantics = [#tpu.dimension_semantics<parallel>], iteration_bounds = array<i64: 1>, scalar_prefetch = 0 : i64, scratch_operands = 0 : i64, tpu.core_type = #tpu.core_type<tc>, window_params = [{transform_indices = @transform_0, window_bounds = array<i64: 128, 128>}, {pipeline_mode = #tpu.pipeline_mode<synchronous>, transform_indices = @transform_1, window_bounds = array<i64: 128, 128>}, {pipeline_mode = #tpu.pipeline_mode<synchronous>, transform_indices = @transform_2, window_bounds = array<i64: 1, 128>}, {pipeline_mode = #tpu.pipeline_mode<synchronous>, transform_indices = @transform_3, window_bounds = array<i64: 128, 128>}, {pipeline_mode = #tpu.pipeline_mode<synchronous>, transform_indices = @transform_4, window_bounds = array<i64: 1, 128>}, {transform_indices = @transform_5, window_bounds = array<i64: 128, 128>}]} {
    %c0 = arith.constant 0 : index
    %c0_0 = arith.constant 0 : index
    %0 = vector.load %arg1[%c0, %c0_0] : memref<128x128xf32, #tpu.memory_space<vmem>>, vector<128x128xf32>
    %1 = arith.truncf %0 : vector<128x128xf32> to vector<128x128xbf16>
    %c0_1 = arith.constant 0 : index
    %c0_2 = arith.constant 0 : index
    %2 = vector.load %arg2[%c0_1, %c0_2] : memref<128x128xbf16, #tpu.memory_space<vmem>>, vector<128x128xbf16>
    %cst = arith.constant dense<0.000000e+00> : vector<128x128xf32>
    %3 = tpu.matmul %1, %2, %cst {dimension_numbers = #tpu.dot_dimension_numbers<[1], [0], [0], [1], [0, 0, 1, 1], [], []>} : vector<128x128xbf16>, vector<128x128xbf16>, vector<128x128xf32> -> vector<128x128xf32>
    %c0_3 = arith.constant 0 : index
    %c0_4 = arith.constant 0 : index
    %4 = vector.load %arg3[%c0_3, %c0_4] : memref<1x128xf32, #tpu.memory_space<vmem>>, vector<1x128xf32>
    %5 = vector.broadcast %4 : vector<1x128xf32> to vector<128x128xf32>
    %6 = arith.addf %3, %5 : vector<128x128xf32>
    %cst_5 = arith.constant 0.000000e+00 : f32
    %7 = vector.broadcast %cst_5 : f32 to vector<128x128xf32>
    %8 = arith.maximumf %6, %7 : vector<128x128xf32>
    %9 = arith.truncf %8 : vector<128x128xf32> to vector<128x128xbf16>
    %c0_6 = arith.constant 0 : index
    %c0_7 = arith.constant 0 : index
    %10 = vector.load %arg4[%c0_6, %c0_7] : memref<128x128xbf16, #tpu.memory_space<vmem>>, vector<128x128xbf16>
    %cst_8 = arith.constant dense<0.000000e+00> : vector<128x128xf32>
    %11 = tpu.matmul %9, %10, %cst_8 {dimension_numbers = #tpu.dot_dimension_numbers<[1], [0], [0], [1], [0, 0, 1, 1], [], []>} : vector<128x128xbf16>, vector<128x128xbf16>, vector<128x128xf32> -> vector<128x128xf32>
    %c0_9 = arith.constant 0 : index
    %c0_10 = arith.constant 0 : index
    %12 = vector.load %arg5[%c0_9, %c0_10] : memref<1x128xf32, #tpu.memory_space<vmem>>, vector<1x128xf32>
    %13 = vector.broadcast %12 : vector<1x128xf32> to vector<128x128xf32>
    %14 = arith.addf %11, %13 : vector<128x128xf32>
    %c0_11 = arith.constant 0 : index
    %c0_12 = arith.constant 0 : index
    %15 = vector.load %arg6[%c0_11, %c0_12] : memref<128x128xf32, #tpu.memory_space<vmem>>, vector<128x128xf32>
    tpu.vector_store %arg6[%c0_11, %c0_12], %14 {strides = array<i32>} : memref<128x128xf32, #tpu.memory_space<vmem>>, vector<128x128xf32>,
    return
  }
  func.func @transform_0(%arg0: i32) -> (i32, i32) {
    %c0_i32 = arith.constant 0 : i32
    %c0_i32_0 = arith.constant 0 : i32
    return %arg0, %c0_i32 : i32, i32
  }
  func.func @transform_1(%arg0: i32) -> (i32, i32) {
    %c0_i32 = arith.constant 0 : i32
    %c0_i32_0 = arith.constant 0 : i32
    %c0_i32_1 = arith.constant 0 : i32
    return %c0_i32, %c0_i32_0 : i32, i32
  }
  func.func @transform_2(%arg0: i32) -> (i32, i32) {
    %c0_i32 = arith.constant 0 : i32
    %c0_i32_0 = arith.constant 0 : i32
    %c0_i32_1 = arith.constant 0 : i32
    return %c0_i32, %c0_i32_0 : i32, i32
  }
  func.func @transform_3(%arg0: i32) -> (i32, i32) {
    %c0_i32 = arith.constant 0 : i32
    %c0_i32_0 = arith.constant 0 : i32
    %c0_i32_1 = arith.constant 0 : i32
    return %c0_i32, %c0_i32_0 : i32, i32
  }
  func.func @transform_4(%arg0: i32) -> (i32, i32) {
    %c0_i32 = arith.constant 0 : i32
    %c0_i32_0 = arith.constant 0 : i32
    %c0_i32_1 = arith.constant 0 : i32
    return %c0_i32, %c0_i32_0 : i32, i32
  }
  func.func @transform_5(%arg0: i32) -> (i32, i32) {
    %c0_i32 = arith.constant 0 : i32
    %c0_i32_0 = arith.constant 0 : i32
    return %arg0, %c0_i32 : i32, i32
  }
}

</mosaic_0001>

<llo_original>
// kernel: sleep_transformer_forward.6
$region0: #{sleep_transformer_forward.6}
  #allocation0 [shape = 'u32[]', space=smem, size = 0x4, offset = 0x4, fixed_abs, tag = 'smem constant byte address 0x4 - core index']
  #allocation1 [shape = 'u32[72,128]{1,0:T(1,128)}', space=vmem, size = 0x9000, scoped, tag = 'internal scratch']
  %s0 = inlined_call_operand.hbm [shape: f32[2,32,64], index: 0, kind: input, shape index: {}]
  %s1 = inlined_call_operand.vmem [shape: bf16[64,128], index: 1, kind: input, shape index: {}]
  %s2 = inlined_call_operand.vmem [shape: f32[1,128], index: 2, kind: input, shape index: {}]
  %s3 = inlined_call_operand.hbm [shape: f32[32,128], index: 3, kind: input, shape index: {}]
  %s4 = inlined_call_operand.vmem [shape: f32[2,32,128], index: 4, kind: output, shape index: {}]
  %s5 = sld [smem:[#allocation0]]
  $region57: #{sleep_transformer_forward.6} parent=0
    _
  %s7 = ssub.s32 1, %s5
  %s8 = scalar_select 0, %s7, %s5
  $region1: #{sleep_transformer_forward.6} parent=0
    #allocation2 [shape = 'u8[32768]{0}', space=vmem, size = 0x8000, scoped, tag = 'input window, operand 0']
    #allocation3 [shape = 's32[2]{0}', space=sflag, size = 0x8, scoped, tag = 'scoped memory for sleep_transformer_forward.6']
    #allocation4 [shape = 'u8[16384]{0}', space=vmem, size = 0x4000, scoped, tag = 'input window, operand 3, single buffered']
    #allocation5 [shape = 's32[1]{0}', space=sflag, size = 0x4, scoped, tag = 'scoped memory for sleep_transformer_forward.6']
    %9 = vsyncpa [#allocation3], 0
    %s10 = scalar_lea.sflag [#allocation3], 1
    %11 = vsyncpa %s10, 0
    %12 = vsyncpa [#allocation5], 0
    loop: start=0, step=1, limit=4
    $region2: #{sleep_transformer_forward.6} parent=1 // loop_pre_header
      _
    $region3: #{sleep_transformer_forward.6} parent=1 // loop_header
      %s14 = sphi 0, %s18
      %p15 = scmp.ge.s32.totalorder %s14, 4
      %s24 = sphi 0, %s26
      %s27 = sphi 0, %s24
      %s28 = sphi 0, %s27
      %s44 = sphi 0, %s28
      %s48 = sphi 0, %s48
      %s50 = sphi 0, %s48
      %s51 = sphi 0, %s50
      %s65 = sphi 0, %s51
      %s69 = sphi 0, %s69
      %s71 = sphi 0, %s69
      %s72 = sphi 0, %s71
      %s86 = sphi 0, %s72
      %s90 = sphi 0, %s90
      %s92 = sphi 0, %s90
      %s93 = sphi 0, %s92
      %s107 = sphi 0, %s93
      %s113 = sphi 0, %s115
      %s116 = sphi 0, %s113
      %s117 = sphi 0, %s116
      %s133 = sphi 0, %s117
    $region4: #{sleep_transformer_forward.6} parent=1 // loop_header_branch
      %17 = sbr.rel (%p15) target = $region8
    $region5: #{sleep_transformer_forward.6} parent=1 // loop_body
      %s19 = ssub.s32 %s14, 1
      %s20 = ssub.s32 %s14, 2
      %s21 = sadd.s32 %s14, 1
      %s22 = ssub.s32 %s14, %s21
      %p23 = scmp.eq.s32.totalorder %s22, 0
      %s25 = sadd.s32 %s24, 1
      %s26 = scalar_select %p23, %s24, %s25
      %p29 = pneg %p23
      %p30 = scmp.eq.s32.totalorder %s14, 1
      %p31 = por %p29, %p30
      %p32 = scmp.ne.s32.totalorder %s24, %s27
      %p33 = scmp.eq.s32.totalorder %s14, 0
      %p34 = por %p32, %p33
      %p35 = scmp.ne.s32.totalorder %s24, %s27
      %p36 = scmp.eq.s32.totalorder %s19, 1
      %p37 = por %p35, %p36
      %p38 = scmp.ne.s32.totalorder %s27, %s28
      %p39 = scmp.eq.s32.totalorder %s19, 0
      %p40 = por %p38, %p39
      %p41 = scmp.ne.s32.totalorder %s27, %s28
      %p42 = scmp.eq.s32.totalorder %s20, 1
      %p43 = por %p41, %p42
      %p45 = scmp.ne.s32.totalorder %s28, %s44
      %p46 = scmp.eq.s32.totalorder %s20, 0
      %p47 = por %p45, %p46
      %s49 = sadd.s32 %s48, 1
      %p52 = scmp.eq.s32.totalorder %s14, 1
      %p53 = scmp.ne.s32.totalorder %s48, %s50
      %p54 = scmp.eq.s32.totalorder %s14, 0
      %p55 = por %p53, %p54
      %p56 = scmp.ne.s32.totalorder %s48, %s50
      %p57 = scmp.eq.s32.totalorder %s19, 1
      %p58 = por %p56, %p57
      %p59 = scmp.ne.s32.totalorder %s50, %s51
      %p60 = scmp.eq.s32.totalorder %s19, 0
      %p61 = por %p59, %p60
      %p62 = scmp.ne.s32.totalorder %s50, %s51
      %p63 = scmp.eq.s32.totalorder %s20, 1
      %p64 = por %p62, %p63
      %p66 = scmp.ne.s32.totalorder %s51, %s65
      %p67 = scmp.eq.s32.totalorder %s20, 0
      %p68 = por %p66, %p67
      %s70 = sadd.s32 %s69, 1
      %p73 = scmp.eq.s32.totalorder %s14, 1
      %p74 = scmp.ne.s32.totalorder %s69, %s71
      %p75 = scmp.eq.s32.totalorder %s14, 0
      %p76 = por %p74, %p75
      %p77 = scmp.ne.s32.totalorder %s69, %s71
      %p78 = scmp.eq.s32.totalorder %s19, 1
      %p79 = por %p77, %p78
      %p80 = scmp.ne.s32.totalorder %s71, %s72
      %p81 = scmp.eq.s32.totalorder %s19, 0
      %p82 = por %p80, %p81
      %p83 = scmp.ne.s32.totalorder %s71, %s72
      %p84 = scmp.eq.s32.totalorder %s20, 1
      %p85 = por %p83, %p84
      %p87 = scmp.ne.s32.totalorder %s72, %s86
      %p88 = scmp.eq.s32.totalorder %s20, 0
      %p89 = por %p87, %p88
      %s91 = sadd.s32 %s90, 1
      %p94 = scmp.eq.s32.totalorder %s14, 1
      %p95 = scmp.ne.s32.totalorder %s90, %s92
      %p96 = scmp.eq.s32.totalorder %s14, 0
      %p97 = por %p95, %p96
      %p98 = scmp.ne.s32.totalorder %s90, %s92
      %p99 = scmp.eq.s32.totalorder %s19, 1
      %p100 = por %p98, %p99
      %p101 = scmp.ne.s32.totalorder %s92, %s93
      %p102 = scmp.eq.s32.totalorder %s19, 0
      %p103 = por %p101, %p102
      %p104 = scmp.ne.s32.totalorder %s92, %s93
      %p105 = scmp.eq.s32.totalorder %s20, 1
      %p106 = por %p104, %p105
      %p108 = scmp.ne.s32.totalorder %s93, %s107
      %p109 = scmp.eq.s32.totalorder %s20, 0
      %p110 = por %p108, %p109
      %s111 = ssub.s32 %s14, %s21
      %p112 = scmp.eq.s32.totalorder %s111, 0
      %s114 = sadd.s32 %s113, 1
      %s115 = scalar_select %p112, %s113, %s114
      %p118 = pneg %p112
      %p119 = scmp.eq.s32.totalorder %s14, 1
      %p120 = por %p118, %p119
      %p121 = scmp.ne.s32.totalorder %s113, %s116
      %p122 = scmp.eq.s32.totalorder %s14, 0
      %p123 = por %p121, %p122
      %p124 = scmp.ne.s32.totalorder %s113, %s116
      %p125 = scmp.eq.s32.totalorder %s19, 1
      %p126 = por %p124, %p125
      %p127 = scmp.ne.s32.totalorder %s116, %s117
      %p128 = scmp.eq.s32.totalorder %s19, 0
      %p129 = por %p127, %p128
      %p130 = scmp.ne.s32.totalorder %s116, %s117
      %p131 = scmp.eq.s32.totalorder %s20, 1
      %p132 = por %p130, %p131
      %p134 = scmp.ne.s32.totalorder %s117, %s133
      %p135 = scmp.eq.s32.totalorder %s20, 0
      %p136 = por %p134, %p135
      %p137 = scmp.le.s32.totalorder 1, %s14
      %p138 = scmp.lt.s32.totalorder %s14, 3
      %p139 = pnand %p137, %p138
      %p140 = pneg %p139
      // Predicated region
      $region9: #{sleep_transformer_forward.6} parent=5 // pred_check
        _
      $region10: #{sleep_transformer_forward.6} parent=5 // pred_check_branch
        %142 = sbr.rel (%p139) target = $region12
      $region11: #{sleep_transformer_forward.6} parent=5 // pred_region
        %s143 = ssub.s32 %s14, 1
        // Predicated region
        $region13: #{sleep_transformer_forward.6} parent=11 // pred_check
          %p144 = pneg %p61
        $region14: #{sleep_transformer_forward.6} parent=11 // pred_check_branch
          %146 = sbr.rel (%p144) target = $region16
        $region15: #{sleep_transformer_forward.6} parent=11 // pred_region
          _
        $region16: #{sleep_transformer_forward.6} parent=11 // pred_fallthru
          _
        // Predicated region
        $region17: #{sleep_transformer_forward.6} parent=11 // pred_check
          %p147 = pneg %p82
        $region18: #{sleep_transformer_forward.6} parent=11 // pred_check_branch
          %149 = sbr.rel (%p147) target = $region20
        $region19: #{sleep_transformer_forward.6} parent=11 // pred_region
          _
        $region20: #{sleep_transformer_forward.6} parent=11 // pred_fallthru
          _
        // Predicated region
        $region21: #{sleep_transformer_forward.6} parent=11 // pred_check
          %p150 = pneg %p103
        $region22: #{sleep_transformer_forward.6} parent=11 // pred_check_branch
          %152 = sbr.rel (%p150) target = $region24
        $region23: #{sleep_transformer_forward.6} parent=11 // pred_region
          %154 = vsyncadd [#allocation5], 0
          %s155 = sshll.u32 %s3, 4
          %s156 = int_to_ptr.hbm [resolvable:$true] %s155
          %s157 = sshll.u32 [#allocation4], 4
          %s158 = int_to_ptr.vmem [resolvable:$true] %s157
          %163 = dma.hbm_to_vmem [thread:$0]  %s156, 512, %s158, [#allocation5], 128, 128, 8
        $region24: #{sleep_transformer_forward.6} parent=11 // pred_fallthru
          _
      $region12: #{sleep_transformer_forward.6} parent=5 // pred_fallthru
        _
      %p164 = scmp.lt.s32.totalorder %s14, 2
      // Predicated region
      $region25: #{sleep_transformer_forward.6} parent=5 // pred_check
        %p165 = pneg %p164
      $region26: #{sleep_transformer_forward.6} parent=5 // pred_check_branch
        %167 = sbr.rel (%p165) target = $region28
      $region27: #{sleep_transformer_forward.6} parent=5 // pred_region
        // Predicated region
        $region29: #{sleep_transformer_forward.6} parent=27 // pred_check
          %p168 = pneg %p34
        $region30: #{sleep_transformer_forward.6} parent=27 // pred_check_branch
          %170 = sbr.rel (%p168) target = $region32
        $region31: #{sleep_transformer_forward.6} parent=27 // pred_region
          %s171 = sand.u32 %s24, 1
          %s172 = scalar_lea.sflag [#allocation3], %s171
          %s173 = sand.u32 %s24, 1
          %s174 = smul.addr %s173, 32
          %s175 = scalar_lea.vmem [#allocation2], %s174
          %177 = vsyncadd %s172, 0
          %s178 = smul.addr %s14, 4
          %s179 = smul.addr %s178, 8
          %s180 = scalar_lea.hbm %s0, %s179
          %s181 = sshll.u32 %s180, 4
          %s182 = int_to_ptr.hbm [resolvable:$true] %s181
          %s183 = sshll.u32 %s175, 4
          %s184 = int_to_ptr.vmem [resolvable:$true] %s183
          %189 = dma.hbm_to_vmem [thread:$0]  %s182, 512, %s184, %s172, 128, 128, 8
        $region32: #{sleep_transformer_forward.6} parent=27 // pred_fallthru
          _
      $region28: #{sleep_transformer_forward.6} parent=5 // pred_fallthru
        _
      %p190 = scmp.le.s32.totalorder 1, %s14
      %p191 = scmp.lt.s32.totalorder %s14, 3
      %p192 = pnand %p190, %p191
      %p193 = pneg %p192
      // Predicated region
      $region33: #{sleep_transformer_forward.6} parent=5 // pred_check
        _
      $region34: #{sleep_transformer_forward.6} parent=5 // pred_check_branch
        %195 = sbr.rel (%p192) target = $region36
      $region35: #{sleep_transformer_forward.6} parent=5 // pred_region
        %s196 = ssub.s32 %s14, 1
        %s197 = sand.u32 %s27, 1
        %s198 = scalar_lea.sflag [#allocation3], %s197
        %s199 = sand.u32 %s27, 1
        %s200 = smul.addr %s199, 32
        %s201 = scalar_lea.vmem [#allocation2], %s200
        // Predicated region
        $region37: #{sleep_transformer_forward.6} parent=35 // pred_check
          %p202 = pneg %p40
        $region38: #{sleep_transformer_forward.6} parent=35 // pred_check_branch
          %204 = sbr.rel (%p202) target = $region40
        $region39: #{sleep_transformer_forward.6} parent=35 // pred_region
          %206 = dma.done %s198, 512
        $region40: #{sleep_transformer_forward.6} parent=35 // pred_fallthru
          _
        // Predicated region
        $region41: #{sleep_transformer_forward.6} parent=35 // pred_check
          %p207 = pneg %p103
        $region42: #{sleep_transformer_forward.6} parent=35 // pred_check_branch
          %209 = sbr.rel (%p207) target = $region44
        $region43: #{sleep_transformer_forward.6} parent=35 // pred_region
          %211 = dma.done [#allocation5], 512
        $region44: #{sleep_transformer_forward.6} parent=35 // pred_fallthru
          _
        %s212 = sand.u32 %s27, 1
        %s213 = scalar_lea.sflag [#allocation3], %s212
        %s214 = sand.u32 %s27, 1
        %s215 = smul.addr %s214, 32
        %s216 = scalar_lea.vmem [#allocation2], %s215
        %p217 = pneg %p40
        %p218 = pneg %p37
        %p219 = pneg %p61
        %p220 = pneg %p58
        %p221 = pneg %p82
        %p222 = pneg %p79
        %p223 = pneg %p103
        %p224 = pneg %p100
        %p225 = pneg %p129
        %p226 = pneg %p126
        %p227 = scmp.lt.s32.totalorder %s19, 1
        %s228 = scalar_select %p227, %s19, 1
        %s229 = smul.addr %s228, 4
        %s230 = smul.addr %s229, 8
        %s231 = scalar_lea.vmem %s4, %s230
        %p232 = scmp.lt.s32.totalorder %s19, 1
        %s233 = scalar_select %p232, %s19, 1
        %s234 = smul.addr %s233, 4
        %s235 = smul.addr %s234, 8
        %s236 = scalar_lea.vmem %s4, %s235
        %v238 = vld [vmem:[%s201] sm:$0xff]
        %v239 = vld [vmem:[%s201 + $0x8] sm:$0xff]
        %v240 = vld [vmem:[%s201 + $0x10] sm:$0xff]
        %v241 = vld [vmem:[%s201 + $0x18] sm:$0xff]
        %v242 = vpack.c.bf16 %v239, %v238
        %v243 = vpack.c.bf16 %v241, %v240
        %v244 = vld [vmem:[%s1] sm:$0xf]
        %v245 = vld [vmem:[%s1 + $0x4] sm:$0xf]
        %v246 = vld [vmem:[%s1 + $0x8] sm:$0xf]
        %v247 = vld [vmem:[%s1 + $0xc] sm:$0xf]
        %v248 = vld [vmem:[%s1 + $0x10] sm:$0xf]
        %v249 = vld [vmem:[%s1 + $0x14] sm:$0xf]
        %v250 = vld [vmem:[%s1 + $0x18] sm:$0xf]
        %v251 = vld [vmem:[%s1 + $0x1c] sm:$0xf]
        %v252 = vld [vmem:[%s2] sm:$0x1]
        %v254 = vperm.slane %v252, 0
        %v264 = vunpack.c.l.b16 %v244
        %v265 = vunpack.c.l.b16 %v245
        %v266 = vunpack.c.l.b16 %v246
        %v267 = vunpack.c.l.b16 %v247
        %v268 = vunpack.c.l.b16 %v248
        %v269 = vunpack.c.l.b16 %v249
        %v270 = vunpack.c.l.b16 %v250
        %v271 = vunpack.c.l.b16 %v251
        %v272 = vpack.c.b16 %v265, %v264
        %v273 = vpack.c.b16 %v267, %v266
        %v274 = vpack.c.b16 %v269, %v268
        %v275 = vpack.c.b16 %v271, %v270
        %vm280 = vcmask 523264
        %v282 = vsel %vm280, %v242, 0
        %v285 = vsel %vm280, %v243, 0
        %287 = vmatpush.bf16.msra.mxu0 0
        %288 = vmatpush.bf16.msra.mxu0 0
        %289 = vmatpush.bf16.msra.mxu0 0
        %290 = vmatpush.bf16.msra.mxu0 0
        %291 = vmatpush.bf16.msra.mxu0 %v275
        %292 = vmatpush.bf16.msra.mxu0 %v274
        %293 = vmatpush.bf16.msra.mxu0 %v273
        %294 = vmatpush.bf16.msra.mxu0 %v272
        %295 = vmatmul.bf16.gmra.mxu0 %v282
        %v296 = vpop.f32.mrf.mxu0
        %v297 = vadd.f32 %v254, %v296
        %v298 = vpop.f32.mrf.mxu0
        %v299 = vadd.f32 %v254, %v298
        %300 = vmatmul.bf16.gmra.mxu0 %v285
        %v301 = vpop.f32.mrf.mxu0
        %v302 = vadd.f32 %v254, %v301
        %v303 = vpop.f32.mrf.mxu0
        %v304 = vadd.f32 %v254, %v303
        %305 = vdwg.mxu0
        %v306 = vld [vmem:[#allocation4] sm:$0xff]
        %v307 = vld [vmem:[#allocation4 + $0x8] sm:$0xff]
        %v308 = vld [vmem:[#allocation4 + $0x10] sm:$0xff]
        %v309 = vld [vmem:[#allocation4 + $0x18] sm:$0xff]
        %v310 = vadd.f32 %v297, %v306
        %v311 = vadd.f32 %v299, %v307
        %v312 = vadd.f32 %v302, %v308
        %v313 = vadd.f32 %v304, %v309
        %314 = vst [vmem:[%s236] sm:$0xff] %v310
        %315 = vst [vmem:[%s236 + $0x8] sm:$0xff] %v311
        %316 = vst [vmem:[%s236 + $0x10] sm:$0xff] %v312
        %317 = vst [vmem:[%s236 + $0x18] sm:$0xff] %v313
        %p318 = scmp.lt.s32.totalorder %s19, 1
        %s319 = scalar_select %p318, %s19, 1
        %s320 = smul.addr %s319, 4
        %s321 = smul.addr %s320, 8
        %s322 = scalar_lea.vmem %s4, %s321
        // Predicated region
        $region45: #{sleep_transformer_forward.6} parent=35 // pred_check
          %p323 = pneg %p126
        $region46: #{sleep_transformer_forward.6} parent=35 // pred_check_branch
          %325 = sbr.rel (%p323) target = $region48
        $region47: #{sleep_transformer_forward.6} parent=35 // pred_region
          _
        $region48: #{sleep_transformer_forward.6} parent=35 // pred_fallthru
          _
      $region36: #{sleep_transformer_forward.6} parent=5 // pred_fallthru
        _
      %p326 = scmp.le.s32.totalorder 2, %s14
      // Predicated region
      $region49: #{sleep_transformer_forward.6} parent=5 // pred_check
        %p327 = pneg %p326
      $region50: #{sleep_transformer_forward.6} parent=5 // pred_check_branch
        %329 = sbr.rel (%p327) target = $region52
      $region51: #{sleep_transformer_forward.6} parent=5 // pred_region
        %s330 = ssub.s32 %s14, 2
        // Predicated region
        $region53: #{sleep_transformer_forward.6} parent=51 // pred_check
          %p331 = pneg %p132
        $region54: #{sleep_transformer_forward.6} parent=51 // pred_check_branch
          %333 = sbr.rel (%p331) target = $region56
        $region55: #{sleep_transformer_forward.6} parent=51 // pred_region
          %p334 = scmp.lt.s32.totalorder %s20, 1
          %s335 = scalar_select %p334, %s20, 1
          %s336 = smul.addr %s335, 4
          %s337 = smul.addr %s336, 8
          %s338 = scalar_lea.vmem %s4, %s337
        $region56: #{sleep_transformer_forward.6} parent=51 // pred_fallthru
          _
      $region52: #{sleep_transformer_forward.6} parent=5 // pred_fallthru
        _
    $region6: #{sleep_transformer_forward.6} parent=1 // loop_footer
      %s18 = sadd.s32 1, %s14
    $region7: #{sleep_transformer_forward.6} parent=1 // loop_footer_branch
      %13 = sbr.rel target = $region3
    $region8: #{sleep_transformer_forward.6} parent=1 // loop_exit
      _
    %339 = vsyncpa [#allocation3], 1
    %s340 = scalar_lea.sflag [#allocation3], 1
    %341 = vsyncpa %s340, 1
    %342 = vsyncpa [#allocation5], 1

// kernel: sleep_transformer_forward.7
$region0: #{sleep_transformer_forward.7}
  #allocation0 [shape = 'u32[]', space=smem, size = 0x4, offset = 0x4, fixed_abs, tag = 'smem constant byte address 0x4 - core index']
  #allocation1 [shape = 'u32[72,128]{1,0:T(1,128)}', space=vmem, size = 0x9000, scoped, tag = 'internal scratch']
  %s0 = inlined_call_operand.vmem [shape: f32[2,32,128], index: 0, kind: input, shape index: {}]
  %s1 = inlined_call_operand.hbm [shape: bf16[128,384], index: 1, kind: input, shape index: {}]
  %s2 = inlined_call_operand.vmem [shape: f32[1,384], index: 2, kind: input, shape index: {}]
  %s3 = inlined_call_operand.hbm [shape: bf16[128,128], index: 3, kind: input, shape index: {}]
  %s4 = inlined_call_operand.vmem [shape: f32[1,128], index: 4, kind: input, shape index: {}]
  %s5 = inlined_call_operand.vmem [shape: f32[1,128], index: 5, kind: input, shape index: {}]
  %s6 = inlined_call_operand.vmem [shape: f32[1,128], index: 6, kind: input, shape index: {}]
  %s7 = inlined_call_operand.hbm [shape: bf16[128,128], index: 7, kind: input, shape index: {}]
  %s8 = inlined_call_operand.vmem [shape: f32[1,128], index: 8, kind: input, shape index: {}]
  %s9 = inlined_call_operand.hbm [shape: bf16[128,128], index: 9, kind: input, shape index: {}]
  %s10 = inlined_call_operand.vmem [shape: f32[1,128], index: 10, kind: input, shape index: {}]
  %s11 = inlined_call_operand.vmem [shape: f32[2,32,128], index: 11, kind: output, shape index: {}]
  %s12 = sld [smem:[#allocation0]]
  $region93: #{sleep_transformer_forward.7} parent=0
    _
  %s14 = ssub.s32 1, %s12
  %s15 = scalar_select 0, %s14, %s12
  $region1: #{sleep_transformer_forward.7} parent=0
    #allocation2 [shape = 'u8[98304]{0}', space=vmem, size = 0x18000, scoped, tag = 'input window, operand 1, single buffered']
    #allocation3 [shape = 's32[2]{0}', space=sflag, size = 0x8, scoped, tag = 'scoped memory for sleep_transformer_forward.7']
    #allocation4 [shape = 'u8[32768]{0}', space=vmem, size = 0x8000, scoped, tag = 'input window, operand 3, single buffered']
    #allocation5 [shape = 's32[1]{0}', space=sflag, size = 0x4, scoped, tag = 'scoped memory for sleep_transformer_forward.7']
    #allocation6 [shape = 'u8[32768]{0}', space=vmem, size = 0x8000, scoped, tag = 'input window, operand 7, single buffered']
    #allocation7 [shape = 'u8[32768]{0}', space=vmem, size = 0x8000, scoped, tag = 'input window, operand 9, single buffered']
    #allocation8 [shape = 's32[1]{0}', space=sflag, size = 0x4, scoped, tag = 'scoped memory for sleep_transformer_forward.7']
    %16 = vsyncpa [#allocation3], 0
    %17 = vsyncpa [#allocation5], 0
    %18 = vsyncpa [#allocation8], 0
    loop: start=0, step=1, limit=4
    $region2: #{sleep_transformer_forward.7} parent=1 // loop_pre_header
      _
    $region3: #{sleep_transformer_forward.7} parent=1 // loop_header
      %s20 = sphi 0, %s24
      %p21 = scmp.ge.s32.totalorder %s20, 4
      %s30 = sphi 0, %s32
      %s33 = sphi 0, %s30
      %s34 = sphi 0, %s33
      %s50 = sphi 0, %s34
      %s54 = sphi 0, %s54
      %s56 = sphi 0, %s54
      %s57 = sphi 0, %s56
      %s71 = sphi 0, %s57
      %s75 = sphi 0, %s75
      %s77 = sphi 0, %s75
      %s78 = sphi 0, %s77
      %s92 = sphi 0, %s78
      %s96 = sphi 0, %s96
      %s98 = sphi 0, %s96
      %s99 = sphi 0, %s98
      %s113 = sphi 0, %s99
      %s117 = sphi 0, %s117
      %s119 = sphi 0, %s117
      %s120 = sphi 0, %s119
      %s134 = sphi 0, %s120
      %s138 = sphi 0, %s138
      %s140 = sphi 0, %s138
      %s141 = sphi 0, %s140
      %s155 = sphi 0, %s141
      %s159 = sphi 0, %s159
      %s161 = sphi 0, %s159
      %s162 = sphi 0, %s161
      %s176 = sphi 0, %s162
      %s180 = sphi 0, %s180
      %s182 = sphi 0, %s180
      %s183 = sphi 0, %s182
      %s197 = sphi 0, %s183
      %s201 = sphi 0, %s201
      %s203 = sphi 0, %s201
      %s204 = sphi 0, %s203
      %s218 = sphi 0, %s204
      %s222 = sphi 0, %s222
      %s224 = sphi 0, %s222
      %s225 = sphi 0, %s224
      %s239 = sphi 0, %s225
      %s243 = sphi 0, %s243
      %s245 = sphi 0, %s243
      %s246 = sphi 0, %s245
      %s260 = sphi 0, %s246
      %s266 = sphi 0, %s268
      %s269 = sphi 0, %s266
      %s270 = sphi 0, %s269
      %s286 = sphi 0, %s270
    $region4: #{sleep_transformer_forward.7} parent=1 // loop_header_branch
      %23 = sbr.rel (%p21) target = $region8
    $region5: #{sleep_transformer_forward.7} parent=1 // loop_body
      %s25 = ssub.s32 %s20, 1
      %s26 = ssub.s32 %s20, 2
      %s27 = sadd.s32 %s20, 1
      %s28 = ssub.s32 %s20, %s27
      %p29 = scmp.eq.s32.totalorder %s28, 0
      %s31 = sadd.s32 %s30, 1
      %s32 = scalar_select %p29, %s30, %s31
      %p35 = pneg %p29
      %p36 = scmp.eq.s32.totalorder %s20, 1
      %p37 = por %p35, %p36
      %p38 = scmp.ne.s32.totalorder %s30, %s33
      %p39 = scmp.eq.s32.totalorder %s20, 0
      %p40 = por %p38, %p39
      %p41 = scmp.ne.s32.totalorder %s30, %s33
      %p42 = scmp.eq.s32.totalorder %s25, 1
      %p43 = por %p41, %p42
      %p44 = scmp.ne.s32.totalorder %s33, %s34
      %p45 = scmp.eq.s32.totalorder %s25, 0
      %p46 = por %p44, %p45
      %p47 = scmp.ne.s32.totalorder %s33, %s34
      %p48 = scmp.eq.s32.totalorder %s26, 1
      %p49 = por %p47, %p48
      %p51 = scmp.ne.s32.totalorder %s34, %s50
      %p52 = scmp.eq.s32.totalorder %s26, 0
      %p53 = por %p51, %p52
      %s55 = sadd.s32 %s54, 1
      %p58 = scmp.eq.s32.totalorder %s20, 1
      %p59 = scmp.ne.s32.totalorder %s54, %s56
      %p60 = scmp.eq.s32.totalorder %s20, 0
      %p61 = por %p59, %p60
      %p62 = scmp.ne.s32.totalorder %s54, %s56
      %p63 = scmp.eq.s32.totalorder %s25, 1
      %p64 = por %p62, %p63
      %p65 = scmp.ne.s32.totalorder %s56, %s57
      %p66 = scmp.eq.s32.totalorder %s25, 0
      %p67 = por %p65, %p66
      %p68 = scmp.ne.s32.totalorder %s56, %s57
      %p69 = scmp.eq.s32.totalorder %s26, 1
      %p70 = por %p68, %p69
      %p72 = scmp.ne.s32.totalorder %s57, %s71
      %p73 = scmp.eq.s32.totalorder %s26, 0
      %p74 = por %p72, %p73
      %s76 = sadd.s32 %s75, 1
      %p79 = scmp.eq.s32.totalorder %s20, 1
      %p80 = scmp.ne.s32.totalorder %s75, %s77
      %p81 = scmp.eq.s32.totalorder %s20, 0
      %p82 = por %p80, %p81
      %p83 = scmp.ne.s32.totalorder %s75, %s77
      %p84 = scmp.eq.s32.totalorder %s25, 1
      %p85 = por %p83, %p84
      %p86 = scmp.ne.s32.totalorder %s77, %s78
      %p87 = scmp.eq.s32.totalorder %s25, 0
      %p88 = por %p86, %p87
      %p89 = scmp.ne.s32.totalorder %s77, %s78
      %p90 = scmp.eq.s32.totalorder %s26, 1
      %p91 = por %p89, %p90
      %p93 = scmp.ne.s32.totalorder %s78, %s92
      %p94 = scmp.eq.s32.totalorder %s26, 0
      %p95 = por %p93, %p94
      %s97 = sadd.s32 %s96, 1
      %p100 = scmp.eq.s32.totalorder %s20, 1
      %p101 = scmp.ne.s32.totalorder %s96, %s98
      %p102 = scmp.eq.s32.totalorder %s20, 0
      %p103 = por %p101, %p102
      %p104 = scmp.ne.s32.totalorder %s96, %s98
      %p105 = scmp.eq.s32.totalorder %s25, 1
      %p106 = por %p104, %p105
      %p107 = scmp.ne.s32.totalorder %s98, %s99
      %p108 = scmp.eq.s32.totalorder %s25, 0
      %p109 = por %p107, %p108
      %p110 = scmp.ne.s32.totalorder %s98, %s99
      %p111 = scmp.eq.s32.totalorder %s26, 1
      %p112 = por %p110, %p111
      %p114 = scmp.ne.s32.totalorder %s99, %s113
      %p115 = scmp.eq.s32.totalorder %s26, 0
      %p116 = por %p114, %p115
      %s118 = sadd.s32 %s117, 1
      %p121 = scmp.eq.s32.totalorder %s20, 1
      %p122 = scmp.ne.s32.totalorder %s117, %s119
      %p123 = scmp.eq.s32.totalorder %s20, 0
      %p124 = por %p122, %p123
      %p125 = scmp.ne.s32.totalorder %s117, %s119
      %p126 = scmp.eq.s32.totalorder %s25, 1
      %p127 = por %p125, %p126
      %p128 = scmp.ne.s32.totalorder %s119, %s120
      %p129 = scmp.eq.s32.totalorder %s25, 0
      %p130 = por %p128, %p129
      %p131 = scmp.ne.s32.totalorder %s119, %s120
      %p132 = scmp.eq.s32.totalorder %s26, 1
      %p133 = por %p131, %p132
      %p135 = scmp.ne.s32.totalorder %s120, %s134
      %p136 = scmp.eq.s32.totalorder %s26, 0
      %p137 = por %p135, %p136
      %s139 = sadd.s32 %s138, 1
      %p142 = scmp.eq.s32.totalorder %s20, 1
      %p143 = scmp.ne.s32.totalorder %s138, %s140
      %p144 = scmp.eq.s32.totalorder %s20, 0
      %p145 = por %p143, %p144
      %p146 = scmp.ne.s32.totalorder %s138, %s140
      %p147 = scmp.eq.s32.totalorder %s25, 1
      %p148 = por %p146, %p147
      %p149 = scmp.ne.s32.totalorder %s140, %s141
      %p150 = scmp.eq.s32.totalorder %s25, 0
      %p151 = por %p149, %p150
      %p152 = scmp.ne.s32.totalorder %s140, %s141
      %p153 = scmp.eq.s32.totalorder %s26, 1
      %p154 = por %p152, %p153
      %p156 = scmp.ne.s32.totalorder %s141, %s155
      %p157 = scmp.eq.s32.totalorder %s26, 0
      %p158 = por %p156, %p157
      %s160 = sadd.s32 %s159, 1
      %p163 = scmp.eq.s32.totalorder %s20, 1
      %p164 = scmp.ne.s32.totalorder %s159, %s161
      %p165 = scmp.eq.s32.totalorder %s20, 0
      %p166 = por %p164, %p165
      %p167 = scmp.ne.s32.totalorder %s159, %s161
      %p168 = scmp.eq.s32.totalorder %s25, 1
      %p169 = por %p167, %p168
      %p170 = scmp.ne.s32.totalorder %s161, %s162
      %p171 = scmp.eq.s32.totalorder %s25, 0
      %p172 = por %p170, %p171
      %p173 = scmp.ne.s32.totalorder %s161, %s162
      %p174 = scmp.eq.s32.totalorder %s26, 1
      %p175 = por %p173, %p174
      %p177 = scmp.ne.s32.totalorder %s162, %s176
      %p178 = scmp.eq.s32.totalorder %s26, 0
      %p179 = por %p177, %p178
      %s181 = sadd.s32 %s180, 1
      %p184 = scmp.eq.s32.totalorder %s20, 1
      %p185 = scmp.ne.s32.totalorder %s180, %s182
      %p186 = scmp.eq.s32.totalorder %s20, 0
      %p187 = por %p185, %p186
      %p188 = scmp.ne.s32.totalorder %s180, %s182
      %p189 = scmp.eq.s32.totalorder %s25, 1
      %p190 = por %p188, %p189
      %p191 = scmp.ne.s32.totalorder %s182, %s183
      %p192 = scmp.eq.s32.totalorder %s25, 0
      %p193 = por %p191, %p192
      %p194 = scmp.ne.s32.totalorder %s182, %s183
      %p195 = scmp.eq.s32.totalorder %s26, 1
      %p196 = por %p194, %p195
      %p198 = scmp.ne.s32.totalorder %s183, %s197
      %p199 = scmp.eq.s32.totalorder %s26, 0
      %p200 = por %p198, %p199
      %s202 = sadd.s32 %s201, 1
      %p205 = scmp.eq.s32.totalorder %s20, 1
      %p206 = scmp.ne.s32.totalorder %s201, %s203
      %p207 = scmp.eq.s32.totalorder %s20, 0
      %p208 = por %p206, %p207
      %p209 = scmp.ne.s32.totalorder %s201, %s203
      %p210 = scmp.eq.s32.totalorder %s25, 1
      %p211 = por %p209, %p210
      %p212 = scmp.ne.s32.totalorder %s203, %s204
      %p213 = scmp.eq.s32.totalorder %s25, 0
      %p214 = por %p212, %p213
      %p215 = scmp.ne.s32.totalorder %s203, %s204
      %p216 = scmp.eq.s32.totalorder %s26, 1
      %p217 = por %p215, %p216
      %p219 = scmp.ne.s32.totalorder %s204, %s218
      %p220 = scmp.eq.s32.totalorder %s26, 0
      %p221 = por %p219, %p220
      %s223 = sadd.s32 %s222, 1
      %p226 = scmp.eq.s32.totalorder %s20, 1
      %p227 = scmp.ne.s32.totalorder %s222, %s224
      %p228 = scmp.eq.s32.totalorder %s20, 0
      %p229 = por %p227, %p228
      %p230 = scmp.ne.s32.totalorder %s222, %s224
      %p231 = scmp.eq.s32.totalorder %s25, 1
      %p232 = por %p230, %p231
      %p233 = scmp.ne.s32.totalorder %s224, %s225
      %p234 = scmp.eq.s32.totalorder %s25, 0
      %p235 = por %p233, %p234
      %p236 = scmp.ne.s32.totalorder %s224, %s225
      %p237 = scmp.eq.s32.totalorder %s26, 1
      %p238 = por %p236, %p237
      %p240 = scmp.ne.s32.totalorder %s225, %s239
      %p241 = scmp.eq.s32.totalorder %s26, 0
      %p242 = por %p240, %p241
      %s244 = sadd.s32 %s243, 1
      %p247 = scmp.eq.s32.totalorder %s20, 1
      %p248 = scmp.ne.s32.totalorder %s243, %s245
      %p249 = scmp.eq.s32.totalorder %s20, 0
      %p250 = por %p248, %p249
      %p251 = scmp.ne.s32.totalorder %s243, %s245
      %p252 = scmp.eq.s32.totalorder %s25, 1
      %p253 = por %p251, %p252
      %p254 = scmp.ne.s32.totalorder %s245, %s246
      %p255 = scmp.eq.s32.totalorder %s25, 0
      %p256 = por %p254, %p255
      %p257 = scmp.ne.s32.totalorder %s245, %s246
      %p258 = scmp.eq.s32.totalorder %s26, 1
      %p259 = por %p257, %p258
      %p261 = scmp.ne.s32.totalorder %s246, %s260
      %p262 = scmp.eq.s32.totalorder %s26, 0
      %p263 = por %p261, %p262
      %s264 = ssub.s32 %s20, %s27
      %p265 = scmp.eq.s32.totalorder %s264, 0
      %s267 = sadd.s32 %s266, 1
      %s268 = scalar_select %p265, %s266, %s267
      %p271 = pneg %p265
      %p272 = scmp.eq.s32.totalorder %s20, 1
      %p273 = por %p271, %p272
      %p274 = scmp.ne.s32.totalorder %s266, %s269
      %p275 = scmp.eq.s32.totalorder %s20, 0
      %p276 = por %p274, %p275
      %p277 = scmp.ne.s32.totalorder %s266, %s269
      %p278 = scmp.eq.s32.totalorder %s25, 1
      %p279 = por %p277, %p278
      %p280 = scmp.ne.s32.totalorder %s269, %s270
      %p281 = scmp.eq.s32.totalorder %s25, 0
      %p282 = por %p280, %p281
      %p283 = scmp.ne.s32.totalorder %s269, %s270
      %p284 = scmp.eq.s32.totalorder %s26, 1
      %p285 = por %p283, %p284
      %p287 = scmp.ne.s32.totalorder %s270, %s286
      %p288 = scmp.eq.s32.totalorder %s26, 0
      %p289 = por %p287, %p288
      %p290 = scmp.le.s32.totalorder 1, %s20
      %p291 = scmp.lt.s32.totalorder %s20, 3
      %p292 = pnand %p290, %p291
      %p293 = pneg %p292
      // Predicated region
      $region9: #{sleep_transformer_forward.7} parent=5 // pred_check
        _
      $region10: #{sleep_transformer_forward.7} parent=5 // pred_check_branch
        %295 = sbr.rel (%p292) target = $region12
      $region11: #{sleep_transformer_forward.7} parent=5 // pred_region
        %s296 = ssub.s32 %s20, 1
        // Predicated region
        $region13: #{sleep_transformer_forward.7} parent=11 // pred_check
          %p297 = pneg %p67
        $region14: #{sleep_transformer_forward.7} parent=11 // pred_check_branch
          %299 = sbr.rel (%p297) target = $region16
        $region15: #{sleep_transformer_forward.7} parent=11 // pred_region
          %301 = vsyncadd [#allocation3], 0
          %s302 = sshll.u32 %s1, 4
          %s303 = int_to_ptr.hbm [resolvable:$true] %s302
          %s304 = sshll.u32 [#allocation2], 4
          %s305 = int_to_ptr.vmem [resolvable:$true] %s304
          %310 = dma.hbm_to_vmem [thread:$0]  %s303, 3072, %s305, [#allocation3], 192, 192, 12
        $region16: #{sleep_transformer_forward.7} parent=11 // pred_fallthru
          _
        // Predicated region
        $region17: #{sleep_transformer_forward.7} parent=11 // pred_check
          %p311 = pneg %p88
        $region18: #{sleep_transformer_forward.7} parent=11 // pred_check_branch
          %313 = sbr.rel (%p311) target = $region20
        $region19: #{sleep_transformer_forward.7} parent=11 // pred_region
          _
        $region20: #{sleep_transformer_forward.7} parent=11 // pred_fallthru
          _
        // Predicated region
        $region21: #{sleep_transformer_forward.7} parent=11 // pred_check
          %p314 = pneg %p109
        $region22: #{sleep_transformer_forward.7} parent=11 // pred_check_branch
          %316 = sbr.rel (%p314) target = $region24
        $region23: #{sleep_transformer_forward.7} parent=11 // pred_region
          %318 = vsyncadd [#allocation5], 0
          %s319 = sshll.u32 %s3, 4
          %s320 = int_to_ptr.hbm [resolvable:$true] %s319
          %s321 = sshll.u32 [#allocation4], 4
          %s322 = int_to_ptr.vmem [resolvable:$true] %s321
          %327 = dma.hbm_to_vmem [thread:$0]  %s320, 1024, %s322, [#allocation5], 64, 64, 4
        $region24: #{sleep_transformer_forward.7} parent=11 // pred_fallthru
          _
        // Predicated region
        $region25: #{sleep_transformer_forward.7} parent=11 // pred_check
          %p328 = pneg %p130
        $region26: #{sleep_transformer_forward.7} parent=11 // pred_check_branch
          %330 = sbr.rel (%p328) target = $region28
        $region27: #{sleep_transformer_forward.7} parent=11 // pred_region
          _
        $region28: #{sleep_transformer_forward.7} parent=11 // pred_fallthru
          _
        // Predicated region
        $region29: #{sleep_transformer_forward.7} parent=11 // pred_check
          %p331 = pneg %p151
        $region30: #{sleep_transformer_forward.7} parent=11 // pred_check_branch
          %333 = sbr.rel (%p331) target = $region32
        $region31: #{sleep_transformer_forward.7} parent=11 // pred_region
          _
        $region32: #{sleep_transformer_forward.7} parent=11 // pred_fallthru
          _
        // Predicated region
        $region33: #{sleep_transformer_forward.7} parent=11 // pred_check
          %p334 = pneg %p172
        $region34: #{sleep_transformer_forward.7} parent=11 // pred_check_branch
          %336 = sbr.rel (%p334) target = $region36
        $region35: #{sleep_transformer_forward.7} parent=11 // pred_region
          _
        $region36: #{sleep_transformer_forward.7} parent=11 // pred_fallthru
          _
        // Predicated region
        $region37: #{sleep_transformer_forward.7} parent=11 // pred_check
          %p337 = pneg %p193
        $region38: #{sleep_transformer_forward.7} parent=11 // pred_check_branch
          %339 = sbr.rel (%p337) target = $region40
        $region39: #{sleep_transformer_forward.7} parent=11 // pred_region
          %341 = vsyncadd [#allocation5], 0
          %s342 = sshll.u32 %s7, 4
          %s343 = int_to_ptr.hbm [resolvable:$true] %s342
          %s344 = sshll.u32 [#allocation6], 4
          %s345 = int_to_ptr.vmem [resolvable:$true] %s344
          %350 = dma.hbm_to_vmem [thread:$0]  %s343, 1024, %s345, [#allocation5], 64, 64, 4
        $region40: #{sleep_transformer_forward.7} parent=11 // pred_fallthru
          _
        // Predicated region
        $region41: #{sleep_transformer_forward.7} parent=11 // pred_check
          %p351 = pneg %p214
        $region42: #{sleep_transformer_forward.7} parent=11 // pred_check_branch
          %353 = sbr.rel (%p351) target = $region44
        $region43: #{sleep_transformer_forward.7} parent=11 // pred_region
          _
        $region44: #{sleep_transformer_forward.7} parent=11 // pred_fallthru
          _
        // Predicated region
        $region45: #{sleep_transformer_forward.7} parent=11 // pred_check
          %p354 = pneg %p235
        $region46: #{sleep_transformer_forward.7} parent=11 // pred_check_branch
          %356 = sbr.rel (%p354) target = $region48
        $region47: #{sleep_transformer_forward.7} parent=11 // pred_region
          %358 = vsyncadd [#allocation8], 0
          %s359 = sshll.u32 %s9, 4
          %s360 = int_to_ptr.hbm [resolvable:$true] %s359
          %s361 = sshll.u32 [#allocation7], 4
          %s362 = int_to_ptr.vmem [resolvable:$true] %s361
          %367 = dma.hbm_to_vmem [thread:$0]  %s360, 1024, %s362, [#allocation8], 64, 64, 4
        $region48: #{sleep_transformer_forward.7} parent=11 // pred_fallthru
          _
        // Predicated region
        $region49: #{sleep_transformer_forward.7} parent=11 // pred_check
          %p368 = pneg %p256
        $region50: #{sleep_transformer_forward.7} parent=11 // pred_check_branch
          %370 = sbr.rel (%p368) target = $region52
        $region51: #{sleep_transformer_forward.7} parent=11 // pred_region
          _
        $region52: #{sleep_transformer_forward.7} parent=11 // pred_fallthru
          _
      $region12: #{sleep_transformer_forward.7} parent=5 // pred_fallthru
        _
      %p371 = scmp.lt.s32.totalorder %s20, 2
      // Predicated region
      $region53: #{sleep_transformer_forward.7} parent=5 // pred_check
        %p372 = pneg %p371
      $region54: #{sleep_transformer_forward.7} parent=5 // pred_check_branch
        %374 = sbr.rel (%p372) target = $region56
      $region55: #{sleep_transformer_forward.7} parent=5 // pred_region
        // Predicated region
        $region57: #{sleep_transformer_forward.7} parent=55 // pred_check
          %p375 = pneg %p40
        $region58: #{sleep_transformer_forward.7} parent=55 // pred_check_branch
          %377 = sbr.rel (%p375) target = $region60
        $region59: #{sleep_transformer_forward.7} parent=55 // pred_region
          %p378 = scmp.lt.s32.totalorder %s20, 1
          %s379 = scalar_select %p378, %s20, 1
          %s380 = smul.addr %s379, 4
          %s381 = smul.addr %s380, 8
          %s382 = scalar_lea.vmem %s0, %s381
        $region60: #{sleep_transformer_forward.7} parent=55 // pred_fallthru
          _
      $region56: #{sleep_transformer_forward.7} parent=5 // pred_fallthru
        _
      %p383 = scmp.le.s32.totalorder 1, %s20
      %p384 = scmp.lt.s32.totalorder %s20, 3
      %p385 = pnand %p383, %p384
      %p386 = pneg %p385
      // Predicated region
      $region61: #{sleep_transformer_forward.7} parent=5 // pred_check
        _
      $region62: #{sleep_transformer_forward.7} parent=5 // pred_check_branch
        %388 = sbr.rel (%p385) target = $region64
      $region63: #{sleep_transformer_forward.7} parent=5 // pred_region
        %s389 = ssub.s32 %s20, 1
        // Predicated region
        $region65: #{sleep_transformer_forward.7} parent=63 // pred_check
          %p390 = pneg %p67
        $region66: #{sleep_transformer_forward.7} parent=63 // pred_check_branch
          %392 = sbr.rel (%p390) target = $region68
        $region67: #{sleep_transformer_forward.7} parent=63 // pred_region
          %394 = dma.done [#allocation3], 3072
        $region68: #{sleep_transformer_forward.7} parent=63 // pred_fallthru
          _
        // Predicated region
        $region69: #{sleep_transformer_forward.7} parent=63 // pred_check
          %p395 = pneg %p109
        $region70: #{sleep_transformer_forward.7} parent=63 // pred_check_branch
          %397 = sbr.rel (%p395) target = $region72
        $region71: #{sleep_transformer_forward.7} parent=63 // pred_region
          %399 = dma.done [#allocation5], 1024
        $region72: #{sleep_transformer_forward.7} parent=63 // pred_fallthru
          _
        // Predicated region
        $region73: #{sleep_transformer_forward.7} parent=63 // pred_check
          %p400 = pneg %p193
        $region74: #{sleep_transformer_forward.7} parent=63 // pred_check_branch
          %402 = sbr.rel (%p400) target = $region76
        $region75: #{sleep_transformer_forward.7} parent=63 // pred_region
          %404 = dma.done [#allocation5], 1024
        $region76: #{sleep_transformer_forward.7} parent=63 // pred_fallthru
          _
        // Predicated region
        $region77: #{sleep_transformer_forward.7} parent=63 // pred_check
          %p405 = pneg %p235
        $region78: #{sleep_transformer_forward.7} parent=63 // pred_check_branch
          %407 = sbr.rel (%p405) target = $region80
        $region79: #{sleep_transformer_forward.7} parent=63 // pred_region
          %409 = dma.done [#allocation8], 1024
        $region80: #{sleep_transformer_forward.7} parent=63 // pred_fallthru
          _
        %p410 = scmp.lt.s32.totalorder %s25, 1
        %s411 = scalar_select %p410, %s25, 1
        %s412 = smul.addr %s411, 4
        %s413 = smul.addr %s412, 8
        %s414 = scalar_lea.vmem %s0, %s413
        %p415 = pneg %p46
        %p416 = pneg %p43
        %p417 = pneg %p67
        %p418 = pneg %p64
        %p419 = pneg %p88
        %p420 = pneg %p85
        %p421 = pneg %p109
        %p422 = pneg %p106
        %p423 = pneg %p130
        %p424 = pneg %p127
        %p425 = pneg %p151
        %p426 = pneg %p148
        %p427 = pneg %p172
        %p428 = pneg %p169
        %p429 = pneg %p193
        %p430 = pneg %p190
        %p431 = pneg %p214
        %p432 = pneg %p211
        %p433 = pneg %p235
        %p434 = pneg %p232
        %p435 = pneg %p256
        %p436 = pneg %p253
        %p437 = pneg %p282
        %p438 = pneg %p279
        %p439 = scmp.lt.s32.totalorder %s25, 1
        %s440 = scalar_select %p439, %s25, 1
        %s441 = smul.addr %s440, 4
        %s442 = smul.addr %s441, 8
        %s443 = scalar_lea.vmem %s11, %s442
        %p444 = scmp.lt.s32.totalorder %s25, 1
        %s445 = scalar_select %p444, %s25, 1
        %s446 = smul.addr %s445, 4
        %s447 = smul.addr %s446, 8
        %s448 = scalar_lea.vmem %s0, %s447
        %p449 = scmp.lt.s32.totalorder %s25, 1
        %s450 = scalar_select %p449, %s25, 1
        %s451 = smul.addr %s450, 4
        %s452 = smul.addr %s451, 8
        %s453 = scalar_lea.vmem %s11, %s452
        %v455 = vld [vmem:[%s448] sm:$0xff]
        %v456 = vld [vmem:[%s448 + $0x8] sm:$0xff]
        %v457 = vld [vmem:[%s448 + $0x10] sm:$0xff]
        %v458 = vld [vmem:[%s448 + $0x18] sm:$0xff]
        %v459 = vpack.c.bf16 %v456, %v455
        %v460 = vpack.c.bf16 %v458, %v457
        %v461 = vld [vmem:[#allocation2] sm:$0xff]
        %v462 = vld [vmem:[#allocation2 + $0x8] sm:$0xf]
        %v463 = vld [vmem:[#allocation2 + $0xc] sm:$0xff]
        %v464 = vld [vmem:[#allocation2 + $0x14] sm:$0xf]
        %v465 = vld [vmem:[#allocation2 + $0x18] sm:$0xff]
        %v466 = vld [vmem:[#allocation2 + $0x20] sm:$0xf]
        %v467 = vld [vmem:[#allocation2 + $0x24] sm:$0xff]
        %v468 = vld [vmem:[#allocation2 + $0x2c] sm:$0xf]
        %v469 = vld [vmem:[#allocation2 + $0x30] sm:$0xff]
        %v470 = vld [vmem:[#allocation2 + $0x38] sm:$0xf]
        %v471 = vld [vmem:[#allocation2 + $0x3c] sm:$0xff]
        %v472 = vld [vmem:[#allocation2 + $0x44] sm:$0xf]
        %v473 = vld [vmem:[#allocation2 + $0x48] sm:$0xff]
        %v474 = vld [vmem:[#allocation2 + $0x50] sm:$0xf]
        %v475 = vld [vmem:[#allocation2 + $0x54] sm:$0xff]
        %v476 = vld [vmem:[#allocation2 + $0x5c] sm:$0xf]
        %v477 = vld [vmem:[#allocation2 + $0x60] sm:$0xff]
        %v478 = vld [vmem:[#allocation2 + $0x68] sm:$0xf]
        %v479 = vld [vmem:[#allocation2 + $0x6c] sm:$0xff]
        %v480 = vld [vmem:[#allocation2 + $0x74] sm:$0xf]
        %v481 = vld [vmem:[#allocation2 + $0x78] sm:$0xff]
        %v482 = vld [vmem:[#allocation2 + $0x80] sm:$0xf]
        %v483 = vld [vmem:[#allocation2 + $0x84] sm:$0xff]
        %v484 = vld [vmem:[#allocation2 + $0x8c] sm:$0xf]
        %v485 = vld [vmem:[#allocation2 + $0x90] sm:$0xff]
        %v486 = vld [vmem:[#allocation2 + $0x98] sm:$0xf]
        %v487 = vld [vmem:[#allocation2 + $0x9c] sm:$0xff]
        %v488 = vld [vmem:[#allocation2 + $0xa4] sm:$0xf]
        %v489 = vld [vmem:[#allocation2 + $0xa8] sm:$0xff]
        %v490 = vld [vmem:[#allocation2 + $0xb0] sm:$0xf]
        %v491 = vld [vmem:[#allocation2 + $0xb4] sm:$0xff]
        %v492 = vld [vmem:[#allocation2 + $0xbc] sm:$0xf]
        %v493 = vld [vmem:[%s2] sm:$0x7]
        %v495 = vperm.slane %v493, 0
        %v496 = vperm.slane %v493, 1
        %v497 = vperm.slane %v493, 2
        %v533 = vunpack.c.l.b16 %v461
        %v534 = vunpack.c.h.b16 %v461
        %v535 = vunpack.c.l.b16 %v462
        %v536 = vunpack.c.l.b16 %v463
        %v537 = vunpack.c.h.b16 %v463
        %v538 = vunpack.c.l.b16 %v464
        %v539 = vunpack.c.l.b16 %v465
        %v540 = vunpack.c.h.b16 %v465
        %v541 = vunpack.c.l.b16 %v466
        %v542 = vunpack.c.l.b16 %v467
        %v543 = vunpack.c.h.b16 %v467
        %v544 = vunpack.c.l.b16 %v468
        %v545 = vunpack.c.l.b16 %v469
        %v546 = vunpack.c.h.b16 %v469
        %v547 = vunpack.c.l.b16 %v470
        %v548 = vunpack.c.l.b16 %v471
        %v549 = vunpack.c.h.b16 %v471
        %v550 = vunpack.c.l.b16 %v472
        %v551 = vunpack.c.l.b16 %v473
        %v552 = vunpack.c.h.b16 %v473
        %v553 = vunpack.c.l.b16 %v474
        %v554 = vunpack.c.l.b16 %v475
        %v555 = vunpack.c.h.b16 %v475
        %v556 = vunpack.c.l.b16 %v476
        %v557 = vunpack.c.l.b16 %v477
        %v558 = vunpack.c.h.b16 %v477
        %v559 = vunpack.c.l.b16 %v478
        %v560 = vunpack.c.l.b16 %v479
        %v561 = vunpack.c.h.b16 %v479
        %v562 = vunpack.c.l.b16 %v480
        %v563 = vunpack.c.l.b16 %v481
        %v564 = vunpack.c.h.b16 %v481
        %v565 = vunpack.c.l.b16 %v482
        %v566 = vunpack.c.l.b16 %v483
        %v567 = vunpack.c.h.b16 %v483
        %v568 = vunpack.c.l.b16 %v484
        %v569 = vunpack.c.l.b16 %v485
        %v570 = vunpack.c.h.b16 %v485
        %v571 = vunpack.c.l.b16 %v486
        %v572 = vunpack.c.l.b16 %v487
        %v573 = vunpack.c.h.b16 %v487
        %v574 = vunpack.c.l.b16 %v488
        %v575 = vunpack.c.l.b16 %v489
        %v576 = vunpack.c.h.b16 %v489
        %v577 = vunpack.c.l.b16 %v490
        %v578 = vunpack.c.l.b16 %v491
        %v579 = vunpack.c.h.b16 %v491
        %v580 = vunpack.c.l.b16 %v492
        %v581 = vpack.c.b16 %v536, %v533
        %v582 = vpack.c.b16 %v537, %v534
        %v583 = vpack.c.b16 %v538, %v535
        %v584 = vpack.c.b16 %v542, %v539
        %v585 = vpack.c.b16 %v543, %v540
        %v586 = vpack.c.b16 %v544, %v541
        %v587 = vpack.c.b16 %v548, %v545
        %v588 = vpack.c.b16 %v549, %v546
        %v589 = vpack.c.b16 %v550, %v547
        %v590 = vpack.c.b16 %v554, %v551
        %v591 = vpack.c.b16 %v555, %v552
        %v592 = vpack.c.b16 %v556, %v553
        %v593 = vpack.c.b16 %v560, %v557
        %v594 = vpack.c.b16 %v561, %v558
        %v595 = vpack.c.b16 %v562, %v559
        %v596 = vpack.c.b16 %v566, %v563
        %v597 = vpack.c.b16 %v567, %v564
        %v598 = vpack.c.b16 %v568, %v565
        %v599 = vpack.c.b16 %v572, %v569
        %v600 = vpack.c.b16 %v573, %v570
        %v601 = vpack.c.b16 %v574, %v571
        %v602 = vpack.c.b16 %v578, %v575
        %v603 = vpack.c.b16 %v579, %v576
        %v604 = vpack.c.b16 %v580, %v577
        %629 = vmatpush.bf16.msra.mxu0 %v602
        %630 = vmatpush.bf16.msra.mxu0 %v599
        %631 = vmatpush.bf16.msra.mxu0 %v596
        %632 = vmatpush.bf16.msra.mxu0 %v593
        %633 = vmatpush.bf16.msra.mxu0 %v590
        %634 = vmatpush.bf16.msra.mxu0 %v587
        %635 = vmatpush.bf16.msra.mxu0 %v584
        %636 = vmatpush.bf16.msra.mxu0 %v581
        %637 = vmatmul.bf16.gmra.mxu0 %v459
        %v638 = vpop.f32.mrf.mxu0
        %v639 = vadd.f32 %v495, %v638
        %v640 = vpop.f32.mrf.mxu0
        %v641 = vadd.f32 %v495, %v640
        %642 = vmatmul.bf16.gmra.mxu0 %v460
        %v643 = vpop.f32.mrf.mxu0
        %v644 = vadd.f32 %v495, %v643
        %v645 = vpop.f32.mrf.mxu0
        %v646 = vadd.f32 %v495, %v645
        %647 = vdwg.mxu0
        %648 = vmatpush.bf16.msra.mxu0 %v603
        %649 = vmatpush.bf16.msra.mxu0 %v600
        %650 = vmatpush.bf16.msra.mxu0 %v597
        %651 = vmatpush.bf16.msra.mxu0 %v594
        %652 = vmatpush.bf16.msra.mxu0 %v591
        %653 = vmatpush.bf16.msra.mxu0 %v588
        %654 = vmatpush.bf16.msra.mxu0 %v585
        %655 = vmatpush.bf16.msra.mxu0 %v582
        %656 = vmatmul.bf16.gmra.mxu0 %v459
        %v657 = vpop.f32.mrf.mxu0
        %v658 = vadd.f32 %v496, %v657
        %v659 = vpop.f32.mrf.mxu0
        %v660 = vadd.f32 %v496, %v659
        %661 = vmatmul.bf16.gmra.mxu0 %v460
        %v662 = vpop.f32.mrf.mxu0
        %v663 = vadd.f32 %v496, %v662
        %v664 = vpop.f32.mrf.mxu0
        %v665 = vadd.f32 %v496, %v664
        %666 = vdwg.mxu0
        %667 = vmatpush.bf16.msra.mxu0 %v604
        %668 = vmatpush.bf16.msra.mxu0 %v601
        %669 = vmatpush.bf16.msra.mxu0 %v598
        %670 = vmatpush.bf16.msra.mxu0 %v595
        %671 = vmatpush.bf16.msra.mxu0 %v592
        %672 = vmatpush.bf16.msra.mxu0 %v589
        %673 = vmatpush.bf16.msra.mxu0 %v586
        %674 = vmatpush.bf16.msra.mxu0 %v583
        %675 = vmatmul.bf16.gmra.mxu0 %v459
        %v676 = vpop.f32.mrf.mxu0
        %v677 = vadd.f32 %v497, %v676
        %v678 = vpop.f32.mrf.mxu0
        %v679 = vadd.f32 %v497, %v678
        %680 = vmatmul.bf16.gmra.mxu0 %v460
        %v681 = vpop.f32.mrf.mxu0
        %v682 = vadd.f32 %v497, %v681
        %v683 = vpop.f32.mrf.mxu0
        %v684 = vadd.f32 %v497, %v683
        %685 = vdwg.mxu0
        %v686 = vld [vmem:[#allocation4] sm:$0xf]
        %v687 = vld [vmem:[#allocation4 + $0x4] sm:$0xf]
        %v688 = vld [vmem:[#allocation4 + $0x8] sm:$0xf]
        %v689 = vld [vmem:[#allocation4 + $0xc] sm:$0xf]
        %v690 = vld [vmem:[#allocation4 + $0x10] sm:$0xf]
        %v691 = vld [vmem:[#allocation4 + $0x14] sm:$0xf]
        %v692 = vld [vmem:[#allocation4 + $0x18] sm:$0xf]
        %v693 = vld [vmem:[#allocation4 + $0x1c] sm:$0xf]
        %v694 = vld [vmem:[#allocation4 + $0x20] sm:$0xf]
        %v695 = vld [vmem:[#allocation4 + $0x24] sm:$0xf]
        %v696 = vld [vmem:[#allocation4 + $0x28] sm:$0xf]
        %v697 = vld [vmem:[#allocation4 + $0x2c] sm:$0xf]
        %v698 = vld [vmem:[#allocation4 + $0x30] sm:$0xf]
        %v699 = vld [vmem:[#allocation4 + $0x34] sm:$0xf]
        %v700 = vld [vmem:[#allocation4 + $0x38] sm:$0xf]
        %v701 = vld [vmem:[#allocation4 + $0x3c] sm:$0xf]
        %v702 = vld [vmem:[%s4] sm:$0x1]
        %v704 = vperm.slane %v702, 0
        %v706 = vpack.c.bf16 %v641, %v639
        %v707 = vpack.c.bf16 %v646, %v644
        %v708 = vpack.c.bf16 %v660, %v658
        %v709 = vpack.c.bf16 %v665, %v663
        %v710 = vpack.c.bf16 %v679, %v677
        %v711 = vpack.c.bf16 %v684, %v682
        %vm712 = vcmask 261120
        %v714 = vsel %vm712, %v706, 0
        %v717 = vsel %vm712, %v707, 0
        %v720 = vsel %vm712, %v708, 0
        %v723 = vsel %vm712, %v709, 0
        %725 = vmatpush.bf16.xpose.msra.mxu0 0
        %726 = vmatpush.bf16.xpose.msra.mxu0 0
        %727 = vmatpush.bf16.xpose.msra.mxu0 0
        %728 = vmatpush.bf16.xpose.msra.mxu0 0
        %729 = vmatpush.bf16.xpose.msra.mxu0 0
        %730 = vmatpush.bf16.xpose.msra.mxu0 0
        %731 = vmatpush.bf16.xpose.msra.mxu0 %v723
        %732 = vmatpush.bf16.xpose.msra.mxu0 %v720
        %733 = vmatmul.bf16.gmra.mxu0 %v714
        %v734 = vpop.f32.mrf.mxu0
        %v735 = vadd.f32 0.0, %v734
        %v736 = vpop.f32.mrf.mxu0
        %v737 = vadd.f32 0.0, %v736
        %738 = vmatmul.bf16.gmra.mxu0 %v717
        %v739 = vpop.f32.mrf.mxu0
        %v740 = vadd.f32 0.0, %v739
        %v741 = vpop.f32.mrf.mxu0
        %v742 = vadd.f32 0.0, %v741
        %743 = vdwg.mxu0
        %v744 = vmul.f32 %v735, 0.17677669
        %v745 = vmul.f32 %v737, 0.17677669
        %v746 = vmul.f32 %v740, 0.17677669
        %v747 = vmul.f32 %v742, 0.17677669
        %v748 = vsel %vm712, %v744, -inf
        %749 = vmax.xlane.f32.xlu0 %v748
        %v750 = vpop.xlane.xlu0 %749
        %v751 = vsel %vm712, %v745, -inf
        %752 = vmax.xlane.f32.xlu0 %v751
        %v753 = vpop.xlane.xlu0 %752
        %v754 = vsel %vm712, %v746, -inf
        %755 = vmax.xlane.f32.xlu0 %v754
        %v756 = vpop.xlane.xlu0 %755
        %v757 = vsel %vm712, %v747, -inf
        %758 = vmax.xlane.f32.xlu0 %v757
        %v759 = vpop.xlane.xlu0 %758
        %v760 = vsub.f32 %v744, %v750
        %v761 = vsub.f32 %v745, %v753
        %v762 = vsub.f32 %v746, %v756
        %v763 = vsub.f32 %v747, %v759
        %v764 = vmul.f32 %v760, 1.442695
        %v765 = vpow.pop %v764
        %v766 = vmul.f32 %v761, 1.442695
        %v767 = vpow.pop %v766
        %v768 = vmul.f32 %v762, 1.442695
        %v769 = vpow.pop %v768
        %v770 = vmul.f32 %v763, 1.442695
        %v771 = vpow.pop %v770
        %v772 = vsel %vm712, %v765, 0.0
        %773 = vadd.xlane.f32.xlu0 %v772
        %v774 = vpop.xlane.xlu0 %773
        %v775 = vsel %vm712, %v767, 0.0
        %776 = vadd.xlane.f32.xlu0 %v775
        %v777 = vpop.xlane.xlu0 %776
        %v778 = vsel %vm712, %v769, 0.0
        %779 = vadd.xlane.f32.xlu0 %v778
        %v780 = vpop.xlane.xlu0 %779
        %v781 = vsel %vm712, %v771, 0.0
        %782 = vadd.xlane.f32.xlu0 %v781
        %v783 = vpop.xlane.xlu0 %782
        %v784 = vrcp.pop %v774
        %v785 = vmul.f32 %v774, %v784
        %v786 = vsub.f32 1.0, %v785
        %v787 = vmul.f32 %v784, %v786
        %v788 = vadd.f32 %v784, %v787
        %vm789 = vweird.f32 %v774
        %vm790 = vweird.f32 %v784
        %vm791 = vmor %vm789, %vm790
        %v792 = vsel %vm791, %v784, %v788
        %v793 = vand.u32 2147483647, %v774
        %vm794 = vcmp.eq.f32.partialorder %v793, 8.507059e+37
        %v795 = vand.u32 %v774, 2147483648
        %v796 = vor.u32 1.1754944e-38, %v795
        %v797 = vsel %vm794, %v796, %v792
        %v798 = vmul.f32 %v765, %v797
        %v799 = vrcp.pop %v777
        %v800 = vmul.f32 %v777, %v799
        %v801 = vsub.f32 1.0, %v800
        %v802 = vmul.f32 %v799, %v801
        %v803 = vadd.f32 %v799, %v802
        %vm804 = vweird.f32 %v777
        %vm805 = vweird.f32 %v799
        %vm806 = vmor %vm804, %vm805
        %v807 = vsel %vm806, %v799, %v803
        %v808 = vand.u32 2147483647, %v777
        %vm809 = vcmp.eq.f32.partialorder %v808, 8.507059e+37
        %v810 = vand.u32 %v777, 2147483648
        %v811 = vor.u32 1.1754944e-38, %v810
        %v812 = vsel %vm809, %v811, %v807
        %v813 = vmul.f32 %v767, %v812
        %v814 = vrcp.pop %v780
        %v815 = vmul.f32 %v780, %v814
        %v816 = vsub.f32 1.0, %v815
        %v817 = vmul.f32 %v814, %v816
        %v818 = vadd.f32 %v814, %v817
        %vm819 = vweird.f32 %v780
        %vm820 = vweird.f32 %v814
        %vm821 = vmor %vm819, %vm820
        %v822 = vsel %vm821, %v814, %v818
        %v823 = vand.u32 2147483647, %v780
        %vm824 = vcmp.eq.f32.partialorder %v823, 8.507059e+37
        %v825 = vand.u32 %v780, 2147483648
        %v826 = vor.u32 1.1754944e-38, %v825
        %v827 = vsel %vm824, %v826, %v822
        %v828 = vmul.f32 %v769, %v827
        %v829 = vrcp.pop %v783
        %v830 = vmul.f32 %v783, %v829
        %v831 = vsub.f32 1.0, %v830
        %v832 = vmul.f32 %v829, %v831
        %v833 = vadd.f32 %v829, %v832
        %vm834 = vweird.f32 %v783
        %vm835 = vweird.f32 %v829
        %vm836 = vmor %vm834, %vm835
        %v837 = vsel %vm836, %v829, %v833
        %v838 = vand.u32 2147483647, %v783
        %vm839 = vcmp.eq.f32.partialorder %v838, 8.507059e+37
        %v840 = vand.u32 %v783, 2147483648
        %v841 = vor.u32 1.1754944e-38, %v840
        %v842 = vsel %vm839, %v841, %v837
        %v843 = vmul.f32 %v771, %v842
        %v844 = vpack.c.bf16 %v813, %v798
        %v845 = vpack.c.bf16 %v843, %v828
        %v847 = vsel %vm712, %v844, 0
        %v850 = vsel %vm712, %v845, 0
        %852 = vmatpush.bf16.msra.mxu0 0
        %853 = vmatpush.bf16.msra.mxu0 0
        %854 = vmatpush.bf16.msra.mxu0 0
        %855 = vmatpush.bf16.msra.mxu0 0
        %856 = vmatpush.bf16.msra.mxu0 0
        %857 = vmatpush.bf16.msra.mxu0 0
        %858 = vmatpush.bf16.msra.mxu0 %v711
        %859 = vmatpush.bf16.msra.mxu0 %v710
        %860 = vmatmul.bf16.gmra.mxu0 %v847
        %v861 = vpop.f32.mrf.mxu0
        %v862 = vadd.f32 0.0, %v861
        %v863 = vpop.f32.mrf.mxu0
        %v864 = vadd.f32 0.0, %v863
        %865 = vmatmul.bf16.gmra.mxu0 %v850
        %v866 = vpop.f32.mrf.mxu0
        %v867 = vadd.f32 0.0, %v866
        %v868 = vpop.f32.mrf.mxu0
        %v869 = vadd.f32 0.0, %v868
        %870 = vdwg.mxu0
        %v871 = vpack.c.bf16 %v864, %v862
        %v872 = vpack.c.bf16 %v869, %v867
        %v877 = vunpack.c.l.b16 %v686
        %v878 = vunpack.c.l.b16 %v687
        %v879 = vunpack.c.l.b16 %v688
        %v880 = vunpack.c.l.b16 %v689
        %v881 = vpack.c.b16 %v878, %v877
        %v882 = vpack.c.b16 %v880, %v879
        %v886 = vsel %vm712, %v871, 0
        %v889 = vsel %vm712, %v872, 0
        %891 = vmatpush.bf16.msra.mxu0 0
        %892 = vmatpush.bf16.msra.mxu0 0
        %893 = vmatpush.bf16.msra.mxu0 0
        %894 = vmatpush.bf16.msra.mxu0 0
        %895 = vmatpush.bf16.msra.mxu0 0
        %896 = vmatpush.bf16.msra.mxu0 0
        %897 = vmatpush.bf16.msra.mxu0 %v882
        %898 = vmatpush.bf16.msra.mxu0 %v881
        %899 = vmatmul.bf16.gmra.mxu0 %v886
        %v900 = vpop.f32.mrf.mxu0
        %v901 = vadd.f32 0.0, %v900
        %v902 = vpop.f32.mrf.mxu0
        %v903 = vadd.f32 0.0, %v902
        %904 = vmatmul.bf16.gmra.mxu0 %v889
        %v905 = vpop.f32.mrf.mxu0
        %v906 = vadd.f32 0.0, %v905
        %v907 = vpop.f32.mrf.mxu0
        %v908 = vadd.f32 0.0, %v907
        %909 = vdwg.mxu0
        %v910 = vadd.f32 %v704, %v901
        %v911 = vadd.f32 %v704, %v903
        %v912 = vadd.f32 %v704, %v906
        %v913 = vadd.f32 %v704, %v908
        %916 = vrot.lane.b32.xlu0 %v706, 96
        %v917 = vpop.permute.xlu0 %916
        %918 = vrot.lane.b32.xlu0 %v707, 96
        %v919 = vpop.permute.xlu0 %918
        %922 = vrot.lane.b32.xlu0 %v708, 96
        %v923 = vpop.permute.xlu0 %922
        %924 = vrot.lane.b32.xlu0 %v709, 96
        %v925 = vpop.permute.xlu0 %924
        %v927 = vsel %vm712, %v917, 0
        %v930 = vsel %vm712, %v919, 0
        %v933 = vsel %vm712, %v923, 0
        %v936 = vsel %vm712, %v925, 0
        %938 = vmatpush.bf16.xpose.msra.mxu0 0
        %939 = vmatpush.bf16.xpose.msra.mxu0 0
        %940 = vmatpush.bf16.xpose.msra.mxu0 0
        %941 = vmatpush.bf16.xpose.msra.mxu0 0
        %942 = vmatpush.bf16.xpose.msra.mxu0 0
        %943 = vmatpush.bf16.xpose.msra.mxu0 0
        %944 = vmatpush.bf16.xpose.msra.mxu0 %v936
        %945 = vmatpush.bf16.xpose.msra.mxu0 %v933
        %946 = vmatmul.bf16.gmra.mxu0 %v927
        %v947 = vpop.f32.mrf.mxu0
        %v948 = vadd.f32 0.0, %v947
        %v949 = vpop.f32.mrf.mxu0
        %v950 = vadd.f32 0.0, %v949
        %951 = vmatmul.bf16.gmra.mxu0 %v930
        %v952 = vpop.f32.mrf.mxu0
        %v953 = vadd.f32 0.0, %v952
        %v954 = vpop.f32.mrf.mxu0
        %v955 = vadd.f32 0.0, %v954
        %956 = vdwg.mxu0
        %v957 = vmul.f32 %v948, 0.17677669
        %v958 = vmul.f32 %v950, 0.17677669
        %v959 = vmul.f32 %v953, 0.17677669
        %v960 = vmul.f32 %v955, 0.17677669
        %v961 = vsel %vm712, %v957, -inf
        %962 = vmax.xlane.f32.xlu0 %v961
        %v963 = vpop.xlane.xlu0 %962
        %v964 = vsel %vm712, %v958, -inf
        %965 = vmax.xlane.f32.xlu0 %v964
        %v966 = vpop.xlane.xlu0 %965
        %v967 = vsel %vm712, %v959, -inf
        %968 = vmax.xlane.f32.xlu0 %v967
        %v969 = vpop.xlane.xlu0 %968
        %v970 = vsel %vm712, %v960, -inf
        %971 = vmax.xlane.f32.xlu0 %v970
        %v972 = vpop.xlane.xlu0 %971
        %v973 = vsub.f32 %v957, %v963
        %v974 = vsub.f32 %v958, %v966
        %v975 = vsub.f32 %v959, %v969
        %v976 = vsub.f32 %v960, %v972
        %v977 = vmul.f32 %v973, 1.442695
        %v978 = vpow.pop %v977
        %v979 = vmul.f32 %v974, 1.442695
        %v980 = vpow.pop %v979
        %v981 = vmul.f32 %v975, 1.442695
        %v982 = vpow.pop %v981
        %v983 = vmul.f32 %v976, 1.442695
        %v984 = vpow.pop %v983
        %v985 = vsel %vm712, %v978, 0.0
        %986 = vadd.xlane.f32.xlu0 %v985
        %v987 = vpop.xlane.xlu0 %986
        %v988 = vsel %vm712, %v980, 0.0
        %989 = vadd.xlane.f32.xlu0 %v988
        %v990 = vpop.xlane.xlu0 %989
        %v991 = vsel %vm712, %v982, 0.0
        %992 = vadd.xlane.f32.xlu0 %v991
        %v993 = vpop.xlane.xlu0 %992
        %v994 = vsel %vm712, %v984, 0.0
        %995 = vadd.xlane.f32.xlu0 %v994
        %v996 = vpop.xlane.xlu0 %995
        %v997 = vrcp.pop %v987
        %v998 = vmul.f32 %v987, %v997
        %v999 = vsub.f32 1.0, %v998
        %v1000 = vmul.f32 %v997, %v999
        %v1001 = vadd.f32 %v997, %v1000
        %vm1002 = vweird.f32 %v987
        %vm1003 = vweird.f32 %v997
        %vm1004 = vmor %vm1002, %vm1003
        %v1005 = vsel %vm1004, %v997, %v1001
        %v1006 = vand.u32 2147483647, %v987
        %vm1007 = vcmp.eq.f32.partialorder %v1006, 8.507059e+37
        %v1008 = vand.u32 %v987, 2147483648
        %v1009 = vor.u32 1.1754944e-38, %v1008
        %v1010 = vsel %vm1007, %v1009, %v1005
        %v1011 = vmul.f32 %v978, %v1010
        %v1012 = vrcp.pop %v990
        %v1013 = vmul.f32 %v990, %v1012
        %v1014 = vsub.f32 1.0, %v1013
        %v1015 = vmul.f32 %v1012, %v1014
        %v1016 = vadd.f32 %v1012, %v1015
        %vm1017 = vweird.f32 %v990
        %vm1018 = vweird.f32 %v1012
        %vm1019 = vmor %vm1017, %vm1018
        %v1020 = vsel %vm1019, %v1012, %v1016
        %v1021 = vand.u32 2147483647, %v990
        %vm1022 = vcmp.eq.f32.partialorder %v1021, 8.507059e+37
        %v1023 = vand.u32 %v990, 2147483648
        %v1024 = vor.u32 1.1754944e-38, %v1023
        %v1025 = vsel %vm1022, %v1024, %v1020
        %v1026 = vmul.f32 %v980, %v1025
        %v1027 = vrcp.pop %v993
        %v1028 = vmul.f32 %v993, %v1027
        %v1029 = vsub.f32 1.0, %v1028
        %v1030 = vmul.f32 %v1027, %v1029
        %v1031 = vadd.f32 %v1027, %v1030
        %vm1032 = vweird.f32 %v993
        %vm1033 = vweird.f32 %v1027
        %vm1034 = vmor %vm1032, %vm1033
        %v1035 = vsel %vm1034, %v1027, %v1031
        %v1036 = vand.u32 2147483647, %v993
        %vm1037 = vcmp.eq.f32.partialorder %v1036, 8.507059e+37
        %v1038 = vand.u32 %v993, 2147483648
        %v1039 = vor.u32 1.1754944e-38, %v1038
        %v1040 = vsel %vm1037, %v1039, %v1035
        %v1041 = vmul.f32 %v982, %v1040
        %v1042 = vrcp.pop %v996
        %v1043 = vmul.f32 %v996, %v1042
        %v1044 = vsub.f32 1.0, %v1043
        %v1045 = vmul.f32 %v1042, %v1044
        %v1046 = vadd.f32 %v1042, %v1045
        %vm1047 = vweird.f32 %v996
        %vm1048 = vweird.f32 %v1042
        %vm1049 = vmor %vm1047, %vm1048
        %v1050 = vsel %vm1049, %v1042, %v1046
        %v1051 = vand.u32 2147483647, %v996
        %vm1052 = vcmp.eq.f32.partialorder %v1051, 8.507059e+37
        %v1053 = vand.u32 %v996, 2147483648
        %v1054 = vor.u32 1.1754944e-38, %v1053
        %v1055 = vsel %vm1052, %v1054, %v1050
        %v1056 = vmul.f32 %v984, %v1055
        %v1057 = vpack.c.bf16 %v1026, %v1011
        %v1058 = vpack.c.bf16 %v1056, %v1041
        %1061 = vrot.lane.b32.xlu0 %v710, 96
        %v1062 = vpop.permute.xlu0 %1061
        %1063 = vrot.lane.b32.xlu0 %v711, 96
        %v1064 = vpop.permute.xlu0 %1063
        %v1068 = vsel %vm712, %v1057, 0
        %v1071 = vsel %vm712, %v1058, 0
        %1073 = vmatpush.bf16.msra.mxu0 0
        %1074 = vmatpush.bf16.msra.mxu0 0
        %1075 = vmatpush.bf16.msra.mxu0 0
        %1076 = vmatpush.bf16.msra.mxu0 0
        %1077 = vmatpush.bf16.msra.mxu0 0
        %1078 = vmatpush.bf16.msra.mxu0 0
        %1079 = vmatpush.bf16.msra.mxu0 %v1064
        %1080 = vmatpush.bf16.msra.mxu0 %v1062
        %1081 = vmatmul.bf16.gmra.mxu0 %v1068
        %v1082 = vpop.f32.mrf.mxu0
        %v1083 = vadd.f32 0.0, %v1082
        %v1084 = vpop.f32.mrf.mxu0
        %v1085 = vadd.f32 0.0, %v1084
        %1086 = vmatmul.bf16.gmra.mxu0 %v1071
        %v1087 = vpop.f32.mrf.mxu0
        %v1088 = vadd.f32 0.0, %v1087
        %v1089 = vpop.f32.mrf.mxu0
        %v1090 = vadd.f32 0.0, %v1089
        %1091 = vdwg.mxu0
        %v1092 = vpack.c.bf16 %v1085, %v1083
        %v1093 = vpack.c.bf16 %v1090, %v1088
        %v1098 = vunpack.c.l.b16 %v690
        %v1099 = vunpack.c.l.b16 %v691
        %v1100 = vunpack.c.l.b16 %v692
        %v1101 = vunpack.c.l.b16 %v693
        %v1102 = vpack.c.b16 %v1099, %v1098
        %v1103 = vpack.c.b16 %v1101, %v1100
        %v1107 = vsel %vm712, %v1092, 0
        %v1110 = vsel %vm712, %v1093, 0
        %1112 = vmatpush.bf16.msra.mxu0 0
        %1113 = vmatpush.bf16.msra.mxu0 0
        %1114 = vmatpush.bf16.msra.mxu0 0
        %1115 = vmatpush.bf16.msra.mxu0 0
        %1116 = vmatpush.bf16.msra.mxu0 0
        %1117 = vmatpush.bf16.msra.mxu0 0
        %1118 = vmatpush.bf16.msra.mxu0 %v1103
        %1119 = vmatpush.bf16.msra.mxu0 %v1102
        %1120 = vmatmul.bf16.gmra.mxu0 %v1107
        %v1121 = vpop.f32.mrf.mxu0
        %v1122 = vadd.f32 0.0, %v1121
        %v1123 = vpop.f32.mrf.mxu0
        %v1124 = vadd.f32 0.0, %v1123
        %1125 = vmatmul.bf16.gmra.mxu0 %v1110
        %v1126 = vpop.f32.mrf.mxu0
        %v1127 = vadd.f32 0.0, %v1126
        %v1128 = vpop.f32.mrf.mxu0
        %v1129 = vadd.f32 0.0, %v1128
        %1130 = vdwg.mxu0
        %v1131 = vadd.f32 %v910, %v1122
        %v1132 = vadd.f32 %v911, %v1124
        %v1133 = vadd.f32 %v912, %v1127
        %v1134 = vadd.f32 %v913, %v1129
        %1135 = vrot.lane.b32.xlu0 %v706, 64
        %v1136 = vpop.permute.xlu0 %1135
        %1137 = vrot.lane.b32.xlu0 %v707, 64
        %v1138 = vpop.permute.xlu0 %1137
        %1139 = vrot.lane.b32.xlu0 %v708, 64
        %v1140 = vpop.permute.xlu0 %1139
        %1141 = vrot.lane.b32.xlu0 %v709, 64
        %v1142 = vpop.permute.xlu0 %1141
        %v1144 = vsel %vm712, %v1136, 0
        %v1147 = vsel %vm712, %v1138, 0
        %v1150 = vsel %vm712, %v1140, 0
        %v1153 = vsel %vm712, %v1142, 0
        %1155 = vmatpush.bf16.xpose.msra.mxu0 0
        %1156 = vmatpush.bf16.xpose.msra.mxu0 0
        %1157 = vmatpush.bf16.xpose.msra.mxu0 0
        %1158 = vmatpush.bf16.xpose.msra.mxu0 0
        %1159 = vmatpush.bf16.xpose.msra.mxu0 0
        %1160 = vmatpush.bf16.xpose.msra.mxu0 0
        %1161 = vmatpush.bf16.xpose.msra.mxu0 %v1153
        %1162 = vmatpush.bf16.xpose.msra.mxu0 %v1150
        %1163 = vmatmul.bf16.gmra.mxu0 %v1144
        %v1164 = vpop.f32.mrf.mxu0
        %v1165 = vadd.f32 0.0, %v1164
        %v1166 = vpop.f32.mrf.mxu0
        %v1167 = vadd.f32 0.0, %v1166
        %1168 = vmatmul.bf16.gmra.mxu0 %v1147
        %v1169 = vpop.f32.mrf.mxu0
        %v1170 = vadd.f32 0.0, %v1169
        %v1171 = vpop.f32.mrf.mxu0
        %v1172 = vadd.f32 0.0, %v1171
        %1173 = vdwg.mxu0
        %v1174 = vmul.f32 %v1165, 0.17677669
        %v1175 = vmul.f32 %v1167, 0.17677669
        %v1176 = vmul.f32 %v1170, 0.17677669
        %v1177 = vmul.f32 %v1172, 0.17677669
        %v1178 = vsel %vm712, %v1174, -inf
        %1179 = vmax.xlane.f32.xlu0 %v1178
        %v1180 = vpop.xlane.xlu0 %1179
        %v1181 = vsel %vm712, %v1175, -inf
        %1182 = vmax.xlane.f32.xlu0 %v1181
        %v1183 = vpop.xlane.xlu0 %1182
        %v1184 = vsel %vm712, %v1176, -inf
        %1185 = vmax.xlane.f32.xlu0 %v1184
        %v1186 = vpop.xlane.xlu0 %1185
        %v1187 = vsel %vm712, %v1177, -inf
        %1188 = vmax.xlane.f32.xlu0 %v1187
        %v1189 = vpop.xlane.xlu0 %1188
        %v1190 = vsub.f32 %v1174, %v1180
        %v1191 = vsub.f32 %v1175, %v1183
        %v1192 = vsub.f32 %v1176, %v1186
        %v1193 = vsub.f32 %v1177, %v1189
        %v1194 = vmul.f32 %v1190, 1.442695
        %v1195 = vpow.pop %v1194
        %v1196 = vmul.f32 %v1191, 1.442695
        %v1197 = vpow.pop %v1196
        %v1198 = vmul.f32 %v1192, 1.442695
        %v1199 = vpow.pop %v1198
        %v1200 = vmul.f32 %v1193, 1.442695
        %v1201 = vpow.pop %v1200
        %v1202 = vsel %vm712, %v1195, 0.0
        %1203 = vadd.xlane.f32.xlu0 %v1202
        %v1204 = vpop.xlane.xlu0 %1203
        %v1205 = vsel %vm712, %v1197, 0.0
        %1206 = vadd.xlane.f32.xlu0 %v1205
        %v1207 = vpop.xlane.xlu0 %1206
        %v1208 = vsel %vm712, %v1199, 0.0
        %1209 = vadd.xlane.f32.xlu0 %v1208
        %v1210 = vpop.xlane.xlu0 %1209
        %v1211 = vsel %vm712, %v1201, 0.0
        %1212 = vadd.xlane.f32.xlu0 %v1211
        %v1213 = vpop.xlane.xlu0 %1212
        %v1214 = vrcp.pop %v1204
        %v1215 = vmul.f32 %v1204, %v1214
        %v1216 = vsub.f32 1.0, %v1215
        %v1217 = vmul.f32 %v1214, %v1216
        %v1218 = vadd.f32 %v1214, %v1217
        %vm1219 = vweird.f32 %v1204
        %vm1220 = vweird.f32 %v1214
        %vm1221 = vmor %vm1219, %vm1220
        %v1222 = vsel %vm1221, %v1214, %v1218
        %v1223 = vand.u32 2147483647, %v1204
        %vm1224 = vcmp.eq.f32.partialorder %v1223, 8.507059e+37
        %v1225 = vand.u32 %v1204, 2147483648
        %v1226 = vor.u32 1.1754944e-38, %v1225
        %v1227 = vsel %vm1224, %v1226, %v1222
        %v1228 = vmul.f32 %v1195, %v1227
        %v1229 = vrcp.pop %v1207
        %v1230 = vmul.f32 %v1207, %v1229
        %v1231 = vsub.f32 1.0, %v1230
        %v1232 = vmul.f32 %v1229, %v1231
        %v1233 = vadd.f32 %v1229, %v1232
        %vm1234 = vweird.f32 %v1207
        %vm1235 = vweird.f32 %v1229
        %vm1236 = vmor %vm1234, %vm1235
        %v1237 = vsel %vm1236, %v1229, %v1233
        %v1238 = vand.u32 2147483647, %v1207
        %vm1239 = vcmp.eq.f32.partialorder %v1238, 8.507059e+37
        %v1240 = vand.u32 %v1207, 2147483648
        %v1241 = vor.u32 1.1754944e-38, %v1240
        %v1242 = vsel %vm1239, %v1241, %v1237
        %v1243 = vmul.f32 %v1197, %v1242
        %v1244 = vrcp.pop %v1210
        %v1245 = vmul.f32 %v1210, %v1244
        %v1246 = vsub.f32 1.0, %v1245
        %v1247 = vmul.f32 %v1244, %v1246
        %v1248 = vadd.f32 %v1244, %v1247
        %vm1249 = vweird.f32 %v1210
        %vm1250 = vweird.f32 %v1244
        %vm1251 = vmor %vm1249, %vm1250
        %v1252 = vsel %vm1251, %v1244, %v1248
        %v1253 = vand.u32 2147483647, %v1210
        %vm1254 = vcmp.eq.f32.partialorder %v1253, 8.507059e+37
        %v1255 = vand.u32 %v1210, 2147483648
        %v1256 = vor.u32 1.1754944e-38, %v1255
        %v1257 = vsel %vm1254, %v1256, %v1252
        %v1258 = vmul.f32 %v1199, %v1257
        %v1259 = vrcp.pop %v1213
        %v1260 = vmul.f32 %v1213, %v1259
        %v1261 = vsub.f32 1.0, %v1260
        %v1262 = vmul.f32 %v1259, %v1261
        %v1263 = vadd.f32 %v1259, %v1262
        %vm1264 = vweird.f32 %v1213
        %vm1265 = vweird.f32 %v1259
        %vm1266 = vmor %vm1264, %vm1265
        %v1267 = vsel %vm1266, %v1259, %v1263
        %v1268 = vand.u32 2147483647, %v1213
        %vm1269 = vcmp.eq.f32.partialorder %v1268, 8.507059e+37
        %v1270 = vand.u32 %v1213, 2147483648
        %v1271 = vor.u32 1.1754944e-38, %v1270
        %v1272 = vsel %vm1269, %v1271, %v1267
        %v1273 = vmul.f32 %v1201, %v1272
        %v1274 = vpack.c.bf16 %v1243, %v1228
        %v1275 = vpack.c.bf16 %v1273, %v1258
        %1276 = vrot.lane.b32.xlu0 %v710, 64
        %v1277 = vpop.permute.xlu0 %1276
        %1278 = vrot.lane.b32.xlu0 %v711, 64
        %v1279 = vpop.permute.xlu0 %1278
        %v1283 = vsel %vm712, %v1274, 0
        %v1286 = vsel %vm712, %v1275, 0
        %1288 = vmatpush.bf16.msra.mxu0 0
        %1289 = vmatpush.bf16.msra.mxu0 0
        %1290 = vmatpush.bf16.msra.mxu0 0
        %1291 = vmatpush.bf16.msra.mxu0 0
        %1292 = vmatpush.bf16.msra.mxu0 0
        %1293 = vmatpush.bf16.msra.mxu0 0
        %1294 = vmatpush.bf16.msra.mxu0 %v1279
        %1295 = vmatpush.bf16.msra.mxu0 %v1277
        %1296 = vmatmul.bf16.gmra.mxu0 %v1283
        %v1297 = vpop.f32.mrf.mxu0
        %v1298 = vadd.f32 0.0, %v1297
        %v1299 = vpop.f32.mrf.mxu0
        %v1300 = vadd.f32 0.0, %v1299
        %1301 = vmatmul.bf16.gmra.mxu0 %v1286
        %v1302 = vpop.f32.mrf.mxu0
        %v1303 = vadd.f32 0.0, %v1302
        %v1304 = vpop.f32.mrf.mxu0
        %v1305 = vadd.f32 0.0, %v1304
        %1306 = vdwg.mxu0
        %v1307 = vpack.c.bf16 %v1300, %v1298
        %v1308 = vpack.c.bf16 %v1305, %v1303
        %v1313 = vunpack.c.l.b16 %v694
        %v1314 = vunpack.c.l.b16 %v695
        %v1315 = vunpack.c.l.b16 %v696
        %v1316 = vunpack.c.l.b16 %v697
        %v1317 = vpack.c.b16 %v1314, %v1313
        %v1318 = vpack.c.b16 %v1316, %v1315
        %v1322 = vsel %vm712, %v1307, 0
        %v1325 = vsel %vm712, %v1308, 0
        %1327 = vmatpush.bf16.msra.mxu0 0
        %1328 = vmatpush.bf16.msra.mxu0 0
        %1329 = vmatpush.bf16.msra.mxu0 0
        %1330 = vmatpush.bf16.msra.mxu0 0
        %1331 = vmatpush.bf16.msra.mxu0 0
        %1332 = vmatpush.bf16.msra.mxu0 0
        %1333 = vmatpush.bf16.msra.mxu0 %v1318
        %1334 = vmatpush.bf16.msra.mxu0 %v1317
        %1335 = vmatmul.bf16.gmra.mxu0 %v1322
        %v1336 = vpop.f32.mrf.mxu0
        %v1337 = vadd.f32 0.0, %v1336
        %v1338 = vpop.f32.mrf.mxu0
        %v1339 = vadd.f32 0.0, %v1338
        %1340 = vmatmul.bf16.gmra.mxu0 %v1325
        %v1341 = vpop.f32.mrf.mxu0
        %v1342 = vadd.f32 0.0, %v1341
        %v1343 = vpop.f32.mrf.mxu0
        %v1344 = vadd.f32 0.0, %v1343
        %1345 = vdwg.mxu0
        %v1346 = vadd.f32 %v1131, %v1337
        %v1347 = vadd.f32 %v1132, %v1339
        %v1348 = vadd.f32 %v1133, %v1342
        %v1349 = vadd.f32 %v1134, %v1344
        %1350 = vrot.lane.b32.xlu0 %v706, 32
        %v1351 = vpop.permute.xlu0 %1350
        %1352 = vrot.lane.b32.xlu0 %v707, 32
        %v1353 = vpop.permute.xlu0 %1352
        %1354 = vrot.lane.b32.xlu0 %v708, 32
        %v1355 = vpop.permute.xlu0 %1354
        %1356 = vrot.lane.b32.xlu0 %v709, 32
        %v1357 = vpop.permute.xlu0 %1356
        %v1359 = vsel %vm712, %v1351, 0
        %v1362 = vsel %vm712, %v1353, 0
        %v1365 = vsel %vm712, %v1355, 0
        %v1368 = vsel %vm712, %v1357, 0
        %1370 = vmatpush.bf16.xpose.msra.mxu0 0
        %1371 = vmatpush.bf16.xpose.msra.mxu0 0
        %1372 = vmatpush.bf16.xpose.msra.mxu0 0
        %1373 = vmatpush.bf16.xpose.msra.mxu0 0
        %1374 = vmatpush.bf16.xpose.msra.mxu0 0
        %1375 = vmatpush.bf16.xpose.msra.mxu0 0
        %1376 = vmatpush.bf16.xpose.msra.mxu0 %v1368
        %1377 = vmatpush.bf16.xpose.msra.mxu0 %v1365
        %1378 = vmatmul.bf16.gmra.mxu0 %v1359
        %v1379 = vpop.f32.mrf.mxu0
        %v1380 = vadd.f32 0.0, %v1379
        %v1381 = vpop.f32.mrf.mxu0
        %v1382 = vadd.f32 0.0, %v1381
        %1383 = vmatmul.bf16.gmra.mxu0 %v1362
        %v1384 = vpop.f32.mrf.mxu0
        %v1385 = vadd.f32 0.0, %v1384
        %v1386 = vpop.f32.mrf.mxu0
        %v1387 = vadd.f32 0.0, %v1386
        %1388 = vdwg.mxu0
        %v1389 = vmul.f32 %v1380, 0.17677669
        %v1390 = vmul.f32 %v1382, 0.17677669
        %v1391 = vmul.f32 %v1385, 0.17677669
        %v1392 = vmul.f32 %v1387, 0.17677669
        %v1393 = vsel %vm712, %v1389, -inf
        %1394 = vmax.xlane.f32.xlu0 %v1393
        %v1395 = vpop.xlane.xlu0 %1394
        %v1396 = vsel %vm712, %v1390, -inf
        %1397 = vmax.xlane.f32.xlu0 %v1396
        %v1398 = vpop.xlane.xlu0 %1397
        %v1399 = vsel %vm712, %v1391, -inf
        %1400 = vmax.xlane.f32.xlu0 %v1399
        %v1401 = vpop.xlane.xlu0 %1400
        %v1402 = vsel %vm712, %v1392, -inf
        %1403 = vmax.xlane.f32.xlu0 %v1402
        %v1404 = vpop.xlane.xlu0 %1403
        %v1405 = vsub.f32 %v1389, %v1395
        %v1406 = vsub.f32 %v1390, %v1398
        %v1407 = vsub.f32 %v1391, %v1401
        %v1408 = vsub.f32 %v1392, %v1404
        %v1409 = vmul.f32 %v1405, 1.442695
        %v1410 = vpow.pop %v1409
        %v1411 = vmul.f32 %v1406, 1.442695
        %v1412 = vpow.pop %v1411
        %v1413 = vmul.f32 %v1407, 1.442695
        %v1414 = vpow.pop %v1413
        %v1415 = vmul.f32 %v1408, 1.442695
        %v1416 = vpow.pop %v1415
        %v1417 = vsel %vm712, %v1410, 0.0
        %1418 = vadd.xlane.f32.xlu0 %v1417
        %v1419 = vpop.xlane.xlu0 %1418
        %v1420 = vsel %vm712, %v1412, 0.0
        %1421 = vadd.xlane.f32.xlu0 %v1420
        %v1422 = vpop.xlane.xlu0 %1421
        %v1423 = vsel %vm712, %v1414, 0.0
        %1424 = vadd.xlane.f32.xlu0 %v1423
        %v1425 = vpop.xlane.xlu0 %1424
        %v1426 = vsel %vm712, %v1416, 0.0
        %1427 = vadd.xlane.f32.xlu0 %v1426
        %v1428 = vpop.xlane.xlu0 %1427
        %v1429 = vrcp.pop %v1419
        %v1430 = vmul.f32 %v1419, %v1429
        %v1431 = vsub.f32 1.0, %v1430
        %v1432 = vmul.f32 %v1429, %v1431
        %v1433 = vadd.f32 %v1429, %v1432
        %vm1434 = vweird.f32 %v1419
        %vm1435 = vweird.f32 %v1429
        %vm1436 = vmor %vm1434, %vm1435
        %v1437 = vsel %vm1436, %v1429, %v1433
        %v1438 = vand.u32 2147483647, %v1419
        %vm1439 = vcmp.eq.f32.partialorder %v1438, 8.507059e+37
        %v1440 = vand.u32 %v1419, 2147483648
        %v1441 = vor.u32 1.1754944e-38, %v1440
        %v1442 = vsel %vm1439, %v1441, %v1437
        %v1443 = vmul.f32 %v1410, %v1442
        %v1444 = vrcp.pop %v1422
        %v1445 = vmul.f32 %v1422, %v1444
        %v1446 = vsub.f32 1.0, %v1445
        %v1447 = vmul.f32 %v1444, %v1446
        %v1448 = vadd.f32 %v1444, %v1447
        %vm1449 = vweird.f32 %v1422
        %vm1450 = vweird.f32 %v1444
        %vm1451 = vmor %vm1449, %vm1450
        %v1452 = vsel %vm1451, %v1444, %v1448
        %v1453 = vand.u32 2147483647, %v1422
        %vm1454 = vcmp.eq.f32.partialorder %v1453, 8.507059e+37
        %v1455 = vand.u32 %v1422, 2147483648
        %v1456 = vor.u32 1.1754944e-38, %v1455
        %v1457 = vsel %vm1454, %v1456, %v1452
        %v1458 = vmul.f32 %v1412, %v1457
        %v1459 = vrcp.pop %v1425
        %v1460 = vmul.f32 %v1425, %v1459
        %v1461 = vsub.f32 1.0, %v1460
        %v1462 = vmul.f32 %v1459, %v1461
        %v1463 = vadd.f32 %v1459, %v1462
        %vm1464 = vweird.f32 %v1425
        %vm1465 = vweird.f32 %v1459
        %vm1466 = vmor %vm1464, %vm1465
        %v1467 = vsel %vm1466, %v1459, %v1463
        %v1468 = vand.u32 2147483647, %v1425
        %vm1469 = vcmp.eq.f32.partialorder %v1468, 8.507059e+37
        %v1470 = vand.u32 %v1425, 2147483648
        %v1471 = vor.u32 1.1754944e-38, %v1470
        %v1472 = vsel %vm1469, %v1471, %v1467
        %v1473 = vmul.f32 %v1414, %v1472
        %v1474 = vrcp.pop %v1428
        %v1475 = vmul.f32 %v1428, %v1474
        %v1476 = vsub.f32 1.0, %v1475
        %v1477 = vmul.f32 %v1474, %v1476
        %v1478 = vadd.f32 %v1474, %v1477
        %vm1479 = vweird.f32 %v1428
        %vm1480 = vweird.f32 %v1474
        %vm1481 = vmor %vm1479, %vm1480
        %v1482 = vsel %vm1481, %v1474, %v1478
        %v1483 = vand.u32 2147483647, %v1428
        %vm1484 = vcmp.eq.f32.partialorder %v1483, 8.507059e+37
        %v1485 = vand.u32 %v1428, 2147483648
        %v1486 = vor.u32 1.1754944e-38, %v1485
        %v1487 = vsel %vm1484, %v1486, %v1482
        %v1488 = vmul.f32 %v1416, %v1487
        %v1489 = vpack.c.bf16 %v1458, %v1443
        %v1490 = vpack.c.bf16 %v1488, %v1473
        %1491 = vrot.lane.b32.xlu0 %v710, 32
        %v1492 = vpop.permute.xlu0 %1491
        %1493 = vrot.lane.b32.xlu0 %v711, 32
        %v1494 = vpop.permute.xlu0 %1493
        %v1498 = vsel %vm712, %v1489, 0
        %v1501 = vsel %vm712, %v1490, 0
        %1503 = vmatpush.bf16.msra.mxu0 0
        %1504 = vmatpush.bf16.msra.mxu0 0
        %1505 = vmatpush.bf16.msra.mxu0 0
        %1506 = vmatpush.bf16.msra.mxu0 0
        %1507 = vmatpush.bf16.msra.mxu0 0
        %1508 = vmatpush.bf16.msra.mxu0 0
        %1509 = vmatpush.bf16.msra.mxu0 %v1494
        %1510 = vmatpush.bf16.msra.mxu0 %v1492
        %1511 = vmatmul.bf16.gmra.mxu0 %v1498
        %v1512 = vpop.f32.mrf.mxu0
        %v1513 = vadd.f32 0.0, %v1512
        %v1514 = vpop.f32.mrf.mxu0
        %v1515 = vadd.f32 0.0, %v1514
        %1516 = vmatmul.bf16.gmra.mxu0 %v1501
        %v1517 = vpop.f32.mrf.mxu0
        %v1518 = vadd.f32 0.0, %v1517
        %v1519 = vpop.f32.mrf.mxu0
        %v1520 = vadd.f32 0.0, %v1519
        %1521 = vdwg.mxu0
        %v1522 = vpack.c.bf16 %v1515, %v1513
        %v1523 = vpack.c.bf16 %v1520, %v1518
        %v1528 = vunpack.c.l.b16 %v698
        %v1529 = vunpack.c.l.b16 %v699
        %v1530 = vunpack.c.l.b16 %v700
        %v1531 = vunpack.c.l.b16 %v701
        %v1532 = vpack.c.b16 %v1529, %v1528
        %v1533 = vpack.c.b16 %v1531, %v1530
        %v1537 = vsel %vm712, %v1522, 0
        %v1540 = vsel %vm712, %v1523, 0
        %1542 = vmatpush.bf16.msra.mxu0 0
        %1543 = vmatpush.bf16.msra.mxu0 0
        %1544 = vmatpush.bf16.msra.mxu0 0
        %1545 = vmatpush.bf16.msra.mxu0 0
        %1546 = vmatpush.bf16.msra.mxu0 0
        %1547 = vmatpush.bf16.msra.mxu0 0
        %1548 = vmatpush.bf16.msra.mxu0 %v1533
        %1549 = vmatpush.bf16.msra.mxu0 %v1532
        %1550 = vmatmul.bf16.gmra.mxu0 %v1537
        %v1551 = vpop.f32.mrf.mxu0
        %v1552 = vadd.f32 0.0, %v1551
        %v1553 = vpop.f32.mrf.mxu0
        %v1554 = vadd.f32 0.0, %v1553
        %1555 = vmatmul.bf16.gmra.mxu0 %v1540
        %v1556 = vpop.f32.mrf.mxu0
        %v1557 = vadd.f32 0.0, %v1556
        %v1558 = vpop.f32.mrf.mxu0
        %v1559 = vadd.f32 0.0, %v1558
        %1560 = vdwg.mxu0
        %v1561 = vadd.f32 %v1346, %v1552
        %v1562 = vadd.f32 %v1347, %v1554
        %v1563 = vadd.f32 %v1348, %v1557
        %v1564 = vadd.f32 %v1349, %v1559
        %v1565 = vadd.f32 %v455, %v1561
        %v1566 = vadd.f32 %v456, %v1562
        %v1567 = vadd.f32 %v457, %v1563
        %v1568 = vadd.f32 %v458, %v1564
        %1569 = vadd.xlane.f32.xlu0 %v1565
        %v1570 = vpop.xlane.xlu0 %1569
        %1571 = vadd.xlane.f32.xlu0 %v1566
        %v1572 = vpop.xlane.xlu0 %1571
        %1573 = vadd.xlane.f32.xlu0 %v1567
        %v1574 = vpop.xlane.xlu0 %1573
        %1575 = vadd.xlane.f32.xlu0 %v1568
        %v1576 = vpop.xlane.xlu0 %1575
        %v1577 = vrcp.pop 128.0
        %v1578 = vmul.f32 128.0, %v1577
        %v1579 = vsub.f32 1.0, %v1578
        %v1580 = vmul.f32 %v1577, %v1579
        %v1581 = vadd.f32 %v1577, %v1580
        %vm1582 = vweird.f32 %v1577
        %v1583 = vsel %vm1582, %v1577, %v1581
        %v1584 = vmul.f32 %v1570, %v1583
        %v1585 = vmul.f32 %v1572, %v1583
        %v1586 = vmul.f32 %v1574, %v1583
        %v1587 = vmul.f32 %v1576, %v1583
        %v1588 = vsub.f32 %v1565, %v1584
        %v1589 = vsub.f32 %v1566, %v1585
        %v1590 = vsub.f32 %v1567, %v1586
        %v1591 = vsub.f32 %v1568, %v1587
        %v1592 = vmul.f32 %v1588, %v1588
        %v1593 = vmul.f32 %v1589, %v1589
        %v1594 = vmul.f32 %v1590, %v1590
        %v1595 = vmul.f32 %v1591, %v1591
        %1596 = vadd.xlane.f32.xlu0 %v1592
        %v1597 = vpop.xlane.xlu0 %1596
        %1598 = vadd.xlane.f32.xlu0 %v1593
        %v1599 = vpop.xlane.xlu0 %1598
        %1600 = vadd.xlane.f32.xlu0 %v1594
        %v1601 = vpop.xlane.xlu0 %1600
        %1602 = vadd.xlane.f32.xlu0 %v1595
        %v1603 = vpop.xlane.xlu0 %1602
        %v1604 = vmul.f32 %v1597, %v1583
        %v1605 = vmul.f32 %v1599, %v1583
        %v1606 = vmul.f32 %v1601, %v1583
        %v1607 = vmul.f32 %v1603, %v1583
        %v1608 = vadd.f32 %v1604, 1e-05
        %v1609 = vadd.f32 %v1605, 1e-05
        %v1610 = vadd.f32 %v1606, 1e-05
        %v1611 = vadd.f32 %v1607, 1e-05
        %v1612 = vrsqrt.pop %v1608
        %v1613 = vmul.f32 %v1612, %v1608
        %v1614 = vmul.f32 %v1613, %v1612
        %v1615 = vmul.f32 0.5, %v1614
        %v1616 = vsub.f32 1.5, %v1615
        %v1617 = vmul.f32 %v1612, %v1616
        %vm1618 = vweird.f32 %v1608
        %vm1619 = vweird.f32 %v1612
        %vm1620 = vmor %vm1618, %vm1619
        %v1621 = vsel %vm1620, %v1612, %v1617
        %v1622 = vrsqrt.pop %v1609
        %v1623 = vmul.f32 %v1622, %v1609
        %v1624 = vmul.f32 %v1623, %v1622
        %v1625 = vmul.f32 0.5, %v1624
        %v1626 = vsub.f32 1.5, %v1625
        %v1627 = vmul.f32 %v1622, %v1626
        %vm1628 = vweird.f32 %v1609
        %vm1629 = vweird.f32 %v1622
        %vm1630 = vmor %vm1628, %vm1629
        %v1631 = vsel %vm1630, %v1622, %v1627
        %v1632 = vrsqrt.pop %v1610
        %v1633 = vmul.f32 %v1632, %v1610
        %v1634 = vmul.f32 %v1633, %v1632
        %v1635 = vmul.f32 0.5, %v1634
        %v1636 = vsub.f32 1.5, %v1635
        %v1637 = vmul.f32 %v1632, %v1636
        %vm1638 = vweird.f32 %v1610
        %vm1639 = vweird.f32 %v1632
        %vm1640 = vmor %vm1638, %vm1639
        %v1641 = vsel %vm1640, %v1632, %v1637
        %v1642 = vrsqrt.pop %v1611
        %v1643 = vmul.f32 %v1642, %v1611
        %v1644 = vmul.f32 %v1643, %v1642
        %v1645 = vmul.f32 0.5, %v1644
        %v1646 = vsub.f32 1.5, %v1645
        %v1647 = vmul.f32 %v1642, %v1646
        %vm1648 = vweird.f32 %v1611
        %vm1649 = vweird.f32 %v1642
        %vm1650 = vmor %vm1648, %vm1649
        %v1651 = vsel %vm1650, %v1642, %v1647
        %v1652 = vmul.f32 %v1588, %v1621
        %v1653 = vmul.f32 %v1589, %v1631
        %v1654 = vmul.f32 %v1590, %v1641
        %v1655 = vmul.f32 %v1591, %v1651
        %v1656 = vld [vmem:[%s5] sm:$0x1]
        %v1658 = vperm.slane %v1656, 0
        %v1660 = vmul.f32 %v1652, %v1658
        %v1661 = vmul.f32 %v1653, %v1658
        %v1662 = vmul.f32 %v1654, %v1658
        %v1663 = vmul.f32 %v1655, %v1658
        %v1664 = vld [vmem:[%s6] sm:$0x1]
        %v1666 = vperm.slane %v1664, 0
        %v1668 = vadd.f32 %v1660, %v1666
        %v1669 = vadd.f32 %v1661, %v1666
        %v1670 = vadd.f32 %v1662, %v1666
        %v1671 = vadd.f32 %v1663, %v1666
        %v1672 = vpack.c.bf16 %v1669, %v1668
        %v1673 = vpack.c.bf16 %v1671, %v1670
        %v1674 = vld [vmem:[#allocation6] sm:$0xf]
        %v1675 = vld [vmem:[#allocation6 + $0x4] sm:$0xf]
        %v1676 = vld [vmem:[#allocation6 + $0x8] sm:$0xf]
        %v1677 = vld [vmem:[#allocation6 + $0xc] sm:$0xf]
        %v1678 = vld [vmem:[#allocation6 + $0x10] sm:$0xf]
        %v1679 = vld [vmem:[#allocation6 + $0x14] sm:$0xf]
        %v1680 = vld [vmem:[#allocation6 + $0x18] sm:$0xf]
        %v1681 = vld [vmem:[#allocation6 + $0x1c] sm:$0xf]
        %v1682 = vld [vmem:[#allocation6 + $0x20] sm:$0xf]
        %v1683 = vld [vmem:[#allocation6 + $0x24] sm:$0xf]
        %v1684 = vld [vmem:[#allocation6 + $0x28] sm:$0xf]
        %v1685 = vld [vmem:[#allocation6 + $0x2c] sm:$0xf]
        %v1686 = vld [vmem:[#allocation6 + $0x30] sm:$0xf]
        %v1687 = vld [vmem:[#allocation6 + $0x34] sm:$0xf]
        %v1688 = vld [vmem:[#allocation6 + $0x38] sm:$0xf]
        %v1689 = vld [vmem:[#allocation6 + $0x3c] sm:$0xf]
        %v1690 = vld [vmem:[%s8] sm:$0x1]
        %v1692 = vperm.slane %v1690, 0
        %v1710 = vunpack.c.l.b16 %v1674
        %v1711 = vunpack.c.l.b16 %v1675
        %v1712 = vunpack.c.l.b16 %v1676
        %v1713 = vunpack.c.l.b16 %v1677
        %v1714 = vunpack.c.l.b16 %v1678
        %v1715 = vunpack.c.l.b16 %v1679
        %v1716 = vunpack.c.l.b16 %v1680
        %v1717 = vunpack.c.l.b16 %v1681
        %v1718 = vunpack.c.l.b16 %v1682
        %v1719 = vunpack.c.l.b16 %v1683
        %v1720 = vunpack.c.l.b16 %v1684
        %v1721 = vunpack.c.l.b16 %v1685
        %v1722 = vunpack.c.l.b16 %v1686
        %v1723 = vunpack.c.l.b16 %v1687
        %v1724 = vunpack.c.l.b16 %v1688
        %v1725 = vunpack.c.l.b16 %v1689
        %v1726 = vpack.c.b16 %v1711, %v1710
        %v1727 = vpack.c.b16 %v1713, %v1712
        %v1728 = vpack.c.b16 %v1715, %v1714
        %v1729 = vpack.c.b16 %v1717, %v1716
        %v1730 = vpack.c.b16 %v1719, %v1718
        %v1731 = vpack.c.b16 %v1721, %v1720
        %v1732 = vpack.c.b16 %v1723, %v1722
        %v1733 = vpack.c.b16 %v1725, %v1724
        %1742 = vmatpush.bf16.msra.mxu0 %v1733
        %1743 = vmatpush.bf16.msra.mxu0 %v1732
        %1744 = vmatpush.bf16.msra.mxu0 %v1731
        %1745 = vmatpush.bf16.msra.mxu0 %v1730
        %1746 = vmatpush.bf16.msra.mxu0 %v1729
        %1747 = vmatpush.bf16.msra.mxu0 %v1728
        %1748 = vmatpush.bf16.msra.mxu0 %v1727
        %1749 = vmatpush.bf16.msra.mxu0 %v1726
        %1750 = vmatmul.bf16.gmra.mxu0 %v1672
        %v1751 = vpop.f32.mrf.mxu0
        %v1752 = vadd.f32 %v1692, %v1751
        %v1753 = vpop.f32.mrf.mxu0
        %v1754 = vadd.f32 %v1692, %v1753
        %1755 = vmatmul.bf16.gmra.mxu0 %v1673
        %v1756 = vpop.f32.mrf.mxu0
        %v1757 = vadd.f32 %v1692, %v1756
        %v1758 = vpop.f32.mrf.mxu0
        %v1759 = vadd.f32 %v1692, %v1758
        %1760 = vdwg.mxu0
        %v1761 = vmax.f32 %v1752, 0.0
        %v1762 = vmax.f32 %v1754, 0.0
        %v1763 = vmax.f32 %v1757, 0.0
        %v1764 = vmax.f32 %v1759, 0.0
        %v1765 = vpack.c.bf16 %v1762, %v1761
        %v1766 = vpack.c.bf16 %v1764, %v1763
        %v1767 = vld [vmem:[#allocation7] sm:$0xf]
        %v1768 = vld [vmem:[#allocation7 + $0x4] sm:$0xf]
        %v1769 = vld [vmem:[#allocation7 + $0x8] sm:$0xf]
        %v1770 = vld [vmem:[#allocation7 + $0xc] sm:$0xf]
        %v1771 = vld [vmem:[#allocation7 + $0x10] sm:$0xf]
        %v1772 = vld [vmem:[#allocation7 + $0x14] sm:$0xf]
        %v1773 = vld [vmem:[#allocation7 + $0x18] sm:$0xf]
        %v1774 = vld [vmem:[#allocation7 + $0x1c] sm:$0xf]
        %v1775 = vld [vmem:[#allocation7 + $0x20] sm:$0xf]
        %v1776 = vld [vmem:[#allocation7 + $0x24] sm:$0xf]
        %v1777 = vld [vmem:[#allocation7 + $0x28] sm:$0xf]
        %v1778 = vld [vmem:[#allocation7 + $0x2c] sm:$0xf]
        %v1779 = vld [vmem:[#allocation7 + $0x30] sm:$0xf]
        %v1780 = vld [vmem:[#allocation7 + $0x34] sm:$0xf]
        %v1781 = vld [vmem:[#allocation7 + $0x38] sm:$0xf]
        %v1782 = vld [vmem:[#allocation7 + $0x3c] sm:$0xf]
        %v1783 = vld [vmem:[%s10] sm:$0x1]
        %v1785 = vperm.slane %v1783, 0
        %v1803 = vunpack.c.l.b16 %v1767
        %v1804 = vunpack.c.l.b16 %v1768
        %v1805 = vunpack.c.l.b16 %v1769
        %v1806 = vunpack.c.l.b16 %v1770
        %v1807 = vunpack.c.l.b16 %v1771
        %v1808 = vunpack.c.l.b16 %v1772
        %v1809 = vunpack.c.l.b16 %v1773
        %v1810 = vunpack.c.l.b16 %v1774
        %v1811 = vunpack.c.l.b16 %v1775
        %v1812 = vunpack.c.l.b16 %v1776
        %v1813 = vunpack.c.l.b16 %v1777
        %v1814 = vunpack.c.l.b16 %v1778
        %v1815 = vunpack.c.l.b16 %v1779
        %v1816 = vunpack.c.l.b16 %v1780
        %v1817 = vunpack.c.l.b16 %v1781
        %v1818 = vunpack.c.l.b16 %v1782
        %v1819 = vpack.c.b16 %v1804, %v1803
        %v1820 = vpack.c.b16 %v1806, %v1805
        %v1821 = vpack.c.b16 %v1808, %v1807
        %v1822 = vpack.c.b16 %v1810, %v1809
        %v1823 = vpack.c.b16 %v1812, %v1811
        %v1824 = vpack.c.b16 %v1814, %v1813
        %v1825 = vpack.c.b16 %v1816, %v1815
        %v1826 = vpack.c.b16 %v1818, %v1817
        %1835 = vmatpush.bf16.msra.mxu0 %v1826
        %1836 = vmatpush.bf16.msra.mxu0 %v1825
        %1837 = vmatpush.bf16.msra.mxu0 %v1824
        %1838 = vmatpush.bf16.msra.mxu0 %v1823
        %1839 = vmatpush.bf16.msra.mxu0 %v1822
        %1840 = vmatpush.bf16.msra.mxu0 %v1821
        %1841 = vmatpush.bf16.msra.mxu0 %v1820
        %1842 = vmatpush.bf16.msra.mxu0 %v1819
        %1843 = vmatmul.bf16.gmra.mxu0 %v1765
        %v1844 = vpop.f32.mrf.mxu0
        %v1845 = vadd.f32 %v1785, %v1844
        %v1846 = vpop.f32.mrf.mxu0
        %v1847 = vadd.f32 %v1785, %v1846
        %1848 = vmatmul.bf16.gmra.mxu0 %v1766
        %v1849 = vpop.f32.mrf.mxu0
        %v1850 = vadd.f32 %v1785, %v1849
        %v1851 = vpop.f32.mrf.mxu0
        %v1852 = vadd.f32 %v1785, %v1851
        %1853 = vdwg.mxu0
        %v1854 = vadd.f32 %v1668, %v1845
        %v1855 = vadd.f32 %v1669, %v1847
        %v1856 = vadd.f32 %v1670, %v1850
        %v1857 = vadd.f32 %v1671, %v1852
        %1858 = vadd.xlane.f32.xlu0 %v1854
        %v1859 = vpop.xlane.xlu0 %1858
        %1860 = vadd.xlane.f32.xlu0 %v1855
        %v1861 = vpop.xlane.xlu0 %1860
        %1862 = vadd.xlane.f32.xlu0 %v1856
        %v1863 = vpop.xlane.xlu0 %1862
        %1864 = vadd.xlane.f32.xlu0 %v1857
        %v1865 = vpop.xlane.xlu0 %1864
        %v1866 = vmul.f32 %v1859, %v1583
        %v1867 = vmul.f32 %v1861, %v1583
        %v1868 = vmul.f32 %v1863, %v1583
        %v1869 = vmul.f32 %v1865, %v1583
        %v1870 = vsub.f32 %v1854, %v1866
        %v1871 = vsub.f32 %v1855, %v1867
        %v1872 = vsub.f32 %v1856, %v1868
        %v1873 = vsub.f32 %v1857, %v1869
        %v1874 = vmul.f32 %v1870, %v1870
        %v1875 = vmul.f32 %v1871, %v1871
        %v1876 = vmul.f32 %v1872, %v1872
        %v1877 = vmul.f32 %v1873, %v1873
        %1878 = vadd.xlane.f32.xlu0 %v1874
        %v1879 = vpop.xlane.xlu0 %1878
        %1880 = vadd.xlane.f32.xlu0 %v1875
        %v1881 = vpop.xlane.xlu0 %1880
        %1882 = vadd.xlane.f32.xlu0 %v1876
        %v1883 = vpop.xlane.xlu0 %1882
        %1884 = vadd.xlane.f32.xlu0 %v1877
        %v1885 = vpop.xlane.xlu0 %1884
        %v1886 = vmul.f32 %v1879, %v1583
        %v1887 = vmul.f32 %v1881, %v1583
        %v1888 = vmul.f32 %v1883, %v1583
        %v1889 = vmul.f32 %v1885, %v1583
        %v1890 = vadd.f32 %v1886, 1e-05
        %v1891 = vadd.f32 %v1887, 1e-05
        %v1892 = vadd.f32 %v1888, 1e-05
        %v1893 = vadd.f32 %v1889, 1e-05
        %v1894 = vrsqrt.pop %v1890
        %v1895 = vmul.f32 %v1894, %v1890
        %v1896 = vmul.f32 %v1895, %v1894
        %v1897 = vmul.f32 0.5, %v1896
        %v1898 = vsub.f32 1.5, %v1897
        %v1899 = vmul.f32 %v1894, %v1898
        %vm1900 = vweird.f32 %v1890
        %vm1901 = vweird.f32 %v1894
        %vm1902 = vmor %vm1900, %vm1901
        %v1903 = vsel %vm1902, %v1894, %v1899
        %v1904 = vrsqrt.pop %v1891
        %v1905 = vmul.f32 %v1904, %v1891
        %v1906 = vmul.f32 %v1905, %v1904
        %v1907 = vmul.f32 0.5, %v1906
        %v1908 = vsub.f32 1.5, %v1907
        %v1909 = vmul.f32 %v1904, %v1908
        %vm1910 = vweird.f32 %v1891
        %vm1911 = vweird.f32 %v1904
        %vm1912 = vmor %vm1910, %vm1911
        %v1913 = vsel %vm1912, %v1904, %v1909
        %v1914 = vrsqrt.pop %v1892
        %v1915 = vmul.f32 %v1914, %v1892
        %v1916 = vmul.f32 %v1915, %v1914
        %v1917 = vmul.f32 0.5, %v1916
        %v1918 = vsub.f32 1.5, %v1917
        %v1919 = vmul.f32 %v1914, %v1918
        %vm1920 = vweird.f32 %v1892
        %vm1921 = vweird.f32 %v1914
        %vm1922 = vmor %vm1920, %vm1921
        %v1923 = vsel %vm1922, %v1914, %v1919
        %v1924 = vrsqrt.pop %v1893
        %v1925 = vmul.f32 %v1924, %v1893
        %v1926 = vmul.f32 %v1925, %v1924
        %v1927 = vmul.f32 0.5, %v1926
        %v1928 = vsub.f32 1.5, %v1927
        %v1929 = vmul.f32 %v1924, %v1928
        %vm1930 = vweird.f32 %v1893
        %vm1931 = vweird.f32 %v1924
        %vm1932 = vmor %vm1930, %vm1931
        %v1933 = vsel %vm1932, %v1924, %v1929
        %v1934 = vmul.f32 %v1870, %v1903
        %v1935 = vmul.f32 %v1871, %v1913
        %v1936 = vmul.f32 %v1872, %v1923
        %v1937 = vmul.f32 %v1873, %v1933
        %v1938 = vmul.f32 %v1934, %v1658
        %v1939 = vmul.f32 %v1935, %v1658
        %v1940 = vmul.f32 %v1936, %v1658
        %v1941 = vmul.f32 %v1937, %v1658
        %v1942 = vadd.f32 %v1938, %v1666
        %v1943 = vadd.f32 %v1939, %v1666
        %v1944 = vadd.f32 %v1940, %v1666
        %v1945 = vadd.f32 %v1941, %v1666
        %v1946 = vmul.f32 %v1942, 0.7
        %v1947 = vmul.f32 %v1943, 0.7
        %v1948 = vmul.f32 %v1944, 0.7
        %v1949 = vmul.f32 %v1945, 0.7
        %v1950 = vmul.f32 %v455, 0.3
        %v1951 = vmul.f32 %v456, 0.3
        %v1952 = vmul.f32 %v457, 0.3
        %v1953 = vmul.f32 %v458, 0.3
        %v1954 = vadd.f32 %v1946, %v1950
        %v1955 = vadd.f32 %v1947, %v1951
        %v1956 = vadd.f32 %v1948, %v1952
        %v1957 = vadd.f32 %v1949, %v1953
        %1958 = vst [vmem:[%s453] sm:$0xff] %v1954
        %1959 = vst [vmem:[%s453 + $0x8] sm:$0xff] %v1955
        %1960 = vst [vmem:[%s453 + $0x10] sm:$0xff] %v1956
        %1961 = vst [vmem:[%s453 + $0x18] sm:$0xff] %v1957
        %p1962 = scmp.lt.s32.totalorder %s25, 1
        %s1963 = scalar_select %p1962, %s25, 1
        %s1964 = smul.addr %s1963, 4
        %s1965 = smul.addr %s1964, 8
        %s1966 = scalar_lea.vmem %s11, %s1965
        // Predicated region
        $region81: #{sleep_transformer_forward.7} parent=63 // pred_check
          %p1967 = pneg %p279
        $region82: #{sleep_transformer_forward.7} parent=63 // pred_check_branch
          %1969 = sbr.rel (%p1967) target = $region84
        $region83: #{sleep_transformer_forward.7} parent=63 // pred_region
          _
        $region84: #{sleep_transformer_forward.7} parent=63 // pred_fallthru
          _
      $region64: #{sleep_transformer_forward.7} parent=5 // pred_fallthru
        _
      %p1970 = scmp.le.s32.totalorder 2, %s20
      // Predicated region
      $region85: #{sleep_transformer_forward.7} parent=5 // pred_check
        %p1971 = pneg %p1970
      $region86: #{sleep_transformer_forward.7} parent=5 // pred_check_branch
        %1973 = sbr.rel (%p1971) target = $region88
      $region87: #{sleep_transformer_forward.7} parent=5 // pred_region
        %s1974 = ssub.s32 %s20, 2
        // Predicated region
        $region89: #{sleep_transformer_forward.7} parent=87 // pred_check
          %p1975 = pneg %p285
        $region90: #{sleep_transformer_forward.7} parent=87 // pred_check_branch
          %1977 = sbr.rel (%p1975) target = $region92
        $region91: #{sleep_transformer_forward.7} parent=87 // pred_region
          %p1978 = scmp.lt.s32.totalorder %s26, 1
          %s1979 = scalar_select %p1978, %s26, 1
          %s1980 = smul.addr %s1979, 4
          %s1981 = smul.addr %s1980, 8
          %s1982 = scalar_lea.vmem %s11, %s1981
        $region92: #{sleep_transformer_forward.7} parent=87 // pred_fallthru
          _
      $region88: #{sleep_transformer_forward.7} parent=5 // pred_fallthru
        _
    $region6: #{sleep_transformer_forward.7} parent=1 // loop_footer
      %s24 = sadd.s32 1, %s20
    $region7: #{sleep_transformer_forward.7} parent=1 // loop_footer_branch
      %19 = sbr.rel target = $region3
    $region8: #{sleep_transformer_forward.7} parent=1 // loop_exit
      _
    %1983 = vsyncpa [#allocation3], 1
    %s1984 = scalar_lea.sflag [#allocation3], 1
    %1985 = vsyncpa %s1984, 1
    %1986 = vsyncpa [#allocation5], 1
    %1987 = vsyncpa [#allocation8], 1

// kernel: sleep_transformer_forward.8
$region0: #{sleep_transformer_forward.8}
  #allocation0 [shape = 'u32[]', space=smem, size = 0x4, offset = 0x4, fixed_abs, tag = 'smem constant byte address 0x4 - core index']
  #allocation1 [shape = 'u32[72,128]{1,0:T(1,128)}', space=vmem, size = 0x9000, scoped, tag = 'internal scratch']
  %s0 = inlined_call_operand.vmem [shape: f32[2,32,128], index: 0, kind: input, shape index: {}]
  %s1 = inlined_call_operand.hbm [shape: bf16[128,384], index: 1, kind: input, shape index: {}]
  %s2 = inlined_call_operand.vmem [shape: f32[1,384], index: 2, kind: input, shape index: {}]
  %s3 = inlined_call_operand.hbm [shape: bf16[128,128], index: 3, kind: input, shape index: {}]
  %s4 = inlined_call_operand.vmem [shape: f32[1,128], index: 4, kind: input, shape index: {}]
  %s5 = inlined_call_operand.vmem [shape: f32[1,128], index: 5, kind: input, shape index: {}]
  %s6 = inlined_call_operand.vmem [shape: f32[1,128], index: 6, kind: input, shape index: {}]
  %s7 = inlined_call_operand.hbm [shape: bf16[128,128], index: 7, kind: input, shape index: {}]
  %s8 = inlined_call_operand.hbm [shape: f32[1,128], index: 8, kind: input, shape index: {}]
  %s9 = inlined_call_operand.hbm [shape: bf16[128,128], index: 9, kind: input, shape index: {}]
  %s10 = inlined_call_operand.hbm [shape: f32[1,128], index: 10, kind: input, shape index: {}]
  %s11 = inlined_call_operand.vmem [shape: f32[2,32,128], index: 11, kind: output, shape index: {}]
  %s12 = sld [smem:[#allocation0]]
  $region101: #{sleep_transformer_forward.8} parent=0
    _
  %s14 = ssub.s32 1, %s12
  %s15 = scalar_select 0, %s14, %s12
  $region1: #{sleep_transformer_forward.8} parent=0
    #allocation2 [shape = 'u8[98304]{0}', space=vmem, size = 0x18000, scoped, tag = 'input window, operand 1, single buffered']
    #allocation3 [shape = 's32[2]{0}', space=sflag, size = 0x8, scoped, tag = 'scoped memory for sleep_transformer_forward.8']
    #allocation4 [shape = 'u8[32768]{0}', space=vmem, size = 0x8000, scoped, tag = 'input window, operand 3, single buffered']
    #allocation5 [shape = 's32[1]{0}', space=sflag, size = 0x4, scoped, tag = 'scoped memory for sleep_transformer_forward.8']
    #allocation6 [shape = 'u8[32768]{0}', space=vmem, size = 0x8000, scoped, tag = 'input window, operand 7, single buffered']
    #allocation7 [shape = 'u8[512]{0}', space=vmem, size = 0x400, scoped, tag = 'input window, operand 8, single buffered']
    #allocation8 [shape = 's32[1]{0}', space=sflag, size = 0x4, scoped, tag = 'scoped memory for sleep_transformer_forward.8']
    #allocation9 [shape = 'u8[32768]{0}', space=vmem, size = 0x8000, scoped, tag = 'input window, operand 9, single buffered']
    #allocation10 [shape = 'u8[512]{0}', space=vmem, size = 0x400, scoped, tag = 'input window, operand 10, single buffered']
    #allocation11 [shape = 's32[1]{0}', space=sflag, size = 0x4, scoped, tag = 'scoped memory for sleep_transformer_forward.8']
    %16 = vsyncpa [#allocation3], 0
    %17 = vsyncpa [#allocation5], 0
    %18 = vsyncpa [#allocation8], 0
    %19 = vsyncpa [#allocation11], 0
    loop: start=0, step=1, limit=4
    $region2: #{sleep_transformer_forward.8} parent=1 // loop_pre_header
      _
    $region3: #{sleep_transformer_forward.8} parent=1 // loop_header
      %s21 = sphi 0, %s25
      %p22 = scmp.ge.s32.totalorder %s21, 4
      %s31 = sphi 0, %s33
      %s34 = sphi 0, %s31
      %s35 = sphi 0, %s34
      %s51 = sphi 0, %s35
      %s55 = sphi 0, %s55
      %s57 = sphi 0, %s55
      %s58 = sphi 0, %s57
      %s72 = sphi 0, %s58
      %s76 = sphi 0, %s76
      %s78 = sphi 0, %s76
      %s79 = sphi 0, %s78
      %s93 = sphi 0, %s79
      %s97 = sphi 0, %s97
      %s99 = sphi 0, %s97
      %s100 = sphi 0, %s99
      %s114 = sphi 0, %s100
      %s118 = sphi 0, %s118
      %s120 = sphi 0, %s118
      %s121 = sphi 0, %s120
      %s135 = sphi 0, %s121
      %s139 = sphi 0, %s139
      %s141 = sphi 0, %s139
      %s142 = sphi 0, %s141
      %s156 = sphi 0, %s142
      %s160 = sphi 0, %s160
      %s162 = sphi 0, %s160
      %s163 = sphi 0, %s162
      %s177 = sphi 0, %s163
      %s181 = sphi 0, %s181
      %s183 = sphi 0, %s181
      %s184 = sphi 0, %s183
      %s198 = sphi 0, %s184
      %s202 = sphi 0, %s202
      %s204 = sphi 0, %s202
      %s205 = sphi 0, %s204
      %s219 = sphi 0, %s205
      %s223 = sphi 0, %s223
      %s225 = sphi 0, %s223
      %s226 = sphi 0, %s225
      %s240 = sphi 0, %s226
      %s244 = sphi 0, %s244
      %s246 = sphi 0, %s244
      %s247 = sphi 0, %s246
      %s261 = sphi 0, %s247
      %s267 = sphi 0, %s269
      %s270 = sphi 0, %s267
      %s271 = sphi 0, %s270
      %s287 = sphi 0, %s271
    $region4: #{sleep_transformer_forward.8} parent=1 // loop_header_branch
      %24 = sbr.rel (%p22) target = $region8
    $region5: #{sleep_transformer_forward.8} parent=1 // loop_body
      %s26 = ssub.s32 %s21, 1
      %s27 = ssub.s32 %s21, 2
      %s28 = sadd.s32 %s21, 1
      %s29 = ssub.s32 %s21, %s28
      %p30 = scmp.eq.s32.totalorder %s29, 0
      %s32 = sadd.s32 %s31, 1
      %s33 = scalar_select %p30, %s31, %s32
      %p36 = pneg %p30
      %p37 = scmp.eq.s32.totalorder %s21, 1
      %p38 = por %p36, %p37
      %p39 = scmp.ne.s32.totalorder %s31, %s34
      %p40 = scmp.eq.s32.totalorder %s21, 0
      %p41 = por %p39, %p40
      %p42 = scmp.ne.s32.totalorder %s31, %s34
      %p43 = scmp.eq.s32.totalorder %s26, 1
      %p44 = por %p42, %p43
      %p45 = scmp.ne.s32.totalorder %s34, %s35
      %p46 = scmp.eq.s32.totalorder %s26, 0
      %p47 = por %p45, %p46
      %p48 = scmp.ne.s32.totalorder %s34, %s35
      %p49 = scmp.eq.s32.totalorder %s27, 1
      %p50 = por %p48, %p49
      %p52 = scmp.ne.s32.totalorder %s35, %s51
      %p53 = scmp.eq.s32.totalorder %s27, 0
      %p54 = por %p52, %p53
      %s56 = sadd.s32 %s55, 1
      %p59 = scmp.eq.s32.totalorder %s21, 1
      %p60 = scmp.ne.s32.totalorder %s55, %s57
      %p61 = scmp.eq.s32.totalorder %s21, 0
      %p62 = por %p60, %p61
      %p63 = scmp.ne.s32.totalorder %s55, %s57
      %p64 = scmp.eq.s32.totalorder %s26, 1
      %p65 = por %p63, %p64
      %p66 = scmp.ne.s32.totalorder %s57, %s58
      %p67 = scmp.eq.s32.totalorder %s26, 0
      %p68 = por %p66, %p67
      %p69 = scmp.ne.s32.totalorder %s57, %s58
      %p70 = scmp.eq.s32.totalorder %s27, 1
      %p71 = por %p69, %p70
      %p73 = scmp.ne.s32.totalorder %s58, %s72
      %p74 = scmp.eq.s32.totalorder %s27, 0
      %p75 = por %p73, %p74
      %s77 = sadd.s32 %s76, 1
      %p80 = scmp.eq.s32.totalorder %s21, 1
      %p81 = scmp.ne.s32.totalorder %s76, %s78
      %p82 = scmp.eq.s32.totalorder %s21, 0
      %p83 = por %p81, %p82
      %p84 = scmp.ne.s32.totalorder %s76, %s78
      %p85 = scmp.eq.s32.totalorder %s26, 1
      %p86 = por %p84, %p85
      %p87 = scmp.ne.s32.totalorder %s78, %s79
      %p88 = scmp.eq.s32.totalorder %s26, 0
      %p89 = por %p87, %p88
      %p90 = scmp.ne.s32.totalorder %s78, %s79
      %p91 = scmp.eq.s32.totalorder %s27, 1
      %p92 = por %p90, %p91
      %p94 = scmp.ne.s32.totalorder %s79, %s93
      %p95 = scmp.eq.s32.totalorder %s27, 0
      %p96 = por %p94, %p95
      %s98 = sadd.s32 %s97, 1
      %p101 = scmp.eq.s32.totalorder %s21, 1
      %p102 = scmp.ne.s32.totalorder %s97, %s99
      %p103 = scmp.eq.s32.totalorder %s21, 0
      %p104 = por %p102, %p103
      %p105 = scmp.ne.s32.totalorder %s97, %s99
      %p106 = scmp.eq.s32.totalorder %s26, 1
      %p107 = por %p105, %p106
      %p108 = scmp.ne.s32.totalorder %s99, %s100
      %p109 = scmp.eq.s32.totalorder %s26, 0
      %p110 = por %p108, %p109
      %p111 = scmp.ne.s32.totalorder %s99, %s100
      %p112 = scmp.eq.s32.totalorder %s27, 1
      %p113 = por %p111, %p112
      %p115 = scmp.ne.s32.totalorder %s100, %s114
      %p116 = scmp.eq.s32.totalorder %s27, 0
      %p117 = por %p115, %p116
      %s119 = sadd.s32 %s118, 1
      %p122 = scmp.eq.s32.totalorder %s21, 1
      %p123 = scmp.ne.s32.totalorder %s118, %s120
      %p124 = scmp.eq.s32.totalorder %s21, 0
      %p125 = por %p123, %p124
      %p126 = scmp.ne.s32.totalorder %s118, %s120
      %p127 = scmp.eq.s32.totalorder %s26, 1
      %p128 = por %p126, %p127
      %p129 = scmp.ne.s32.totalorder %s120, %s121
      %p130 = scmp.eq.s32.totalorder %s26, 0
      %p131 = por %p129, %p130
      %p132 = scmp.ne.s32.totalorder %s120, %s121
      %p133 = scmp.eq.s32.totalorder %s27, 1
      %p134 = por %p132, %p133
      %p136 = scmp.ne.s32.totalorder %s121, %s135
      %p137 = scmp.eq.s32.totalorder %s27, 0
      %p138 = por %p136, %p137
      %s140 = sadd.s32 %s139, 1
      %p143 = scmp.eq.s32.totalorder %s21, 1
      %p144 = scmp.ne.s32.totalorder %s139, %s141
      %p145 = scmp.eq.s32.totalorder %s21, 0
      %p146 = por %p144, %p145
      %p147 = scmp.ne.s32.totalorder %s139, %s141
      %p148 = scmp.eq.s32.totalorder %s26, 1
      %p149 = por %p147, %p148
      %p150 = scmp.ne.s32.totalorder %s141, %s142
      %p151 = scmp.eq.s32.totalorder %s26, 0
      %p152 = por %p150, %p151
      %p153 = scmp.ne.s32.totalorder %s141, %s142
      %p154 = scmp.eq.s32.totalorder %s27, 1
      %p155 = por %p153, %p154
      %p157 = scmp.ne.s32.totalorder %s142, %s156
      %p158 = scmp.eq.s32.totalorder %s27, 0
      %p159 = por %p157, %p158
      %s161 = sadd.s32 %s160, 1
      %p164 = scmp.eq.s32.totalorder %s21, 1
      %p165 = scmp.ne.s32.totalorder %s160, %s162
      %p166 = scmp.eq.s32.totalorder %s21, 0
      %p167 = por %p165, %p166
      %p168 = scmp.ne.s32.totalorder %s160, %s162
      %p169 = scmp.eq.s32.totalorder %s26, 1
      %p170 = por %p168, %p169
      %p171 = scmp.ne.s32.totalorder %s162, %s163
      %p172 = scmp.eq.s32.totalorder %s26, 0
      %p173 = por %p171, %p172
      %p174 = scmp.ne.s32.totalorder %s162, %s163
      %p175 = scmp.eq.s32.totalorder %s27, 1
      %p176 = por %p174, %p175
      %p178 = scmp.ne.s32.totalorder %s163, %s177
      %p179 = scmp.eq.s32.totalorder %s27, 0
      %p180 = por %p178, %p179
      %s182 = sadd.s32 %s181, 1
      %p185 = scmp.eq.s32.totalorder %s21, 1
      %p186 = scmp.ne.s32.totalorder %s181, %s183
      %p187 = scmp.eq.s32.totalorder %s21, 0
      %p188 = por %p186, %p187
      %p189 = scmp.ne.s32.totalorder %s181, %s183
      %p190 = scmp.eq.s32.totalorder %s26, 1
      %p191 = por %p189, %p190
      %p192 = scmp.ne.s32.totalorder %s183, %s184
      %p193 = scmp.eq.s32.totalorder %s26, 0
      %p194 = por %p192, %p193
      %p195 = scmp.ne.s32.totalorder %s183, %s184
      %p196 = scmp.eq.s32.totalorder %s27, 1
      %p197 = por %p195, %p196
      %p199 = scmp.ne.s32.totalorder %s184, %s198
      %p200 = scmp.eq.s32.totalorder %s27, 0
      %p201 = por %p199, %p200
      %s203 = sadd.s32 %s202, 1
      %p206 = scmp.eq.s32.totalorder %s21, 1
      %p207 = scmp.ne.s32.totalorder %s202, %s204
      %p208 = scmp.eq.s32.totalorder %s21, 0
      %p209 = por %p207, %p208
      %p210 = scmp.ne.s32.totalorder %s202, %s204
      %p211 = scmp.eq.s32.totalorder %s26, 1
      %p212 = por %p210, %p211
      %p213 = scmp.ne.s32.totalorder %s204, %s205
      %p214 = scmp.eq.s32.totalorder %s26, 0
      %p215 = por %p213, %p214
      %p216 = scmp.ne.s32.totalorder %s204, %s205
      %p217 = scmp.eq.s32.totalorder %s27, 1
      %p218 = por %p216, %p217
      %p220 = scmp.ne.s32.totalorder %s205, %s219
      %p221 = scmp.eq.s32.totalorder %s27, 0
      %p222 = por %p220, %p221
      %s224 = sadd.s32 %s223, 1
      %p227 = scmp.eq.s32.totalorder %s21, 1
      %p228 = scmp.ne.s32.totalorder %s223, %s225
      %p229 = scmp.eq.s32.totalorder %s21, 0
      %p230 = por %p228, %p229
      %p231 = scmp.ne.s32.totalorder %s223, %s225
      %p232 = scmp.eq.s32.totalorder %s26, 1
      %p233 = por %p231, %p232
      %p234 = scmp.ne.s32.totalorder %s225, %s226
      %p235 = scmp.eq.s32.totalorder %s26, 0
      %p236 = por %p234, %p235
      %p237 = scmp.ne.s32.totalorder %s225, %s226
      %p238 = scmp.eq.s32.totalorder %s27, 1
      %p239 = por %p237, %p238
      %p241 = scmp.ne.s32.totalorder %s226, %s240
      %p242 = scmp.eq.s32.totalorder %s27, 0
      %p243 = por %p241, %p242
      %s245 = sadd.s32 %s244, 1
      %p248 = scmp.eq.s32.totalorder %s21, 1
      %p249 = scmp.ne.s32.totalorder %s244, %s246
      %p250 = scmp.eq.s32.totalorder %s21, 0
      %p251 = por %p249, %p250
      %p252 = scmp.ne.s32.totalorder %s244, %s246
      %p253 = scmp.eq.s32.totalorder %s26, 1
      %p254 = por %p252, %p253
      %p255 = scmp.ne.s32.totalorder %s246, %s247
      %p256 = scmp.eq.s32.totalorder %s26, 0
      %p257 = por %p255, %p256
      %p258 = scmp.ne.s32.totalorder %s246, %s247
      %p259 = scmp.eq.s32.totalorder %s27, 1
      %p260 = por %p258, %p259
      %p262 = scmp.ne.s32.totalorder %s247, %s261
      %p263 = scmp.eq.s32.totalorder %s27, 0
      %p264 = por %p262, %p263
      %s265 = ssub.s32 %s21, %s28
      %p266 = scmp.eq.s32.totalorder %s265, 0
      %s268 = sadd.s32 %s267, 1
      %s269 = scalar_select %p266, %s267, %s268
      %p272 = pneg %p266
      %p273 = scmp.eq.s32.totalorder %s21, 1
      %p274 = por %p272, %p273
      %p275 = scmp.ne.s32.totalorder %s267, %s270
      %p276 = scmp.eq.s32.totalorder %s21, 0
      %p277 = por %p275, %p276
      %p278 = scmp.ne.s32.totalorder %s267, %s270
      %p279 = scmp.eq.s32.totalorder %s26, 1
      %p280 = por %p278, %p279
      %p281 = scmp.ne.s32.totalorder %s270, %s271
      %p282 = scmp.eq.s32.totalorder %s26, 0
      %p283 = por %p281, %p282
      %p284 = scmp.ne.s32.totalorder %s270, %s271
      %p285 = scmp.eq.s32.totalorder %s27, 1
      %p286 = por %p284, %p285
      %p288 = scmp.ne.s32.totalorder %s271, %s287
      %p289 = scmp.eq.s32.totalorder %s27, 0
      %p290 = por %p288, %p289
      %p291 = scmp.le.s32.totalorder 1, %s21
      %p292 = scmp.lt.s32.totalorder %s21, 3
      %p293 = pnand %p291, %p292
      %p294 = pneg %p293
      // Predicated region
      $region9: #{sleep_transformer_forward.8} parent=5 // pred_check
        _
      $region10: #{sleep_transformer_forward.8} parent=5 // pred_check_branch
        %296 = sbr.rel (%p293) target = $region12
      $region11: #{sleep_transformer_forward.8} parent=5 // pred_region
        %s297 = ssub.s32 %s21, 1
        // Predicated region
        $region13: #{sleep_transformer_forward.8} parent=11 // pred_check
          %p298 = pneg %p68
        $region14: #{sleep_transformer_forward.8} parent=11 // pred_check_branch
          %300 = sbr.rel (%p298) target = $region16
        $region15: #{sleep_transformer_forward.8} parent=11 // pred_region
          %302 = vsyncadd [#allocation3], 0
          %s303 = sshll.u32 %s1, 4
          %s304 = int_to_ptr.hbm [resolvable:$true] %s303
          %s305 = sshll.u32 [#allocation2], 4
          %s306 = int_to_ptr.vmem [resolvable:$true] %s305
          %311 = dma.hbm_to_vmem [thread:$0]  %s304, 3072, %s306, [#allocation3], 192, 192, 12
        $region16: #{sleep_transformer_forward.8} parent=11 // pred_fallthru
          _
        // Predicated region
        $region17: #{sleep_transformer_forward.8} parent=11 // pred_check
          %p312 = pneg %p89
        $region18: #{sleep_transformer_forward.8} parent=11 // pred_check_branch
          %314 = sbr.rel (%p312) target = $region20
        $region19: #{sleep_transformer_forward.8} parent=11 // pred_region
          _
        $region20: #{sleep_transformer_forward.8} parent=11 // pred_fallthru
          _
        // Predicated region
        $region21: #{sleep_transformer_forward.8} parent=11 // pred_check
          %p315 = pneg %p110
        $region22: #{sleep_transformer_forward.8} parent=11 // pred_check_branch
          %317 = sbr.rel (%p315) target = $region24
        $region23: #{sleep_transformer_forward.8} parent=11 // pred_region
          %319 = vsyncadd [#allocation5], 0
          %s320 = sshll.u32 %s3, 4
          %s321 = int_to_ptr.hbm [resolvable:$true] %s320
          %s322 = sshll.u32 [#allocation4], 4
          %s323 = int_to_ptr.vmem [resolvable:$true] %s322
          %328 = dma.hbm_to_vmem [thread:$0]  %s321, 1024, %s323, [#allocation5], 64, 64, 4
        $region24: #{sleep_transformer_forward.8} parent=11 // pred_fallthru
          _
        // Predicated region
        $region25: #{sleep_transformer_forward.8} parent=11 // pred_check
          %p329 = pneg %p131
        $region26: #{sleep_transformer_forward.8} parent=11 // pred_check_branch
          %331 = sbr.rel (%p329) target = $region28
        $region27: #{sleep_transformer_forward.8} parent=11 // pred_region
          _
        $region28: #{sleep_transformer_forward.8} parent=11 // pred_fallthru
          _
        // Predicated region
        $region29: #{sleep_transformer_forward.8} parent=11 // pred_check
          %p332 = pneg %p152
        $region30: #{sleep_transformer_forward.8} parent=11 // pred_check_branch
          %334 = sbr.rel (%p332) target = $region32
        $region31: #{sleep_transformer_forward.8} parent=11 // pred_region
          _
        $region32: #{sleep_transformer_forward.8} parent=11 // pred_fallthru
          _
        // Predicated region
        $region33: #{sleep_transformer_forward.8} parent=11 // pred_check
          %p335 = pneg %p173
        $region34: #{sleep_transformer_forward.8} parent=11 // pred_check_branch
          %337 = sbr.rel (%p335) target = $region36
        $region35: #{sleep_transformer_forward.8} parent=11 // pred_region
          _
        $region36: #{sleep_transformer_forward.8} parent=11 // pred_fallthru
          _
        // Predicated region
        $region37: #{sleep_transformer_forward.8} parent=11 // pred_check
          %p338 = pneg %p194
        $region38: #{sleep_transformer_forward.8} parent=11 // pred_check_branch
          %340 = sbr.rel (%p338) target = $region40
        $region39: #{sleep_transformer_forward.8} parent=11 // pred_region
          %342 = vsyncadd [#allocation5], 0
          %s343 = sshll.u32 %s7, 4
          %s344 = int_to_ptr.hbm [resolvable:$true] %s343
          %s345 = sshll.u32 [#allocation6], 4
          %s346 = int_to_ptr.vmem [resolvable:$true] %s345
          %351 = dma.hbm_to_vmem [thread:$0]  %s344, 1024, %s346, [#allocation5], 64, 64, 4
        $region40: #{sleep_transformer_forward.8} parent=11 // pred_fallthru
          _
        // Predicated region
        $region41: #{sleep_transformer_forward.8} parent=11 // pred_check
          %p352 = pneg %p215
        $region42: #{sleep_transformer_forward.8} parent=11 // pred_check_branch
          %354 = sbr.rel (%p352) target = $region44
        $region43: #{sleep_transformer_forward.8} parent=11 // pred_region
          %356 = vsyncadd [#allocation8], 0
          %s358 = sshll.u32 %s8, 4
          %s359 = int_to_ptr.hbm [resolvable:$true] %s358
          %s360 = sshll.u32 [#allocation7], 4
          %s361 = int_to_ptr.vmem [resolvable:$true] %s360
          %363 = dma.hbm_to_vmem [thread:$0]  %s359, 16, %s361, [#allocation8]
        $region44: #{sleep_transformer_forward.8} parent=11 // pred_fallthru
          _
        // Predicated region
        $region45: #{sleep_transformer_forward.8} parent=11 // pred_check
          %p364 = pneg %p236
        $region46: #{sleep_transformer_forward.8} parent=11 // pred_check_branch
          %366 = sbr.rel (%p364) target = $region48
        $region47: #{sleep_transformer_forward.8} parent=11 // pred_region
          %368 = vsyncadd [#allocation8], 0
          %s369 = sshll.u32 %s9, 4
          %s370 = int_to_ptr.hbm [resolvable:$true] %s369
          %s371 = sshll.u32 [#allocation9], 4
          %s372 = int_to_ptr.vmem [resolvable:$true] %s371
          %377 = dma.hbm_to_vmem [thread:$0]  %s370, 1024, %s372, [#allocation8], 64, 64, 4
        $region48: #{sleep_transformer_forward.8} parent=11 // pred_fallthru
          _
        // Predicated region
        $region49: #{sleep_transformer_forward.8} parent=11 // pred_check
          %p378 = pneg %p257
        $region50: #{sleep_transformer_forward.8} parent=11 // pred_check_branch
          %380 = sbr.rel (%p378) target = $region52
        $region51: #{sleep_transformer_forward.8} parent=11 // pred_region
          %382 = vsyncadd [#allocation11], 0
          %s384 = sshll.u32 %s10, 4
          %s385 = int_to_ptr.hbm [resolvable:$true] %s384
          %s386 = sshll.u32 [#allocation10], 4
          %s387 = int_to_ptr.vmem [resolvable:$true] %s386
          %389 = dma.hbm_to_vmem [thread:$0]  %s385, 16, %s387, [#allocation11]
        $region52: #{sleep_transformer_forward.8} parent=11 // pred_fallthru
          _
      $region12: #{sleep_transformer_forward.8} parent=5 // pred_fallthru
        _
      %p390 = scmp.lt.s32.totalorder %s21, 2
      // Predicated region
      $region53: #{sleep_transformer_forward.8} parent=5 // pred_check
        %p391 = pneg %p390
      $region54: #{sleep_transformer_forward.8} parent=5 // pred_check_branch
        %393 = sbr.rel (%p391) target = $region56
      $region55: #{sleep_transformer_forward.8} parent=5 // pred_region
        // Predicated region
        $region57: #{sleep_transformer_forward.8} parent=55 // pred_check
          %p394 = pneg %p41
        $region58: #{sleep_transformer_forward.8} parent=55 // pred_check_branch
          %396 = sbr.rel (%p394) target = $region60
        $region59: #{sleep_transformer_forward.8} parent=55 // pred_region
          %p397 = scmp.lt.s32.totalorder %s21, 1
          %s398 = scalar_select %p397, %s21, 1
          %s399 = smul.addr %s398, 4
          %s400 = smul.addr %s399, 8
          %s401 = scalar_lea.vmem %s0, %s400
        $region60: #{sleep_transformer_forward.8} parent=55 // pred_fallthru
          _
      $region56: #{sleep_transformer_forward.8} parent=5 // pred_fallthru
        _
      %p402 = scmp.le.s32.totalorder 1, %s21
      %p403 = scmp.lt.s32.totalorder %s21, 3
      %p404 = pnand %p402, %p403
      %p405 = pneg %p404
      // Predicated region
      $region61: #{sleep_transformer_forward.8} parent=5 // pred_check
        _
      $region62: #{sleep_transformer_forward.8} parent=5 // pred_check_branch
        %407 = sbr.rel (%p404) target = $region64
      $region63: #{sleep_transformer_forward.8} parent=5 // pred_region
        %s408 = ssub.s32 %s21, 1
        // Predicated region
        $region65: #{sleep_transformer_forward.8} parent=63 // pred_check
          %p409 = pneg %p68
        $region66: #{sleep_transformer_forward.8} parent=63 // pred_check_branch
          %411 = sbr.rel (%p409) target = $region68
        $region67: #{sleep_transformer_forward.8} parent=63 // pred_region
          %413 = dma.done [#allocation3], 3072
        $region68: #{sleep_transformer_forward.8} parent=63 // pred_fallthru
          _
        // Predicated region
        $region69: #{sleep_transformer_forward.8} parent=63 // pred_check
          %p414 = pneg %p110
        $region70: #{sleep_transformer_forward.8} parent=63 // pred_check_branch
          %416 = sbr.rel (%p414) target = $region72
        $region71: #{sleep_transformer_forward.8} parent=63 // pred_region
          %418 = dma.done [#allocation5], 1024
        $region72: #{sleep_transformer_forward.8} parent=63 // pred_fallthru
          _
        // Predicated region
        $region73: #{sleep_transformer_forward.8} parent=63 // pred_check
          %p419 = pneg %p194
        $region74: #{sleep_transformer_forward.8} parent=63 // pred_check_branch
          %421 = sbr.rel (%p419) target = $region76
        $region75: #{sleep_transformer_forward.8} parent=63 // pred_region
          %423 = dma.done [#allocation5], 1024
        $region76: #{sleep_transformer_forward.8} parent=63 // pred_fallthru
          _
        // Predicated region
        $region77: #{sleep_transformer_forward.8} parent=63 // pred_check
          %p424 = pneg %p215
        $region78: #{sleep_transformer_forward.8} parent=63 // pred_check_branch
          %426 = sbr.rel (%p424) target = $region80
        $region79: #{sleep_transformer_forward.8} parent=63 // pred_region
          %428 = dma.done [#allocation8], 16
        $region80: #{sleep_transformer_forward.8} parent=63 // pred_fallthru
          _
        // Predicated region
        $region81: #{sleep_transformer_forward.8} parent=63 // pred_check
          %p429 = pneg %p236
        $region82: #{sleep_transformer_forward.8} parent=63 // pred_check_branch
          %431 = sbr.rel (%p429) target = $region84
        $region83: #{sleep_transformer_forward.8} parent=63 // pred_region
          %433 = dma.done [#allocation8], 1024
        $region84: #{sleep_transformer_forward.8} parent=63 // pred_fallthru
          _
        // Predicated region
        $region85: #{sleep_transformer_forward.8} parent=63 // pred_check
          %p434 = pneg %p257
        $region86: #{sleep_transformer_forward.8} parent=63 // pred_check_branch
          %436 = sbr.rel (%p434) target = $region88
        $region87: #{sleep_transformer_forward.8} parent=63 // pred_region
          %438 = dma.done [#allocation11], 16
        $region88: #{sleep_transformer_forward.8} parent=63 // pred_fallthru
          _
        %p439 = scmp.lt.s32.totalorder %s26, 1
        %s440 = scalar_select %p439, %s26, 1
        %s441 = smul.addr %s440, 4
        %s442 = smul.addr %s441, 8
        %s443 = scalar_lea.vmem %s0, %s442
        %p444 = pneg %p47
        %p445 = pneg %p44
        %p446 = pneg %p68
        %p447 = pneg %p65
        %p448 = pneg %p89
        %p449 = pneg %p86
        %p450 = pneg %p110
        %p451 = pneg %p107
        %p452 = pneg %p131
        %p453 = pneg %p128
        %p454 = pneg %p152
        %p455 = pneg %p149
        %p456 = pneg %p173
        %p457 = pneg %p170
        %p458 = pneg %p194
        %p459 = pneg %p191
        %p460 = pneg %p215
        %p461 = pneg %p212
        %p462 = pneg %p236
        %p463 = pneg %p233
        %p464 = pneg %p257
        %p465 = pneg %p254
        %p466 = pneg %p283
        %p467 = pneg %p280
        %p468 = scmp.lt.s32.totalorder %s26, 1
        %s469 = scalar_select %p468, %s26, 1
        %s470 = smul.addr %s469, 4
        %s471 = smul.addr %s470, 8
        %s472 = scalar_lea.vmem %s11, %s471
        %p473 = scmp.lt.s32.totalorder %s26, 1
        %s474 = scalar_select %p473, %s26, 1
        %s475 = smul.addr %s474, 4
        %s476 = smul.addr %s475, 8
        %s477 = scalar_lea.vmem %s0, %s476
        %p478 = scmp.lt.s32.totalorder %s26, 1
        %s479 = scalar_select %p478, %s26, 1
        %s480 = smul.addr %s479, 4
        %s481 = smul.addr %s480, 8
        %s482 = scalar_lea.vmem %s11, %s481
        %v484 = vld [vmem:[%s477] sm:$0xff]
        %v485 = vld [vmem:[%s477 + $0x8] sm:$0xff]
        %v486 = vld [vmem:[%s477 + $0x10] sm:$0xff]
        %v487 = vld [vmem:[%s477 + $0x18] sm:$0xff]
        %v488 = vpack.c.bf16 %v485, %v484
        %v489 = vpack.c.bf16 %v487, %v486
        %v490 = vld [vmem:[#allocation2] sm:$0xff]
        %v491 = vld [vmem:[#allocation2 + $0x8] sm:$0xf]
        %v492 = vld [vmem:[#allocation2 + $0xc] sm:$0xff]
        %v493 = vld [vmem:[#allocation2 + $0x14] sm:$0xf]
        %v494 = vld [vmem:[#allocation2 + $0x18] sm:$0xff]
        %v495 = vld [vmem:[#allocation2 + $0x20] sm:$0xf]
        %v496 = vld [vmem:[#allocation2 + $0x24] sm:$0xff]
        %v497 = vld [vmem:[#allocation2 + $0x2c] sm:$0xf]
        %v498 = vld [vmem:[#allocation2 + $0x30] sm:$0xff]
        %v499 = vld [vmem:[#allocation2 + $0x38] sm:$0xf]
        %v500 = vld [vmem:[#allocation2 + $0x3c] sm:$0xff]
        %v501 = vld [vmem:[#allocation2 + $0x44] sm:$0xf]
        %v502 = vld [vmem:[#allocation2 + $0x48] sm:$0xff]
        %v503 = vld [vmem:[#allocation2 + $0x50] sm:$0xf]
        %v504 = vld [vmem:[#allocation2 + $0x54] sm:$0xff]
        %v505 = vld [vmem:[#allocation2 + $0x5c] sm:$0xf]
        %v506 = vld [vmem:[#allocation2 + $0x60] sm:$0xff]
        %v507 = vld [vmem:[#allocation2 + $0x68] sm:$0xf]
        %v508 = vld [vmem:[#allocation2 + $0x6c] sm:$0xff]
        %v509 = vld [vmem:[#allocation2 + $0x74] sm:$0xf]
        %v510 = vld [vmem:[#allocation2 + $0x78] sm:$0xff]
        %v511 = vld [vmem:[#allocation2 + $0x80] sm:$0xf]
        %v512 = vld [vmem:[#allocation2 + $0x84] sm:$0xff]
        %v513 = vld [vmem:[#allocation2 + $0x8c] sm:$0xf]
        %v514 = vld [vmem:[#allocation2 + $0x90] sm:$0xff]
        %v515 = vld [vmem:[#allocation2 + $0x98] sm:$0xf]
        %v516 = vld [vmem:[#allocation2 + $0x9c] sm:$0xff]
        %v517 = vld [vmem:[#allocation2 + $0xa4] sm:$0xf]
        %v518 = vld [vmem:[#allocation2 + $0xa8] sm:$0xff]
        %v519 = vld [vmem:[#allocation2 + $0xb0] sm:$0xf]
        %v520 = vld [vmem:[#allocation2 + $0xb4] sm:$0xff]
        %v521 = vld [vmem:[#allocation2 + $0xbc] sm:$0xf]
        %v522 = vld [vmem:[%s2] sm:$0x7]
        %v524 = vperm.slane %v522, 0
        %v525 = vperm.slane %v522, 1
        %v526 = vperm.slane %v522, 2
        %v562 = vunpack.c.l.b16 %v490
        %v563 = vunpack.c.h.b16 %v490
        %v564 = vunpack.c.l.b16 %v491
        %v565 = vunpack.c.l.b16 %v492
        %v566 = vunpack.c.h.b16 %v492
        %v567 = vunpack.c.l.b16 %v493
        %v568 = vunpack.c.l.b16 %v494
        %v569 = vunpack.c.h.b16 %v494
        %v570 = vunpack.c.l.b16 %v495
        %v571 = vunpack.c.l.b16 %v496
        %v572 = vunpack.c.h.b16 %v496
        %v573 = vunpack.c.l.b16 %v497
        %v574 = vunpack.c.l.b16 %v498
        %v575 = vunpack.c.h.b16 %v498
        %v576 = vunpack.c.l.b16 %v499
        %v577 = vunpack.c.l.b16 %v500
        %v578 = vunpack.c.h.b16 %v500
        %v579 = vunpack.c.l.b16 %v501
        %v580 = vunpack.c.l.b16 %v502
        %v581 = vunpack.c.h.b16 %v502
        %v582 = vunpack.c.l.b16 %v503
        %v583 = vunpack.c.l.b16 %v504
        %v584 = vunpack.c.h.b16 %v504
        %v585 = vunpack.c.l.b16 %v505
        %v586 = vunpack.c.l.b16 %v506
        %v587 = vunpack.c.h.b16 %v506
        %v588 = vunpack.c.l.b16 %v507
        %v589 = vunpack.c.l.b16 %v508
        %v590 = vunpack.c.h.b16 %v508
        %v591 = vunpack.c.l.b16 %v509
        %v592 = vunpack.c.l.b16 %v510
        %v593 = vunpack.c.h.b16 %v510
        %v594 = vunpack.c.l.b16 %v511
        %v595 = vunpack.c.l.b16 %v512
        %v596 = vunpack.c.h.b16 %v512
        %v597 = vunpack.c.l.b16 %v513
        %v598 = vunpack.c.l.b16 %v514
        %v599 = vunpack.c.h.b16 %v514
        %v600 = vunpack.c.l.b16 %v515
        %v601 = vunpack.c.l.b16 %v516
        %v602 = vunpack.c.h.b16 %v516
        %v603 = vunpack.c.l.b16 %v517
        %v604 = vunpack.c.l.b16 %v518
        %v605 = vunpack.c.h.b16 %v518
        %v606 = vunpack.c.l.b16 %v519
        %v607 = vunpack.c.l.b16 %v520
        %v608 = vunpack.c.h.b16 %v520
        %v609 = vunpack.c.l.b16 %v521
        %v610 = vpack.c.b16 %v565, %v562
        %v611 = vpack.c.b16 %v566, %v563
        %v612 = vpack.c.b16 %v567, %v564
        %v613 = vpack.c.b16 %v571, %v568
        %v614 = vpack.c.b16 %v572, %v569
        %v615 = vpack.c.b16 %v573, %v570
        %v616 = vpack.c.b16 %v577, %v574
        %v617 = vpack.c.b16 %v578, %v575
        %v618 = vpack.c.b16 %v579, %v576
        %v619 = vpack.c.b16 %v583, %v580
        %v620 = vpack.c.b16 %v584, %v581
        %v621 = vpack.c.b16 %v585, %v582
        %v622 = vpack.c.b16 %v589, %v586
        %v623 = vpack.c.b16 %v590, %v587
        %v624 = vpack.c.b16 %v591, %v588
        %v625 = vpack.c.b16 %v595, %v592
        %v626 = vpack.c.b16 %v596, %v593
        %v627 = vpack.c.b16 %v597, %v594
        %v628 = vpack.c.b16 %v601, %v598
        %v629 = vpack.c.b16 %v602, %v599
        %v630 = vpack.c.b16 %v603, %v600
        %v631 = vpack.c.b16 %v607, %v604
        %v632 = vpack.c.b16 %v608, %v605
        %v633 = vpack.c.b16 %v609, %v606
        %658 = vmatpush.bf16.msra.mxu0 %v631
        %659 = vmatpush.bf16.msra.mxu0 %v628
        %660 = vmatpush.bf16.msra.mxu0 %v625
        %661 = vmatpush.bf16.msra.mxu0 %v622
        %662 = vmatpush.bf16.msra.mxu0 %v619
        %663 = vmatpush.bf16.msra.mxu0 %v616
        %664 = vmatpush.bf16.msra.mxu0 %v613
        %665 = vmatpush.bf16.msra.mxu0 %v610
        %666 = vmatmul.bf16.gmra.mxu0 %v488
        %v667 = vpop.f32.mrf.mxu0
        %v668 = vadd.f32 %v524, %v667
        %v669 = vpop.f32.mrf.mxu0
        %v670 = vadd.f32 %v524, %v669
        %671 = vmatmul.bf16.gmra.mxu0 %v489
        %v672 = vpop.f32.mrf.mxu0
        %v673 = vadd.f32 %v524, %v672
        %v674 = vpop.f32.mrf.mxu0
        %v675 = vadd.f32 %v524, %v674
        %676 = vdwg.mxu0
        %677 = vmatpush.bf16.msra.mxu0 %v632
        %678 = vmatpush.bf16.msra.mxu0 %v629
        %679 = vmatpush.bf16.msra.mxu0 %v626
        %680 = vmatpush.bf16.msra.mxu0 %v623
        %681 = vmatpush.bf16.msra.mxu0 %v620
        %682 = vmatpush.bf16.msra.mxu0 %v617
        %683 = vmatpush.bf16.msra.mxu0 %v614
        %684 = vmatpush.bf16.msra.mxu0 %v611
        %685 = vmatmul.bf16.gmra.mxu0 %v488
        %v686 = vpop.f32.mrf.mxu0
        %v687 = vadd.f32 %v525, %v686
        %v688 = vpop.f32.mrf.mxu0
        %v689 = vadd.f32 %v525, %v688
        %690 = vmatmul.bf16.gmra.mxu0 %v489
        %v691 = vpop.f32.mrf.mxu0
        %v692 = vadd.f32 %v525, %v691
        %v693 = vpop.f32.mrf.mxu0
        %v694 = vadd.f32 %v525, %v693
        %695 = vdwg.mxu0
        %696 = vmatpush.bf16.msra.mxu0 %v633
        %697 = vmatpush.bf16.msra.mxu0 %v630
        %698 = vmatpush.bf16.msra.mxu0 %v627
        %699 = vmatpush.bf16.msra.mxu0 %v624
        %700 = vmatpush.bf16.msra.mxu0 %v621
        %701 = vmatpush.bf16.msra.mxu0 %v618
        %702 = vmatpush.bf16.msra.mxu0 %v615
        %703 = vmatpush.bf16.msra.mxu0 %v612
        %704 = vmatmul.bf16.gmra.mxu0 %v488
        %v705 = vpop.f32.mrf.mxu0
        %v706 = vadd.f32 %v526, %v705
        %v707 = vpop.f32.mrf.mxu0
        %v708 = vadd.f32 %v526, %v707
        %709 = vmatmul.bf16.gmra.mxu0 %v489
        %v710 = vpop.f32.mrf.mxu0
        %v711 = vadd.f32 %v526, %v710
        %v712 = vpop.f32.mrf.mxu0
        %v713 = vadd.f32 %v526, %v712
        %714 = vdwg.mxu0
        %v715 = vld [vmem:[#allocation4] sm:$0xf]
        %v716 = vld [vmem:[#allocation4 + $0x4] sm:$0xf]
        %v717 = vld [vmem:[#allocation4 + $0x8] sm:$0xf]
        %v718 = vld [vmem:[#allocation4 + $0xc] sm:$0xf]
        %v719 = vld [vmem:[#allocation4 + $0x10] sm:$0xf]
        %v720 = vld [vmem:[#allocation4 + $0x14] sm:$0xf]
        %v721 = vld [vmem:[#allocation4 + $0x18] sm:$0xf]
        %v722 = vld [vmem:[#allocation4 + $0x1c] sm:$0xf]
        %v723 = vld [vmem:[#allocation4 + $0x20] sm:$0xf]
        %v724 = vld [vmem:[#allocation4 + $0x24] sm:$0xf]
        %v725 = vld [vmem:[#allocation4 + $0x28] sm:$0xf]
        %v726 = vld [vmem:[#allocation4 + $0x2c] sm:$0xf]
        %v727 = vld [vmem:[#allocation4 + $0x30] sm:$0xf]
        %v728 = vld [vmem:[#allocation4 + $0x34] sm:$0xf]
        %v729 = vld [vmem:[#allocation4 + $0x38] sm:$0xf]
        %v730 = vld [vmem:[#allocation4 + $0x3c] sm:$0xf]
        %v731 = vld [vmem:[%s4] sm:$0x1]
        %v733 = vperm.slane %v731, 0
        %v735 = vpack.c.bf16 %v670, %v668
        %v736 = vpack.c.bf16 %v675, %v673
        %v737 = vpack.c.bf16 %v689, %v687
        %v738 = vpack.c.bf16 %v694, %v692
        %v739 = vpack.c.bf16 %v708, %v706
        %v740 = vpack.c.bf16 %v713, %v711
        %vm741 = vcmask 261120
        %v743 = vsel %vm741, %v735, 0
        %v746 = vsel %vm741, %v736, 0
        %v749 = vsel %vm741, %v737, 0
        %v752 = vsel %vm741, %v738, 0
        %754 = vmatpush.bf16.xpose.msra.mxu0 0
        %755 = vmatpush.bf16.xpose.msra.mxu0 0
        %756 = vmatpush.bf16.xpose.msra.mxu0 0
        %757 = vmatpush.bf16.xpose.msra.mxu0 0
        %758 = vmatpush.bf16.xpose.msra.mxu0 0
        %759 = vmatpush.bf16.xpose.msra.mxu0 0
        %760 = vmatpush.bf16.xpose.msra.mxu0 %v752
        %761 = vmatpush.bf16.xpose.msra.mxu0 %v749
        %762 = vmatmul.bf16.gmra.mxu0 %v743
        %v763 = vpop.f32.mrf.mxu0
        %v764 = vadd.f32 0.0, %v763
        %v765 = vpop.f32.mrf.mxu0
        %v766 = vadd.f32 0.0, %v765
        %767 = vmatmul.bf16.gmra.mxu0 %v746
        %v768 = vpop.f32.mrf.mxu0
        %v769 = vadd.f32 0.0, %v768
        %v770 = vpop.f32.mrf.mxu0
        %v771 = vadd.f32 0.0, %v770
        %772 = vdwg.mxu0
        %v773 = vmul.f32 %v764, 0.17677669
        %v774 = vmul.f32 %v766, 0.17677669
        %v775 = vmul.f32 %v769, 0.17677669
        %v776 = vmul.f32 %v771, 0.17677669
        %v777 = vsel %vm741, %v773, -inf
        %778 = vmax.xlane.f32.xlu0 %v777
        %v779 = vpop.xlane.xlu0 %778
        %v780 = vsel %vm741, %v774, -inf
        %781 = vmax.xlane.f32.xlu0 %v780
        %v782 = vpop.xlane.xlu0 %781
        %v783 = vsel %vm741, %v775, -inf
        %784 = vmax.xlane.f32.xlu0 %v783
        %v785 = vpop.xlane.xlu0 %784
        %v786 = vsel %vm741, %v776, -inf
        %787 = vmax.xlane.f32.xlu0 %v786
        %v788 = vpop.xlane.xlu0 %787
        %v789 = vsub.f32 %v773, %v779
        %v790 = vsub.f32 %v774, %v782
        %v791 = vsub.f32 %v775, %v785
        %v792 = vsub.f32 %v776, %v788
        %v793 = vmul.f32 %v789, 1.442695
        %v794 = vpow.pop %v793
        %v795 = vmul.f32 %v790, 1.442695
        %v796 = vpow.pop %v795
        %v797 = vmul.f32 %v791, 1.442695
        %v798 = vpow.pop %v797
        %v799 = vmul.f32 %v792, 1.442695
        %v800 = vpow.pop %v799
        %v801 = vsel %vm741, %v794, 0.0
        %802 = vadd.xlane.f32.xlu0 %v801
        %v803 = vpop.xlane.xlu0 %802
        %v804 = vsel %vm741, %v796, 0.0
        %805 = vadd.xlane.f32.xlu0 %v804
        %v806 = vpop.xlane.xlu0 %805
        %v807 = vsel %vm741, %v798, 0.0
        %808 = vadd.xlane.f32.xlu0 %v807
        %v809 = vpop.xlane.xlu0 %808
        %v810 = vsel %vm741, %v800, 0.0
        %811 = vadd.xlane.f32.xlu0 %v810
        %v812 = vpop.xlane.xlu0 %811
        %v813 = vrcp.pop %v803
        %v814 = vmul.f32 %v803, %v813
        %v815 = vsub.f32 1.0, %v814
        %v816 = vmul.f32 %v813, %v815
        %v817 = vadd.f32 %v813, %v816
        %vm818 = vweird.f32 %v803
        %vm819 = vweird.f32 %v813
        %vm820 = vmor %vm818, %vm819
        %v821 = vsel %vm820, %v813, %v817
        %v822 = vand.u32 2147483647, %v803
        %vm823 = vcmp.eq.f32.partialorder %v822, 8.507059e+37
        %v824 = vand.u32 %v803, 2147483648
        %v825 = vor.u32 1.1754944e-38, %v824
        %v826 = vsel %vm823, %v825, %v821
        %v827 = vmul.f32 %v794, %v826
        %v828 = vrcp.pop %v806
        %v829 = vmul.f32 %v806, %v828
        %v830 = vsub.f32 1.0, %v829
        %v831 = vmul.f32 %v828, %v830
        %v832 = vadd.f32 %v828, %v831
        %vm833 = vweird.f32 %v806
        %vm834 = vweird.f32 %v828
        %vm835 = vmor %vm833, %vm834
        %v836 = vsel %vm835, %v828, %v832
        %v837 = vand.u32 2147483647, %v806
        %vm838 = vcmp.eq.f32.partialorder %v837, 8.507059e+37
        %v839 = vand.u32 %v806, 2147483648
        %v840 = vor.u32 1.1754944e-38, %v839
        %v841 = vsel %vm838, %v840, %v836
        %v842 = vmul.f32 %v796, %v841
        %v843 = vrcp.pop %v809
        %v844 = vmul.f32 %v809, %v843
        %v845 = vsub.f32 1.0, %v844
        %v846 = vmul.f32 %v843, %v845
        %v847 = vadd.f32 %v843, %v846
        %vm848 = vweird.f32 %v809
        %vm849 = vweird.f32 %v843
        %vm850 = vmor %vm848, %vm849
        %v851 = vsel %vm850, %v843, %v847
        %v852 = vand.u32 2147483647, %v809
        %vm853 = vcmp.eq.f32.partialorder %v852, 8.507059e+37
        %v854 = vand.u32 %v809, 2147483648
        %v855 = vor.u32 1.1754944e-38, %v854
        %v856 = vsel %vm853, %v855, %v851
        %v857 = vmul.f32 %v798, %v856
        %v858 = vrcp.pop %v812
        %v859 = vmul.f32 %v812, %v858
        %v860 = vsub.f32 1.0, %v859
        %v861 = vmul.f32 %v858, %v860
        %v862 = vadd.f32 %v858, %v861
        %vm863 = vweird.f32 %v812
        %vm864 = vweird.f32 %v858
        %vm865 = vmor %vm863, %vm864
        %v866 = vsel %vm865, %v858, %v862
        %v867 = vand.u32 2147483647, %v812
        %vm868 = vcmp.eq.f32.partialorder %v867, 8.507059e+37
        %v869 = vand.u32 %v812, 2147483648
        %v870 = vor.u32 1.1754944e-38, %v869
        %v871 = vsel %vm868, %v870, %v866
        %v872 = vmul.f32 %v800, %v871
        %v873 = vpack.c.bf16 %v842, %v827
        %v874 = vpack.c.bf16 %v872, %v857
        %v876 = vsel %vm741, %v873, 0
        %v879 = vsel %vm741, %v874, 0
        %881 = vmatpush.bf16.msra.mxu0 0
        %882 = vmatpush.bf16.msra.mxu0 0
        %883 = vmatpush.bf16.msra.mxu0 0
        %884 = vmatpush.bf16.msra.mxu0 0
        %885 = vmatpush.bf16.msra.mxu0 0
        %886 = vmatpush.bf16.msra.mxu0 0
        %887 = vmatpush.bf16.msra.mxu0 %v740
        %888 = vmatpush.bf16.msra.mxu0 %v739
        %889 = vmatmul.bf16.gmra.mxu0 %v876
        %v890 = vpop.f32.mrf.mxu0
        %v891 = vadd.f32 0.0, %v890
        %v892 = vpop.f32.mrf.mxu0
        %v893 = vadd.f32 0.0, %v892
        %894 = vmatmul.bf16.gmra.mxu0 %v879
        %v895 = vpop.f32.mrf.mxu0
        %v896 = vadd.f32 0.0, %v895
        %v897 = vpop.f32.mrf.mxu0
        %v898 = vadd.f32 0.0, %v897
        %899 = vdwg.mxu0
        %v900 = vpack.c.bf16 %v893, %v891
        %v901 = vpack.c.bf16 %v898, %v896
        %v906 = vunpack.c.l.b16 %v715
        %v907 = vunpack.c.l.b16 %v716
        %v908 = vunpack.c.l.b16 %v717
        %v909 = vunpack.c.l.b16 %v718
        %v910 = vpack.c.b16 %v907, %v906
        %v911 = vpack.c.b16 %v909, %v908
        %v915 = vsel %vm741, %v900, 0
        %v918 = vsel %vm741, %v901, 0
        %920 = vmatpush.bf16.msra.mxu0 0
        %921 = vmatpush.bf16.msra.mxu0 0
        %922 = vmatpush.bf16.msra.mxu0 0
        %923 = vmatpush.bf16.msra.mxu0 0
        %924 = vmatpush.bf16.msra.mxu0 0
        %925 = vmatpush.bf16.msra.mxu0 0
        %926 = vmatpush.bf16.msra.mxu0 %v911
        %927 = vmatpush.bf16.msra.mxu0 %v910
        %928 = vmatmul.bf16.gmra.mxu0 %v915
        %v929 = vpop.f32.mrf.mxu0
        %v930 = vadd.f32 0.0, %v929
        %v931 = vpop.f32.mrf.mxu0
        %v932 = vadd.f32 0.0, %v931
        %933 = vmatmul.bf16.gmra.mxu0 %v918
        %v934 = vpop.f32.mrf.mxu0
        %v935 = vadd.f32 0.0, %v934
        %v936 = vpop.f32.mrf.mxu0
        %v937 = vadd.f32 0.0, %v936
        %938 = vdwg.mxu0
        %v939 = vadd.f32 %v733, %v930
        %v940 = vadd.f32 %v733, %v932
        %v941 = vadd.f32 %v733, %v935
        %v942 = vadd.f32 %v733, %v937
        %945 = vrot.lane.b32.xlu0 %v735, 96
        %v946 = vpop.permute.xlu0 %945
        %947 = vrot.lane.b32.xlu0 %v736, 96
        %v948 = vpop.permute.xlu0 %947
        %951 = vrot.lane.b32.xlu0 %v737, 96
        %v952 = vpop.permute.xlu0 %951
        %953 = vrot.lane.b32.xlu0 %v738, 96
        %v954 = vpop.permute.xlu0 %953
        %v956 = vsel %vm741, %v946, 0
        %v959 = vsel %vm741, %v948, 0
        %v962 = vsel %vm741, %v952, 0
        %v965 = vsel %vm741, %v954, 0
        %967 = vmatpush.bf16.xpose.msra.mxu0 0
        %968 = vmatpush.bf16.xpose.msra.mxu0 0
        %969 = vmatpush.bf16.xpose.msra.mxu0 0
        %970 = vmatpush.bf16.xpose.msra.mxu0 0
        %971 = vmatpush.bf16.xpose.msra.mxu0 0
        %972 = vmatpush.bf16.xpose.msra.mxu0 0
        %973 = vmatpush.bf16.xpose.msra.mxu0 %v965
        %974 = vmatpush.bf16.xpose.msra.mxu0 %v962
        %975 = vmatmul.bf16.gmra.mxu0 %v956
        %v976 = vpop.f32.mrf.mxu0
        %v977 = vadd.f32 0.0, %v976
        %v978 = vpop.f32.mrf.mxu0
        %v979 = vadd.f32 0.0, %v978
        %980 = vmatmul.bf16.gmra.mxu0 %v959
        %v981 = vpop.f32.mrf.mxu0
        %v982 = vadd.f32 0.0, %v981
        %v983 = vpop.f32.mrf.mxu0
        %v984 = vadd.f32 0.0, %v983
        %985 = vdwg.mxu0
        %v986 = vmul.f32 %v977, 0.17677669
        %v987 = vmul.f32 %v979, 0.17677669
        %v988 = vmul.f32 %v982, 0.17677669
        %v989 = vmul.f32 %v984, 0.17677669
        %v990 = vsel %vm741, %v986, -inf
        %991 = vmax.xlane.f32.xlu0 %v990
        %v992 = vpop.xlane.xlu0 %991
        %v993 = vsel %vm741, %v987, -inf
        %994 = vmax.xlane.f32.xlu0 %v993
        %v995 = vpop.xlane.xlu0 %994
        %v996 = vsel %vm741, %v988, -inf
        %997 = vmax.xlane.f32.xlu0 %v996
        %v998 = vpop.xlane.xlu0 %997
        %v999 = vsel %vm741, %v989, -inf
        %1000 = vmax.xlane.f32.xlu0 %v999
        %v1001 = vpop.xlane.xlu0 %1000
        %v1002 = vsub.f32 %v986, %v992
        %v1003 = vsub.f32 %v987, %v995
        %v1004 = vsub.f32 %v988, %v998
        %v1005 = vsub.f32 %v989, %v1001
        %v1006 = vmul.f32 %v1002, 1.442695
        %v1007 = vpow.pop %v1006
        %v1008 = vmul.f32 %v1003, 1.442695
        %v1009 = vpow.pop %v1008
        %v1010 = vmul.f32 %v1004, 1.442695
        %v1011 = vpow.pop %v1010
        %v1012 = vmul.f32 %v1005, 1.442695
        %v1013 = vpow.pop %v1012
        %v1014 = vsel %vm741, %v1007, 0.0
        %1015 = vadd.xlane.f32.xlu0 %v1014
        %v1016 = vpop.xlane.xlu0 %1015
        %v1017 = vsel %vm741, %v1009, 0.0
        %1018 = vadd.xlane.f32.xlu0 %v1017
        %v1019 = vpop.xlane.xlu0 %1018
        %v1020 = vsel %vm741, %v1011, 0.0
        %1021 = vadd.xlane.f32.xlu0 %v1020
        %v1022 = vpop.xlane.xlu0 %1021
        %v1023 = vsel %vm741, %v1013, 0.0
        %1024 = vadd.xlane.f32.xlu0 %v1023
        %v1025 = vpop.xlane.xlu0 %1024
        %v1026 = vrcp.pop %v1016
        %v1027 = vmul.f32 %v1016, %v1026
        %v1028 = vsub.f32 1.0, %v1027
        %v1029 = vmul.f32 %v1026, %v1028
        %v1030 = vadd.f32 %v1026, %v1029
        %vm1031 = vweird.f32 %v1016
        %vm1032 = vweird.f32 %v1026
        %vm1033 = vmor %vm1031, %vm1032
        %v1034 = vsel %vm1033, %v1026, %v1030
        %v1035 = vand.u32 2147483647, %v1016
        %vm1036 = vcmp.eq.f32.partialorder %v1035, 8.507059e+37
        %v1037 = vand.u32 %v1016, 2147483648
        %v1038 = vor.u32 1.1754944e-38, %v1037
        %v1039 = vsel %vm1036, %v1038, %v1034
        %v1040 = vmul.f32 %v1007, %v1039
        %v1041 = vrcp.pop %v1019
        %v1042 = vmul.f32 %v1019, %v1041
        %v1043 = vsub.f32 1.0, %v1042
        %v1044 = vmul.f32 %v1041, %v1043
        %v1045 = vadd.f32 %v1041, %v1044
        %vm1046 = vweird.f32 %v1019
        %vm1047 = vweird.f32 %v1041
        %vm1048 = vmor %vm1046, %vm1047
        %v1049 = vsel %vm1048, %v1041, %v1045
        %v1050 = vand.u32 2147483647, %v1019
        %vm1051 = vcmp.eq.f32.partialorder %v1050, 8.507059e+37
        %v1052 = vand.u32 %v1019, 2147483648
        %v1053 = vor.u32 1.1754944e-38, %v1052
        %v1054 = vsel %vm1051, %v1053, %v1049
        %v1055 = vmul.f32 %v1009, %v1054
        %v1056 = vrcp.pop %v1022
        %v1057 = vmul.f32 %v1022, %v1056
        %v1058 = vsub.f32 1.0, %v1057
        %v1059 = vmul.f32 %v1056, %v1058
        %v1060 = vadd.f32 %v1056, %v1059
        %vm1061 = vweird.f32 %v1022
        %vm1062 = vweird.f32 %v1056
        %vm1063 = vmor %vm1061, %vm1062
        %v1064 = vsel %vm1063, %v1056, %v1060
        %v1065 = vand.u32 2147483647, %v1022
        %vm1066 = vcmp.eq.f32.partialorder %v1065, 8.507059e+37
        %v1067 = vand.u32 %v1022, 2147483648
        %v1068 = vor.u32 1.1754944e-38, %v1067
        %v1069 = vsel %vm1066, %v1068, %v1064
        %v1070 = vmul.f32 %v1011, %v1069
        %v1071 = vrcp.pop %v1025
        %v1072 = vmul.f32 %v1025, %v1071
        %v1073 = vsub.f32 1.0, %v1072
        %v1074 = vmul.f32 %v1071, %v1073
        %v1075 = vadd.f32 %v1071, %v1074
        %vm1076 = vweird.f32 %v1025
        %vm1077 = vweird.f32 %v1071
        %vm1078 = vmor %vm1076, %vm1077
        %v1079 = vsel %vm1078, %v1071, %v1075
        %v1080 = vand.u32 2147483647, %v1025
        %vm1081 = vcmp.eq.f32.partialorder %v1080, 8.507059e+37
        %v1082 = vand.u32 %v1025, 2147483648
        %v1083 = vor.u32 1.1754944e-38, %v1082
        %v1084 = vsel %vm1081, %v1083, %v1079
        %v1085 = vmul.f32 %v1013, %v1084
        %v1086 = vpack.c.bf16 %v1055, %v1040
        %v1087 = vpack.c.bf16 %v1085, %v1070
        %1090 = vrot.lane.b32.xlu0 %v739, 96
        %v1091 = vpop.permute.xlu0 %1090
        %1092 = vrot.lane.b32.xlu0 %v740, 96
        %v1093 = vpop.permute.xlu0 %1092
        %v1097 = vsel %vm741, %v1086, 0
        %v1100 = vsel %vm741, %v1087, 0
        %1102 = vmatpush.bf16.msra.mxu0 0
        %1103 = vmatpush.bf16.msra.mxu0 0
        %1104 = vmatpush.bf16.msra.mxu0 0
        %1105 = vmatpush.bf16.msra.mxu0 0
        %1106 = vmatpush.bf16.msra.mxu0 0
        %1107 = vmatpush.bf16.msra.mxu0 0
        %1108 = vmatpush.bf16.msra.mxu0 %v1093
        %1109 = vmatpush.bf16.msra.mxu0 %v1091
        %1110 = vmatmul.bf16.gmra.mxu0 %v1097
        %v1111 = vpop.f32.mrf.mxu0
        %v1112 = vadd.f32 0.0, %v1111
        %v1113 = vpop.f32.mrf.mxu0
        %v1114 = vadd.f32 0.0, %v1113
        %1115 = vmatmul.bf16.gmra.mxu0 %v1100
        %v1116 = vpop.f32.mrf.mxu0
        %v1117 = vadd.f32 0.0, %v1116
        %v1118 = vpop.f32.mrf.mxu0
        %v1119 = vadd.f32 0.0, %v1118
        %1120 = vdwg.mxu0
        %v1121 = vpack.c.bf16 %v1114, %v1112
        %v1122 = vpack.c.bf16 %v1119, %v1117
        %v1127 = vunpack.c.l.b16 %v719
        %v1128 = vunpack.c.l.b16 %v720
        %v1129 = vunpack.c.l.b16 %v721
        %v1130 = vunpack.c.l.b16 %v722
        %v1131 = vpack.c.b16 %v1128, %v1127
        %v1132 = vpack.c.b16 %v1130, %v1129
        %v1136 = vsel %vm741, %v1121, 0
        %v1139 = vsel %vm741, %v1122, 0
        %1141 = vmatpush.bf16.msra.mxu0 0
        %1142 = vmatpush.bf16.msra.mxu0 0
        %1143 = vmatpush.bf16.msra.mxu0 0
        %1144 = vmatpush.bf16.msra.mxu0 0
        %1145 = vmatpush.bf16.msra.mxu0 0
        %1146 = vmatpush.bf16.msra.mxu0 0
        %1147 = vmatpush.bf16.msra.mxu0 %v1132
        %1148 = vmatpush.bf16.msra.mxu0 %v1131
        %1149 = vmatmul.bf16.gmra.mxu0 %v1136
        %v1150 = vpop.f32.mrf.mxu0
        %v1151 = vadd.f32 0.0, %v1150
        %v1152 = vpop.f32.mrf.mxu0
        %v1153 = vadd.f32 0.0, %v1152
        %1154 = vmatmul.bf16.gmra.mxu0 %v1139
        %v1155 = vpop.f32.mrf.mxu0
        %v1156 = vadd.f32 0.0, %v1155
        %v1157 = vpop.f32.mrf.mxu0
        %v1158 = vadd.f32 0.0, %v1157
        %1159 = vdwg.mxu0
        %v1160 = vadd.f32 %v939, %v1151
        %v1161 = vadd.f32 %v940, %v1153
        %v1162 = vadd.f32 %v941, %v1156
        %v1163 = vadd.f32 %v942, %v1158
        %1164 = vrot.lane.b32.xlu0 %v735, 64
        %v1165 = vpop.permute.xlu0 %1164
        %1166 = vrot.lane.b32.xlu0 %v736, 64
        %v1167 = vpop.permute.xlu0 %1166
        %1168 = vrot.lane.b32.xlu0 %v737, 64
        %v1169 = vpop.permute.xlu0 %1168
        %1170 = vrot.lane.b32.xlu0 %v738, 64
        %v1171 = vpop.permute.xlu0 %1170
        %v1173 = vsel %vm741, %v1165, 0
        %v1176 = vsel %vm741, %v1167, 0
        %v1179 = vsel %vm741, %v1169, 0
        %v1182 = vsel %vm741, %v1171, 0
        %1184 = vmatpush.bf16.xpose.msra.mxu0 0
        %1185 = vmatpush.bf16.xpose.msra.mxu0 0
        %1186 = vmatpush.bf16.xpose.msra.mxu0 0
        %1187 = vmatpush.bf16.xpose.msra.mxu0 0
        %1188 = vmatpush.bf16.xpose.msra.mxu0 0
        %1189 = vmatpush.bf16.xpose.msra.mxu0 0
        %1190 = vmatpush.bf16.xpose.msra.mxu0 %v1182
        %1191 = vmatpush.bf16.xpose.msra.mxu0 %v1179
        %1192 = vmatmul.bf16.gmra.mxu0 %v1173
        %v1193 = vpop.f32.mrf.mxu0
        %v1194 = vadd.f32 0.0, %v1193
        %v1195 = vpop.f32.mrf.mxu0
        %v1196 = vadd.f32 0.0, %v1195
        %1197 = vmatmul.bf16.gmra.mxu0 %v1176
        %v1198 = vpop.f32.mrf.mxu0
        %v1199 = vadd.f32 0.0, %v1198
        %v1200 = vpop.f32.mrf.mxu0
        %v1201 = vadd.f32 0.0, %v1200
        %1202 = vdwg.mxu0
        %v1203 = vmul.f32 %v1194, 0.17677669
        %v1204 = vmul.f32 %v1196, 0.17677669
        %v1205 = vmul.f32 %v1199, 0.17677669
        %v1206 = vmul.f32 %v1201, 0.17677669
        %v1207 = vsel %vm741, %v1203, -inf
        %1208 = vmax.xlane.f32.xlu0 %v1207
        %v1209 = vpop.xlane.xlu0 %1208
        %v1210 = vsel %vm741, %v1204, -inf
        %1211 = vmax.xlane.f32.xlu0 %v1210
        %v1212 = vpop.xlane.xlu0 %1211
        %v1213 = vsel %vm741, %v1205, -inf
        %1214 = vmax.xlane.f32.xlu0 %v1213
        %v1215 = vpop.xlane.xlu0 %1214
        %v1216 = vsel %vm741, %v1206, -inf
        %1217 = vmax.xlane.f32.xlu0 %v1216
        %v1218 = vpop.xlane.xlu0 %1217
        %v1219 = vsub.f32 %v1203, %v1209
        %v1220 = vsub.f32 %v1204, %v1212
        %v1221 = vsub.f32 %v1205, %v1215
        %v1222 = vsub.f32 %v1206, %v1218
        %v1223 = vmul.f32 %v1219, 1.442695
        %v1224 = vpow.pop %v1223
        %v1225 = vmul.f32 %v1220, 1.442695
        %v1226 = vpow.pop %v1225
        %v1227 = vmul.f32 %v1221, 1.442695
        %v1228 = vpow.pop %v1227
        %v1229 = vmul.f32 %v1222, 1.442695
        %v1230 = vpow.pop %v1229
        %v1231 = vsel %vm741, %v1224, 0.0
        %1232 = vadd.xlane.f32.xlu0 %v1231
        %v1233 = vpop.xlane.xlu0 %1232
        %v1234 = vsel %vm741, %v1226, 0.0
        %1235 = vadd.xlane.f32.xlu0 %v1234
        %v1236 = vpop.xlane.xlu0 %1235
        %v1237 = vsel %vm741, %v1228, 0.0
        %1238 = vadd.xlane.f32.xlu0 %v1237
        %v1239 = vpop.xlane.xlu0 %1238
        %v1240 = vsel %vm741, %v1230, 0.0
        %1241 = vadd.xlane.f32.xlu0 %v1240
        %v1242 = vpop.xlane.xlu0 %1241
        %v1243 = vrcp.pop %v1233
        %v1244 = vmul.f32 %v1233, %v1243
        %v1245 = vsub.f32 1.0, %v1244
        %v1246 = vmul.f32 %v1243, %v1245
        %v1247 = vadd.f32 %v1243, %v1246
        %vm1248 = vweird.f32 %v1233
        %vm1249 = vweird.f32 %v1243
        %vm1250 = vmor %vm1248, %vm1249
        %v1251 = vsel %vm1250, %v1243, %v1247
        %v1252 = vand.u32 2147483647, %v1233
        %vm1253 = vcmp.eq.f32.partialorder %v1252, 8.507059e+37
        %v1254 = vand.u32 %v1233, 2147483648
        %v1255 = vor.u32 1.1754944e-38, %v1254
        %v1256 = vsel %vm1253, %v1255, %v1251
        %v1257 = vmul.f32 %v1224, %v1256
        %v1258 = vrcp.pop %v1236
        %v1259 = vmul.f32 %v1236, %v1258
        %v1260 = vsub.f32 1.0, %v1259
        %v1261 = vmul.f32 %v1258, %v1260
        %v1262 = vadd.f32 %v1258, %v1261
        %vm1263 = vweird.f32 %v1236
        %vm1264 = vweird.f32 %v1258
        %vm1265 = vmor %vm1263, %vm1264
        %v1266 = vsel %vm1265, %v1258, %v1262
        %v1267 = vand.u32 2147483647, %v1236
        %vm1268 = vcmp.eq.f32.partialorder %v1267, 8.507059e+37
        %v1269 = vand.u32 %v1236, 2147483648
        %v1270 = vor.u32 1.1754944e-38, %v1269
        %v1271 = vsel %vm1268, %v1270, %v1266
        %v1272 = vmul.f32 %v1226, %v1271
        %v1273 = vrcp.pop %v1239
        %v1274 = vmul.f32 %v1239, %v1273
        %v1275 = vsub.f32 1.0, %v1274
        %v1276 = vmul.f32 %v1273, %v1275
        %v1277 = vadd.f32 %v1273, %v1276
        %vm1278 = vweird.f32 %v1239
        %vm1279 = vweird.f32 %v1273
        %vm1280 = vmor %vm1278, %vm1279
        %v1281 = vsel %vm1280, %v1273, %v1277
        %v1282 = vand.u32 2147483647, %v1239
        %vm1283 = vcmp.eq.f32.partialorder %v1282, 8.507059e+37
        %v1284 = vand.u32 %v1239, 2147483648
        %v1285 = vor.u32 1.1754944e-38, %v1284
        %v1286 = vsel %vm1283, %v1285, %v1281
        %v1287 = vmul.f32 %v1228, %v1286
        %v1288 = vrcp.pop %v1242
        %v1289 = vmul.f32 %v1242, %v1288
        %v1290 = vsub.f32 1.0, %v1289
        %v1291 = vmul.f32 %v1288, %v1290
        %v1292 = vadd.f32 %v1288, %v1291
        %vm1293 = vweird.f32 %v1242
        %vm1294 = vweird.f32 %v1288
        %vm1295 = vmor %vm1293, %vm1294
        %v1296 = vsel %vm1295, %v1288, %v1292
        %v1297 = vand.u32 2147483647, %v1242
        %vm1298 = vcmp.eq.f32.partialorder %v1297, 8.507059e+37
        %v1299 = vand.u32 %v1242, 2147483648
        %v1300 = vor.u32 1.1754944e-38, %v1299
        %v1301 = vsel %vm1298, %v1300, %v1296
        %v1302 = vmul.f32 %v1230, %v1301
        %v1303 = vpack.c.bf16 %v1272, %v1257
        %v1304 = vpack.c.bf16 %v1302, %v1287
        %1305 = vrot.lane.b32.xlu0 %v739, 64
        %v1306 = vpop.permute.xlu0 %1305
        %1307 = vrot.lane.b32.xlu0 %v740, 64
        %v1308 = vpop.permute.xlu0 %1307
        %v1312 = vsel %vm741, %v1303, 0
        %v1315 = vsel %vm741, %v1304, 0
        %1317 = vmatpush.bf16.msra.mxu0 0
        %1318 = vmatpush.bf16.msra.mxu0 0
        %1319 = vmatpush.bf16.msra.mxu0 0
        %1320 = vmatpush.bf16.msra.mxu0 0
        %1321 = vmatpush.bf16.msra.mxu0 0
        %1322 = vmatpush.bf16.msra.mxu0 0
        %1323 = vmatpush.bf16.msra.mxu0 %v1308
        %1324 = vmatpush.bf16.msra.mxu0 %v1306
        %1325 = vmatmul.bf16.gmra.mxu0 %v1312
        %v1326 = vpop.f32.mrf.mxu0
        %v1327 = vadd.f32 0.0, %v1326
        %v1328 = vpop.f32.mrf.mxu0
        %v1329 = vadd.f32 0.0, %v1328
        %1330 = vmatmul.bf16.gmra.mxu0 %v1315
        %v1331 = vpop.f32.mrf.mxu0
        %v1332 = vadd.f32 0.0, %v1331
        %v1333 = vpop.f32.mrf.mxu0
        %v1334 = vadd.f32 0.0, %v1333
        %1335 = vdwg.mxu0
        %v1336 = vpack.c.bf16 %v1329, %v1327
        %v1337 = vpack.c.bf16 %v1334, %v1332
        %v1342 = vunpack.c.l.b16 %v723
        %v1343 = vunpack.c.l.b16 %v724
        %v1344 = vunpack.c.l.b16 %v725
        %v1345 = vunpack.c.l.b16 %v726
        %v1346 = vpack.c.b16 %v1343, %v1342
        %v1347 = vpack.c.b16 %v1345, %v1344
        %v1351 = vsel %vm741, %v1336, 0
        %v1354 = vsel %vm741, %v1337, 0
        %1356 = vmatpush.bf16.msra.mxu0 0
        %1357 = vmatpush.bf16.msra.mxu0 0
        %1358 = vmatpush.bf16.msra.mxu0 0
        %1359 = vmatpush.bf16.msra.mxu0 0
        %1360 = vmatpush.bf16.msra.mxu0 0
        %1361 = vmatpush.bf16.msra.mxu0 0
        %1362 = vmatpush.bf16.msra.mxu0 %v1347
        %1363 = vmatpush.bf16.msra.mxu0 %v1346
        %1364 = vmatmul.bf16.gmra.mxu0 %v1351
        %v1365 = vpop.f32.mrf.mxu0
        %v1366 = vadd.f32 0.0, %v1365
        %v1367 = vpop.f32.mrf.mxu0
        %v1368 = vadd.f32 0.0, %v1367
        %1369 = vmatmul.bf16.gmra.mxu0 %v1354
        %v1370 = vpop.f32.mrf.mxu0
        %v1371 = vadd.f32 0.0, %v1370
        %v1372 = vpop.f32.mrf.mxu0
        %v1373 = vadd.f32 0.0, %v1372
        %1374 = vdwg.mxu0
        %v1375 = vadd.f32 %v1160, %v1366
        %v1376 = vadd.f32 %v1161, %v1368
        %v1377 = vadd.f32 %v1162, %v1371
        %v1378 = vadd.f32 %v1163, %v1373
        %1379 = vrot.lane.b32.xlu0 %v735, 32
        %v1380 = vpop.permute.xlu0 %1379
        %1381 = vrot.lane.b32.xlu0 %v736, 32
        %v1382 = vpop.permute.xlu0 %1381
        %1383 = vrot.lane.b32.xlu0 %v737, 32
        %v1384 = vpop.permute.xlu0 %1383
        %1385 = vrot.lane.b32.xlu0 %v738, 32
        %v1386 = vpop.permute.xlu0 %1385
        %v1388 = vsel %vm741, %v1380, 0
        %v1391 = vsel %vm741, %v1382, 0
        %v1394 = vsel %vm741, %v1384, 0
        %v1397 = vsel %vm741, %v1386, 0
        %1399 = vmatpush.bf16.xpose.msra.mxu0 0
        %1400 = vmatpush.bf16.xpose.msra.mxu0 0
        %1401 = vmatpush.bf16.xpose.msra.mxu0 0
        %1402 = vmatpush.bf16.xpose.msra.mxu0 0
        %1403 = vmatpush.bf16.xpose.msra.mxu0 0
        %1404 = vmatpush.bf16.xpose.msra.mxu0 0
        %1405 = vmatpush.bf16.xpose.msra.mxu0 %v1397
        %1406 = vmatpush.bf16.xpose.msra.mxu0 %v1394
        %1407 = vmatmul.bf16.gmra.mxu0 %v1388
        %v1408 = vpop.f32.mrf.mxu0
        %v1409 = vadd.f32 0.0, %v1408
        %v1410 = vpop.f32.mrf.mxu0
        %v1411 = vadd.f32 0.0, %v1410
        %1412 = vmatmul.bf16.gmra.mxu0 %v1391
        %v1413 = vpop.f32.mrf.mxu0
        %v1414 = vadd.f32 0.0, %v1413
        %v1415 = vpop.f32.mrf.mxu0
        %v1416 = vadd.f32 0.0, %v1415
        %1417 = vdwg.mxu0
        %v1418 = vmul.f32 %v1409, 0.17677669
        %v1419 = vmul.f32 %v1411, 0.17677669
        %v1420 = vmul.f32 %v1414, 0.17677669
        %v1421 = vmul.f32 %v1416, 0.17677669
        %v1422 = vsel %vm741, %v1418, -inf
        %1423 = vmax.xlane.f32.xlu0 %v1422
        %v1424 = vpop.xlane.xlu0 %1423
        %v1425 = vsel %vm741, %v1419, -inf
        %1426 = vmax.xlane.f32.xlu0 %v1425
        %v1427 = vpop.xlane.xlu0 %1426
        %v1428 = vsel %vm741, %v1420, -inf
        %1429 = vmax.xlane.f32.xlu0 %v1428
        %v1430 = vpop.xlane.xlu0 %1429
        %v1431 = vsel %vm741, %v1421, -inf
        %1432 = vmax.xlane.f32.xlu0 %v1431
        %v1433 = vpop.xlane.xlu0 %1432
        %v1434 = vsub.f32 %v1418, %v1424
        %v1435 = vsub.f32 %v1419, %v1427
        %v1436 = vsub.f32 %v1420, %v1430
        %v1437 = vsub.f32 %v1421, %v1433
        %v1438 = vmul.f32 %v1434, 1.442695
        %v1439 = vpow.pop %v1438
        %v1440 = vmul.f32 %v1435, 1.442695
        %v1441 = vpow.pop %v1440
        %v1442 = vmul.f32 %v1436, 1.442695
        %v1443 = vpow.pop %v1442
        %v1444 = vmul.f32 %v1437, 1.442695
        %v1445 = vpow.pop %v1444
        %v1446 = vsel %vm741, %v1439, 0.0
        %1447 = vadd.xlane.f32.xlu0 %v1446
        %v1448 = vpop.xlane.xlu0 %1447
        %v1449 = vsel %vm741, %v1441, 0.0
        %1450 = vadd.xlane.f32.xlu0 %v1449
        %v1451 = vpop.xlane.xlu0 %1450
        %v1452 = vsel %vm741, %v1443, 0.0
        %1453 = vadd.xlane.f32.xlu0 %v1452
        %v1454 = vpop.xlane.xlu0 %1453
        %v1455 = vsel %vm741, %v1445, 0.0
        %1456 = vadd.xlane.f32.xlu0 %v1455
        %v1457 = vpop.xlane.xlu0 %1456
        %v1458 = vrcp.pop %v1448
        %v1459 = vmul.f32 %v1448, %v1458
        %v1460 = vsub.f32 1.0, %v1459
        %v1461 = vmul.f32 %v1458, %v1460
        %v1462 = vadd.f32 %v1458, %v1461
        %vm1463 = vweird.f32 %v1448
        %vm1464 = vweird.f32 %v1458
        %vm1465 = vmor %vm1463, %vm1464
        %v1466 = vsel %vm1465, %v1458, %v1462
        %v1467 = vand.u32 2147483647, %v1448
        %vm1468 = vcmp.eq.f32.partialorder %v1467, 8.507059e+37
        %v1469 = vand.u32 %v1448, 2147483648
        %v1470 = vor.u32 1.1754944e-38, %v1469
        %v1471 = vsel %vm1468, %v1470, %v1466
        %v1472 = vmul.f32 %v1439, %v1471
        %v1473 = vrcp.pop %v1451
        %v1474 = vmul.f32 %v1451, %v1473
        %v1475 = vsub.f32 1.0, %v1474
        %v1476 = vmul.f32 %v1473, %v1475
        %v1477 = vadd.f32 %v1473, %v1476
        %vm1478 = vweird.f32 %v1451
        %vm1479 = vweird.f32 %v1473
        %vm1480 = vmor %vm1478, %vm1479
        %v1481 = vsel %vm1480, %v1473, %v1477
        %v1482 = vand.u32 2147483647, %v1451
        %vm1483 = vcmp.eq.f32.partialorder %v1482, 8.507059e+37
        %v1484 = vand.u32 %v1451, 2147483648
        %v1485 = vor.u32 1.1754944e-38, %v1484
        %v1486 = vsel %vm1483, %v1485, %v1481
        %v1487 = vmul.f32 %v1441, %v1486
        %v1488 = vrcp.pop %v1454
        %v1489 = vmul.f32 %v1454, %v1488
        %v1490 = vsub.f32 1.0, %v1489
        %v1491 = vmul.f32 %v1488, %v1490
        %v1492 = vadd.f32 %v1488, %v1491
        %vm1493 = vweird.f32 %v1454
        %vm1494 = vweird.f32 %v1488
        %vm1495 = vmor %vm1493, %vm1494
        %v1496 = vsel %vm1495, %v1488, %v1492
        %v1497 = vand.u32 2147483647, %v1454
        %vm1498 = vcmp.eq.f32.partialorder %v1497, 8.507059e+37
        %v1499 = vand.u32 %v1454, 2147483648
        %v1500 = vor.u32 1.1754944e-38, %v1499
        %v1501 = vsel %vm1498, %v1500, %v1496
        %v1502 = vmul.f32 %v1443, %v1501
        %v1503 = vrcp.pop %v1457
        %v1504 = vmul.f32 %v1457, %v1503
        %v1505 = vsub.f32 1.0, %v1504
        %v1506 = vmul.f32 %v1503, %v1505
        %v1507 = vadd.f32 %v1503, %v1506
        %vm1508 = vweird.f32 %v1457
        %vm1509 = vweird.f32 %v1503
        %vm1510 = vmor %vm1508, %vm1509
        %v1511 = vsel %vm1510, %v1503, %v1507
        %v1512 = vand.u32 2147483647, %v1457
        %vm1513 = vcmp.eq.f32.partialorder %v1512, 8.507059e+37
        %v1514 = vand.u32 %v1457, 2147483648
        %v1515 = vor.u32 1.1754944e-38, %v1514
        %v1516 = vsel %vm1513, %v1515, %v1511
        %v1517 = vmul.f32 %v1445, %v1516
        %v1518 = vpack.c.bf16 %v1487, %v1472
        %v1519 = vpack.c.bf16 %v1517, %v1502
        %1520 = vrot.lane.b32.xlu0 %v739, 32
        %v1521 = vpop.permute.xlu0 %1520
        %1522 = vrot.lane.b32.xlu0 %v740, 32
        %v1523 = vpop.permute.xlu0 %1522
        %v1527 = vsel %vm741, %v1518, 0
        %v1530 = vsel %vm741, %v1519, 0
        %1532 = vmatpush.bf16.msra.mxu0 0
        %1533 = vmatpush.bf16.msra.mxu0 0
        %1534 = vmatpush.bf16.msra.mxu0 0
        %1535 = vmatpush.bf16.msra.mxu0 0
        %1536 = vmatpush.bf16.msra.mxu0 0
        %1537 = vmatpush.bf16.msra.mxu0 0
        %1538 = vmatpush.bf16.msra.mxu0 %v1523
        %1539 = vmatpush.bf16.msra.mxu0 %v1521
        %1540 = vmatmul.bf16.gmra.mxu0 %v1527
        %v1541 = vpop.f32.mrf.mxu0
        %v1542 = vadd.f32 0.0, %v1541
        %v1543 = vpop.f32.mrf.mxu0
        %v1544 = vadd.f32 0.0, %v1543
        %1545 = vmatmul.bf16.gmra.mxu0 %v1530
        %v1546 = vpop.f32.mrf.mxu0
        %v1547 = vadd.f32 0.0, %v1546
        %v1548 = vpop.f32.mrf.mxu0
        %v1549 = vadd.f32 0.0, %v1548
        %1550 = vdwg.mxu0
        %v1551 = vpack.c.bf16 %v1544, %v1542
        %v1552 = vpack.c.bf16 %v1549, %v1547
        %v1557 = vunpack.c.l.b16 %v727
        %v1558 = vunpack.c.l.b16 %v728
        %v1559 = vunpack.c.l.b16 %v729
        %v1560 = vunpack.c.l.b16 %v730
        %v1561 = vpack.c.b16 %v1558, %v1557
        %v1562 = vpack.c.b16 %v1560, %v1559
        %v1566 = vsel %vm741, %v1551, 0
        %v1569 = vsel %vm741, %v1552, 0
        %1571 = vmatpush.bf16.msra.mxu0 0
        %1572 = vmatpush.bf16.msra.mxu0 0
        %1573 = vmatpush.bf16.msra.mxu0 0
        %1574 = vmatpush.bf16.msra.mxu0 0
        %1575 = vmatpush.bf16.msra.mxu0 0
        %1576 = vmatpush.bf16.msra.mxu0 0
        %1577 = vmatpush.bf16.msra.mxu0 %v1562
        %1578 = vmatpush.bf16.msra.mxu0 %v1561
        %1579 = vmatmul.bf16.gmra.mxu0 %v1566
        %v1580 = vpop.f32.mrf.mxu0
        %v1581 = vadd.f32 0.0, %v1580
        %v1582 = vpop.f32.mrf.mxu0
        %v1583 = vadd.f32 0.0, %v1582
        %1584 = vmatmul.bf16.gmra.mxu0 %v1569
        %v1585 = vpop.f32.mrf.mxu0
        %v1586 = vadd.f32 0.0, %v1585
        %v1587 = vpop.f32.mrf.mxu0
        %v1588 = vadd.f32 0.0, %v1587
        %1589 = vdwg.mxu0
        %v1590 = vadd.f32 %v1375, %v1581
        %v1591 = vadd.f32 %v1376, %v1583
        %v1592 = vadd.f32 %v1377, %v1586
        %v1593 = vadd.f32 %v1378, %v1588
        %v1594 = vadd.f32 %v484, %v1590
        %v1595 = vadd.f32 %v485, %v1591
        %v1596 = vadd.f32 %v486, %v1592
        %v1597 = vadd.f32 %v487, %v1593
        %1598 = vadd.xlane.f32.xlu0 %v1594
        %v1599 = vpop.xlane.xlu0 %1598
        %1600 = vadd.xlane.f32.xlu0 %v1595
        %v1601 = vpop.xlane.xlu0 %1600
        %1602 = vadd.xlane.f32.xlu0 %v1596
        %v1603 = vpop.xlane.xlu0 %1602
        %1604 = vadd.xlane.f32.xlu0 %v1597
        %v1605 = vpop.xlane.xlu0 %1604
        %v1606 = vrcp.pop 128.0
        %v1607 = vmul.f32 128.0, %v1606
        %v1608 = vsub.f32 1.0, %v1607
        %v1609 = vmul.f32 %v1606, %v1608
        %v1610 = vadd.f32 %v1606, %v1609
        %vm1611 = vweird.f32 %v1606
        %v1612 = vsel %vm1611, %v1606, %v1610
        %v1613 = vmul.f32 %v1599, %v1612
        %v1614 = vmul.f32 %v1601, %v1612
        %v1615 = vmul.f32 %v1603, %v1612
        %v1616 = vmul.f32 %v1605, %v1612
        %v1617 = vsub.f32 %v1594, %v1613
        %v1618 = vsub.f32 %v1595, %v1614
        %v1619 = vsub.f32 %v1596, %v1615
        %v1620 = vsub.f32 %v1597, %v1616
        %v1621 = vmul.f32 %v1617, %v1617
        %v1622 = vmul.f32 %v1618, %v1618
        %v1623 = vmul.f32 %v1619, %v1619
        %v1624 = vmul.f32 %v1620, %v1620
        %1625 = vadd.xlane.f32.xlu0 %v1621
        %v1626 = vpop.xlane.xlu0 %1625
        %1627 = vadd.xlane.f32.xlu0 %v1622
        %v1628 = vpop.xlane.xlu0 %1627
        %1629 = vadd.xlane.f32.xlu0 %v1623
        %v1630 = vpop.xlane.xlu0 %1629
        %1631 = vadd.xlane.f32.xlu0 %v1624
        %v1632 = vpop.xlane.xlu0 %1631
        %v1633 = vmul.f32 %v1626, %v1612
        %v1634 = vmul.f32 %v1628, %v1612
        %v1635 = vmul.f32 %v1630, %v1612
        %v1636 = vmul.f32 %v1632, %v1612
        %v1637 = vadd.f32 %v1633, 1e-05
        %v1638 = vadd.f32 %v1634, 1e-05
        %v1639 = vadd.f32 %v1635, 1e-05
        %v1640 = vadd.f32 %v1636, 1e-05
        %v1641 = vrsqrt.pop %v1637
        %v1642 = vmul.f32 %v1641, %v1637
        %v1643 = vmul.f32 %v1642, %v1641
        %v1644 = vmul.f32 0.5, %v1643
        %v1645 = vsub.f32 1.5, %v1644
        %v1646 = vmul.f32 %v1641, %v1645
        %vm1647 = vweird.f32 %v1637
        %vm1648 = vweird.f32 %v1641
        %vm1649 = vmor %vm1647, %vm1648
        %v1650 = vsel %vm1649, %v1641, %v1646
        %v1651 = vrsqrt.pop %v1638
        %v1652 = vmul.f32 %v1651, %v1638
        %v1653 = vmul.f32 %v1652, %v1651
        %v1654 = vmul.f32 0.5, %v1653
        %v1655 = vsub.f32 1.5, %v1654
        %v1656 = vmul.f32 %v1651, %v1655
        %vm1657 = vweird.f32 %v1638
        %vm1658 = vweird.f32 %v1651
        %vm1659 = vmor %vm1657, %vm1658
        %v1660 = vsel %vm1659, %v1651, %v1656
        %v1661 = vrsqrt.pop %v1639
        %v1662 = vmul.f32 %v1661, %v1639
        %v1663 = vmul.f32 %v1662, %v1661
        %v1664 = vmul.f32 0.5, %v1663
        %v1665 = vsub.f32 1.5, %v1664
        %v1666 = vmul.f32 %v1661, %v1665
        %vm1667 = vweird.f32 %v1639
        %vm1668 = vweird.f32 %v1661
        %vm1669 = vmor %vm1667, %vm1668
        %v1670 = vsel %vm1669, %v1661, %v1666
        %v1671 = vrsqrt.pop %v1640
        %v1672 = vmul.f32 %v1671, %v1640
        %v1673 = vmul.f32 %v1672, %v1671
        %v1674 = vmul.f32 0.5, %v1673
        %v1675 = vsub.f32 1.5, %v1674
        %v1676 = vmul.f32 %v1671, %v1675
        %vm1677 = vweird.f32 %v1640
        %vm1678 = vweird.f32 %v1671
        %vm1679 = vmor %vm1677, %vm1678
        %v1680 = vsel %vm1679, %v1671, %v1676
        %v1681 = vmul.f32 %v1617, %v1650
        %v1682 = vmul.f32 %v1618, %v1660
        %v1683 = vmul.f32 %v1619, %v1670
        %v1684 = vmul.f32 %v1620, %v1680
        %v1685 = vld [vmem:[%s5] sm:$0x1]
        %v1687 = vperm.slane %v1685, 0
        %v1689 = vmul.f32 %v1681, %v1687
        %v1690 = vmul.f32 %v1682, %v1687
        %v1691 = vmul.f32 %v1683, %v1687
        %v1692 = vmul.f32 %v1684, %v1687
        %v1693 = vld [vmem:[%s6] sm:$0x1]
        %v1695 = vperm.slane %v1693, 0
        %v1697 = vadd.f32 %v1689, %v1695
        %v1698 = vadd.f32 %v1690, %v1695
        %v1699 = vadd.f32 %v1691, %v1695
        %v1700 = vadd.f32 %v1692, %v1695
        %v1701 = vpack.c.bf16 %v1698, %v1697
        %v1702 = vpack.c.bf16 %v1700, %v1699
        %v1703 = vld [vmem:[#allocation6] sm:$0xf]
        %v1704 = vld [vmem:[#allocation6 + $0x4] sm:$0xf]
        %v1705 = vld [vmem:[#allocation6 + $0x8] sm:$0xf]
        %v1706 = vld [vmem:[#allocation6 + $0xc] sm:$0xf]
        %v1707 = vld [vmem:[#allocation6 + $0x10] sm:$0xf]
        %v1708 = vld [vmem:[#allocation6 + $0x14] sm:$0xf]
        %v1709 = vld [vmem:[#allocation6 + $0x18] sm:$0xf]
        %v1710 = vld [vmem:[#allocation6 + $0x1c] sm:$0xf]
        %v1711 = vld [vmem:[#allocation6 + $0x20] sm:$0xf]
        %v1712 = vld [vmem:[#allocation6 + $0x24] sm:$0xf]
        %v1713 = vld [vmem:[#allocation6 + $0x28] sm:$0xf]
        %v1714 = vld [vmem:[#allocation6 + $0x2c] sm:$0xf]
        %v1715 = vld [vmem:[#allocation6 + $0x30] sm:$0xf]
        %v1716 = vld [vmem:[#allocation6 + $0x34] sm:$0xf]
        %v1717 = vld [vmem:[#allocation6 + $0x38] sm:$0xf]
        %v1718 = vld [vmem:[#allocation6 + $0x3c] sm:$0xf]
        %v1719 = vld [vmem:[#allocation7] sm:$0x1]
        %v1721 = vperm.slane %v1719, 0
        %v1739 = vunpack.c.l.b16 %v1703
        %v1740 = vunpack.c.l.b16 %v1704
        %v1741 = vunpack.c.l.b16 %v1705
        %v1742 = vunpack.c.l.b16 %v1706
        %v1743 = vunpack.c.l.b16 %v1707
        %v1744 = vunpack.c.l.b16 %v1708
        %v1745 = vunpack.c.l.b16 %v1709
        %v1746 = vunpack.c.l.b16 %v1710
        %v1747 = vunpack.c.l.b16 %v1711
        %v1748 = vunpack.c.l.b16 %v1712
        %v1749 = vunpack.c.l.b16 %v1713
        %v1750 = vunpack.c.l.b16 %v1714
        %v1751 = vunpack.c.l.b16 %v1715
        %v1752 = vunpack.c.l.b16 %v1716
        %v1753 = vunpack.c.l.b16 %v1717
        %v1754 = vunpack.c.l.b16 %v1718
        %v1755 = vpack.c.b16 %v1740, %v1739
        %v1756 = vpack.c.b16 %v1742, %v1741
        %v1757 = vpack.c.b16 %v1744, %v1743
        %v1758 = vpack.c.b16 %v1746, %v1745
        %v1759 = vpack.c.b16 %v1748, %v1747
        %v1760 = vpack.c.b16 %v1750, %v1749
        %v1761 = vpack.c.b16 %v1752, %v1751
        %v1762 = vpack.c.b16 %v1754, %v1753
        %1771 = vmatpush.bf16.msra.mxu0 %v1762
        %1772 = vmatpush.bf16.msra.mxu0 %v1761
        %1773 = vmatpush.bf16.msra.mxu0 %v1760
        %1774 = vmatpush.bf16.msra.mxu0 %v1759
        %1775 = vmatpush.bf16.msra.mxu0 %v1758
        %1776 = vmatpush.bf16.msra.mxu0 %v1757
        %1777 = vmatpush.bf16.msra.mxu0 %v1756
        %1778 = vmatpush.bf16.msra.mxu0 %v1755
        %1779 = vmatmul.bf16.gmra.mxu0 %v1701
        %v1780 = vpop.f32.mrf.mxu0
        %v1781 = vadd.f32 %v1721, %v1780
        %v1782 = vpop.f32.mrf.mxu0
        %v1783 = vadd.f32 %v1721, %v1782
        %1784 = vmatmul.bf16.gmra.mxu0 %v1702
        %v1785 = vpop.f32.mrf.mxu0
        %v1786 = vadd.f32 %v1721, %v1785
        %v1787 = vpop.f32.mrf.mxu0
        %v1788 = vadd.f32 %v1721, %v1787
        %1789 = vdwg.mxu0
        %v1790 = vmax.f32 %v1781, 0.0
        %v1791 = vmax.f32 %v1783, 0.0
        %v1792 = vmax.f32 %v1786, 0.0
        %v1793 = vmax.f32 %v1788, 0.0
        %v1794 = vpack.c.bf16 %v1791, %v1790
        %v1795 = vpack.c.bf16 %v1793, %v1792
        %v1796 = vld [vmem:[#allocation9] sm:$0xf]
        %v1797 = vld [vmem:[#allocation9 + $0x4] sm:$0xf]
        %v1798 = vld [vmem:[#allocation9 + $0x8] sm:$0xf]
        %v1799 = vld [vmem:[#allocation9 + $0xc] sm:$0xf]
        %v1800 = vld [vmem:[#allocation9 + $0x10] sm:$0xf]
        %v1801 = vld [vmem:[#allocation9 + $0x14] sm:$0xf]
        %v1802 = vld [vmem:[#allocation9 + $0x18] sm:$0xf]
        %v1803 = vld [vmem:[#allocation9 + $0x1c] sm:$0xf]
        %v1804 = vld [vmem:[#allocation9 + $0x20] sm:$0xf]
        %v1805 = vld [vmem:[#allocation9 + $0x24] sm:$0xf]
        %v1806 = vld [vmem:[#allocation9 + $0x28] sm:$0xf]
        %v1807 = vld [vmem:[#allocation9 + $0x2c] sm:$0xf]
        %v1808 = vld [vmem:[#allocation9 + $0x30] sm:$0xf]
        %v1809 = vld [vmem:[#allocation9 + $0x34] sm:$0xf]
        %v1810 = vld [vmem:[#allocation9 + $0x38] sm:$0xf]
        %v1811 = vld [vmem:[#allocation9 + $0x3c] sm:$0xf]
        %v1812 = vld [vmem:[#allocation10] sm:$0x1]
        %v1814 = vperm.slane %v1812, 0
        %v1832 = vunpack.c.l.b16 %v1796
        %v1833 = vunpack.c.l.b16 %v1797
        %v1834 = vunpack.c.l.b16 %v1798
        %v1835 = vunpack.c.l.b16 %v1799
        %v1836 = vunpack.c.l.b16 %v1800
        %v1837 = vunpack.c.l.b16 %v1801
        %v1838 = vunpack.c.l.b16 %v1802
        %v1839 = vunpack.c.l.b16 %v1803
        %v1840 = vunpack.c.l.b16 %v1804
        %v1841 = vunpack.c.l.b16 %v1805
        %v1842 = vunpack.c.l.b16 %v1806
        %v1843 = vunpack.c.l.b16 %v1807
        %v1844 = vunpack.c.l.b16 %v1808
        %v1845 = vunpack.c.l.b16 %v1809
        %v1846 = vunpack.c.l.b16 %v1810
        %v1847 = vunpack.c.l.b16 %v1811
        %v1848 = vpack.c.b16 %v1833, %v1832
        %v1849 = vpack.c.b16 %v1835, %v1834
        %v1850 = vpack.c.b16 %v1837, %v1836
        %v1851 = vpack.c.b16 %v1839, %v1838
        %v1852 = vpack.c.b16 %v1841, %v1840
        %v1853 = vpack.c.b16 %v1843, %v1842
        %v1854 = vpack.c.b16 %v1845, %v1844
        %v1855 = vpack.c.b16 %v1847, %v1846
        %1864 = vmatpush.bf16.msra.mxu0 %v1855
        %1865 = vmatpush.bf16.msra.mxu0 %v1854
        %1866 = vmatpush.bf16.msra.mxu0 %v1853
        %1867 = vmatpush.bf16.msra.mxu0 %v1852
        %1868 = vmatpush.bf16.msra.mxu0 %v1851
        %1869 = vmatpush.bf16.msra.mxu0 %v1850
        %1870 = vmatpush.bf16.msra.mxu0 %v1849
        %1871 = vmatpush.bf16.msra.mxu0 %v1848
        %1872 = vmatmul.bf16.gmra.mxu0 %v1794
        %v1873 = vpop.f32.mrf.mxu0
        %v1874 = vadd.f32 %v1814, %v1873
        %v1875 = vpop.f32.mrf.mxu0
        %v1876 = vadd.f32 %v1814, %v1875
        %1877 = vmatmul.bf16.gmra.mxu0 %v1795
        %v1878 = vpop.f32.mrf.mxu0
        %v1879 = vadd.f32 %v1814, %v1878
        %v1880 = vpop.f32.mrf.mxu0
        %v1881 = vadd.f32 %v1814, %v1880
        %1882 = vdwg.mxu0
        %v1883 = vadd.f32 %v1697, %v1874
        %v1884 = vadd.f32 %v1698, %v1876
        %v1885 = vadd.f32 %v1699, %v1879
        %v1886 = vadd.f32 %v1700, %v1881
        %1887 = vadd.xlane.f32.xlu0 %v1883
        %v1888 = vpop.xlane.xlu0 %1887
        %1889 = vadd.xlane.f32.xlu0 %v1884
        %v1890 = vpop.xlane.xlu0 %1889
        %1891 = vadd.xlane.f32.xlu0 %v1885
        %v1892 = vpop.xlane.xlu0 %1891
        %1893 = vadd.xlane.f32.xlu0 %v1886
        %v1894 = vpop.xlane.xlu0 %1893
        %v1895 = vmul.f32 %v1888, %v1612
        %v1896 = vmul.f32 %v1890, %v1612
        %v1897 = vmul.f32 %v1892, %v1612
        %v1898 = vmul.f32 %v1894, %v1612
        %v1899 = vsub.f32 %v1883, %v1895
        %v1900 = vsub.f32 %v1884, %v1896
        %v1901 = vsub.f32 %v1885, %v1897
        %v1902 = vsub.f32 %v1886, %v1898
        %v1903 = vmul.f32 %v1899, %v1899
        %v1904 = vmul.f32 %v1900, %v1900
        %v1905 = vmul.f32 %v1901, %v1901
        %v1906 = vmul.f32 %v1902, %v1902
        %1907 = vadd.xlane.f32.xlu0 %v1903
        %v1908 = vpop.xlane.xlu0 %1907
        %1909 = vadd.xlane.f32.xlu0 %v1904
        %v1910 = vpop.xlane.xlu0 %1909
        %1911 = vadd.xlane.f32.xlu0 %v1905
        %v1912 = vpop.xlane.xlu0 %1911
        %1913 = vadd.xlane.f32.xlu0 %v1906
        %v1914 = vpop.xlane.xlu0 %1913
        %v1915 = vmul.f32 %v1908, %v1612
        %v1916 = vmul.f32 %v1910, %v1612
        %v1917 = vmul.f32 %v1912, %v1612
        %v1918 = vmul.f32 %v1914, %v1612
        %v1919 = vadd.f32 %v1915, 1e-05
        %v1920 = vadd.f32 %v1916, 1e-05
        %v1921 = vadd.f32 %v1917, 1e-05
        %v1922 = vadd.f32 %v1918, 1e-05
        %v1923 = vrsqrt.pop %v1919
        %v1924 = vmul.f32 %v1923, %v1919
        %v1925 = vmul.f32 %v1924, %v1923
        %v1926 = vmul.f32 0.5, %v1925
        %v1927 = vsub.f32 1.5, %v1926
        %v1928 = vmul.f32 %v1923, %v1927
        %vm1929 = vweird.f32 %v1919
        %vm1930 = vweird.f32 %v1923
        %vm1931 = vmor %vm1929, %vm1930
        %v1932 = vsel %vm1931, %v1923, %v1928
        %v1933 = vrsqrt.pop %v1920
        %v1934 = vmul.f32 %v1933, %v1920
        %v1935 = vmul.f32 %v1934, %v1933
        %v1936 = vmul.f32 0.5, %v1935
        %v1937 = vsub.f32 1.5, %v1936
        %v1938 = vmul.f32 %v1933, %v1937
        %vm1939 = vweird.f32 %v1920
        %vm1940 = vweird.f32 %v1933
        %vm1941 = vmor %vm1939, %vm1940
        %v1942 = vsel %vm1941, %v1933, %v1938
        %v1943 = vrsqrt.pop %v1921
        %v1944 = vmul.f32 %v1943, %v1921
        %v1945 = vmul.f32 %v1944, %v1943
        %v1946 = vmul.f32 0.5, %v1945
        %v1947 = vsub.f32 1.5, %v1946
        %v1948 = vmul.f32 %v1943, %v1947
        %vm1949 = vweird.f32 %v1921
        %vm1950 = vweird.f32 %v1943
        %vm1951 = vmor %vm1949, %vm1950
        %v1952 = vsel %vm1951, %v1943, %v1948
        %v1953 = vrsqrt.pop %v1922
        %v1954 = vmul.f32 %v1953, %v1922
        %v1955 = vmul.f32 %v1954, %v1953
        %v1956 = vmul.f32 0.5, %v1955
        %v1957 = vsub.f32 1.5, %v1956
        %v1958 = vmul.f32 %v1953, %v1957
        %vm1959 = vweird.f32 %v1922
        %vm1960 = vweird.f32 %v1953
        %vm1961 = vmor %vm1959, %vm1960
        %v1962 = vsel %vm1961, %v1953, %v1958
        %v1963 = vmul.f32 %v1899, %v1932
        %v1964 = vmul.f32 %v1900, %v1942
        %v1965 = vmul.f32 %v1901, %v1952
        %v1966 = vmul.f32 %v1902, %v1962
        %v1967 = vmul.f32 %v1963, %v1687
        %v1968 = vmul.f32 %v1964, %v1687
        %v1969 = vmul.f32 %v1965, %v1687
        %v1970 = vmul.f32 %v1966, %v1687
        %v1971 = vadd.f32 %v1967, %v1695
        %v1972 = vadd.f32 %v1968, %v1695
        %v1973 = vadd.f32 %v1969, %v1695
        %v1974 = vadd.f32 %v1970, %v1695
        %v1975 = vmul.f32 %v1971, 0.7
        %v1976 = vmul.f32 %v1972, 0.7
        %v1977 = vmul.f32 %v1973, 0.7
        %v1978 = vmul.f32 %v1974, 0.7
        %v1979 = vmul.f32 %v484, 0.3
        %v1980 = vmul.f32 %v485, 0.3
        %v1981 = vmul.f32 %v486, 0.3
        %v1982 = vmul.f32 %v487, 0.3
        %v1983 = vadd.f32 %v1975, %v1979
        %v1984 = vadd.f32 %v1976, %v1980
        %v1985 = vadd.f32 %v1977, %v1981
        %v1986 = vadd.f32 %v1978, %v1982
        %1987 = vst [vmem:[%s482] sm:$0xff] %v1983
        %1988 = vst [vmem:[%s482 + $0x8] sm:$0xff] %v1984
        %1989 = vst [vmem:[%s482 + $0x10] sm:$0xff] %v1985
        %1990 = vst [vmem:[%s482 + $0x18] sm:$0xff] %v1986
        %p1991 = scmp.lt.s32.totalorder %s26, 1
        %s1992 = scalar_select %p1991, %s26, 1
        %s1993 = smul.addr %s1992, 4
        %s1994 = smul.addr %s1993, 8
        %s1995 = scalar_lea.vmem %s11, %s1994
        // Predicated region
        $region89: #{sleep_transformer_forward.8} parent=63 // pred_check
          %p1996 = pneg %p280
        $region90: #{sleep_transformer_forward.8} parent=63 // pred_check_branch
          %1998 = sbr.rel (%p1996) target = $region92
        $region91: #{sleep_transformer_forward.8} parent=63 // pred_region
          _
        $region92: #{sleep_transformer_forward.8} parent=63 // pred_fallthru
          _
      $region64: #{sleep_transformer_forward.8} parent=5 // pred_fallthru
        _
      %p1999 = scmp.le.s32.totalorder 2, %s21
      // Predicated region
      $region93: #{sleep_transformer_forward.8} parent=5 // pred_check
        %p2000 = pneg %p1999
      $region94: #{sleep_transformer_forward.8} parent=5 // pred_check_branch
        %2002 = sbr.rel (%p2000) target = $region96
      $region95: #{sleep_transformer_forward.8} parent=5 // pred_region
        %s2003 = ssub.s32 %s21, 2
        // Predicated region
        $region97: #{sleep_transformer_forward.8} parent=95 // pred_check
          %p2004 = pneg %p286
        $region98: #{sleep_transformer_forward.8} parent=95 // pred_check_branch
          %2006 = sbr.rel (%p2004) target = $region100
        $region99: #{sleep_transformer_forward.8} parent=95 // pred_region
          %p2007 = scmp.lt.s32.totalorder %s27, 1
          %s2008 = scalar_select %p2007, %s27, 1
          %s2009 = smul.addr %s2008, 4
          %s2010 = smul.addr %s2009, 8
          %s2011 = scalar_lea.vmem %s11, %s2010
        $region100: #{sleep_transformer_forward.8} parent=95 // pred_fallthru
          _
      $region96: #{sleep_transformer_forward.8} parent=5 // pred_fallthru
        _
    $region6: #{sleep_transformer_forward.8} parent=1 // loop_footer
      %s25 = sadd.s32 1, %s21
    $region7: #{sleep_transformer_forward.8} parent=1 // loop_footer_branch
      %20 = sbr.rel target = $region3
    $region8: #{sleep_transformer_forward.8} parent=1 // loop_exit
      _
    %2012 = vsyncpa [#allocation3], 1
    %s2013 = scalar_lea.sflag [#allocation3], 1
    %2014 = vsyncpa %s2013, 1
    %2015 = vsyncpa [#allocation5], 1
    %2016 = vsyncpa [#allocation8], 1
    %2017 = vsyncpa [#allocation11], 1

// kernel: sleep_transformer_forward.9
$region0: #{sleep_transformer_forward.9}
  #allocation0 [shape = 'u32[]', space=smem, size = 0x4, offset = 0x4, fixed_abs, tag = 'smem constant byte address 0x4 - core index']
  #allocation1 [shape = 'u32[72,128]{1,0:T(1,128)}', space=vmem, size = 0x9000, scoped, tag = 'internal scratch']
  #allocation2 [shape = 'f32[2,64]{1,0:T(2,128)}', space=vmem, size = 0x400, scoped, tag = 'scratch operand']
  #allocation3 [shape = 'f32[2,64]{1,0:T(2,128)}', space=vmem, size = 0x400, scoped, tag = 'scratch operand']
  #allocation4 [shape = 'f32[2,64]{1,0:T(2,128)}', space=vmem, size = 0x400, scoped, tag = 'scratch operand']
  #allocation5 [shape = 'f32[2,64]{1,0:T(2,128)}', space=vmem, size = 0x400, scoped, tag = 'scratch operand']
  #allocation6 [shape = 'f32[32,2,64]{2,1,0:T(2,128)}', space=vmem, size = 0x8000, scoped, tag = 'scratch operand']
  #allocation7 [shape = 'f32[32,2,64]{2,1,0:T(2,128)}', space=vmem, size = 0x8000, scoped, tag = 'scratch operand']
  %s0 = inlined_call_operand.vmem [shape: f32[32,2,128], index: 0, kind: input, shape index: {}]
  %s1 = inlined_call_operand.vmem [shape: bf16[128,256], index: 1, kind: input, shape index: {}]
  %s2 = inlined_call_operand.hbm [shape: bf16[64,256], index: 2, kind: input, shape index: {}]
  %s3 = inlined_call_operand.vmem [shape: f32[1,256], index: 3, kind: input, shape index: {}]
  %s4 = inlined_call_operand.hbm [shape: bf16[128,256], index: 4, kind: input, shape index: {}]
  %s5 = inlined_call_operand.hbm [shape: bf16[64,256], index: 5, kind: input, shape index: {}]
  %s6 = inlined_call_operand.vmem [shape: f32[1,256], index: 6, kind: input, shape index: {}]
  %s7 = inlined_call_operand.vmem [shape: f32[32,2,128], index: 7, kind: output, shape index: {}]
  %s8 = sld [smem:[#allocation0]]
  $region57: #{sleep_transformer_forward.9} parent=0
    _
  %s10 = ssub.s32 1, %s8
  %s11 = scalar_select 0, %s10, %s8
  $region1: #{sleep_transformer_forward.9} parent=0
    #allocation8 [shape = 'u8[32768]{0}', space=vmem, size = 0x8000, scoped, tag = 'input window, operand 2, single buffered']
    #allocation9 [shape = 's32[1]{0}', space=sflag, size = 0x4, scoped, tag = 'scoped memory for sleep_transformer_forward.9']
    #allocation10 [shape = 'u8[65536]{0}', space=vmem, size = 0x10000, scoped, tag = 'input window, operand 4, single buffered']
    #allocation11 [shape = 's32[1]{0}', space=sflag, size = 0x4, scoped, tag = 'scoped memory for sleep_transformer_forward.9']
    #allocation12 [shape = 'u8[32768]{0}', space=vmem, size = 0x8000, scoped, tag = 'input window, operand 5, single buffered']
    %12 = vsyncpa [#allocation9], 0
    %13 = vsyncpa [#allocation11], 0
    // Predicated region
    $region2: #{sleep_transformer_forward.9} parent=1 // pred_check
      _
    $region3: #{sleep_transformer_forward.9} parent=1 // pred_check_branch
      %15 = sbr.rel (0) target = $region5
    $region4: #{sleep_transformer_forward.9} parent=1 // pred_region
      _
    $region5: #{sleep_transformer_forward.9} parent=1 // pred_fallthru
      _
    // Predicated region
    $region6: #{sleep_transformer_forward.9} parent=1 // pred_check
      _
    $region7: #{sleep_transformer_forward.9} parent=1 // pred_check_branch
      %17 = sbr.rel (0) target = $region9
    $region8: #{sleep_transformer_forward.9} parent=1 // pred_region
      _
    $region9: #{sleep_transformer_forward.9} parent=1 // pred_fallthru
      _
    // Predicated region
    $region10: #{sleep_transformer_forward.9} parent=1 // pred_check
      _
    $region11: #{sleep_transformer_forward.9} parent=1 // pred_check_branch
      %19 = sbr.rel (0) target = $region13
    $region12: #{sleep_transformer_forward.9} parent=1 // pred_region
      %21 = vsyncadd [#allocation9], 0
      %s22 = sshll.u32 %s2, 4
      %s23 = int_to_ptr.hbm [resolvable:$true] %s22
      %s24 = sshll.u32 [#allocation8], 4
      %s25 = int_to_ptr.vmem [resolvable:$true] %s24
      %30 = dma.hbm_to_vmem [thread:$0]  %s23, 1024, %s25, [#allocation9], 128, 128, 8
    $region13: #{sleep_transformer_forward.9} parent=1 // pred_fallthru
      _
    // Predicated region
    $region14: #{sleep_transformer_forward.9} parent=1 // pred_check
      _
    $region15: #{sleep_transformer_forward.9} parent=1 // pred_check_branch
      %32 = sbr.rel (0) target = $region17
    $region16: #{sleep_transformer_forward.9} parent=1 // pred_region
      _
    $region17: #{sleep_transformer_forward.9} parent=1 // pred_fallthru
      _
    // Predicated region
    $region18: #{sleep_transformer_forward.9} parent=1 // pred_check
      _
    $region19: #{sleep_transformer_forward.9} parent=1 // pred_check_branch
      %34 = sbr.rel (0) target = $region21
    $region20: #{sleep_transformer_forward.9} parent=1 // pred_region
      %36 = vsyncadd [#allocation11], 0
      %s37 = sshll.u32 %s4, 4
      %s38 = int_to_ptr.hbm [resolvable:$true] %s37
      %s39 = sshll.u32 [#allocation10], 4
      %s40 = int_to_ptr.vmem [resolvable:$true] %s39
      %45 = dma.hbm_to_vmem [thread:$0]  %s38, 2048, %s40, [#allocation11], 128, 128, 8
    $region21: #{sleep_transformer_forward.9} parent=1 // pred_fallthru
      _
    // Predicated region
    $region22: #{sleep_transformer_forward.9} parent=1 // pred_check
      _
    $region23: #{sleep_transformer_forward.9} parent=1 // pred_check_branch
      %47 = sbr.rel (0) target = $region25
    $region24: #{sleep_transformer_forward.9} parent=1 // pred_region
      %49 = vsyncadd [#allocation11], 0
      %s50 = sshll.u32 %s5, 4
      %s51 = int_to_ptr.hbm [resolvable:$true] %s50
      %s52 = sshll.u32 [#allocation12], 4
      %s53 = int_to_ptr.vmem [resolvable:$true] %s52
      %58 = dma.hbm_to_vmem [thread:$0]  %s51, 1024, %s53, [#allocation11], 128, 128, 8
    $region25: #{sleep_transformer_forward.9} parent=1 // pred_fallthru
      _
    // Predicated region
    $region26: #{sleep_transformer_forward.9} parent=1 // pred_check
      _
    $region27: #{sleep_transformer_forward.9} parent=1 // pred_check_branch
      %60 = sbr.rel (0) target = $region29
    $region28: #{sleep_transformer_forward.9} parent=1 // pred_region
      _
    $region29: #{sleep_transformer_forward.9} parent=1 // pred_fallthru
      _
    // Predicated region
    $region30: #{sleep_transformer_forward.9} parent=1 // pred_check
      _
    $region31: #{sleep_transformer_forward.9} parent=1 // pred_check_branch
      %62 = sbr.rel (0) target = $region33
    $region32: #{sleep_transformer_forward.9} parent=1 // pred_region
      %64 = dma.done [#allocation9], 1024
    $region33: #{sleep_transformer_forward.9} parent=1 // pred_fallthru
      _
    // Predicated region
    $region34: #{sleep_transformer_forward.9} parent=1 // pred_check
      _
    $region35: #{sleep_transformer_forward.9} parent=1 // pred_check_branch
      %66 = sbr.rel (0) target = $region37
    $region36: #{sleep_transformer_forward.9} parent=1 // pred_region
      %68 = dma.done [#allocation11], 2048
    $region37: #{sleep_transformer_forward.9} parent=1 // pred_fallthru
      _
    // Predicated region
    $region38: #{sleep_transformer_forward.9} parent=1 // pred_check
      _
    $region39: #{sleep_transformer_forward.9} parent=1 // pred_check_branch
      %70 = sbr.rel (0) target = $region41
    $region40: #{sleep_transformer_forward.9} parent=1 // pred_region
      %72 = dma.done [#allocation11], 1024
    $region41: #{sleep_transformer_forward.9} parent=1 // pred_fallthru
      _
    %v74 = vld [vmem:[%s1] sm:$0xff]
    %v75 = vld [vmem:[%s1 + $0x8] sm:$0xff]
    %v76 = vld [vmem:[%s1 + $0x10] sm:$0xff]
    %v77 = vld [vmem:[%s1 + $0x18] sm:$0xff]
    %v78 = vld [vmem:[%s1 + $0x20] sm:$0xff]
    %v79 = vld [vmem:[%s1 + $0x28] sm:$0xff]
    %v80 = vld [vmem:[%s1 + $0x30] sm:$0xff]
    %v81 = vld [vmem:[%s1 + $0x38] sm:$0xff]
    %v82 = vld [vmem:[%s1 + $0x40] sm:$0xff]
    %v83 = vld [vmem:[%s1 + $0x48] sm:$0xff]
    %v84 = vld [vmem:[%s1 + $0x50] sm:$0xff]
    %v85 = vld [vmem:[%s1 + $0x58] sm:$0xff]
    %v86 = vld [vmem:[%s1 + $0x60] sm:$0xff]
    %v87 = vld [vmem:[%s1 + $0x68] sm:$0xff]
    %v88 = vld [vmem:[%s1 + $0x70] sm:$0xff]
    %v89 = vld [vmem:[%s1 + $0x78] sm:$0xff]
    %v90 = vld [vmem:[#allocation8] sm:$0xff]
    %v91 = vld [vmem:[#allocation8 + $0x8] sm:$0xff]
    %v92 = vld [vmem:[#allocation8 + $0x10] sm:$0xff]
    %v93 = vld [vmem:[#allocation8 + $0x18] sm:$0xff]
    %v94 = vld [vmem:[#allocation8 + $0x20] sm:$0xff]
    %v95 = vld [vmem:[#allocation8 + $0x28] sm:$0xff]
    %v96 = vld [vmem:[#allocation8 + $0x30] sm:$0xff]
    %v97 = vld [vmem:[#allocation8 + $0x38] sm:$0xff]
    %v98 = vld [vmem:[%s3] sm:$0x3]
    %v99 = vld [vmem:[#allocation10] sm:$0xff]
    %v100 = vld [vmem:[#allocation10 + $0x8] sm:$0xff]
    %v101 = vld [vmem:[#allocation10 + $0x10] sm:$0xff]
    %v102 = vld [vmem:[#allocation10 + $0x18] sm:$0xff]
    %v103 = vld [vmem:[#allocation10 + $0x20] sm:$0xff]
    %v104 = vld [vmem:[#allocation10 + $0x28] sm:$0xff]
    %v105 = vld [vmem:[#allocation10 + $0x30] sm:$0xff]
    %v106 = vld [vmem:[#allocation10 + $0x38] sm:$0xff]
    %v107 = vld [vmem:[#allocation10 + $0x40] sm:$0xff]
    %v108 = vld [vmem:[#allocation10 + $0x48] sm:$0xff]
    %v109 = vld [vmem:[#allocation10 + $0x50] sm:$0xff]
    %v110 = vld [vmem:[#allocation10 + $0x58] sm:$0xff]
    %v111 = vld [vmem:[#allocation10 + $0x60] sm:$0xff]
    %v112 = vld [vmem:[#allocation10 + $0x68] sm:$0xff]
    %v113 = vld [vmem:[#allocation10 + $0x70] sm:$0xff]
    %v114 = vld [vmem:[#allocation10 + $0x78] sm:$0xff]
    %v115 = vld [vmem:[#allocation12] sm:$0xff]
    %v116 = vld [vmem:[#allocation12 + $0x8] sm:$0xff]
    %v117 = vld [vmem:[#allocation12 + $0x10] sm:$0xff]
    %v118 = vld [vmem:[#allocation12 + $0x18] sm:$0xff]
    %v119 = vld [vmem:[#allocation12 + $0x20] sm:$0xff]
    %v120 = vld [vmem:[#allocation12 + $0x28] sm:$0xff]
    %v121 = vld [vmem:[#allocation12 + $0x30] sm:$0xff]
    %v122 = vld [vmem:[#allocation12 + $0x38] sm:$0xff]
    %v123 = vld [vmem:[%s6] sm:$0x3]
    %vm124 = vcmask 517120
    %125 = vst.msk [vmem:[#allocation2] sm:$0x3] %vm124, 0.0
    %126 = vst.msk [vmem:[#allocation3] sm:$0x3] %vm124, 0.0
    %127 = vst.msk [vmem:[#allocation4] sm:$0x3] %vm124, 0.0
    %128 = vst.msk [vmem:[#allocation5] sm:$0x3] %vm124, 0.0
    loop: start=0, step=1, limit=32
    $region42: #{sleep_transformer_forward.9} parent=1 // loop_pre_header
      _
    $region43: #{sleep_transformer_forward.9} parent=1 // loop_header
      %s130 = sphi 0, %s134
      %p131 = scmp.ge.s32.totalorder %s130, 32
    $region44: #{sleep_transformer_forward.9} parent=1 // loop_header_branch
      %133 = sbr.rel (%p131) target = $region48
    $region45: #{sleep_transformer_forward.9} parent=1 // loop_body
      %s135 = smul.u32 %s130, 2
      %s136 = scalar_lea.vmem %s0, %s135
      %v137 = vld [vmem:[%s136] sm:$0x3]
      %v138 = vpack.c.bf16 %v137, %v137
      %v139 = vld [vmem:[#allocation2] sm:$0x3]
      %v140 = vld [vmem:[#allocation3] sm:$0x3]
      %v141 = vpack.c.bf16 %v139, %v139
      %v150 = vunpack.c.l.b16 %v90
      %v151 = vunpack.c.h.b16 %v90
      %v152 = vunpack.c.l.b16 %v91
      %v153 = vunpack.c.h.b16 %v91
      %v154 = vunpack.c.l.b16 %v92
      %v155 = vunpack.c.h.b16 %v92
      %v156 = vunpack.c.l.b16 %v93
      %v157 = vunpack.c.h.b16 %v93
      %v158 = vunpack.c.l.b16 %v94
      %v159 = vunpack.c.h.b16 %v94
      %v160 = vunpack.c.l.b16 %v95
      %v161 = vunpack.c.h.b16 %v95
      %v162 = vunpack.c.l.b16 %v96
      %v163 = vunpack.c.h.b16 %v96
      %v164 = vunpack.c.l.b16 %v97
      %v165 = vunpack.c.h.b16 %v97
      %v166 = vpack.c.b16 %v152, %v150
      %v167 = vpack.c.b16 %v153, %v151
      %v168 = vpack.c.b16 %v156, %v154
      %v169 = vpack.c.b16 %v157, %v155
      %v170 = vpack.c.b16 %v160, %v158
      %v171 = vpack.c.b16 %v161, %v159
      %v172 = vpack.c.b16 %v164, %v162
      %v173 = vpack.c.b16 %v165, %v163
      %vm182 = vcmask 523264
      %v184 = vsel %vm182, %v141, 0
      %186 = vmatpush.bf16.msra.mxu0 0
      %187 = vmatpush.bf16.msra.mxu0 0
      %188 = vmatpush.bf16.msra.mxu0 0
      %189 = vmatpush.bf16.msra.mxu0 0
      %190 = vmatpush.bf16.msra.mxu0 %v172
      %191 = vmatpush.bf16.msra.mxu0 %v170
      %192 = vmatpush.bf16.msra.mxu0 %v168
      %193 = vmatpush.bf16.msra.mxu0 %v166
      %194 = vmatmul.bf16.gmra.mxu0 %v184
      %v195 = vpop.f32.mrf.mxu0
      %v196 = vadd.f32 0.0, %v195
      %v197 = vpop.f32.mrf.mxu0
      %198 = vdwg.mxu0
      %199 = vmatpush.bf16.msra.mxu0 0
      %200 = vmatpush.bf16.msra.mxu0 0
      %201 = vmatpush.bf16.msra.mxu0 0
      %202 = vmatpush.bf16.msra.mxu0 0
      %203 = vmatpush.bf16.msra.mxu0 %v173
      %204 = vmatpush.bf16.msra.mxu0 %v171
      %205 = vmatpush.bf16.msra.mxu0 %v169
      %206 = vmatpush.bf16.msra.mxu0 %v167
      %207 = vmatmul.bf16.gmra.mxu0 %v184
      %v208 = vpop.f32.mrf.mxu0
      %v209 = vadd.f32 0.0, %v208
      %v210 = vpop.f32.mrf.mxu0
      %211 = vdwg.mxu0
      %v228 = vunpack.c.l.b16 %v74
      %v229 = vunpack.c.h.b16 %v74
      %v230 = vunpack.c.l.b16 %v75
      %v231 = vunpack.c.h.b16 %v75
      %v232 = vunpack.c.l.b16 %v76
      %v233 = vunpack.c.h.b16 %v76
      %v234 = vunpack.c.l.b16 %v77
      %v235 = vunpack.c.h.b16 %v77
      %v236 = vunpack.c.l.b16 %v78
      %v237 = vunpack.c.h.b16 %v78
      %v238 = vunpack.c.l.b16 %v79
      %v239 = vunpack.c.h.b16 %v79
      %v240 = vunpack.c.l.b16 %v80
      %v241 = vunpack.c.h.b16 %v80
      %v242 = vunpack.c.l.b16 %v81
      %v243 = vunpack.c.h.b16 %v81
      %v244 = vunpack.c.l.b16 %v82
      %v245 = vunpack.c.h.b16 %v82
      %v246 = vunpack.c.l.b16 %v83
      %v247 = vunpack.c.h.b16 %v83
      %v248 = vunpack.c.l.b16 %v84
      %v249 = vunpack.c.h.b16 %v84
      %v250 = vunpack.c.l.b16 %v85
      %v251 = vunpack.c.h.b16 %v85
      %v252 = vunpack.c.l.b16 %v86
      %v253 = vunpack.c.h.b16 %v86
      %v254 = vunpack.c.l.b16 %v87
      %v255 = vunpack.c.h.b16 %v87
      %v256 = vunpack.c.l.b16 %v88
      %v257 = vunpack.c.h.b16 %v88
      %v258 = vunpack.c.l.b16 %v89
      %v259 = vunpack.c.h.b16 %v89
      %v260 = vpack.c.b16 %v230, %v228
      %v261 = vpack.c.b16 %v231, %v229
      %v262 = vpack.c.b16 %v234, %v232
      %v263 = vpack.c.b16 %v235, %v233
      %v264 = vpack.c.b16 %v238, %v236
      %v265 = vpack.c.b16 %v239, %v237
      %v266 = vpack.c.b16 %v242, %v240
      %v267 = vpack.c.b16 %v243, %v241
      %v268 = vpack.c.b16 %v246, %v244
      %v269 = vpack.c.b16 %v247, %v245
      %v270 = vpack.c.b16 %v250, %v248
      %v271 = vpack.c.b16 %v251, %v249
      %v272 = vpack.c.b16 %v254, %v252
      %v273 = vpack.c.b16 %v255, %v253
      %v274 = vpack.c.b16 %v258, %v256
      %v275 = vpack.c.b16 %v259, %v257
      %292 = vmatpush.bf16.msra.mxu0 %v274
      %293 = vmatpush.bf16.msra.mxu0 %v272
      %294 = vmatpush.bf16.msra.mxu0 %v270
      %295 = vmatpush.bf16.msra.mxu0 %v268
      %296 = vmatpush.bf16.msra.mxu0 %v266
      %297 = vmatpush.bf16.msra.mxu0 %v264
      %298 = vmatpush.bf16.msra.mxu0 %v262
      %299 = vmatpush.bf16.msra.mxu0 %v260
      %300 = vmatmul.bf16.gmra.mxu0 %v138
      %v301 = vpop.f32.mrf.mxu0
      %v302 = vadd.f32 %v196, %v301
      %v303 = vpop.f32.mrf.mxu0
      %304 = vdwg.mxu0
      %305 = vmatpush.bf16.msra.mxu0 %v275
      %306 = vmatpush.bf16.msra.mxu0 %v273
      %307 = vmatpush.bf16.msra.mxu0 %v271
      %308 = vmatpush.bf16.msra.mxu0 %v269
      %309 = vmatpush.bf16.msra.mxu0 %v267
      %310 = vmatpush.bf16.msra.mxu0 %v265
      %311 = vmatpush.bf16.msra.mxu0 %v263
      %312 = vmatpush.bf16.msra.mxu0 %v261
      %313 = vmatmul.bf16.gmra.mxu0 %v138
      %v314 = vpop.f32.mrf.mxu0
      %v315 = vadd.f32 %v209, %v314
      %v316 = vpop.f32.mrf.mxu0
      %317 = vdwg.mxu0
      %v319 = vperm.slane %v98, 0
      %v320 = vperm.slane %v98, 1
      %v323 = vadd.f32 %v302, %v319
      %v324 = vadd.f32 %v315, %v320
      %v325 = vxor.u32 %v323, 2147483648
      %v326 = vmul.f32 %v325, 1.442695
      %v327 = vpow.pop %v326
      %v328 = vadd.f32 %v327, 1.0
      %v329 = vrcp.pop %v328
      %v330 = vmul.f32 %v328, %v329
      %v331 = vsub.f32 1.0, %v330
      %v332 = vmul.f32 %v329, %v331
      %v333 = vadd.f32 %v329, %v332
      %vm334 = vweird.f32 %v328
      %vm335 = vweird.f32 %v329
      %vm336 = vmor %vm334, %vm335
      %v337 = vsel %vm336, %v329, %v333
      %v338 = vand.u32 2147483647, %v328
      %vm339 = vcmp.eq.f32.partialorder %v338, 8.507059e+37
      %v340 = vand.u32 %v328, 2147483648
      %v341 = vor.u32 1.1754944e-38, %v340
      %v342 = vsel %vm339, %v341, %v337
      %v343 = vmul.f32 1.0, %v342
      %v344 = vtanh.pop %v324
      %v345 = vxor.u32 %v324, 2147483648
      %v346 = vmul.f32 %v345, 1.442695
      %v347 = vpow.pop %v346
      %v348 = vadd.f32 %v347, 1.0
      %v349 = vrcp.pop %v348
      %v350 = vmul.f32 %v348, %v349
      %v351 = vsub.f32 1.0, %v350
      %v352 = vmul.f32 %v349, %v351
      %v353 = vadd.f32 %v349, %v352
      %vm354 = vweird.f32 %v348
      %vm355 = vweird.f32 %v349
      %vm356 = vmor %vm354, %vm355
      %v357 = vsel %vm356, %v349, %v353
      %v358 = vand.u32 2147483647, %v348
      %vm359 = vcmp.eq.f32.partialorder %v358, 8.507059e+37
      %v360 = vand.u32 %v348, 2147483648
      %v361 = vor.u32 1.1754944e-38, %v360
      %v362 = vsel %vm359, %v361, %v357
      %v363 = vmul.f32 1.0, %v362
      %365 = vrot.lane.b32.xlu0 %v140, 64
      %v366 = vpop.permute.xlu0 %365
      %v368 = vmul.f32 %v343, %v366
      %v369 = vmul.f32 %v343, %v344
      %371 = vrot.lane.b32.xlu0 %v369, 64
      %v372 = vpop.permute.xlu0 %371
      %v374 = vadd.f32 %v368, %v372
      %v375 = vtanh.pop %v374
      %v376 = vmul.f32 %v363, %v375
      %s377 = ssub.s32 31, %s130
      %s378 = smul.u32 %s377, 2
      %s379 = scalar_lea.vmem %s0, %s378
      %v380 = vld [vmem:[%s379] sm:$0x3]
      %v381 = vpack.c.bf16 %v380, %v380
      %v382 = vld [vmem:[#allocation4] sm:$0x3]
      %v383 = vld [vmem:[#allocation5] sm:$0x3]
      %v384 = vpack.c.bf16 %v382, %v382
      %v393 = vunpack.c.l.b16 %v115
      %v394 = vunpack.c.h.b16 %v115
      %v395 = vunpack.c.l.b16 %v116
      %v396 = vunpack.c.h.b16 %v116
      %v397 = vunpack.c.l.b16 %v117
      %v398 = vunpack.c.h.b16 %v117
      %v399 = vunpack.c.l.b16 %v118
      %v400 = vunpack.c.h.b16 %v118
      %v401 = vunpack.c.l.b16 %v119
      %v402 = vunpack.c.h.b16 %v119
      %v403 = vunpack.c.l.b16 %v120
      %v404 = vunpack.c.h.b16 %v120
      %v405 = vunpack.c.l.b16 %v121
      %v406 = vunpack.c.h.b16 %v121
      %v407 = vunpack.c.l.b16 %v122
      %v408 = vunpack.c.h.b16 %v122
      %v409 = vpack.c.b16 %v395, %v393
      %v410 = vpack.c.b16 %v396, %v394
      %v411 = vpack.c.b16 %v399, %v397
      %v412 = vpack.c.b16 %v400, %v398
      %v413 = vpack.c.b16 %v403, %v401
      %v414 = vpack.c.b16 %v404, %v402
      %v415 = vpack.c.b16 %v407, %v405
      %v416 = vpack.c.b16 %v408, %v406
      %v426 = vsel %vm182, %v384, 0
      %428 = vmatpush.bf16.msra.mxu0 0
      %429 = vmatpush.bf16.msra.mxu0 0
      %430 = vmatpush.bf16.msra.mxu0 0
      %431 = vmatpush.bf16.msra.mxu0 0
      %432 = vmatpush.bf16.msra.mxu0 %v415
      %433 = vmatpush.bf16.msra.mxu0 %v413
      %434 = vmatpush.bf16.msra.mxu0 %v411
      %435 = vmatpush.bf16.msra.mxu0 %v409
      %436 = vmatmul.bf16.gmra.mxu0 %v426
      %v437 = vpop.f32.mrf.mxu0
      %v438 = vadd.f32 0.0, %v437
      %v439 = vpop.f32.mrf.mxu0
      %440 = vdwg.mxu0
      %441 = vmatpush.bf16.msra.mxu0 0
      %442 = vmatpush.bf16.msra.mxu0 0
      %443 = vmatpush.bf16.msra.mxu0 0
      %444 = vmatpush.bf16.msra.mxu0 0
      %445 = vmatpush.bf16.msra.mxu0 %v416
      %446 = vmatpush.bf16.msra.mxu0 %v414
      %447 = vmatpush.bf16.msra.mxu0 %v412
      %448 = vmatpush.bf16.msra.mxu0 %v410
      %449 = vmatmul.bf16.gmra.mxu0 %v426
      %v450 = vpop.f32.mrf.mxu0
      %v451 = vadd.f32 0.0, %v450
      %v452 = vpop.f32.mrf.mxu0
      %453 = vdwg.mxu0
      %v470 = vunpack.c.l.b16 %v99
      %v471 = vunpack.c.h.b16 %v99
      %v472 = vunpack.c.l.b16 %v100
      %v473 = vunpack.c.h.b16 %v100
      %v474 = vunpack.c.l.b16 %v101
      %v475 = vunpack.c.h.b16 %v101
      %v476 = vunpack.c.l.b16 %v102
      %v477 = vunpack.c.h.b16 %v102
      %v478 = vunpack.c.l.b16 %v103
      %v479 = vunpack.c.h.b16 %v103
      %v480 = vunpack.c.l.b16 %v104
      %v481 = vunpack.c.h.b16 %v104
      %v482 = vunpack.c.l.b16 %v105
      %v483 = vunpack.c.h.b16 %v105
      %v484 = vunpack.c.l.b16 %v106
      %v485 = vunpack.c.h.b16 %v106
      %v486 = vunpack.c.l.b16 %v107
      %v487 = vunpack.c.h.b16 %v107
      %v488 = vunpack.c.l.b16 %v108
      %v489 = vunpack.c.h.b16 %v108
      %v490 = vunpack.c.l.b16 %v109
      %v491 = vunpack.c.h.b16 %v109
      %v492 = vunpack.c.l.b16 %v110
      %v493 = vunpack.c.h.b16 %v110
      %v494 = vunpack.c.l.b16 %v111
      %v495 = vunpack.c.h.b16 %v111
      %v496 = vunpack.c.l.b16 %v112
      %v497 = vunpack.c.h.b16 %v112
      %v498 = vunpack.c.l.b16 %v113
      %v499 = vunpack.c.h.b16 %v113
      %v500 = vunpack.c.l.b16 %v114
      %v501 = vunpack.c.h.b16 %v114
      %v502 = vpack.c.b16 %v472, %v470
      %v503 = vpack.c.b16 %v473, %v471
      %v504 = vpack.c.b16 %v476, %v474
      %v505 = vpack.c.b16 %v477, %v475
      %v506 = vpack.c.b16 %v480, %v478
      %v507 = vpack.c.b16 %v481, %v479
      %v508 = vpack.c.b16 %v484, %v482
      %v509 = vpack.c.b16 %v485, %v483
      %v510 = vpack.c.b16 %v488, %v486
      %v511 = vpack.c.b16 %v489, %v487
      %v512 = vpack.c.b16 %v492, %v490
      %v513 = vpack.c.b16 %v493, %v491
      %v514 = vpack.c.b16 %v496, %v494
      %v515 = vpack.c.b16 %v497, %v495
      %v516 = vpack.c.b16 %v500, %v498
      %v517 = vpack.c.b16 %v501, %v499
      %534 = vmatpush.bf16.msra.mxu0 %v516
      %535 = vmatpush.bf16.msra.mxu0 %v514
      %536 = vmatpush.bf16.msra.mxu0 %v512
      %537 = vmatpush.bf16.msra.mxu0 %v510
      %538 = vmatpush.bf16.msra.mxu0 %v508
      %539 = vmatpush.bf16.msra.mxu0 %v506
      %540 = vmatpush.bf16.msra.mxu0 %v504
      %541 = vmatpush.bf16.msra.mxu0 %v502
      %542 = vmatmul.bf16.gmra.mxu0 %v381
      %v543 = vpop.f32.mrf.mxu0
      %v544 = vadd.f32 %v438, %v543
      %v545 = vpop.f32.mrf.mxu0
      %546 = vdwg.mxu0
      %547 = vmatpush.bf16.msra.mxu0 %v517
      %548 = vmatpush.bf16.msra.mxu0 %v515
      %549 = vmatpush.bf16.msra.mxu0 %v513
      %550 = vmatpush.bf16.msra.mxu0 %v511
      %551 = vmatpush.bf16.msra.mxu0 %v509
      %552 = vmatpush.bf16.msra.mxu0 %v507
      %553 = vmatpush.bf16.msra.mxu0 %v505
      %554 = vmatpush.bf16.msra.mxu0 %v503
      %555 = vmatmul.bf16.gmra.mxu0 %v381
      %v556 = vpop.f32.mrf.mxu0
      %v557 = vadd.f32 %v451, %v556
      %v558 = vpop.f32.mrf.mxu0
      %559 = vdwg.mxu0
      %v561 = vperm.slane %v123, 0
      %v562 = vperm.slane %v123, 1
      %v565 = vadd.f32 %v544, %v561
      %v566 = vadd.f32 %v557, %v562
      %v567 = vxor.u32 %v565, 2147483648
      %v568 = vmul.f32 %v567, 1.442695
      %v569 = vpow.pop %v568
      %v570 = vadd.f32 %v569, 1.0
      %v571 = vrcp.pop %v570
      %v572 = vmul.f32 %v570, %v571
      %v573 = vsub.f32 1.0, %v572
      %v574 = vmul.f32 %v571, %v573
      %v575 = vadd.f32 %v571, %v574
      %vm576 = vweird.f32 %v570
      %vm577 = vweird.f32 %v571
      %vm578 = vmor %vm576, %vm577
      %v579 = vsel %vm578, %v571, %v575
      %v580 = vand.u32 2147483647, %v570
      %vm581 = vcmp.eq.f32.partialorder %v580, 8.507059e+37
      %v582 = vand.u32 %v570, 2147483648
      %v583 = vor.u32 1.1754944e-38, %v582
      %v584 = vsel %vm581, %v583, %v579
      %v585 = vmul.f32 1.0, %v584
      %v586 = vtanh.pop %v566
      %v587 = vxor.u32 %v566, 2147483648
      %v588 = vmul.f32 %v587, 1.442695
      %v589 = vpow.pop %v588
      %v590 = vadd.f32 %v589, 1.0
      %v591 = vrcp.pop %v590
      %v592 = vmul.f32 %v590, %v591
      %v593 = vsub.f32 1.0, %v592
      %v594 = vmul.f32 %v591, %v593
      %v595 = vadd.f32 %v591, %v594
      %vm596 = vweird.f32 %v590
      %vm597 = vweird.f32 %v591
      %vm598 = vmor %vm596, %vm597
      %v599 = vsel %vm598, %v591, %v595
      %v600 = vand.u32 2147483647, %v590
      %vm601 = vcmp.eq.f32.partialorder %v600, 8.507059e+37
      %v602 = vand.u32 %v590, 2147483648
      %v603 = vor.u32 1.1754944e-38, %v602
      %v604 = vsel %vm601, %v603, %v599
      %v605 = vmul.f32 1.0, %v604
      %607 = vrot.lane.b32.xlu0 %v383, 64
      %v608 = vpop.permute.xlu0 %607
      %v610 = vmul.f32 %v585, %v608
      %v611 = vmul.f32 %v585, %v586
      %613 = vrot.lane.b32.xlu0 %v611, 64
      %v614 = vpop.permute.xlu0 %613
      %v616 = vadd.f32 %v610, %v614
      %v617 = vtanh.pop %v616
      %v618 = vmul.f32 %v605, %v617
      %620 = vrot.lane.b32.xlu0 %v376, 64
      %v621 = vpop.permute.xlu0 %620
      %623 = vst.msk [vmem:[#allocation2] sm:$0x3] %vm124, %v621
      %625 = vrot.lane.b32.xlu0 %v374, 64
      %v626 = vpop.permute.xlu0 %625
      %628 = vst.msk [vmem:[#allocation3] sm:$0x3] %vm124, %v626
      %630 = vrot.lane.b32.xlu0 %v618, 64
      %v631 = vpop.permute.xlu0 %630
      %633 = vst.msk [vmem:[#allocation4] sm:$0x3] %vm124, %v631
      %635 = vrot.lane.b32.xlu0 %v616, 64
      %v636 = vpop.permute.xlu0 %635
      %638 = vst.msk [vmem:[#allocation5] sm:$0x3] %vm124, %v636
      %s639 = scalar_lea.vmem [#allocation6], %s135
      %640 = vst.msk [vmem:[%s639] sm:$0x3] %vm124, %v621
      %s641 = scalar_lea.vmem [#allocation7], %s378
      %642 = vst.msk [vmem:[%s641] sm:$0x3] %vm124, %v631
    $region46: #{sleep_transformer_forward.9} parent=1 // loop_footer
      %s134 = sadd.s32 1, %s130
    $region47: #{sleep_transformer_forward.9} parent=1 // loop_footer_branch
      %129 = sbr.rel target = $region43
    $region48: #{sleep_transformer_forward.9} parent=1 // loop_exit
      _
    %v643 = vld [vmem:[#allocation6] sm:$0x3]
    %v644 = vld [vmem:[#allocation6 + $0x2] sm:$0x3]
    %v645 = vld [vmem:[#allocation6 + $0x4] sm:$0x3]
    %v646 = vld [vmem:[#allocation6 + $0x6] sm:$0x3]
    %v647 = vld [vmem:[#allocation6 + $0x8] sm:$0x3]
    %v648 = vld [vmem:[#allocation6 + $0xa] sm:$0x3]
    %v649 = vld [vmem:[#allocation6 + $0xc] sm:$0x3]
    %v650 = vld [vmem:[#allocation6 + $0xe] sm:$0x3]
    %v651 = vld [vmem:[#allocation6 + $0x10] sm:$0x3]
    %v652 = vld [vmem:[#allocation6 + $0x12] sm:$0x3]
    %v653 = vld [vmem:[#allocation6 + $0x14] sm:$0x3]
    %v654 = vld [vmem:[#allocation6 + $0x16] sm:$0x3]
    %v655 = vld [vmem:[#allocation6 + $0x18] sm:$0x3]
    %v656 = vld [vmem:[#allocation6 + $0x1a] sm:$0x3]
    %v657 = vld [vmem:[#allocation6 + $0x1c] sm:$0x3]
    %v658 = vld [vmem:[#allocation6 + $0x1e] sm:$0x3]
    %v659 = vld [vmem:[#allocation6 + $0x20] sm:$0x3]
    %v660 = vld [vmem:[#allocation6 + $0x22] sm:$0x3]
    %v661 = vld [vmem:[#allocation6 + $0x24] sm:$0x3]
    %v662 = vld [vmem:[#allocation6 + $0x26] sm:$0x3]
    %v663 = vld [vmem:[#allocation6 + $0x28] sm:$0x3]
    %v664 = vld [vmem:[#allocation6 + $0x2a] sm:$0x3]
    %v665 = vld [vmem:[#allocation6 + $0x2c] sm:$0x3]
    %v666 = vld [vmem:[#allocation6 + $0x2e] sm:$0x3]
    %v667 = vld [vmem:[#allocation6 + $0x30] sm:$0x3]
    %v668 = vld [vmem:[#allocation6 + $0x32] sm:$0x3]
    %v669 = vld [vmem:[#allocation6 + $0x34] sm:$0x3]
    %v670 = vld [vmem:[#allocation6 + $0x36] sm:$0x3]
    %v671 = vld [vmem:[#allocation6 + $0x38] sm:$0x3]
    %v672 = vld [vmem:[#allocation6 + $0x3a] sm:$0x3]
    %v673 = vld [vmem:[#allocation6 + $0x3c] sm:$0x3]
    %v674 = vld [vmem:[#allocation6 + $0x3e] sm:$0x3]
    %v675 = vld [vmem:[#allocation7] sm:$0x3]
    %v676 = vld [vmem:[#allocation7 + $0x2] sm:$0x3]
    %v677 = vld [vmem:[#allocation7 + $0x4] sm:$0x3]
    %v678 = vld [vmem:[#allocation7 + $0x6] sm:$0x3]
    %v679 = vld [vmem:[#allocation7 + $0x8] sm:$0x3]
    %v680 = vld [vmem:[#allocation7 + $0xa] sm:$0x3]
    %v681 = vld [vmem:[#allocation7 + $0xc] sm:$0x3]
    %v682 = vld [vmem:[#allocation7 + $0xe] sm:$0x3]
    %v683 = vld [vmem:[#allocation7 + $0x10] sm:$0x3]
    %v684 = vld [vmem:[#allocation7 + $0x12] sm:$0x3]
    %v685 = vld [vmem:[#allocation7 + $0x14] sm:$0x3]
    %v686 = vld [vmem:[#allocation7 + $0x16] sm:$0x3]
    %v687 = vld [vmem:[#allocation7 + $0x18] sm:$0x3]
    %v688 = vld [vmem:[#allocation7 + $0x1a] sm:$0x3]
    %v689 = vld [vmem:[#allocation7 + $0x1c] sm:$0x3]
    %v690 = vld [vmem:[#allocation7 + $0x1e] sm:$0x3]
    %v691 = vld [vmem:[#allocation7 + $0x20] sm:$0x3]
    %v692 = vld [vmem:[#allocation7 + $0x22] sm:$0x3]
    %v693 = vld [vmem:[#allocation7 + $0x24] sm:$0x3]
    %v694 = vld [vmem:[#allocation7 + $0x26] sm:$0x3]
    %v695 = vld [vmem:[#allocation7 + $0x28] sm:$0x3]
    %v696 = vld [vmem:[#allocation7 + $0x2a] sm:$0x3]
    %v697 = vld [vmem:[#allocation7 + $0x2c] sm:$0x3]
    %v698 = vld [vmem:[#allocation7 + $0x2e] sm:$0x3]
    %v699 = vld [vmem:[#allocation7 + $0x30] sm:$0x3]
    %v700 = vld [vmem:[#allocation7 + $0x32] sm:$0x3]
    %v701 = vld [vmem:[#allocation7 + $0x34] sm:$0x3]
    %v702 = vld [vmem:[#allocation7 + $0x36] sm:$0x3]
    %v703 = vld [vmem:[#allocation7 + $0x38] sm:$0x3]
    %v704 = vld [vmem:[#allocation7 + $0x3a] sm:$0x3]
    %v705 = vld [vmem:[#allocation7 + $0x3c] sm:$0x3]
    %v706 = vld [vmem:[#allocation7 + $0x3e] sm:$0x3]
    %739 = vrot.lane.b32.xlu0 %v675, 64
    %v740 = vpop.permute.xlu0 %739
    %741 = vrot.lane.b32.xlu0 %v676, 64
    %v742 = vpop.permute.xlu0 %741
    %743 = vrot.lane.b32.xlu0 %v677, 64
    %v744 = vpop.permute.xlu0 %743
    %745 = vrot.lane.b32.xlu0 %v678, 64
    %v746 = vpop.permute.xlu0 %745
    %747 = vrot.lane.b32.xlu0 %v679, 64
    %v748 = vpop.permute.xlu0 %747
    %749 = vrot.lane.b32.xlu0 %v680, 64
    %v750 = vpop.permute.xlu0 %749
    %751 = vrot.lane.b32.xlu0 %v681, 64
    %v752 = vpop.permute.xlu0 %751
    %753 = vrot.lane.b32.xlu0 %v682, 64
    %v754 = vpop.permute.xlu0 %753
    %755 = vrot.lane.b32.xlu0 %v683, 64
    %v756 = vpop.permute.xlu0 %755
    %757 = vrot.lane.b32.xlu0 %v684, 64
    %v758 = vpop.permute.xlu0 %757
    %759 = vrot.lane.b32.xlu0 %v685, 64
    %v760 = vpop.permute.xlu0 %759
    %761 = vrot.lane.b32.xlu0 %v686, 64
    %v762 = vpop.permute.xlu0 %761
    %763 = vrot.lane.b32.xlu0 %v687, 64
    %v764 = vpop.permute.xlu0 %763
    %765 = vrot.lane.b32.xlu0 %v688, 64
    %v766 = vpop.permute.xlu0 %765
    %767 = vrot.lane.b32.xlu0 %v689, 64
    %v768 = vpop.permute.xlu0 %767
    %769 = vrot.lane.b32.xlu0 %v690, 64
    %v770 = vpop.permute.xlu0 %769
    %771 = vrot.lane.b32.xlu0 %v691, 64
    %v772 = vpop.permute.xlu0 %771
    %773 = vrot.lane.b32.xlu0 %v692, 64
    %v774 = vpop.permute.xlu0 %773
    %775 = vrot.lane.b32.xlu0 %v693, 64
    %v776 = vpop.permute.xlu0 %775
    %777 = vrot.lane.b32.xlu0 %v694, 64
    %v778 = vpop.permute.xlu0 %777
    %779 = vrot.lane.b32.xlu0 %v695, 64
    %v780 = vpop.permute.xlu0 %779
    %781 = vrot.lane.b32.xlu0 %v696, 64
    %v782 = vpop.permute.xlu0 %781
    %783 = vrot.lane.b32.xlu0 %v697, 64
    %v784 = vpop.permute.xlu0 %783
    %785 = vrot.lane.b32.xlu0 %v698, 64
    %v786 = vpop.permute.xlu0 %785
    %787 = vrot.lane.b32.xlu0 %v699, 64
    %v788 = vpop.permute.xlu0 %787
    %789 = vrot.lane.b32.xlu0 %v700, 64
    %v790 = vpop.permute.xlu0 %789
    %791 = vrot.lane.b32.xlu0 %v701, 64
    %v792 = vpop.permute.xlu0 %791
    %793 = vrot.lane.b32.xlu0 %v702, 64
    %v794 = vpop.permute.xlu0 %793
    %795 = vrot.lane.b32.xlu0 %v703, 64
    %v796 = vpop.permute.xlu0 %795
    %797 = vrot.lane.b32.xlu0 %v704, 64
    %v798 = vpop.permute.xlu0 %797
    %799 = vrot.lane.b32.xlu0 %v705, 64
    %v800 = vpop.permute.xlu0 %799
    %801 = vrot.lane.b32.xlu0 %v706, 64
    %v802 = vpop.permute.xlu0 %801
    %vm835 = vcmask 523264
    %v836 = vsel %vm835, %v643, %v740
    %v837 = vsel %vm835, %v644, %v742
    %v838 = vsel %vm835, %v645, %v744
    %v839 = vsel %vm835, %v646, %v746
    %v840 = vsel %vm835, %v647, %v748
    %v841 = vsel %vm835, %v648, %v750
    %v842 = vsel %vm835, %v649, %v752
    %v843 = vsel %vm835, %v650, %v754
    %v844 = vsel %vm835, %v651, %v756
    %v845 = vsel %vm835, %v652, %v758
    %v846 = vsel %vm835, %v653, %v760
    %v847 = vsel %vm835, %v654, %v762
    %v848 = vsel %vm835, %v655, %v764
    %v849 = vsel %vm835, %v656, %v766
    %v850 = vsel %vm835, %v657, %v768
    %v851 = vsel %vm835, %v658, %v770
    %v852 = vsel %vm835, %v659, %v772
    %v853 = vsel %vm835, %v660, %v774
    %v854 = vsel %vm835, %v661, %v776
    %v855 = vsel %vm835, %v662, %v778
    %v856 = vsel %vm835, %v663, %v780
    %v857 = vsel %vm835, %v664, %v782
    %v858 = vsel %vm835, %v665, %v784
    %v859 = vsel %vm835, %v666, %v786
    %v860 = vsel %vm835, %v667, %v788
    %v861 = vsel %vm835, %v668, %v790
    %v862 = vsel %vm835, %v669, %v792
    %v863 = vsel %vm835, %v670, %v794
    %v864 = vsel %vm835, %v671, %v796
    %v865 = vsel %vm835, %v672, %v798
    %v866 = vsel %vm835, %v673, %v800
    %v867 = vsel %vm835, %v674, %v802
    %868 = vst [vmem:[%s7] sm:$0x3] %v836
    %869 = vst [vmem:[%s7 + $0x2] sm:$0x3] %v837
    %870 = vst [vmem:[%s7 + $0x4] sm:$0x3] %v838
    %871 = vst [vmem:[%s7 + $0x6] sm:$0x3] %v839
    %872 = vst [vmem:[%s7 + $0x8] sm:$0x3] %v840
    %873 = vst [vmem:[%s7 + $0xa] sm:$0x3] %v841
    %874 = vst [vmem:[%s7 + $0xc] sm:$0x3] %v842
    %875 = vst [vmem:[%s7 + $0xe] sm:$0x3] %v843
    %876 = vst [vmem:[%s7 + $0x10] sm:$0x3] %v844
    %877 = vst [vmem:[%s7 + $0x12] sm:$0x3] %v845
    %878 = vst [vmem:[%s7 + $0x14] sm:$0x3] %v846
    %879 = vst [vmem:[%s7 + $0x16] sm:$0x3] %v847
    %880 = vst [vmem:[%s7 + $0x18] sm:$0x3] %v848
    %881 = vst [vmem:[%s7 + $0x1a] sm:$0x3] %v849
    %882 = vst [vmem:[%s7 + $0x1c] sm:$0x3] %v850
    %883 = vst [vmem:[%s7 + $0x1e] sm:$0x3] %v851
    %884 = vst [vmem:[%s7 + $0x20] sm:$0x3] %v852
    %885 = vst [vmem:[%s7 + $0x22] sm:$0x3] %v853
    %886 = vst [vmem:[%s7 + $0x24] sm:$0x3] %v854
    %887 = vst [vmem:[%s7 + $0x26] sm:$0x3] %v855
    %888 = vst [vmem:[%s7 + $0x28] sm:$0x3] %v856
    %889 = vst [vmem:[%s7 + $0x2a] sm:$0x3] %v857
    %890 = vst [vmem:[%s7 + $0x2c] sm:$0x3] %v858
    %891 = vst [vmem:[%s7 + $0x2e] sm:$0x3] %v859
    %892 = vst [vmem:[%s7 + $0x30] sm:$0x3] %v860
    %893 = vst [vmem:[%s7 + $0x32] sm:$0x3] %v861
    %894 = vst [vmem:[%s7 + $0x34] sm:$0x3] %v862
    %895 = vst [vmem:[%s7 + $0x36] sm:$0x3] %v863
    %896 = vst [vmem:[%s7 + $0x38] sm:$0x3] %v864
    %897 = vst [vmem:[%s7 + $0x3a] sm:$0x3] %v865
    %898 = vst [vmem:[%s7 + $0x3c] sm:$0x3] %v866
    %899 = vst [vmem:[%s7 + $0x3e] sm:$0x3] %v867
    // Predicated region
    $region49: #{sleep_transformer_forward.9} parent=1 // pred_check
      _
    $region50: #{sleep_transformer_forward.9} parent=1 // pred_check_branch
      %901 = sbr.rel (0) target = $region52
    $region51: #{sleep_transformer_forward.9} parent=1 // pred_region
      _
    $region52: #{sleep_transformer_forward.9} parent=1 // pred_fallthru
      _
    // Predicated region
    $region53: #{sleep_transformer_forward.9} parent=1 // pred_check
      _
    $region54: #{sleep_transformer_forward.9} parent=1 // pred_check_branch
      %903 = sbr.rel (0) target = $region56
    $region55: #{sleep_transformer_forward.9} parent=1 // pred_region
      _
    $region56: #{sleep_transformer_forward.9} parent=1 // pred_fallthru
      _
    %904 = vsyncpa [#allocation9], 1
    %905 = vsyncpa [#allocation11], 1

// kernel: sleep_transformer_forward.10
$region0: #{sleep_transformer_forward.10}
  #allocation0 [shape = 'u32[]', space=smem, size = 0x4, offset = 0x4, fixed_abs, tag = 'smem constant byte address 0x4 - core index']
  #allocation1 [shape = 'u32[72,128]{1,0:T(1,128)}', space=vmem, size = 0x9000, scoped, tag = 'internal scratch']
  #allocation2 [shape = 'f32[2,64]{1,0:T(2,128)}', space=vmem, size = 0x400, scoped, tag = 'scratch operand']
  #allocation3 [shape = 'f32[2,64]{1,0:T(2,128)}', space=vmem, size = 0x400, scoped, tag = 'scratch operand']
  #allocation4 [shape = 'f32[2,64]{1,0:T(2,128)}', space=vmem, size = 0x400, scoped, tag = 'scratch operand']
  #allocation5 [shape = 'f32[2,64]{1,0:T(2,128)}', space=vmem, size = 0x400, scoped, tag = 'scratch operand']
  #allocation6 [shape = 'f32[32,2,64]{2,1,0:T(2,128)}', space=vmem, size = 0x8000, scoped, tag = 'scratch operand']
  #allocation7 [shape = 'f32[32,2,64]{2,1,0:T(2,128)}', space=vmem, size = 0x8000, scoped, tag = 'scratch operand']
  %s0 = inlined_call_operand.vmem [shape: f32[32,2,128], index: 0, kind: input, shape index: {}]
  %s1 = inlined_call_operand.hbm [shape: bf16[128,256], index: 1, kind: input, shape index: {}]
  %s2 = inlined_call_operand.hbm [shape: bf16[64,256], index: 2, kind: input, shape index: {}]
  %s3 = inlined_call_operand.vmem [shape: f32[1,256], index: 3, kind: input, shape index: {}]
  %s4 = inlined_call_operand.hbm [shape: bf16[128,256], index: 4, kind: input, shape index: {}]
  %s5 = inlined_call_operand.hbm [shape: bf16[64,256], index: 5, kind: input, shape index: {}]
  %s6 = inlined_call_operand.vmem [shape: f32[1,256], index: 6, kind: input, shape index: {}]
  %s7 = inlined_call_operand.vmem [shape: f32[32,2,128], index: 7, kind: output, shape index: {}]
  %s8 = sld [smem:[#allocation0]]
  $region61: #{sleep_transformer_forward.10} parent=0
    _
  %s10 = ssub.s32 1, %s8
  %s11 = scalar_select 0, %s10, %s8
  $region1: #{sleep_transformer_forward.10} parent=0
    #allocation8 [shape = 'u8[65536]{0}', space=vmem, size = 0x10000, scoped, tag = 'input window, operand 1, single buffered']
    #allocation9 [shape = 's32[1]{0}', space=sflag, size = 0x4, scoped, tag = 'scoped memory for sleep_transformer_forward.10']
    #allocation10 [shape = 'u8[32768]{0}', space=vmem, size = 0x8000, scoped, tag = 'input window, operand 2, single buffered']
    #allocation11 [shape = 's32[1]{0}', space=sflag, size = 0x4, scoped, tag = 'scoped memory for sleep_transformer_forward.10']
    #allocation12 [shape = 'u8[65536]{0}', space=vmem, size = 0x10000, scoped, tag = 'input window, operand 4, single buffered']
    #allocation13 [shape = 'u8[32768]{0}', space=vmem, size = 0x8000, scoped, tag = 'input window, operand 5, single buffered']
    #allocation14 [shape = 's32[1]{0}', space=sflag, size = 0x4, scoped, tag = 'scoped memory for sleep_transformer_forward.10']
    %12 = vsyncpa [#allocation9], 0
    %13 = vsyncpa [#allocation11], 0
    %14 = vsyncpa [#allocation14], 0
    // Predicated region
    $region2: #{sleep_transformer_forward.10} parent=1 // pred_check
      _
    $region3: #{sleep_transformer_forward.10} parent=1 // pred_check_branch
      %16 = sbr.rel (0) target = $region5
    $region4: #{sleep_transformer_forward.10} parent=1 // pred_region
      _
    $region5: #{sleep_transformer_forward.10} parent=1 // pred_fallthru
      _
    // Predicated region
    $region6: #{sleep_transformer_forward.10} parent=1 // pred_check
      _
    $region7: #{sleep_transformer_forward.10} parent=1 // pred_check_branch
      %18 = sbr.rel (0) target = $region9
    $region8: #{sleep_transformer_forward.10} parent=1 // pred_region
      %20 = vsyncadd [#allocation9], 0
      %s21 = sshll.u32 %s1, 4
      %s22 = int_to_ptr.hbm [resolvable:$true] %s21
      %s23 = sshll.u32 [#allocation8], 4
      %s24 = int_to_ptr.vmem [resolvable:$true] %s23
      %29 = dma.hbm_to_vmem [thread:$0]  %s22, 2048, %s24, [#allocation9], 128, 128, 8
    $region9: #{sleep_transformer_forward.10} parent=1 // pred_fallthru
      _
    // Predicated region
    $region10: #{sleep_transformer_forward.10} parent=1 // pred_check
      _
    $region11: #{sleep_transformer_forward.10} parent=1 // pred_check_branch
      %31 = sbr.rel (0) target = $region13
    $region12: #{sleep_transformer_forward.10} parent=1 // pred_region
      %33 = vsyncadd [#allocation11], 0
      %s34 = sshll.u32 %s2, 4
      %s35 = int_to_ptr.hbm [resolvable:$true] %s34
      %s36 = sshll.u32 [#allocation10], 4
      %s37 = int_to_ptr.vmem [resolvable:$true] %s36
      %42 = dma.hbm_to_vmem [thread:$0]  %s35, 1024, %s37, [#allocation11], 128, 128, 8
    $region13: #{sleep_transformer_forward.10} parent=1 // pred_fallthru
      _
    // Predicated region
    $region14: #{sleep_transformer_forward.10} parent=1 // pred_check
      _
    $region15: #{sleep_transformer_forward.10} parent=1 // pred_check_branch
      %44 = sbr.rel (0) target = $region17
    $region16: #{sleep_transformer_forward.10} parent=1 // pred_region
      _
    $region17: #{sleep_transformer_forward.10} parent=1 // pred_fallthru
      _
    // Predicated region
    $region18: #{sleep_transformer_forward.10} parent=1 // pred_check
      _
    $region19: #{sleep_transformer_forward.10} parent=1 // pred_check_branch
      %46 = sbr.rel (0) target = $region21
    $region20: #{sleep_transformer_forward.10} parent=1 // pred_region
      %48 = vsyncadd [#allocation11], 0
      %s49 = sshll.u32 %s4, 4
      %s50 = int_to_ptr.hbm [resolvable:$true] %s49
      %s51 = sshll.u32 [#allocation12], 4
      %s52 = int_to_ptr.vmem [resolvable:$true] %s51
      %57 = dma.hbm_to_vmem [thread:$0]  %s50, 2048, %s52, [#allocation11], 128, 128, 8
    $region21: #{sleep_transformer_forward.10} parent=1 // pred_fallthru
      _
    // Predicated region
    $region22: #{sleep_transformer_forward.10} parent=1 // pred_check
      _
    $region23: #{sleep_transformer_forward.10} parent=1 // pred_check_branch
      %59 = sbr.rel (0) target = $region25
    $region24: #{sleep_transformer_forward.10} parent=1 // pred_region
      %61 = vsyncadd [#allocation14], 0
      %s62 = sshll.u32 %s5, 4
      %s63 = int_to_ptr.hbm [resolvable:$true] %s62
      %s64 = sshll.u32 [#allocation13], 4
      %s65 = int_to_ptr.vmem [resolvable:$true] %s64
      %70 = dma.hbm_to_vmem [thread:$0]  %s63, 1024, %s65, [#allocation14], 128, 128, 8
    $region25: #{sleep_transformer_forward.10} parent=1 // pred_fallthru
      _
    // Predicated region
    $region26: #{sleep_transformer_forward.10} parent=1 // pred_check
      _
    $region27: #{sleep_transformer_forward.10} parent=1 // pred_check_branch
      %72 = sbr.rel (0) target = $region29
    $region28: #{sleep_transformer_forward.10} parent=1 // pred_region
      _
    $region29: #{sleep_transformer_forward.10} parent=1 // pred_fallthru
      _
    // Predicated region
    $region30: #{sleep_transformer_forward.10} parent=1 // pred_check
      _
    $region31: #{sleep_transformer_forward.10} parent=1 // pred_check_branch
      %74 = sbr.rel (0) target = $region33
    $region32: #{sleep_transformer_forward.10} parent=1 // pred_region
      %76 = dma.done [#allocation9], 2048
    $region33: #{sleep_transformer_forward.10} parent=1 // pred_fallthru
      _
    // Predicated region
    $region34: #{sleep_transformer_forward.10} parent=1 // pred_check
      _
    $region35: #{sleep_transformer_forward.10} parent=1 // pred_check_branch
      %78 = sbr.rel (0) target = $region37
    $region36: #{sleep_transformer_forward.10} parent=1 // pred_region
      %80 = dma.done [#allocation11], 1024
    $region37: #{sleep_transformer_forward.10} parent=1 // pred_fallthru
      _
    // Predicated region
    $region38: #{sleep_transformer_forward.10} parent=1 // pred_check
      _
    $region39: #{sleep_transformer_forward.10} parent=1 // pred_check_branch
      %82 = sbr.rel (0) target = $region41
    $region40: #{sleep_transformer_forward.10} parent=1 // pred_region
      %84 = dma.done [#allocation11], 2048
    $region41: #{sleep_transformer_forward.10} parent=1 // pred_fallthru
      _
    // Predicated region
    $region42: #{sleep_transformer_forward.10} parent=1 // pred_check
      _
    $region43: #{sleep_transformer_forward.10} parent=1 // pred_check_branch
      %86 = sbr.rel (0) target = $region45
    $region44: #{sleep_transformer_forward.10} parent=1 // pred_region
      %88 = dma.done [#allocation14], 1024
    $region45: #{sleep_transformer_forward.10} parent=1 // pred_fallthru
      _
    %v90 = vld [vmem:[#allocation8] sm:$0xff]
    %v91 = vld [vmem:[#allocation8 + $0x8] sm:$0xff]
    %v92 = vld [vmem:[#allocation8 + $0x10] sm:$0xff]
    %v93 = vld [vmem:[#allocation8 + $0x18] sm:$0xff]
    %v94 = vld [vmem:[#allocation8 + $0x20] sm:$0xff]
    %v95 = vld [vmem:[#allocation8 + $0x28] sm:$0xff]
    %v96 = vld [vmem:[#allocation8 + $0x30] sm:$0xff]
    %v97 = vld [vmem:[#allocation8 + $0x38] sm:$0xff]
    %v98 = vld [vmem:[#allocation8 + $0x40] sm:$0xff]
    %v99 = vld [vmem:[#allocation8 + $0x48] sm:$0xff]
    %v100 = vld [vmem:[#allocation8 + $0x50] sm:$0xff]
    %v101 = vld [vmem:[#allocation8 + $0x58] sm:$0xff]
    %v102 = vld [vmem:[#allocation8 + $0x60] sm:$0xff]
    %v103 = vld [vmem:[#allocation8 + $0x68] sm:$0xff]
    %v104 = vld [vmem:[#allocation8 + $0x70] sm:$0xff]
    %v105 = vld [vmem:[#allocation8 + $0x78] sm:$0xff]
    %v106 = vld [vmem:[#allocation10] sm:$0xff]
    %v107 = vld [vmem:[#allocation10 + $0x8] sm:$0xff]
    %v108 = vld [vmem:[#allocation10 + $0x10] sm:$0xff]
    %v109 = vld [vmem:[#allocation10 + $0x18] sm:$0xff]
    %v110 = vld [vmem:[#allocation10 + $0x20] sm:$0xff]
    %v111 = vld [vmem:[#allocation10 + $0x28] sm:$0xff]
    %v112 = vld [vmem:[#allocation10 + $0x30] sm:$0xff]
    %v113 = vld [vmem:[#allocation10 + $0x38] sm:$0xff]
    %v114 = vld [vmem:[%s3] sm:$0x3]
    %v115 = vld [vmem:[#allocation12] sm:$0xff]
    %v116 = vld [vmem:[#allocation12 + $0x8] sm:$0xff]
    %v117 = vld [vmem:[#allocation12 + $0x10] sm:$0xff]
    %v118 = vld [vmem:[#allocation12 + $0x18] sm:$0xff]
    %v119 = vld [vmem:[#allocation12 + $0x20] sm:$0xff]
    %v120 = vld [vmem:[#allocation12 + $0x28] sm:$0xff]
    %v121 = vld [vmem:[#allocation12 + $0x30] sm:$0xff]
    %v122 = vld [vmem:[#allocation12 + $0x38] sm:$0xff]
    %v123 = vld [vmem:[#allocation12 + $0x40] sm:$0xff]
    %v124 = vld [vmem:[#allocation12 + $0x48] sm:$0xff]
    %v125 = vld [vmem:[#allocation12 + $0x50] sm:$0xff]
    %v126 = vld [vmem:[#allocation12 + $0x58] sm:$0xff]
    %v127 = vld [vmem:[#allocation12 + $0x60] sm:$0xff]
    %v128 = vld [vmem:[#allocation12 + $0x68] sm:$0xff]
    %v129 = vld [vmem:[#allocation12 + $0x70] sm:$0xff]
    %v130 = vld [vmem:[#allocation12 + $0x78] sm:$0xff]
    %v131 = vld [vmem:[#allocation13] sm:$0xff]
    %v132 = vld [vmem:[#allocation13 + $0x8] sm:$0xff]
    %v133 = vld [vmem:[#allocation13 + $0x10] sm:$0xff]
    %v134 = vld [vmem:[#allocation13 + $0x18] sm:$0xff]
    %v135 = vld [vmem:[#allocation13 + $0x20] sm:$0xff]
    %v136 = vld [vmem:[#allocation13 + $0x28] sm:$0xff]
    %v137 = vld [vmem:[#allocation13 + $0x30] sm:$0xff]
    %v138 = vld [vmem:[#allocation13 + $0x38] sm:$0xff]
    %v139 = vld [vmem:[%s6] sm:$0x3]
    %vm140 = vcmask 517120
    %141 = vst.msk [vmem:[#allocation2] sm:$0x3] %vm140, 0.0
    %142 = vst.msk [vmem:[#allocation3] sm:$0x3] %vm140, 0.0
    %143 = vst.msk [vmem:[#allocation4] sm:$0x3] %vm140, 0.0
    %144 = vst.msk [vmem:[#allocation5] sm:$0x3] %vm140, 0.0
    loop: start=0, step=1, limit=32
    $region46: #{sleep_transformer_forward.10} parent=1 // loop_pre_header
      _
    $region47: #{sleep_transformer_forward.10} parent=1 // loop_header
      %s146 = sphi 0, %s150
      %p147 = scmp.ge.s32.totalorder %s146, 32
    $region48: #{sleep_transformer_forward.10} parent=1 // loop_header_branch
      %149 = sbr.rel (%p147) target = $region52
    $region49: #{sleep_transformer_forward.10} parent=1 // loop_body
      %s151 = smul.u32 %s146, 2
      %s152 = scalar_lea.vmem %s0, %s151
      %v153 = vld [vmem:[%s152] sm:$0x3]
      %v154 = vpack.c.bf16 %v153, %v153
      %v155 = vld [vmem:[#allocation2] sm:$0x3]
      %v156 = vld [vmem:[#allocation3] sm:$0x3]
      %v157 = vpack.c.bf16 %v155, %v155
      %v166 = vunpack.c.l.b16 %v106
      %v167 = vunpack.c.h.b16 %v106
      %v168 = vunpack.c.l.b16 %v107
      %v169 = vunpack.c.h.b16 %v107
      %v170 = vunpack.c.l.b16 %v108
      %v171 = vunpack.c.h.b16 %v108
      %v172 = vunpack.c.l.b16 %v109
      %v173 = vunpack.c.h.b16 %v109
      %v174 = vunpack.c.l.b16 %v110
      %v175 = vunpack.c.h.b16 %v110
      %v176 = vunpack.c.l.b16 %v111
      %v177 = vunpack.c.h.b16 %v111
      %v178 = vunpack.c.l.b16 %v112
      %v179 = vunpack.c.h.b16 %v112
      %v180 = vunpack.c.l.b16 %v113
      %v181 = vunpack.c.h.b16 %v113
      %v182 = vpack.c.b16 %v168, %v166
      %v183 = vpack.c.b16 %v169, %v167
      %v184 = vpack.c.b16 %v172, %v170
      %v185 = vpack.c.b16 %v173, %v171
      %v186 = vpack.c.b16 %v176, %v174
      %v187 = vpack.c.b16 %v177, %v175
      %v188 = vpack.c.b16 %v180, %v178
      %v189 = vpack.c.b16 %v181, %v179
      %vm198 = vcmask 523264
      %v200 = vsel %vm198, %v157, 0
      %202 = vmatpush.bf16.msra.mxu0 0
      %203 = vmatpush.bf16.msra.mxu0 0
      %204 = vmatpush.bf16.msra.mxu0 0
      %205 = vmatpush.bf16.msra.mxu0 0
      %206 = vmatpush.bf16.msra.mxu0 %v188
      %207 = vmatpush.bf16.msra.mxu0 %v186
      %208 = vmatpush.bf16.msra.mxu0 %v184
      %209 = vmatpush.bf16.msra.mxu0 %v182
      %210 = vmatmul.bf16.gmra.mxu0 %v200
      %v211 = vpop.f32.mrf.mxu0
      %v212 = vadd.f32 0.0, %v211
      %v213 = vpop.f32.mrf.mxu0
      %214 = vdwg.mxu0
      %215 = vmatpush.bf16.msra.mxu0 0
      %216 = vmatpush.bf16.msra.mxu0 0
      %217 = vmatpush.bf16.msra.mxu0 0
      %218 = vmatpush.bf16.msra.mxu0 0
      %219 = vmatpush.bf16.msra.mxu0 %v189
      %220 = vmatpush.bf16.msra.mxu0 %v187
      %221 = vmatpush.bf16.msra.mxu0 %v185
      %222 = vmatpush.bf16.msra.mxu0 %v183
      %223 = vmatmul.bf16.gmra.mxu0 %v200
      %v224 = vpop.f32.mrf.mxu0
      %v225 = vadd.f32 0.0, %v224
      %v226 = vpop.f32.mrf.mxu0
      %227 = vdwg.mxu0
      %v244 = vunpack.c.l.b16 %v90
      %v245 = vunpack.c.h.b16 %v90
      %v246 = vunpack.c.l.b16 %v91
      %v247 = vunpack.c.h.b16 %v91
      %v248 = vunpack.c.l.b16 %v92
      %v249 = vunpack.c.h.b16 %v92
      %v250 = vunpack.c.l.b16 %v93
      %v251 = vunpack.c.h.b16 %v93
      %v252 = vunpack.c.l.b16 %v94
      %v253 = vunpack.c.h.b16 %v94
      %v254 = vunpack.c.l.b16 %v95
      %v255 = vunpack.c.h.b16 %v95
      %v256 = vunpack.c.l.b16 %v96
      %v257 = vunpack.c.h.b16 %v96
      %v258 = vunpack.c.l.b16 %v97
      %v259 = vunpack.c.h.b16 %v97
      %v260 = vunpack.c.l.b16 %v98
      %v261 = vunpack.c.h.b16 %v98
      %v262 = vunpack.c.l.b16 %v99
      %v263 = vunpack.c.h.b16 %v99
      %v264 = vunpack.c.l.b16 %v100
      %v265 = vunpack.c.h.b16 %v100
      %v266 = vunpack.c.l.b16 %v101
      %v267 = vunpack.c.h.b16 %v101
      %v268 = vunpack.c.l.b16 %v102
      %v269 = vunpack.c.h.b16 %v102
      %v270 = vunpack.c.l.b16 %v103
      %v271 = vunpack.c.h.b16 %v103
      %v272 = vunpack.c.l.b16 %v104
      %v273 = vunpack.c.h.b16 %v104
      %v274 = vunpack.c.l.b16 %v105
      %v275 = vunpack.c.h.b16 %v105
      %v276 = vpack.c.b16 %v246, %v244
      %v277 = vpack.c.b16 %v247, %v245
      %v278 = vpack.c.b16 %v250, %v248
      %v279 = vpack.c.b16 %v251, %v249
      %v280 = vpack.c.b16 %v254, %v252
      %v281 = vpack.c.b16 %v255, %v253
      %v282 = vpack.c.b16 %v258, %v256
      %v283 = vpack.c.b16 %v259, %v257
      %v284 = vpack.c.b16 %v262, %v260
      %v285 = vpack.c.b16 %v263, %v261
      %v286 = vpack.c.b16 %v266, %v264
      %v287 = vpack.c.b16 %v267, %v265
      %v288 = vpack.c.b16 %v270, %v268
      %v289 = vpack.c.b16 %v271, %v269
      %v290 = vpack.c.b16 %v274, %v272
      %v291 = vpack.c.b16 %v275, %v273
      %308 = vmatpush.bf16.msra.mxu0 %v290
      %309 = vmatpush.bf16.msra.mxu0 %v288
      %310 = vmatpush.bf16.msra.mxu0 %v286
      %311 = vmatpush.bf16.msra.mxu0 %v284
      %312 = vmatpush.bf16.msra.mxu0 %v282
      %313 = vmatpush.bf16.msra.mxu0 %v280
      %314 = vmatpush.bf16.msra.mxu0 %v278
      %315 = vmatpush.bf16.msra.mxu0 %v276
      %316 = vmatmul.bf16.gmra.mxu0 %v154
      %v317 = vpop.f32.mrf.mxu0
      %v318 = vadd.f32 %v212, %v317
      %v319 = vpop.f32.mrf.mxu0
      %320 = vdwg.mxu0
      %321 = vmatpush.bf16.msra.mxu0 %v291
      %322 = vmatpush.bf16.msra.mxu0 %v289
      %323 = vmatpush.bf16.msra.mxu0 %v287
      %324 = vmatpush.bf16.msra.mxu0 %v285
      %325 = vmatpush.bf16.msra.mxu0 %v283
      %326 = vmatpush.bf16.msra.mxu0 %v281
      %327 = vmatpush.bf16.msra.mxu0 %v279
      %328 = vmatpush.bf16.msra.mxu0 %v277
      %329 = vmatmul.bf16.gmra.mxu0 %v154
      %v330 = vpop.f32.mrf.mxu0
      %v331 = vadd.f32 %v225, %v330
      %v332 = vpop.f32.mrf.mxu0
      %333 = vdwg.mxu0
      %v335 = vperm.slane %v114, 0
      %v336 = vperm.slane %v114, 1
      %v339 = vadd.f32 %v318, %v335
      %v340 = vadd.f32 %v331, %v336
      %v341 = vxor.u32 %v339, 2147483648
      %v342 = vmul.f32 %v341, 1.442695
      %v343 = vpow.pop %v342
      %v344 = vadd.f32 %v343, 1.0
      %v345 = vrcp.pop %v344
      %v346 = vmul.f32 %v344, %v345
      %v347 = vsub.f32 1.0, %v346
      %v348 = vmul.f32 %v345, %v347
      %v349 = vadd.f32 %v345, %v348
      %vm350 = vweird.f32 %v344
      %vm351 = vweird.f32 %v345
      %vm352 = vmor %vm350, %vm351
      %v353 = vsel %vm352, %v345, %v349
      %v354 = vand.u32 2147483647, %v344
      %vm355 = vcmp.eq.f32.partialorder %v354, 8.507059e+37
      %v356 = vand.u32 %v344, 2147483648
      %v357 = vor.u32 1.1754944e-38, %v356
      %v358 = vsel %vm355, %v357, %v353
      %v359 = vmul.f32 1.0, %v358
      %v360 = vtanh.pop %v340
      %v361 = vxor.u32 %v340, 2147483648
      %v362 = vmul.f32 %v361, 1.442695
      %v363 = vpow.pop %v362
      %v364 = vadd.f32 %v363, 1.0
      %v365 = vrcp.pop %v364
      %v366 = vmul.f32 %v364, %v365
      %v367 = vsub.f32 1.0, %v366
      %v368 = vmul.f32 %v365, %v367
      %v369 = vadd.f32 %v365, %v368
      %vm370 = vweird.f32 %v364
      %vm371 = vweird.f32 %v365
      %vm372 = vmor %vm370, %vm371
      %v373 = vsel %vm372, %v365, %v369
      %v374 = vand.u32 2147483647, %v364
      %vm375 = vcmp.eq.f32.partialorder %v374, 8.507059e+37
      %v376 = vand.u32 %v364, 2147483648
      %v377 = vor.u32 1.1754944e-38, %v376
      %v378 = vsel %vm375, %v377, %v373
      %v379 = vmul.f32 1.0, %v378
      %381 = vrot.lane.b32.xlu0 %v156, 64
      %v382 = vpop.permute.xlu0 %381
      %v384 = vmul.f32 %v359, %v382
      %v385 = vmul.f32 %v359, %v360
      %387 = vrot.lane.b32.xlu0 %v385, 64
      %v388 = vpop.permute.xlu0 %387
      %v390 = vadd.f32 %v384, %v388
      %v391 = vtanh.pop %v390
      %v392 = vmul.f32 %v379, %v391
      %s393 = ssub.s32 31, %s146
      %s394 = smul.u32 %s393, 2
      %s395 = scalar_lea.vmem %s0, %s394
      %v396 = vld [vmem:[%s395] sm:$0x3]
      %v397 = vpack.c.bf16 %v396, %v396
      %v398 = vld [vmem:[#allocation4] sm:$0x3]
      %v399 = vld [vmem:[#allocation5] sm:$0x3]
      %v400 = vpack.c.bf16 %v398, %v398
      %v409 = vunpack.c.l.b16 %v131
      %v410 = vunpack.c.h.b16 %v131
      %v411 = vunpack.c.l.b16 %v132
      %v412 = vunpack.c.h.b16 %v132
      %v413 = vunpack.c.l.b16 %v133
      %v414 = vunpack.c.h.b16 %v133
      %v415 = vunpack.c.l.b16 %v134
      %v416 = vunpack.c.h.b16 %v134
      %v417 = vunpack.c.l.b16 %v135
      %v418 = vunpack.c.h.b16 %v135
      %v419 = vunpack.c.l.b16 %v136
      %v420 = vunpack.c.h.b16 %v136
      %v421 = vunpack.c.l.b16 %v137
      %v422 = vunpack.c.h.b16 %v137
      %v423 = vunpack.c.l.b16 %v138
      %v424 = vunpack.c.h.b16 %v138
      %v425 = vpack.c.b16 %v411, %v409
      %v426 = vpack.c.b16 %v412, %v410
      %v427 = vpack.c.b16 %v415, %v413
      %v428 = vpack.c.b16 %v416, %v414
      %v429 = vpack.c.b16 %v419, %v417
      %v430 = vpack.c.b16 %v420, %v418
      %v431 = vpack.c.b16 %v423, %v421
      %v432 = vpack.c.b16 %v424, %v422
      %v442 = vsel %vm198, %v400, 0
      %444 = vmatpush.bf16.msra.mxu0 0
      %445 = vmatpush.bf16.msra.mxu0 0
      %446 = vmatpush.bf16.msra.mxu0 0
      %447 = vmatpush.bf16.msra.mxu0 0
      %448 = vmatpush.bf16.msra.mxu0 %v431
      %449 = vmatpush.bf16.msra.mxu0 %v429
      %450 = vmatpush.bf16.msra.mxu0 %v427
      %451 = vmatpush.bf16.msra.mxu0 %v425
      %452 = vmatmul.bf16.gmra.mxu0 %v442
      %v453 = vpop.f32.mrf.mxu0
      %v454 = vadd.f32 0.0, %v453
      %v455 = vpop.f32.mrf.mxu0
      %456 = vdwg.mxu0
      %457 = vmatpush.bf16.msra.mxu0 0
      %458 = vmatpush.bf16.msra.mxu0 0
      %459 = vmatpush.bf16.msra.mxu0 0
      %460 = vmatpush.bf16.msra.mxu0 0
      %461 = vmatpush.bf16.msra.mxu0 %v432
      %462 = vmatpush.bf16.msra.mxu0 %v430
      %463 = vmatpush.bf16.msra.mxu0 %v428
      %464 = vmatpush.bf16.msra.mxu0 %v426
      %465 = vmatmul.bf16.gmra.mxu0 %v442
      %v466 = vpop.f32.mrf.mxu0
      %v467 = vadd.f32 0.0, %v466
      %v468 = vpop.f32.mrf.mxu0
      %469 = vdwg.mxu0
      %v486 = vunpack.c.l.b16 %v115
      %v487 = vunpack.c.h.b16 %v115
      %v488 = vunpack.c.l.b16 %v116
      %v489 = vunpack.c.h.b16 %v116
      %v490 = vunpack.c.l.b16 %v117
      %v491 = vunpack.c.h.b16 %v117
      %v492 = vunpack.c.l.b16 %v118
      %v493 = vunpack.c.h.b16 %v118
      %v494 = vunpack.c.l.b16 %v119
      %v495 = vunpack.c.h.b16 %v119
      %v496 = vunpack.c.l.b16 %v120
      %v497 = vunpack.c.h.b16 %v120
      %v498 = vunpack.c.l.b16 %v121
      %v499 = vunpack.c.h.b16 %v121
      %v500 = vunpack.c.l.b16 %v122
      %v501 = vunpack.c.h.b16 %v122
      %v502 = vunpack.c.l.b16 %v123
      %v503 = vunpack.c.h.b16 %v123
      %v504 = vunpack.c.l.b16 %v124
      %v505 = vunpack.c.h.b16 %v124
      %v506 = vunpack.c.l.b16 %v125
      %v507 = vunpack.c.h.b16 %v125
      %v508 = vunpack.c.l.b16 %v126
      %v509 = vunpack.c.h.b16 %v126
      %v510 = vunpack.c.l.b16 %v127
      %v511 = vunpack.c.h.b16 %v127
      %v512 = vunpack.c.l.b16 %v128
      %v513 = vunpack.c.h.b16 %v128
      %v514 = vunpack.c.l.b16 %v129
      %v515 = vunpack.c.h.b16 %v129
      %v516 = vunpack.c.l.b16 %v130
      %v517 = vunpack.c.h.b16 %v130
      %v518 = vpack.c.b16 %v488, %v486
      %v519 = vpack.c.b16 %v489, %v487
      %v520 = vpack.c.b16 %v492, %v490
      %v521 = vpack.c.b16 %v493, %v491
      %v522 = vpack.c.b16 %v496, %v494
      %v523 = vpack.c.b16 %v497, %v495
      %v524 = vpack.c.b16 %v500, %v498
      %v525 = vpack.c.b16 %v501, %v499
      %v526 = vpack.c.b16 %v504, %v502
      %v527 = vpack.c.b16 %v505, %v503
      %v528 = vpack.c.b16 %v508, %v506
      %v529 = vpack.c.b16 %v509, %v507
      %v530 = vpack.c.b16 %v512, %v510
      %v531 = vpack.c.b16 %v513, %v511
      %v532 = vpack.c.b16 %v516, %v514
      %v533 = vpack.c.b16 %v517, %v515
      %550 = vmatpush.bf16.msra.mxu0 %v532
      %551 = vmatpush.bf16.msra.mxu0 %v530
      %552 = vmatpush.bf16.msra.mxu0 %v528
      %553 = vmatpush.bf16.msra.mxu0 %v526
      %554 = vmatpush.bf16.msra.mxu0 %v524
      %555 = vmatpush.bf16.msra.mxu0 %v522
      %556 = vmatpush.bf16.msra.mxu0 %v520
      %557 = vmatpush.bf16.msra.mxu0 %v518
      %558 = vmatmul.bf16.gmra.mxu0 %v397
      %v559 = vpop.f32.mrf.mxu0
      %v560 = vadd.f32 %v454, %v559
      %v561 = vpop.f32.mrf.mxu0
      %562 = vdwg.mxu0
      %563 = vmatpush.bf16.msra.mxu0 %v533
      %564 = vmatpush.bf16.msra.mxu0 %v531
      %565 = vmatpush.bf16.msra.mxu0 %v529
      %566 = vmatpush.bf16.msra.mxu0 %v527
      %567 = vmatpush.bf16.msra.mxu0 %v525
      %568 = vmatpush.bf16.msra.mxu0 %v523
      %569 = vmatpush.bf16.msra.mxu0 %v521
      %570 = vmatpush.bf16.msra.mxu0 %v519
      %571 = vmatmul.bf16.gmra.mxu0 %v397
      %v572 = vpop.f32.mrf.mxu0
      %v573 = vadd.f32 %v467, %v572
      %v574 = vpop.f32.mrf.mxu0
      %575 = vdwg.mxu0
      %v577 = vperm.slane %v139, 0
      %v578 = vperm.slane %v139, 1
      %v581 = vadd.f32 %v560, %v577
      %v582 = vadd.f32 %v573, %v578
      %v583 = vxor.u32 %v581, 2147483648
      %v584 = vmul.f32 %v583, 1.442695
      %v585 = vpow.pop %v584
      %v586 = vadd.f32 %v585, 1.0
      %v587 = vrcp.pop %v586
      %v588 = vmul.f32 %v586, %v587
      %v589 = vsub.f32 1.0, %v588
      %v590 = vmul.f32 %v587, %v589
      %v591 = vadd.f32 %v587, %v590
      %vm592 = vweird.f32 %v586
      %vm593 = vweird.f32 %v587
      %vm594 = vmor %vm592, %vm593
      %v595 = vsel %vm594, %v587, %v591
      %v596 = vand.u32 2147483647, %v586
      %vm597 = vcmp.eq.f32.partialorder %v596, 8.507059e+37
      %v598 = vand.u32 %v586, 2147483648
      %v599 = vor.u32 1.1754944e-38, %v598
      %v600 = vsel %vm597, %v599, %v595
      %v601 = vmul.f32 1.0, %v600
      %v602 = vtanh.pop %v582
      %v603 = vxor.u32 %v582, 2147483648
      %v604 = vmul.f32 %v603, 1.442695
      %v605 = vpow.pop %v604
      %v606 = vadd.f32 %v605, 1.0
      %v607 = vrcp.pop %v606
      %v608 = vmul.f32 %v606, %v607
      %v609 = vsub.f32 1.0, %v608
      %v610 = vmul.f32 %v607, %v609
      %v611 = vadd.f32 %v607, %v610
      %vm612 = vweird.f32 %v606
      %vm613 = vweird.f32 %v607
      %vm614 = vmor %vm612, %vm613
      %v615 = vsel %vm614, %v607, %v611
      %v616 = vand.u32 2147483647, %v606
      %vm617 = vcmp.eq.f32.partialorder %v616, 8.507059e+37
      %v618 = vand.u32 %v606, 2147483648
      %v619 = vor.u32 1.1754944e-38, %v618
      %v620 = vsel %vm617, %v619, %v615
      %v621 = vmul.f32 1.0, %v620
      %623 = vrot.lane.b32.xlu0 %v399, 64
      %v624 = vpop.permute.xlu0 %623
      %v626 = vmul.f32 %v601, %v624
      %v627 = vmul.f32 %v601, %v602
      %629 = vrot.lane.b32.xlu0 %v627, 64
      %v630 = vpop.permute.xlu0 %629
      %v632 = vadd.f32 %v626, %v630
      %v633 = vtanh.pop %v632
      %v634 = vmul.f32 %v621, %v633
      %636 = vrot.lane.b32.xlu0 %v392, 64
      %v637 = vpop.permute.xlu0 %636
      %639 = vst.msk [vmem:[#allocation2] sm:$0x3] %vm140, %v637
      %641 = vrot.lane.b32.xlu0 %v390, 64
      %v642 = vpop.permute.xlu0 %641
      %644 = vst.msk [vmem:[#allocation3] sm:$0x3] %vm140, %v642
      %646 = vrot.lane.b32.xlu0 %v634, 64
      %v647 = vpop.permute.xlu0 %646
      %649 = vst.msk [vmem:[#allocation4] sm:$0x3] %vm140, %v647
      %651 = vrot.lane.b32.xlu0 %v632, 64
      %v652 = vpop.permute.xlu0 %651
      %654 = vst.msk [vmem:[#allocation5] sm:$0x3] %vm140, %v652
      %s655 = scalar_lea.vmem [#allocation6], %s151
      %656 = vst.msk [vmem:[%s655] sm:$0x3] %vm140, %v637
      %s657 = scalar_lea.vmem [#allocation7], %s394
      %658 = vst.msk [vmem:[%s657] sm:$0x3] %vm140, %v647
    $region50: #{sleep_transformer_forward.10} parent=1 // loop_footer
      %s150 = sadd.s32 1, %s146
    $region51: #{sleep_transformer_forward.10} parent=1 // loop_footer_branch
      %145 = sbr.rel target = $region47
    $region52: #{sleep_transformer_forward.10} parent=1 // loop_exit
      _
    %v659 = vld [vmem:[#allocation6] sm:$0x3]
    %v660 = vld [vmem:[#allocation6 + $0x2] sm:$0x3]
    %v661 = vld [vmem:[#allocation6 + $0x4] sm:$0x3]
    %v662 = vld [vmem:[#allocation6 + $0x6] sm:$0x3]
    %v663 = vld [vmem:[#allocation6 + $0x8] sm:$0x3]
    %v664 = vld [vmem:[#allocation6 + $0xa] sm:$0x3]
    %v665 = vld [vmem:[#allocation6 + $0xc] sm:$0x3]
    %v666 = vld [vmem:[#allocation6 + $0xe] sm:$0x3]
    %v667 = vld [vmem:[#allocation6 + $0x10] sm:$0x3]
    %v668 = vld [vmem:[#allocation6 + $0x12] sm:$0x3]
    %v669 = vld [vmem:[#allocation6 + $0x14] sm:$0x3]
    %v670 = vld [vmem:[#allocation6 + $0x16] sm:$0x3]
    %v671 = vld [vmem:[#allocation6 + $0x18] sm:$0x3]
    %v672 = vld [vmem:[#allocation6 + $0x1a] sm:$0x3]
    %v673 = vld [vmem:[#allocation6 + $0x1c] sm:$0x3]
    %v674 = vld [vmem:[#allocation6 + $0x1e] sm:$0x3]
    %v675 = vld [vmem:[#allocation6 + $0x20] sm:$0x3]
    %v676 = vld [vmem:[#allocation6 + $0x22] sm:$0x3]
    %v677 = vld [vmem:[#allocation6 + $0x24] sm:$0x3]
    %v678 = vld [vmem:[#allocation6 + $0x26] sm:$0x3]
    %v679 = vld [vmem:[#allocation6 + $0x28] sm:$0x3]
    %v680 = vld [vmem:[#allocation6 + $0x2a] sm:$0x3]
    %v681 = vld [vmem:[#allocation6 + $0x2c] sm:$0x3]
    %v682 = vld [vmem:[#allocation6 + $0x2e] sm:$0x3]
    %v683 = vld [vmem:[#allocation6 + $0x30] sm:$0x3]
    %v684 = vld [vmem:[#allocation6 + $0x32] sm:$0x3]
    %v685 = vld [vmem:[#allocation6 + $0x34] sm:$0x3]
    %v686 = vld [vmem:[#allocation6 + $0x36] sm:$0x3]
    %v687 = vld [vmem:[#allocation6 + $0x38] sm:$0x3]
    %v688 = vld [vmem:[#allocation6 + $0x3a] sm:$0x3]
    %v689 = vld [vmem:[#allocation6 + $0x3c] sm:$0x3]
    %v690 = vld [vmem:[#allocation6 + $0x3e] sm:$0x3]
    %v691 = vld [vmem:[#allocation7] sm:$0x3]
    %v692 = vld [vmem:[#allocation7 + $0x2] sm:$0x3]
    %v693 = vld [vmem:[#allocation7 + $0x4] sm:$0x3]
    %v694 = vld [vmem:[#allocation7 + $0x6] sm:$0x3]
    %v695 = vld [vmem:[#allocation7 + $0x8] sm:$0x3]
    %v696 = vld [vmem:[#allocation7 + $0xa] sm:$0x3]
    %v697 = vld [vmem:[#allocation7 + $0xc] sm:$0x3]
    %v698 = vld [vmem:[#allocation7 + $0xe] sm:$0x3]
    %v699 = vld [vmem:[#allocation7 + $0x10] sm:$0x3]
    %v700 = vld [vmem:[#allocation7 + $0x12] sm:$0x3]
    %v701 = vld [vmem:[#allocation7 + $0x14] sm:$0x3]
    %v702 = vld [vmem:[#allocation7 + $0x16] sm:$0x3]
    %v703 = vld [vmem:[#allocation7 + $0x18] sm:$0x3]
    %v704 = vld [vmem:[#allocation7 + $0x1a] sm:$0x3]
    %v705 = vld [vmem:[#allocation7 + $0x1c] sm:$0x3]
    %v706 = vld [vmem:[#allocation7 + $0x1e] sm:$0x3]
    %v707 = vld [vmem:[#allocation7 + $0x20] sm:$0x3]
    %v708 = vld [vmem:[#allocation7 + $0x22] sm:$0x3]
    %v709 = vld [vmem:[#allocation7 + $0x24] sm:$0x3]
    %v710 = vld [vmem:[#allocation7 + $0x26] sm:$0x3]
    %v711 = vld [vmem:[#allocation7 + $0x28] sm:$0x3]
    %v712 = vld [vmem:[#allocation7 + $0x2a] sm:$0x3]
    %v713 = vld [vmem:[#allocation7 + $0x2c] sm:$0x3]
    %v714 = vld [vmem:[#allocation7 + $0x2e] sm:$0x3]
    %v715 = vld [vmem:[#allocation7 + $0x30] sm:$0x3]
    %v716 = vld [vmem:[#allocation7 + $0x32] sm:$0x3]
    %v717 = vld [vmem:[#allocation7 + $0x34] sm:$0x3]
    %v718 = vld [vmem:[#allocation7 + $0x36] sm:$0x3]
    %v719 = vld [vmem:[#allocation7 + $0x38] sm:$0x3]
    %v720 = vld [vmem:[#allocation7 + $0x3a] sm:$0x3]
    %v721 = vld [vmem:[#allocation7 + $0x3c] sm:$0x3]
    %v722 = vld [vmem:[#allocation7 + $0x3e] sm:$0x3]
    %755 = vrot.lane.b32.xlu0 %v691, 64
    %v756 = vpop.permute.xlu0 %755
    %757 = vrot.lane.b32.xlu0 %v692, 64
    %v758 = vpop.permute.xlu0 %757
    %759 = vrot.lane.b32.xlu0 %v693, 64
    %v760 = vpop.permute.xlu0 %759
    %761 = vrot.lane.b32.xlu0 %v694, 64
    %v762 = vpop.permute.xlu0 %761
    %763 = vrot.lane.b32.xlu0 %v695, 64
    %v764 = vpop.permute.xlu0 %763
    %765 = vrot.lane.b32.xlu0 %v696, 64
    %v766 = vpop.permute.xlu0 %765
    %767 = vrot.lane.b32.xlu0 %v697, 64
    %v768 = vpop.permute.xlu0 %767
    %769 = vrot.lane.b32.xlu0 %v698, 64
    %v770 = vpop.permute.xlu0 %769
    %771 = vrot.lane.b32.xlu0 %v699, 64
    %v772 = vpop.permute.xlu0 %771
    %773 = vrot.lane.b32.xlu0 %v700, 64
    %v774 = vpop.permute.xlu0 %773
    %775 = vrot.lane.b32.xlu0 %v701, 64
    %v776 = vpop.permute.xlu0 %775
    %777 = vrot.lane.b32.xlu0 %v702, 64
    %v778 = vpop.permute.xlu0 %777
    %779 = vrot.lane.b32.xlu0 %v703, 64
    %v780 = vpop.permute.xlu0 %779
    %781 = vrot.lane.b32.xlu0 %v704, 64
    %v782 = vpop.permute.xlu0 %781
    %783 = vrot.lane.b32.xlu0 %v705, 64
    %v784 = vpop.permute.xlu0 %783
    %785 = vrot.lane.b32.xlu0 %v706, 64
    %v786 = vpop.permute.xlu0 %785
    %787 = vrot.lane.b32.xlu0 %v707, 64
    %v788 = vpop.permute.xlu0 %787
    %789 = vrot.lane.b32.xlu0 %v708, 64
    %v790 = vpop.permute.xlu0 %789
    %791 = vrot.lane.b32.xlu0 %v709, 64
    %v792 = vpop.permute.xlu0 %791
    %793 = vrot.lane.b32.xlu0 %v710, 64
    %v794 = vpop.permute.xlu0 %793
    %795 = vrot.lane.b32.xlu0 %v711, 64
    %v796 = vpop.permute.xlu0 %795
    %797 = vrot.lane.b32.xlu0 %v712, 64
    %v798 = vpop.permute.xlu0 %797
    %799 = vrot.lane.b32.xlu0 %v713, 64
    %v800 = vpop.permute.xlu0 %799
    %801 = vrot.lane.b32.xlu0 %v714, 64
    %v802 = vpop.permute.xlu0 %801
    %803 = vrot.lane.b32.xlu0 %v715, 64
    %v804 = vpop.permute.xlu0 %803
    %805 = vrot.lane.b32.xlu0 %v716, 64
    %v806 = vpop.permute.xlu0 %805
    %807 = vrot.lane.b32.xlu0 %v717, 64
    %v808 = vpop.permute.xlu0 %807
    %809 = vrot.lane.b32.xlu0 %v718, 64
    %v810 = vpop.permute.xlu0 %809
    %811 = vrot.lane.b32.xlu0 %v719, 64
    %v812 = vpop.permute.xlu0 %811
    %813 = vrot.lane.b32.xlu0 %v720, 64
    %v814 = vpop.permute.xlu0 %813
    %815 = vrot.lane.b32.xlu0 %v721, 64
    %v816 = vpop.permute.xlu0 %815
    %817 = vrot.lane.b32.xlu0 %v722, 64
    %v818 = vpop.permute.xlu0 %817
    %vm851 = vcmask 523264
    %v852 = vsel %vm851, %v659, %v756
    %v853 = vsel %vm851, %v660, %v758
    %v854 = vsel %vm851, %v661, %v760
    %v855 = vsel %vm851, %v662, %v762
    %v856 = vsel %vm851, %v663, %v764
    %v857 = vsel %vm851, %v664, %v766
    %v858 = vsel %vm851, %v665, %v768
    %v859 = vsel %vm851, %v666, %v770
    %v860 = vsel %vm851, %v667, %v772
    %v861 = vsel %vm851, %v668, %v774
    %v862 = vsel %vm851, %v669, %v776
    %v863 = vsel %vm851, %v670, %v778
    %v864 = vsel %vm851, %v671, %v780
    %v865 = vsel %vm851, %v672, %v782
    %v866 = vsel %vm851, %v673, %v784
    %v867 = vsel %vm851, %v674, %v786
    %v868 = vsel %vm851, %v675, %v788
    %v869 = vsel %vm851, %v676, %v790
    %v870 = vsel %vm851, %v677, %v792
    %v871 = vsel %vm851, %v678, %v794
    %v872 = vsel %vm851, %v679, %v796
    %v873 = vsel %vm851, %v680, %v798
    %v874 = vsel %vm851, %v681, %v800
    %v875 = vsel %vm851, %v682, %v802
    %v876 = vsel %vm851, %v683, %v804
    %v877 = vsel %vm851, %v684, %v806
    %v878 = vsel %vm851, %v685, %v808
    %v879 = vsel %vm851, %v686, %v810
    %v880 = vsel %vm851, %v687, %v812
    %v881 = vsel %vm851, %v688, %v814
    %v882 = vsel %vm851, %v689, %v816
    %v883 = vsel %vm851, %v690, %v818
    %884 = vst [vmem:[%s7] sm:$0x3] %v852
    %885 = vst [vmem:[%s7 + $0x2] sm:$0x3] %v853
    %886 = vst [vmem:[%s7 + $0x4] sm:$0x3] %v854
    %887 = vst [vmem:[%s7 + $0x6] sm:$0x3] %v855
    %888 = vst [vmem:[%s7 + $0x8] sm:$0x3] %v856
    %889 = vst [vmem:[%s7 + $0xa] sm:$0x3] %v857
    %890 = vst [vmem:[%s7 + $0xc] sm:$0x3] %v858
    %891 = vst [vmem:[%s7 + $0xe] sm:$0x3] %v859
    %892 = vst [vmem:[%s7 + $0x10] sm:$0x3] %v860
    %893 = vst [vmem:[%s7 + $0x12] sm:$0x3] %v861
    %894 = vst [vmem:[%s7 + $0x14] sm:$0x3] %v862
    %895 = vst [vmem:[%s7 + $0x16] sm:$0x3] %v863
    %896 = vst [vmem:[%s7 + $0x18] sm:$0x3] %v864
    %897 = vst [vmem:[%s7 + $0x1a] sm:$0x3] %v865
    %898 = vst [vmem:[%s7 + $0x1c] sm:$0x3] %v866
    %899 = vst [vmem:[%s7 + $0x1e] sm:$0x3] %v867
    %900 = vst [vmem:[%s7 + $0x20] sm:$0x3] %v868
    %901 = vst [vmem:[%s7 + $0x22] sm:$0x3] %v869
    %902 = vst [vmem:[%s7 + $0x24] sm:$0x3] %v870
    %903 = vst [vmem:[%s7 + $0x26] sm:$0x3] %v871
    %904 = vst [vmem:[%s7 + $0x28] sm:$0x3] %v872
    %905 = vst [vmem:[%s7 + $0x2a] sm:$0x3] %v873
    %906 = vst [vmem:[%s7 + $0x2c] sm:$0x3] %v874
    %907 = vst [vmem:[%s7 + $0x2e] sm:$0x3] %v875
    %908 = vst [vmem:[%s7 + $0x30] sm:$0x3] %v876
    %909 = vst [vmem:[%s7 + $0x32] sm:$0x3] %v877
    %910 = vst [vmem:[%s7 + $0x34] sm:$0x3] %v878
    %911 = vst [vmem:[%s7 + $0x36] sm:$0x3] %v879
    %912 = vst [vmem:[%s7 + $0x38] sm:$0x3] %v880
    %913 = vst [vmem:[%s7 + $0x3a] sm:$0x3] %v881
    %914 = vst [vmem:[%s7 + $0x3c] sm:$0x3] %v882
    %915 = vst [vmem:[%s7 + $0x3e] sm:$0x3] %v883
    // Predicated region
    $region53: #{sleep_transformer_forward.10} parent=1 // pred_check
      _
    $region54: #{sleep_transformer_forward.10} parent=1 // pred_check_branch
      %917 = sbr.rel (0) target = $region56
    $region55: #{sleep_transformer_forward.10} parent=1 // pred_region
      _
    $region56: #{sleep_transformer_forward.10} parent=1 // pred_fallthru
      _
    // Predicated region
    $region57: #{sleep_transformer_forward.10} parent=1 // pred_check
      _
    $region58: #{sleep_transformer_forward.10} parent=1 // pred_check_branch
      %919 = sbr.rel (0) target = $region60
    $region59: #{sleep_transformer_forward.10} parent=1 // pred_region
      _
    $region60: #{sleep_transformer_forward.10} parent=1 // pred_fallthru
      _
    %920 = vsyncpa [#allocation9], 1
    %921 = vsyncpa [#allocation11], 1
    %922 = vsyncpa [#allocation14], 1

// kernel: sleep_transformer_forward.11
$region0: #{sleep_transformer_forward.11}
  #allocation0 [shape = 'u32[]', space=smem, size = 0x4, offset = 0x4, fixed_abs, tag = 'smem constant byte address 0x4 - core index']
  #allocation1 [shape = 'u32[72,128]{1,0:T(1,128)}', space=vmem, size = 0x9000, scoped, tag = 'internal scratch']
  %s0 = inlined_call_operand.vmem [shape: f32[128,128], index: 0, kind: input, shape index: {}]
  %s1 = inlined_call_operand.vmem [shape: bf16[128,128], index: 1, kind: input, shape index: {}]
  %s2 = inlined_call_operand.vmem [shape: f32[1,128], index: 2, kind: input, shape index: {}]
  %s3 = inlined_call_operand.vmem [shape: bf16[128,128], index: 3, kind: input, shape index: {}]
  %s4 = inlined_call_operand.vmem [shape: f32[1,128], index: 4, kind: input, shape index: {}]
  %s5 = inlined_call_operand.vmem [shape: f32[128,128], index: 5, kind: output, shape index: {}]
  %s6 = sld [smem:[#allocation0]]
  $region30: #{sleep_transformer_forward.11} parent=0
    _
  %s8 = ssub.s32 1, %s6
  %s9 = scalar_select 0, %s8, %s6
  // Predicated region
  $region2: #{sleep_transformer_forward.11} parent=0 // pred_check
    _
  $region3: #{sleep_transformer_forward.11} parent=0 // pred_check_branch
    %11 = sbr.rel (0) target = $region5
  $region4: #{sleep_transformer_forward.11} parent=0 // pred_region
    _
  $region5: #{sleep_transformer_forward.11} parent=0 // pred_fallthru
    _
  // Predicated region
  $region6: #{sleep_transformer_forward.11} parent=0 // pred_check
    _
  $region7: #{sleep_transformer_forward.11} parent=0 // pred_check_branch
    %13 = sbr.rel (0) target = $region9
  $region8: #{sleep_transformer_forward.11} parent=0 // pred_region
    _
  $region9: #{sleep_transformer_forward.11} parent=0 // pred_fallthru
    _
  // Predicated region
  $region10: #{sleep_transformer_forward.11} parent=0 // pred_check
    _
  $region11: #{sleep_transformer_forward.11} parent=0 // pred_check_branch
    %15 = sbr.rel (0) target = $region13
  $region12: #{sleep_transformer_forward.11} parent=0 // pred_region
    _
  $region13: #{sleep_transformer_forward.11} parent=0 // pred_fallthru
    _
  // Predicated region
  $region14: #{sleep_transformer_forward.11} parent=0 // pred_check
    _
  $region15: #{sleep_transformer_forward.11} parent=0 // pred_check_branch
    %17 = sbr.rel (0) target = $region17
  $region16: #{sleep_transformer_forward.11} parent=0 // pred_region
    _
  $region17: #{sleep_transformer_forward.11} parent=0 // pred_fallthru
    _
  // Predicated region
  $region18: #{sleep_transformer_forward.11} parent=0 // pred_check
    _
  $region19: #{sleep_transformer_forward.11} parent=0 // pred_check_branch
    %19 = sbr.rel (0) target = $region21
  $region20: #{sleep_transformer_forward.11} parent=0 // pred_region
    _
  $region21: #{sleep_transformer_forward.11} parent=0 // pred_fallthru
    _
  %v20 = vld [vmem:[%s0] sm:$0xff]
  %v21 = vld [vmem:[%s0 + $0x8] sm:$0xff]
  %v22 = vld [vmem:[%s0 + $0x10] sm:$0xff]
  %v23 = vld [vmem:[%s0 + $0x18] sm:$0xff]
  %v24 = vld [vmem:[%s0 + $0x20] sm:$0xff]
  %v25 = vld [vmem:[%s0 + $0x28] sm:$0xff]
  %v26 = vld [vmem:[%s0 + $0x30] sm:$0xff]
  %v27 = vld [vmem:[%s0 + $0x38] sm:$0xff]
  %v28 = vld [vmem:[%s0 + $0x40] sm:$0xff]
  %v29 = vld [vmem:[%s0 + $0x48] sm:$0xff]
  %v30 = vld [vmem:[%s0 + $0x50] sm:$0xff]
  %v31 = vld [vmem:[%s0 + $0x58] sm:$0xff]
  %v32 = vld [vmem:[%s0 + $0x60] sm:$0xff]
  %v33 = vld [vmem:[%s0 + $0x68] sm:$0xff]
  %v34 = vld [vmem:[%s0 + $0x70] sm:$0xff]
  %v35 = vld [vmem:[%s0 + $0x78] sm:$0xff]
  %v36 = vpack.c.bf16 %v21, %v20
  %v37 = vpack.c.bf16 %v23, %v22
  %v38 = vpack.c.bf16 %v25, %v24
  %v39 = vpack.c.bf16 %v27, %v26
  %v40 = vpack.c.bf16 %v29, %v28
  %v41 = vpack.c.bf16 %v31, %v30
  %v42 = vpack.c.bf16 %v33, %v32
  %v43 = vpack.c.bf16 %v35, %v34
  %v44 = vld [vmem:[%s1] sm:$0xf]
  %v45 = vld [vmem:[%s1 + $0x4] sm:$0xf]
  %v46 = vld [vmem:[%s1 + $0x8] sm:$0xf]
  %v47 = vld [vmem:[%s1 + $0xc] sm:$0xf]
  %v48 = vld [vmem:[%s1 + $0x10] sm:$0xf]
  %v49 = vld [vmem:[%s1 + $0x14] sm:$0xf]
  %v50 = vld [vmem:[%s1 + $0x18] sm:$0xf]
  %v51 = vld [vmem:[%s1 + $0x1c] sm:$0xf]
  %v52 = vld [vmem:[%s1 + $0x20] sm:$0xf]
  %v53 = vld [vmem:[%s1 + $0x24] sm:$0xf]
  %v54 = vld [vmem:[%s1 + $0x28] sm:$0xf]
  %v55 = vld [vmem:[%s1 + $0x2c] sm:$0xf]
  %v56 = vld [vmem:[%s1 + $0x30] sm:$0xf]
  %v57 = vld [vmem:[%s1 + $0x34] sm:$0xf]
  %v58 = vld [vmem:[%s1 + $0x38] sm:$0xf]
  %v59 = vld [vmem:[%s1 + $0x3c] sm:$0xf]
  %v60 = vld [vmem:[%s2] sm:$0x1]
  %v62 = vperm.slane %v60, 0
  %v80 = vunpack.c.l.b16 %v44
  %v81 = vunpack.c.l.b16 %v45
  %v82 = vunpack.c.l.b16 %v46
  %v83 = vunpack.c.l.b16 %v47
  %v84 = vunpack.c.l.b16 %v48
  %v85 = vunpack.c.l.b16 %v49
  %v86 = vunpack.c.l.b16 %v50
  %v87 = vunpack.c.l.b16 %v51
  %v88 = vunpack.c.l.b16 %v52
  %v89 = vunpack.c.l.b16 %v53
  %v90 = vunpack.c.l.b16 %v54
  %v91 = vunpack.c.l.b16 %v55
  %v92 = vunpack.c.l.b16 %v56
  %v93 = vunpack.c.l.b16 %v57
  %v94 = vunpack.c.l.b16 %v58
  %v95 = vunpack.c.l.b16 %v59
  %v96 = vpack.c.b16 %v81, %v80
  %v97 = vpack.c.b16 %v83, %v82
  %v98 = vpack.c.b16 %v85, %v84
  %v99 = vpack.c.b16 %v87, %v86
  %v100 = vpack.c.b16 %v89, %v88
  %v101 = vpack.c.b16 %v91, %v90
  %v102 = vpack.c.b16 %v93, %v92
  %v103 = vpack.c.b16 %v95, %v94
  %112 = vmatpush.bf16.msra.mxu0 %v103
  %113 = vmatpush.bf16.msra.mxu0 %v102
  %114 = vmatpush.bf16.msra.mxu0 %v101
  %115 = vmatpush.bf16.msra.mxu0 %v100
  %116 = vmatpush.bf16.msra.mxu0 %v99
  %117 = vmatpush.bf16.msra.mxu0 %v98
  %118 = vmatpush.bf16.msra.mxu0 %v97
  %119 = vmatpush.bf16.msra.mxu0 %v96
  %120 = vmatmul.bf16.gmra.mxu0 %v36
  %v121 = vpop.f32.mrf.mxu0
  %v122 = vadd.f32 %v62, %v121
  %v123 = vpop.f32.mrf.mxu0
  %v124 = vadd.f32 %v62, %v123
  %125 = vmatmul.bf16.gmra.mxu0 %v37
  %v126 = vpop.f32.mrf.mxu0
  %v127 = vadd.f32 %v62, %v126
  %v128 = vpop.f32.mrf.mxu0
  %v129 = vadd.f32 %v62, %v128
  %130 = vmatmul.bf16.gmra.mxu0 %v38
  %v131 = vpop.f32.mrf.mxu0
  %v132 = vadd.f32 %v62, %v131
  %v133 = vpop.f32.mrf.mxu0
  %v134 = vadd.f32 %v62, %v133
  %135 = vmatmul.bf16.gmra.mxu0 %v39
  %v136 = vpop.f32.mrf.mxu0
  %v137 = vadd.f32 %v62, %v136
  %v138 = vpop.f32.mrf.mxu0
  %v139 = vadd.f32 %v62, %v138
  %140 = vmatmul.bf16.gmra.mxu0 %v40
  %v141 = vpop.f32.mrf.mxu0
  %v142 = vadd.f32 %v62, %v141
  %v143 = vpop.f32.mrf.mxu0
  %v144 = vadd.f32 %v62, %v143
  %145 = vmatmul.bf16.gmra.mxu0 %v41
  %v146 = vpop.f32.mrf.mxu0
  %v147 = vadd.f32 %v62, %v146
  %v148 = vpop.f32.mrf.mxu0
  %v149 = vadd.f32 %v62, %v148
  %150 = vmatmul.bf16.gmra.mxu0 %v42
  %v151 = vpop.f32.mrf.mxu0
  %v152 = vadd.f32 %v62, %v151
  %v153 = vpop.f32.mrf.mxu0
  %v154 = vadd.f32 %v62, %v153
  %155 = vmatmul.bf16.gmra.mxu0 %v43
  %v156 = vpop.f32.mrf.mxu0
  %v157 = vadd.f32 %v62, %v156
  %v158 = vpop.f32.mrf.mxu0
  %v159 = vadd.f32 %v62, %v158
  %160 = vdwg.mxu0
  %v161 = vmax.f32 %v122, 0.0
  %v162 = vmax.f32 %v124, 0.0
  %v163 = vmax.f32 %v127, 0.0
  %v164 = vmax.f32 %v129, 0.0
  %v165 = vmax.f32 %v132, 0.0
  %v166 = vmax.f32 %v134, 0.0
  %v167 = vmax.f32 %v137, 0.0
  %v168 = vmax.f32 %v139, 0.0
  %v169 = vmax.f32 %v142, 0.0
  %v170 = vmax.f32 %v144, 0.0
  %v171 = vmax.f32 %v147, 0.0
  %v172 = vmax.f32 %v149, 0.0
  %v173 = vmax.f32 %v152, 0.0
  %v174 = vmax.f32 %v154, 0.0
  %v175 = vmax.f32 %v157, 0.0
  %v176 = vmax.f32 %v159, 0.0
  %v177 = vpack.c.bf16 %v162, %v161
  %v178 = vpack.c.bf16 %v164, %v163
  %v179 = vpack.c.bf16 %v166, %v165
  %v180 = vpack.c.bf16 %v168, %v167
  %v181 = vpack.c.bf16 %v170, %v169
  %v182 = vpack.c.bf16 %v172, %v171
  %v183 = vpack.c.bf16 %v174, %v173
  %v184 = vpack.c.bf16 %v176, %v175
  %v185 = vld [vmem:[%s3] sm:$0xf]
  %v186 = vld [vmem:[%s3 + $0x4] sm:$0xf]
  %v187 = vld [vmem:[%s3 + $0x8] sm:$0xf]
  %v188 = vld [vmem:[%s3 + $0xc] sm:$0xf]
  %v189 = vld [vmem:[%s3 + $0x10] sm:$0xf]
  %v190 = vld [vmem:[%s3 + $0x14] sm:$0xf]
  %v191 = vld [vmem:[%s3 + $0x18] sm:$0xf]
  %v192 = vld [vmem:[%s3 + $0x1c] sm:$0xf]
  %v193 = vld [vmem:[%s3 + $0x20] sm:$0xf]
  %v194 = vld [vmem:[%s3 + $0x24] sm:$0xf]
  %v195 = vld [vmem:[%s3 + $0x28] sm:$0xf]
  %v196 = vld [vmem:[%s3 + $0x2c] sm:$0xf]
  %v197 = vld [vmem:[%s3 + $0x30] sm:$0xf]
  %v198 = vld [vmem:[%s3 + $0x34] sm:$0xf]
  %v199 = vld [vmem:[%s3 + $0x38] sm:$0xf]
  %v200 = vld [vmem:[%s3 + $0x3c] sm:$0xf]
  %v201 = vld [vmem:[%s4] sm:$0x1]
  %v203 = vperm.slane %v201, 0
  %v221 = vunpack.c.l.b16 %v185
  %v222 = vunpack.c.l.b16 %v186
  %v223 = vunpack.c.l.b16 %v187
  %v224 = vunpack.c.l.b16 %v188
  %v225 = vunpack.c.l.b16 %v189
  %v226 = vunpack.c.l.b16 %v190
  %v227 = vunpack.c.l.b16 %v191
  %v228 = vunpack.c.l.b16 %v192
  %v229 = vunpack.c.l.b16 %v193
  %v230 = vunpack.c.l.b16 %v194
  %v231 = vunpack.c.l.b16 %v195
  %v232 = vunpack.c.l.b16 %v196
  %v233 = vunpack.c.l.b16 %v197
  %v234 = vunpack.c.l.b16 %v198
  %v235 = vunpack.c.l.b16 %v199
  %v236 = vunpack.c.l.b16 %v200
  %v237 = vpack.c.b16 %v222, %v221
  %v238 = vpack.c.b16 %v224, %v223
  %v239 = vpack.c.b16 %v226, %v225
  %v240 = vpack.c.b16 %v228, %v227
  %v241 = vpack.c.b16 %v230, %v229
  %v242 = vpack.c.b16 %v232, %v231
  %v243 = vpack.c.b16 %v234, %v233
  %v244 = vpack.c.b16 %v236, %v235
  %253 = vmatpush.bf16.msra.mxu0 %v244
  %254 = vmatpush.bf16.msra.mxu0 %v243
  %255 = vmatpush.bf16.msra.mxu0 %v242
  %256 = vmatpush.bf16.msra.mxu0 %v241
  %257 = vmatpush.bf16.msra.mxu0 %v240
  %258 = vmatpush.bf16.msra.mxu0 %v239
  %259 = vmatpush.bf16.msra.mxu0 %v238
  %260 = vmatpush.bf16.msra.mxu0 %v237
  %261 = vmatmul.bf16.gmra.mxu0 %v177
  %v262 = vpop.f32.mrf.mxu0
  %v263 = vadd.f32 %v203, %v262
  %v264 = vpop.f32.mrf.mxu0
  %v265 = vadd.f32 %v203, %v264
  %266 = vmatmul.bf16.gmra.mxu0 %v178
  %v267 = vpop.f32.mrf.mxu0
  %v268 = vadd.f32 %v203, %v267
  %v269 = vpop.f32.mrf.mxu0
  %v270 = vadd.f32 %v203, %v269
  %271 = vmatmul.bf16.gmra.mxu0 %v179
  %v272 = vpop.f32.mrf.mxu0
  %v273 = vadd.f32 %v203, %v272
  %v274 = vpop.f32.mrf.mxu0
  %v275 = vadd.f32 %v203, %v274
  %276 = vmatmul.bf16.gmra.mxu0 %v180
  %v277 = vpop.f32.mrf.mxu0
  %v278 = vadd.f32 %v203, %v277
  %v279 = vpop.f32.mrf.mxu0
  %v280 = vadd.f32 %v203, %v279
  %281 = vmatmul.bf16.gmra.mxu0 %v181
  %v282 = vpop.f32.mrf.mxu0
  %v283 = vadd.f32 %v203, %v282
  %v284 = vpop.f32.mrf.mxu0
  %v285 = vadd.f32 %v203, %v284
  %286 = vmatmul.bf16.gmra.mxu0 %v182
  %v287 = vpop.f32.mrf.mxu0
  %v288 = vadd.f32 %v203, %v287
  %v289 = vpop.f32.mrf.mxu0
  %v290 = vadd.f32 %v203, %v289
  %291 = vmatmul.bf16.gmra.mxu0 %v183
  %v292 = vpop.f32.mrf.mxu0
  %v293 = vadd.f32 %v203, %v292
  %v294 = vpop.f32.mrf.mxu0
  %v295 = vadd.f32 %v203, %v294
  %296 = vmatmul.bf16.gmra.mxu0 %v184
  %v297 = vpop.f32.mrf.mxu0
  %v298 = vadd.f32 %v203, %v297
  %v299 = vpop.f32.mrf.mxu0
  %v300 = vadd.f32 %v203, %v299
  %301 = vdwg.mxu0
  %302 = vst [vmem:[%s5] sm:$0xff] %v263
  %303 = vst [vmem:[%s5 + $0x8] sm:$0xff] %v265
  %304 = vst [vmem:[%s5 + $0x10] sm:$0xff] %v268
  %305 = vst [vmem:[%s5 + $0x18] sm:$0xff] %v270
  %306 = vst [vmem:[%s5 + $0x20] sm:$0xff] %v273
  %307 = vst [vmem:[%s5 + $0x28] sm:$0xff] %v275
  %308 = vst [vmem:[%s5 + $0x30] sm:$0xff] %v278
  %309 = vst [vmem:[%s5 + $0x38] sm:$0xff] %v280
  %310 = vst [vmem:[%s5 + $0x40] sm:$0xff] %v283
  %311 = vst [vmem:[%s5 + $0x48] sm:$0xff] %v285
  %312 = vst [vmem:[%s5 + $0x50] sm:$0xff] %v288
  %313 = vst [vmem:[%s5 + $0x58] sm:$0xff] %v290
  %314 = vst [vmem:[%s5 + $0x60] sm:$0xff] %v293
  %315 = vst [vmem:[%s5 + $0x68] sm:$0xff] %v295
  %316 = vst [vmem:[%s5 + $0x70] sm:$0xff] %v298
  %317 = vst [vmem:[%s5 + $0x78] sm:$0xff] %v300
  // Predicated region
  $region22: #{sleep_transformer_forward.11} parent=0 // pred_check
    _
  $region23: #{sleep_transformer_forward.11} parent=0 // pred_check_branch
    %319 = sbr.rel (0) target = $region25
  $region24: #{sleep_transformer_forward.11} parent=0 // pred_region
    _
  $region25: #{sleep_transformer_forward.11} parent=0 // pred_fallthru
    _
  // Predicated region
  $region26: #{sleep_transformer_forward.11} parent=0 // pred_check
    _
  $region27: #{sleep_transformer_forward.11} parent=0 // pred_check_branch
    %321 = sbr.rel (0) target = $region29
  $region28: #{sleep_transformer_forward.11} parent=0 // pred_region
    _
  $region29: #{sleep_transformer_forward.11} parent=0 // pred_fallthru
    _

</llo_original>
